<compile_context>
chip_gen: v7x
topology: tpu7x:2x2x1
jax: 0.10.0
libtpu: 0.0.40
codegen_flags: <defaults>
</compile_context>

<pallas_src>
import jax
import jax.numpy as jnp
from jax import lax
from jax.experimental import pallas as pl
from jax.experimental.pallas import tpu as pltpu

NUM_LAYERS = 2   # args.num_blocks
NUM_HEADS = 2    # args.num_heads
EPS = 1e-8       # SASRec uses LayerNorm(eps=1e-8)
NEG_INF = -1e30  # safe only because scores stay f32 and row-max is subtracted


def _layernorm(x, gamma, beta):
    """x: (N, H); gamma/beta: (1, H)."""
    mu = jnp.mean(x, axis=-1, keepdims=True)
    xc = x - mu
    var = jnp.mean(xc * xc, axis=-1, keepdims=True)
    return xc * lax.rsqrt(var + EPS) * gamma + beta


def _prologue(seqs_ref, sdata_ref):
    """Shared setup: masked flattened activations + additive causal bias."""
    B, L, H = seqs_ref.shape
    x0 = seqs_ref[...].reshape(B * L, H)            # layout-preserving (L multiple of 8)
    m2d = (sdata_ref[...] != 0).astype(x0.dtype)    # (BL, 1) timeline mask, built on-chip
    x0 = x0 * m2d
    row = lax.broadcasted_iota(jnp.int32, (L, L), 0)
    col = lax.broadcasted_iota(jnp.int32, (L, L), 1)
    causal_bias = jnp.where(col <= row, jnp.float32(0.0),
                            jnp.float32(NEG_INF))[None, :, :]     # (1, L, L)
    return x0, m2d, causal_bias, B, L, H


def _stack_compute(x0, m2d, causal_bias, B, L, H,
                   ln1_g, ln1_b, wq, bq, wkv, bkv, wo, bo,
                   ln2_g, ln2_b, w1, b1, w2, b2, lnf_g, lnf_b):
    """One SelfAttention stack on the flattened (B*L, H) activations."""
    BL = B * L
    dh = H // NUM_HEADS
    x = x0
    for l in range(NUM_LAYERS):                                   # statically unrolled
        # --- attention sub-block (pre-norm on Q only, as in SASRec) ---
        q_in = _layernorm(x, ln1_g[l], ln1_b[l])                  # (BL, H)
        # Fused projections: 2 matmuls instead of 6 per-head ones.
        q_all = jnp.dot(q_in, wq[l], preferred_element_type=jnp.float32) + bq[l]   # (BL, H)
        kv = jnp.dot(x, wkv[l], preferred_element_type=jnp.float32) + bkv[l]       # (BL, 2H)

        heads = []
        for h in range(NUM_HEADS):                                # unrolled; static slices
            qh = q_all[:, h * dh:(h + 1) * dh].reshape(B, L, dh)
            kh = kv[:, h * dh:(h + 1) * dh].reshape(B, L, dh)
            vh = kv[:, H + h * dh:H + (h + 1) * dh].reshape(B, L, dh)
            s = jnp.einsum('bqd,bkd->bqk', qh, kh,
                           preferred_element_type=jnp.float32) + causal_bias
            s = s - jnp.max(s, axis=-1, keepdims=True)
            p = jnp.exp(s)
            p = p / jnp.sum(p, axis=-1, keepdims=True)            # exact division
            ah = jnp.einsum('bqk,bkd->bqd', p, vh,
                            preferred_element_type=jnp.float32)   # (B, L, dh)
            heads.append(ah.reshape(BL, dh))
        attn = jnp.concatenate(heads, axis=-1)                    # (BL, H) lane concat
        # Single output projection; residual on the normed Q.
        x = q_in + jnp.dot(attn, wo[l],
                           preferred_element_type=jnp.float32) + bo[l]

        # --- point-wise FFN sub-block (Conv1d k=1 == matmul) ---
        y = _layernorm(x, ln2_g[l], ln2_b[l])
        h1 = jnp.maximum(
            jnp.dot(y, w1[l], preferred_element_type=jnp.float32) + b1[l], 0.0)
        h2 = jnp.dot(h1, w2[l], preferred_element_type=jnp.float32) + b2[l]
        x = (h2 + y) * m2d                                        # FFN residual + mask
    return _layernorm(x, lnf_g, lnf_b)                            # final LayerNorm


def encoder_kernel_whole(seqs_ref, sdata_ref, *refs):
    """No-grid kernel (v5e/v6e): both encoder stacks in one invocation."""
    param_refs = refs[:16]
    out_refs = refs[16:18]                                        # (mu_ref, logvar_ref)
    x0, m2d, bias, B, L, H = _prologue(seqs_ref, sdata_ref)
    for e in range(2):                                            # e=0: mu, e=1: logvar
        prm = [r[e] for r in param_refs]
        out = _stack_compute(x0, m2d, bias, B, L, H, *prm)
        out_refs[e][...] = out.reshape(B, L, H).astype(out_refs[e].dtype)


def encoder_kernel_sharded(seqs_ref, sdata_ref, *refs):
    """grid=(2,) kernel (v7x): one encoder stack per grid step / TensorCore."""
    param_refs = refs[:16]
    out_ref = refs[16]
    x0, m2d, bias, B, L, H = _prologue(seqs_ref, sdata_ref)
    prm = [r[...] for r in param_refs]
    out = _stack_compute(x0, m2d, bias, B, L, H, *prm)
    out_ref[...] = out.reshape(B, L, H).astype(out_ref.dtype)


def _pack_encoder_params(params_mu, params_lv, H):
    """Stack mu/logvar params on a leading axis; fold the Q scale; keep heads fused."""
    stacked = [jnp.stack([a, b], axis=0) for a, b in zip(params_mu, params_lv)]
    (ln1_g, ln1_b, wqkv, bqkv, wo, bo,
     ln2_g, ln2_b, w1, b1, w2, b2, lnf_g, lnf_b) = stacked
    NE, NL = ln1_g.shape[0], ln1_g.shape[1]
    dh = H // NUM_HEADS
    scale = 1.0 / jnp.sqrt(jnp.float32(dh))

    def rowvec(v):                     # (NE, NL, H') -> (NE, NL, 1, H')
        return v[:, :, None, :]

    wq = wqkv[..., 0:H] * scale        # (NE, NL, H, H)   scale folded into Wq
    wkv = wqkv[..., H:3 * H]           # (NE, NL, H, 2H)  fused K|V projection
    bq = rowvec(bqkv[..., 0:H] * scale)
    bkv = rowvec(bqkv[..., H:3 * H])

    return [rowvec(ln1_g), rowvec(ln1_b),
            wq, bq, wkv, bkv,
            wo, rowvec(bo),
            rowvec(ln2_g), rowvec(ln2_b),
            w1, rowvec(b1), w2, rowvec(b2),
            lnf_g.reshape(NE, 1, H), lnf_b.reshape(NE, 1, H)]


def _tensorcores_per_chip():
    """2 TensorCores/chip on v7x; 1 on v5e/v6e.  Fall back to the safe 1-TC path."""
    try:
        kind = jax.devices()[0].device_kind.lower()
    except Exception:
        return 1
    return 2 if "v7" in kind else 1


_NUM_TC_PER_CHIP = _tensorcores_per_chip()


def _param_spec(p):
    zeros = (0,) * (p.ndim - 1)
    # Block only the leading encoder axis (squeezed out of the kernel ref).
    return pl.BlockSpec((None,) + tuple(p.shape[1:]), lambda e: (e,) + zeros)


@jax.jit
def encoder_forward(seqs, seqs_data, params_mu, params_lv):
    B, L, H = seqs.shape
    packed = _pack_encoder_params(params_mu, params_lv, H)
    sdata = seqs_data.reshape(B * L, 1).astype(jnp.int32)

    if _NUM_TC_PER_CHIP >= 2:
        # v7x: shard the two independent encoder stacks across the 2 TensorCores.
        out = pl.pallas_call(
            encoder_kernel_sharded,
            out_shape=jax.ShapeDtypeStruct((2, B, L, H), seqs.dtype),
            grid=(2,),
            in_specs=[pl.BlockSpec((B, L, H), lambda e: (0, 0, 0)),
                      pl.BlockSpec((B * L, 1), lambda e: (0, 0))]
                     + [_param_spec(p) for p in packed],
            out_specs=pl.BlockSpec((None, B, L, H), lambda e: (e, 0, 0, 0)),
            compiler_params=pltpu.CompilerParams(
                dimension_semantics=("parallel",)),
        )(seqs, sdata, *packed)
        return out[0], out[1]

    # v5e/v6e (1 TC/chip): single no-grid invocation, all operands whole-array VMEM
    # blocks (avoids per-grid-step overhead and re-streaming shared inputs).
    mu, logvar = pl.pallas_call(
        encoder_kernel_whole,
        out_shape=(jax.ShapeDtypeStruct((B, L, H), seqs.dtype),
                   jax.ShapeDtypeStruct((B, L, H), seqs.dtype)),
    )(seqs, sdata, *packed)
    return mu, logvar


def init_selfattention_params(key, H, num_layers):
    ks = jax.random.split(key, 8)
    s = 0.05
    f32 = jnp.float32
    return [
        jnp.ones((num_layers, H), f32),                              # attn LN gamma
        jnp.zeros((num_layers, H), f32),                             # attn LN beta
        s * jax.random.normal(ks[0], (num_layers, H, 3 * H), f32),   # in_proj weight (Q|K|V)
        s * jax.random.normal(ks[1], (num_layers, 3 * H), f32),      # in_proj bias
        s * jax.random.normal(ks[2], (num_layers, H, H), f32),       # out_proj weight
        s * jax.random.normal(ks[3], (num_layers, H), f32),          # out_proj bias
        jnp.ones((num_layers, H), f32),                              # ffn LN gamma
        jnp.zeros((num_layers, H), f32),                             # ffn LN beta
        s * jax.random.normal(ks[4], (num_layers, H, H), f32),       # conv1 (1x1) weight
        s * jax.random.normal(ks[5], (num_layers, H), f32),          # conv1 bias
        s * jax.random.normal(ks[6], (num_layers, H, H), f32),       # conv2 (1x1) weight
        s * jax.random.normal(ks[7], (num_layers, H), f32),          # conv2 bias
        jnp.ones((H,), f32),                                         # last LN gamma
        jnp.zeros((H,), f32),                                        # last LN beta
    ]


def selfattention_reference(seqs, seqs_data, params):
    """Pure-JAX mirror of one SelfAttention stack for correctness checks."""
    (ln1_g, ln1_b, wqkv, bqkv, wo, bo,
     ln2_g, ln2_b, w1, b1, w2, b2, lnf_g, lnf_b) = params
    B, L, H = seqs.shape
    dh = H // NUM_HEADS
    scale = 1.0 / jnp.sqrt(jnp.float32(dh))
    m = (seqs_data != 0).astype(seqs.dtype)[..., None]      # (B, L, 1)
    x = seqs * m
    row = lax.broadcasted_iota(jnp.int32, (L, L), 0)
    col = lax.broadcasted_iota(jnp.int32, (L, L), 1)
    causal = col <= row

    def ln(x, g, b):
        mu = jnp.mean(x, -1, keepdims=True)
        var = jnp.mean((x - mu) ** 2, -1, keepdims=True)
        return (x - mu) * lax.rsqrt(var + EPS) * g + b

    for l in range(NUM_LAYERS):
        q_in = ln(x, ln1_g[l], ln1_b[l])
        q = jnp.einsum('bld,de->ble', q_in, wqkv[l, :, 0:H]) + bqkv[l, 0:H]
        k = jnp.einsum('bld,de->ble', x, wqkv[l, :, H:2 * H]) + bqkv[l, H:2 * H]
        v = jnp.einsum('bld,de->ble', x, wqkv[l, :, 2 * H:]) + bqkv[l, 2 * H:]
        q = q.reshape(B, L, NUM_HEADS, dh)
        k = k.reshape(B, L, NUM_HEADS, dh)
        v = v.reshape(B, L, NUM_HEADS, dh)
        s = jnp.einsum('bqhd,bkhd->bhqk', q, k) * scale
        s = jnp.where(causal[None, None], s, NEG_INF)
        p = jax.nn.softmax(s, axis=-1)
        attn = jnp.einsum('bhqk,bkhd->bqhd', p, v).reshape(B, L, H)
        attn = jnp.einsum('bld,de->ble', attn, wo[l]) + bo[l]
        x = q_in + attn
        y = ln(x, ln2_g[l], ln2_b[l])
        h1 = jax.nn.relu(jnp.einsum('bld,de->ble', y, w1[l]) + b1[l])
        h2 = jnp.einsum('bld,de->ble', h1, w2[l]) + b2[l]
        x = (h2 + y) * m
    return ln(x, lnf_g, lnf_b)


if __name__ == "__main__":
    B, L, H = 2, 8, 32
    NUM_ITEMS = 100

    key = jax.random.PRNGKey(0)
    k_seq, k_data, k_mu, k_lv = jax.random.split(key, 4)
    seqs = jax.random.normal(k_seq, (B, L, H), jnp.float32)
    # item ids; zeros act as padding (first two positions padded)
    seqs_data = jax.random.randint(k_data, (B, L), 1, NUM_ITEMS)
    seqs_data = seqs_data.at[:, :2].set(0)

    params_mu = init_selfattention_params(k_mu, H, NUM_LAYERS)
    params_lv = init_selfattention_params(k_lv, H, NUM_LAYERS)

    mu, logvar = encoder_forward(seqs, seqs_data, params_mu, params_lv)
    mu, logvar = jax.block_until_ready((mu, logvar))

    ref_mu = selfattention_reference(seqs, seqs_data, params_mu)
    ref_lv = selfattention_reference(seqs, seqs_data, params_lv)

    assert mu.shape == (B, L, H) and logvar.shape == (B, L, H)
    # Exact (non-approx) softmax division -> only f32 rounding differences remain.
    err = max(float(jnp.max(jnp.abs(mu - ref_mu))),
              float(jnp.max(jnp.abs(logvar - ref_lv))))
    assert err < 2e-4, f"mismatch vs pure-JAX reference: {err}"

    print("KERNEL_OK")
</pallas_src>

<mosaic_0001>
module attributes {stable_mosaic.version = 11 : i64} {
  func.func @encoder_kernel_whole(%arg0: memref<2x8x32xf32, #tpu.memory_space<vmem>>, %arg1: memref<16x1xi32, #tpu.memory_space<vmem>>, %arg2: memref<2x2x1x32xf32, #tpu.memory_space<vmem>>, %arg3: memref<2x2x1x32xf32, #tpu.memory_space<vmem>>, %arg4: memref<2x2x32x32xf32, #tpu.memory_space<vmem>>, %arg5: memref<2x2x1x32xf32, #tpu.memory_space<vmem>>, %arg6: memref<2x2x32x64xf32, #tpu.memory_space<vmem>>, %arg7: memref<2x2x1x64xf32, #tpu.memory_space<vmem>>, %arg8: memref<2x2x32x32xf32, #tpu.memory_space<vmem>>, %arg9: memref<2x2x1x32xf32, #tpu.memory_space<vmem>>, %arg10: memref<2x2x1x32xf32, #tpu.memory_space<vmem>>, %arg11: memref<2x2x1x32xf32, #tpu.memory_space<vmem>>, %arg12: memref<2x2x32x32xf32, #tpu.memory_space<vmem>>, %arg13: memref<2x2x1x32xf32, #tpu.memory_space<vmem>>, %arg14: memref<2x2x32x32xf32, #tpu.memory_space<vmem>>, %arg15: memref<2x2x1x32xf32, #tpu.memory_space<vmem>>, %arg16: memref<2x1x32xf32, #tpu.memory_space<vmem>>, %arg17: memref<2x1x32xf32, #tpu.memory_space<vmem>>, %arg18: memref<2x8x32xf32, #tpu.memory_space<vmem>>, %arg19: memref<2x8x32xf32, #tpu.memory_space<vmem>>) attributes {dimension_semantics = [], scalar_prefetch = 0 : i64, scratch_operands = 0 : i64, tpu.core_type = #tpu.core_type<tc>} {
    %c0 = arith.constant 0 : index
    %c0_0 = arith.constant 0 : index
    %c0_1 = arith.constant 0 : index
    %0 = vector.load %arg0[%c0, %c0_0, %c0_1] : memref<2x8x32xf32, #tpu.memory_space<vmem>>, vector<2x8x32xf32>
    %1 = vector.shape_cast %0 : vector<2x8x32xf32> to vector<16x32xf32>
    %c0_2 = arith.constant 0 : index
    %c0_3 = arith.constant 0 : index
    %2 = vector.load %arg1[%c0_2, %c0_3] : memref<16x1xi32, #tpu.memory_space<vmem>>, vector<16x1xi32>
    %c0_i32 = arith.constant 0 : i32
    %3 = vector.broadcast %c0_i32 : i32 to vector<16x1xi32>
    %4 = arith.cmpi ne, %2, %3 : vector<16x1xi32>
    %5 = arith.extui %4 : vector<16x1xi1> to vector<16x1xi32>
    %6 = arith.sitofp %5 : vector<16x1xi32> to vector<16x1xf32>
    %7 = vector.broadcast %6 : vector<16x1xf32> to vector<16x32xf32>
    %8 = arith.mulf %1, %7 : vector<16x32xf32>
    %9 = tpu.iota {dimensions = array<i32: 0>} : vector<8x8xi32>
    %10 = tpu.iota {dimensions = array<i32: 1>} : vector<8x8xi32>
    %11 = arith.cmpi sle, %10, %9 : vector<8x8xi32>
    %cst = arith.constant 0.000000e+00 : f32
    %cst_4 = arith.constant -1.000000e+30 : f32
    %12 = vector.broadcast %cst : f32 to vector<8x8xf32>
    %13 = vector.broadcast %cst_4 : f32 to vector<8x8xf32>
    %14 = arith.select %11, %12, %13 : vector<8x8xi1>, vector<8x8xf32>
    %15 = vector.shape_cast %14 : vector<8x8xf32> to vector<1x8x8xf32>
    %c0_5 = arith.constant 0 : index
    %c0_6 = arith.constant 0 : index
    %c0_7 = arith.constant 0 : index
    %c0_8 = arith.constant 0 : index
    %16 = vector.load %arg2[%c0_5, %c0_6, %c0_7, %c0_8] : memref<2x2x1x32xf32, #tpu.memory_space<vmem>>, vector<1x2x1x32xf32>
    %17 = vector.shape_cast %16 : vector<1x2x1x32xf32> to vector<2x1x32xf32>
    %c0_9 = arith.constant 0 : index
    %c0_10 = arith.constant 0 : index
    %c0_11 = arith.constant 0 : index
    %c0_12 = arith.constant 0 : index
    %18 = vector.load %arg3[%c0_9, %c0_10, %c0_11, %c0_12] : memref<2x2x1x32xf32, #tpu.memory_space<vmem>>, vector<1x2x1x32xf32>
    %19 = vector.shape_cast %18 : vector<1x2x1x32xf32> to vector<2x1x32xf32>
    %c0_13 = arith.constant 0 : index
    %c0_14 = arith.constant 0 : index
    %c0_15 = arith.constant 0 : index
    %c0_16 = arith.constant 0 : index
    %20 = vector.load %arg4[%c0_13, %c0_14, %c0_15, %c0_16] : memref<2x2x32x32xf32, #tpu.memory_space<vmem>>, vector<1x2x32x32xf32>
    %21 = vector.shape_cast %20 : vector<1x2x32x32xf32> to vector<2x32x32xf32>
    %c0_17 = arith.constant 0 : index
    %c0_18 = arith.constant 0 : index
    %c0_19 = arith.constant 0 : index
    %c0_20 = arith.constant 0 : index
    %22 = vector.load %arg5[%c0_17, %c0_18, %c0_19, %c0_20] : memref<2x2x1x32xf32, #tpu.memory_space<vmem>>, vector<1x2x1x32xf32>
    %23 = vector.shape_cast %22 : vector<1x2x1x32xf32> to vector<2x1x32xf32>
    %c0_21 = arith.constant 0 : index
    %c0_22 = arith.constant 0 : index
    %c0_23 = arith.constant 0 : index
    %c0_24 = arith.constant 0 : index
    %24 = vector.load %arg6[%c0_21, %c0_22, %c0_23, %c0_24] : memref<2x2x32x64xf32, #tpu.memory_space<vmem>>, vector<1x2x32x64xf32>
    %25 = vector.shape_cast %24 : vector<1x2x32x64xf32> to vector<2x32x64xf32>
    %c0_25 = arith.constant 0 : index
    %c0_26 = arith.constant 0 : index
    %c0_27 = arith.constant 0 : index
    %c0_28 = arith.constant 0 : index
    %26 = vector.load %arg7[%c0_25, %c0_26, %c0_27, %c0_28] : memref<2x2x1x64xf32, #tpu.memory_space<vmem>>, vector<1x2x1x64xf32>
    %27 = vector.shape_cast %26 : vector<1x2x1x64xf32> to vector<2x1x64xf32>
    %c0_29 = arith.constant 0 : index
    %c0_30 = arith.constant 0 : index
    %c0_31 = arith.constant 0 : index
    %c0_32 = arith.constant 0 : index
    %28 = vector.load %arg8[%c0_29, %c0_30, %c0_31, %c0_32] : memref<2x2x32x32xf32, #tpu.memory_space<vmem>>, vector<1x2x32x32xf32>
    %29 = vector.shape_cast %28 : vector<1x2x32x32xf32> to vector<2x32x32xf32>
    %c0_33 = arith.constant 0 : index
    %c0_34 = arith.constant 0 : index
    %c0_35 = arith.constant 0 : index
    %c0_36 = arith.constant 0 : index
    %30 = vector.load %arg9[%c0_33, %c0_34, %c0_35, %c0_36] : memref<2x2x1x32xf32, #tpu.memory_space<vmem>>, vector<1x2x1x32xf32>
    %31 = vector.shape_cast %30 : vector<1x2x1x32xf32> to vector<2x1x32xf32>
    %c0_37 = arith.constant 0 : index
    %c0_38 = arith.constant 0 : index
    %c0_39 = arith.constant 0 : index
    %c0_40 = arith.constant 0 : index
    %32 = vector.load %arg10[%c0_37, %c0_38, %c0_39, %c0_40] : memref<2x2x1x32xf32, #tpu.memory_space<vmem>>, vector<1x2x1x32xf32>
    %33 = vector.shape_cast %32 : vector<1x2x1x32xf32> to vector<2x1x32xf32>
    %c0_41 = arith.constant 0 : index
    %c0_42 = arith.constant 0 : index
    %c0_43 = arith.constant 0 : index
    %c0_44 = arith.constant 0 : index
    %34 = vector.load %arg11[%c0_41, %c0_42, %c0_43, %c0_44] : memref<2x2x1x32xf32, #tpu.memory_space<vmem>>, vector<1x2x1x32xf32>
    %35 = vector.shape_cast %34 : vector<1x2x1x32xf32> to vector<2x1x32xf32>
    %c0_45 = arith.constant 0 : index
    %c0_46 = arith.constant 0 : index
    %c0_47 = arith.constant 0 : index
    %c0_48 = arith.constant 0 : index
    %36 = vector.load %arg12[%c0_45, %c0_46, %c0_47, %c0_48] : memref<2x2x32x32xf32, #tpu.memory_space<vmem>>, vector<1x2x32x32xf32>
    %37 = vector.shape_cast %36 : vector<1x2x32x32xf32> to vector<2x32x32xf32>
    %c0_49 = arith.constant 0 : index
    %c0_50 = arith.constant 0 : index
    %c0_51 = arith.constant 0 : index
    %c0_52 = arith.constant 0 : index
    %38 = vector.load %arg13[%c0_49, %c0_50, %c0_51, %c0_52] : memref<2x2x1x32xf32, #tpu.memory_space<vmem>>, vector<1x2x1x32xf32>
    %39 = vector.shape_cast %38 : vector<1x2x1x32xf32> to vector<2x1x32xf32>
    %c0_53 = arith.constant 0 : index
    %c0_54 = arith.constant 0 : index
    %c0_55 = arith.constant 0 : index
    %c0_56 = arith.constant 0 : index
    %40 = vector.load %arg14[%c0_53, %c0_54, %c0_55, %c0_56] : memref<2x2x32x32xf32, #tpu.memory_space<vmem>>, vector<1x2x32x32xf32>
    %41 = vector.shape_cast %40 : vector<1x2x32x32xf32> to vector<2x32x32xf32>
    %c0_57 = arith.constant 0 : index
    %c0_58 = arith.constant 0 : index
    %c0_59 = arith.constant 0 : index
    %c0_60 = arith.constant 0 : index
    %42 = vector.load %arg15[%c0_57, %c0_58, %c0_59, %c0_60] : memref<2x2x1x32xf32, #tpu.memory_space<vmem>>, vector<1x2x1x32xf32>
    %43 = vector.shape_cast %42 : vector<1x2x1x32xf32> to vector<2x1x32xf32>
    %c0_61 = arith.constant 0 : index
    %c0_62 = arith.constant 0 : index
    %c0_63 = arith.constant 0 : index
    %44 = vector.load %arg16[%c0_61, %c0_62, %c0_63] : memref<2x1x32xf32, #tpu.memory_space<vmem>>, vector<1x1x32xf32>
    %45 = vector.shape_cast %44 : vector<1x1x32xf32> to vector<1x32xf32>
    %c0_64 = arith.constant 0 : index
    %c0_65 = arith.constant 0 : index
    %c0_66 = arith.constant 0 : index
    %46 = vector.load %arg17[%c0_64, %c0_65, %c0_66] : memref<2x1x32xf32, #tpu.memory_space<vmem>>, vector<1x1x32xf32>
    %47 = vector.shape_cast %46 : vector<1x1x32xf32> to vector<1x32xf32>
    %48 = vector.extract_strided_slice %17 {offsets = [0, 0, 0], sizes = [1, 1, 32], strides = [1, 1, 1]} : vector<2x1x32xf32> to vector<1x1x32xf32>
    %49 = vector.shape_cast %48 : vector<1x1x32xf32> to vector<1x32xf32>
    %50 = vector.extract_strided_slice %19 {offsets = [0, 0, 0], sizes = [1, 1, 32], strides = [1, 1, 1]} : vector<2x1x32xf32> to vector<1x1x32xf32>
    %51 = vector.shape_cast %50 : vector<1x1x32xf32> to vector<1x32xf32>
    %cst_67 = arith.constant dense<0.000000e+00> : vector<16xf32>
    %52 = vector.multi_reduction <add>, %8, %cst_67 [1] : vector<16x32xf32> to vector<16xf32>
    %53 = vector.shape_cast %52 : vector<16xf32> to vector<16x1xf32>
    %cst_68 = arith.constant 3.200000e+01 : f32
    %54 = vector.broadcast %cst_68 : f32 to vector<16x1xf32>
    %55 = arith.divf %53, %54 : vector<16x1xf32>
    %56 = vector.broadcast %55 : vector<16x1xf32> to vector<16x32xf32>
    %57 = arith.subf %8, %56 : vector<16x32xf32>
    %58 = arith.mulf %57, %57 : vector<16x32xf32>
    %cst_69 = arith.constant dense<0.000000e+00> : vector<16xf32>
    %59 = vector.multi_reduction <add>, %58, %cst_69 [1] : vector<16x32xf32> to vector<16xf32>
    %60 = vector.shape_cast %59 : vector<16xf32> to vector<16x1xf32>
    %cst_70 = arith.constant 3.200000e+01 : f32
    %61 = vector.broadcast %cst_70 : f32 to vector<16x1xf32>
    %62 = arith.divf %60, %61 : vector<16x1xf32>
    %cst_71 = arith.constant 9.99999993E-9 : f32
    %63 = vector.broadcast %cst_71 : f32 to vector<16x1xf32>
    %64 = arith.addf %62, %63 : vector<16x1xf32>
    %65 = math.rsqrt %64 : vector<16x1xf32>
    %66 = vector.broadcast %65 : vector<16x1xf32> to vector<16x32xf32>
    %67 = arith.mulf %57, %66 : vector<16x32xf32>
    %68 = vector.broadcast %49 : vector<1x32xf32> to vector<16x32xf32>
    %69 = arith.mulf %67, %68 : vector<16x32xf32>
    %70 = vector.broadcast %51 : vector<1x32xf32> to vector<16x32xf32>
    %71 = arith.addf %69, %70 : vector<16x32xf32>
    %72 = vector.extract_strided_slice %21 {offsets = [0, 0, 0], sizes = [1, 32, 32], strides = [1, 1, 1]} : vector<2x32x32xf32> to vector<1x32x32xf32>
    %73 = vector.shape_cast %72 : vector<1x32x32xf32> to vector<32x32xf32>
    %cst_72 = arith.constant dense<0.000000e+00> : vector<16x32xf32>
    %74 = tpu.matmul %71, %73, %cst_72 {dimension_numbers = #tpu.dot_dimension_numbers<[1], [0], [0], [1], [0, 0, 1, 1], [], []>} : vector<16x32xf32>, vector<32x32xf32>, vector<16x32xf32> -> vector<16x32xf32>
    %75 = vector.extract_strided_slice %23 {offsets = [0, 0, 0], sizes = [1, 1, 32], strides = [1, 1, 1]} : vector<2x1x32xf32> to vector<1x1x32xf32>
    %76 = vector.shape_cast %75 : vector<1x1x32xf32> to vector<1x32xf32>
    %77 = vector.broadcast %76 : vector<1x32xf32> to vector<16x32xf32>
    %78 = arith.addf %74, %77 : vector<16x32xf32>
    %79 = vector.extract_strided_slice %25 {offsets = [0, 0, 0], sizes = [1, 32, 64], strides = [1, 1, 1]} : vector<2x32x64xf32> to vector<1x32x64xf32>
    %80 = vector.shape_cast %79 : vector<1x32x64xf32> to vector<32x64xf32>
    %cst_73 = arith.constant dense<0.000000e+00> : vector<16x64xf32>
    %81 = tpu.matmul %8, %80, %cst_73 {dimension_numbers = #tpu.dot_dimension_numbers<[1], [0], [0], [1], [0, 0, 1, 1], [], []>} : vector<16x32xf32>, vector<32x64xf32>, vector<16x64xf32> -> vector<16x64xf32>
    %82 = vector.extract_strided_slice %27 {offsets = [0, 0, 0], sizes = [1, 1, 64], strides = [1, 1, 1]} : vector<2x1x64xf32> to vector<1x1x64xf32>
    %83 = vector.shape_cast %82 : vector<1x1x64xf32> to vector<1x64xf32>
    %84 = vector.broadcast %83 : vector<1x64xf32> to vector<16x64xf32>
    %85 = arith.addf %81, %84 : vector<16x64xf32>
    %86 = vector.extract_strided_slice %78 {offsets = [0, 0], sizes = [16, 16], strides = [1, 1]} : vector<16x32xf32> to vector<16x16xf32>
    %87 = vector.shape_cast %86 : vector<16x16xf32> to vector<2x8x16xf32>
    %88 = vector.extract_strided_slice %85 {offsets = [0, 0], sizes = [16, 16], strides = [1, 1]} : vector<16x64xf32> to vector<16x16xf32>
    %89 = vector.shape_cast %88 : vector<16x16xf32> to vector<2x8x16xf32>
    %90 = vector.extract_strided_slice %85 {offsets = [0, 32], sizes = [16, 16], strides = [1, 1]} : vector<16x64xf32> to vector<16x16xf32>
    %91 = vector.shape_cast %90 : vector<16x16xf32> to vector<2x8x16xf32>
    "tpu.trace_start"() <{level = 10 : i32, message = "bqd,bkd->bqk"}> : () -> ()
    %cst_74 = arith.constant dense<0.000000e+00> : vector<2x8x8xf32>
    %92 = tpu.matmul %87, %89, %cst_74 {dimension_numbers = #tpu.dot_dimension_numbers<[2], [2], [1], [1], [0, 0, 0, 1, 1, 1], [0], [0]>} : vector<2x8x16xf32>, vector<2x8x16xf32>, vector<2x8x8xf32> -> vector<2x8x8xf32>
    "tpu.trace_stop"() : () -> ()
    %93 = vector.broadcast %15 : vector<1x8x8xf32> to vector<2x8x8xf32>
    %94 = arith.addf %92, %93 : vector<2x8x8xf32>
    %cst_75 = arith.constant dense<0xFF800000> : vector<2x8xf32>
    %95 = vector.multi_reduction <maximumf>, %94, %cst_75 [2] : vector<2x8x8xf32> to vector<2x8xf32>
    %96 = vector.shape_cast %95 : vector<2x8xf32> to vector<2x8x1xf32>
    %97 = vector.broadcast %96 : vector<2x8x1xf32> to vector<2x8x8xf32>
    %98 = arith.subf %94, %97 : vector<2x8x8xf32>
    %99 = math.exp %98 : vector<2x8x8xf32>
    %cst_76 = arith.constant dense<0.000000e+00> : vector<2x8xf32>
    %100 = vector.multi_reduction <add>, %99, %cst_76 [2] : vector<2x8x8xf32> to vector<2x8xf32>
    %101 = vector.shape_cast %100 : vector<2x8xf32> to vector<2x8x1xf32>
    %102 = vector.broadcast %101 : vector<2x8x1xf32> to vector<2x8x8xf32>
    %103 = arith.divf %99, %102 : vector<2x8x8xf32>
    "tpu.trace_start"() <{level = 10 : i32, message = "bqk,bkd->bqd"}> : () -> ()
    %cst_77 = arith.constant dense<0.000000e+00> : vector<2x8x16xf32>
    %104 = tpu.matmul %103, %91, %cst_77 {dimension_numbers = #tpu.dot_dimension_numbers<[2], [1], [1], [2], [0, 0, 0, 1, 1, 2], [0], [0]>} : vector<2x8x8xf32>, vector<2x8x16xf32>, vector<2x8x16xf32> -> vector<2x8x16xf32>
    "tpu.trace_stop"() : () -> ()
    %105 = vector.shape_cast %104 : vector<2x8x16xf32> to vector<16x16xf32>
    %106 = vector.extract_strided_slice %78 {offsets = [0, 16], sizes = [16, 16], strides = [1, 1]} : vector<16x32xf32> to vector<16x16xf32>
    %107 = vector.shape_cast %106 : vector<16x16xf32> to vector<2x8x16xf32>
    %108 = vector.extract_strided_slice %85 {offsets = [0, 16], sizes = [16, 16], strides = [1, 1]} : vector<16x64xf32> to vector<16x16xf32>
    %109 = vector.shape_cast %108 : vector<16x16xf32> to vector<2x8x16xf32>
    %110 = vector.extract_strided_slice %85 {offsets = [0, 48], sizes = [16, 16], strides = [1, 1]} : vector<16x64xf32> to vector<16x16xf32>
    %111 = vector.shape_cast %110 : vector<16x16xf32> to vector<2x8x16xf32>
    "tpu.trace_start"() <{level = 10 : i32, message = "bqd,bkd->bqk"}> : () -> ()
    %cst_78 = arith.constant dense<0.000000e+00> : vector<2x8x8xf32>
    %112 = tpu.matmul %107, %109, %cst_78 {dimension_numbers = #tpu.dot_dimension_numbers<[2], [2], [1], [1], [0, 0, 0, 1, 1, 1], [0], [0]>} : vector<2x8x16xf32>, vector<2x8x16xf32>, vector<2x8x8xf32> -> vector<2x8x8xf32>
    "tpu.trace_stop"() : () -> ()
    %113 = vector.broadcast %15 : vector<1x8x8xf32> to vector<2x8x8xf32>
    %114 = arith.addf %112, %113 : vector<2x8x8xf32>
    %cst_79 = arith.constant dense<0xFF800000> : vector<2x8xf32>
    %115 = vector.multi_reduction <maximumf>, %114, %cst_79 [2] : vector<2x8x8xf32> to vector<2x8xf32>
    %116 = vector.shape_cast %115 : vector<2x8xf32> to vector<2x8x1xf32>
    %117 = vector.broadcast %116 : vector<2x8x1xf32> to vector<2x8x8xf32>
    %118 = arith.subf %114, %117 : vector<2x8x8xf32>
    %119 = math.exp %118 : vector<2x8x8xf32>
    %cst_80 = arith.constant dense<0.000000e+00> : vector<2x8xf32>
    %120 = vector.multi_reduction <add>, %119, %cst_80 [2] : vector<2x8x8xf32> to vector<2x8xf32>
    %121 = vector.shape_cast %120 : vector<2x8xf32> to vector<2x8x1xf32>
    %122 = vector.broadcast %121 : vector<2x8x1xf32> to vector<2x8x8xf32>
    %123 = arith.divf %119, %122 : vector<2x8x8xf32>
    "tpu.trace_start"() <{level = 10 : i32, message = "bqk,bkd->bqd"}> : () -> ()
    %cst_81 = arith.constant dense<0.000000e+00> : vector<2x8x16xf32>
    %124 = tpu.matmul %123, %111, %cst_81 {dimension_numbers = #tpu.dot_dimension_numbers<[2], [1], [1], [2], [0, 0, 0, 1, 1, 2], [0], [0]>} : vector<2x8x8xf32>, vector<2x8x16xf32>, vector<2x8x16xf32> -> vector<2x8x16xf32>
    "tpu.trace_stop"() : () -> ()
    %125 = vector.shape_cast %124 : vector<2x8x16xf32> to vector<16x16xf32>
    %126 = tpu.concatenate %105, %125 in 1 : vector<16x16xf32>, vector<16x16xf32> -> vector<16x32xf32>
    %127 = vector.extract_strided_slice %29 {offsets = [0, 0, 0], sizes = [1, 32, 32], strides = [1, 1, 1]} : vector<2x32x32xf32> to vector<1x32x32xf32>
    %128 = vector.shape_cast %127 : vector<1x32x32xf32> to vector<32x32xf32>
    %cst_82 = arith.constant dense<0.000000e+00> : vector<16x32xf32>
    %129 = tpu.matmul %126, %128, %cst_82 {dimension_numbers = #tpu.dot_dimension_numbers<[1], [0], [0], [1], [0, 0, 1, 1], [], []>} : vector<16x32xf32>, vector<32x32xf32>, vector<16x32xf32> -> vector<16x32xf32>
    %130 = arith.addf %71, %129 : vector<16x32xf32>
    %131 = vector.extract_strided_slice %31 {offsets = [0, 0, 0], sizes = [1, 1, 32], strides = [1, 1, 1]} : vector<2x1x32xf32> to vector<1x1x32xf32>
    %132 = vector.shape_cast %131 : vector<1x1x32xf32> to vector<1x32xf32>
    %133 = vector.broadcast %132 : vector<1x32xf32> to vector<16x32xf32>
    %134 = arith.addf %130, %133 : vector<16x32xf32>
    %135 = vector.extract_strided_slice %33 {offsets = [0, 0, 0], sizes = [1, 1, 32], strides = [1, 1, 1]} : vector<2x1x32xf32> to vector<1x1x32xf32>
    %136 = vector.shape_cast %135 : vector<1x1x32xf32> to vector<1x32xf32>
    %137 = vector.extract_strided_slice %35 {offsets = [0, 0, 0], sizes = [1, 1, 32], strides = [1, 1, 1]} : vector<2x1x32xf32> to vector<1x1x32xf32>
    %138 = vector.shape_cast %137 : vector<1x1x32xf32> to vector<1x32xf32>
    %cst_83 = arith.constant dense<0.000000e+00> : vector<16xf32>
    %139 = vector.multi_reduction <add>, %134, %cst_83 [1] : vector<16x32xf32> to vector<16xf32>
    %140 = vector.shape_cast %139 : vector<16xf32> to vector<16x1xf32>
    %cst_84 = arith.constant 3.200000e+01 : f32
    %141 = vector.broadcast %cst_84 : f32 to vector<16x1xf32>
    %142 = arith.divf %140, %141 : vector<16x1xf32>
    %143 = vector.broadcast %142 : vector<16x1xf32> to vector<16x32xf32>
    %144 = arith.subf %134, %143 : vector<16x32xf32>
    %145 = arith.mulf %144, %144 : vector<16x32xf32>
    %cst_85 = arith.constant dense<0.000000e+00> : vector<16xf32>
    %146 = vector.multi_reduction <add>, %145, %cst_85 [1] : vector<16x32xf32> to vector<16xf32>
    %147 = vector.shape_cast %146 : vector<16xf32> to vector<16x1xf32>
    %cst_86 = arith.constant 3.200000e+01 : f32
    %148 = vector.broadcast %cst_86 : f32 to vector<16x1xf32>
    %149 = arith.divf %147, %148 : vector<16x1xf32>
    %cst_87 = arith.constant 9.99999993E-9 : f32
    %150 = vector.broadcast %cst_87 : f32 to vector<16x1xf32>
    %151 = arith.addf %149, %150 : vector<16x1xf32>
    %152 = math.rsqrt %151 : vector<16x1xf32>
    %153 = vector.broadcast %152 : vector<16x1xf32> to vector<16x32xf32>
    %154 = arith.mulf %144, %153 : vector<16x32xf32>
    %155 = vector.broadcast %136 : vector<1x32xf32> to vector<16x32xf32>
    %156 = arith.mulf %154, %155 : vector<16x32xf32>
    %157 = vector.broadcast %138 : vector<1x32xf32> to vector<16x32xf32>
    %158 = arith.addf %156, %157 : vector<16x32xf32>
    %159 = vector.extract_strided_slice %37 {offsets = [0, 0, 0], sizes = [1, 32, 32], strides = [1, 1, 1]} : vector<2x32x32xf32> to vector<1x32x32xf32>
    %160 = vector.shape_cast %159 : vector<1x32x32xf32> to vector<32x32xf32>
    %cst_88 = arith.constant dense<0.000000e+00> : vector<16x32xf32>
    %161 = tpu.matmul %158, %160, %cst_88 {dimension_numbers = #tpu.dot_dimension_numbers<[1], [0], [0], [1], [0, 0, 1, 1], [], []>} : vector<16x32xf32>, vector<32x32xf32>, vector<16x32xf32> -> vector<16x32xf32>
    %162 = vector.extract_strided_slice %39 {offsets = [0, 0, 0], sizes = [1, 1, 32], strides = [1, 1, 1]} : vector<2x1x32xf32> to vector<1x1x32xf32>
    %163 = vector.shape_cast %162 : vector<1x1x32xf32> to vector<1x32xf32>
    %164 = vector.broadcast %163 : vector<1x32xf32> to vector<16x32xf32>
    %165 = arith.addf %161, %164 : vector<16x32xf32>
    %cst_89 = arith.constant 0.000000e+00 : f32
    %166 = vector.broadcast %cst_89 : f32 to vector<16x32xf32>
    %167 = arith.maximumf %165, %166 : vector<16x32xf32>
    %168 = vector.extract_strided_slice %41 {offsets = [0, 0, 0], sizes = [1, 32, 32], strides = [1, 1, 1]} : vector<2x32x32xf32> to vector<1x32x32xf32>
    %169 = vector.shape_cast %168 : vector<1x32x32xf32> to vector<32x32xf32>
    %cst_90 = arith.constant dense<0.000000e+00> : vector<16x32xf32>
    %170 = tpu.matmul %167, %169, %cst_90 {dimension_numbers = #tpu.dot_dimension_numbers<[1], [0], [0], [1], [0, 0, 1, 1], [], []>} : vector<16x32xf32>, vector<32x32xf32>, vector<16x32xf32> -> vector<16x32xf32>
    %171 = vector.extract_strided_slice %43 {offsets = [0, 0, 0], sizes = [1, 1, 32], strides = [1, 1, 1]} : vector<2x1x32xf32> to vector<1x1x32xf32>
    %172 = vector.shape_cast %171 : vector<1x1x32xf32> to vector<1x32xf32>
    %173 = vector.broadcast %172 : vector<1x32xf32> to vector<16x32xf32>
    %174 = arith.addf %170, %173 : vector<16x32xf32>
    %175 = arith.addf %174, %158 : vector<16x32xf32>
    %176 = vector.broadcast %6 : vector<16x1xf32> to vector<16x32xf32>
    %177 = arith.mulf %175, %176 : vector<16x32xf32>
    %178 = vector.extract_strided_slice %17 {offsets = [1, 0, 0], sizes = [1, 1, 32], strides = [1, 1, 1]} : vector<2x1x32xf32> to vector<1x1x32xf32>
    %179 = vector.shape_cast %178 : vector<1x1x32xf32> to vector<1x32xf32>
    %180 = vector.extract_strided_slice %19 {offsets = [1, 0, 0], sizes = [1, 1, 32], strides = [1, 1, 1]} : vector<2x1x32xf32> to vector<1x1x32xf32>
    %181 = vector.shape_cast %180 : vector<1x1x32xf32> to vector<1x32xf32>
    %cst_91 = arith.constant dense<0.000000e+00> : vector<16xf32>
    %182 = vector.multi_reduction <add>, %177, %cst_91 [1] : vector<16x32xf32> to vector<16xf32>
    %183 = vector.shape_cast %182 : vector<16xf32> to vector<16x1xf32>
    %cst_92 = arith.constant 3.200000e+01 : f32
    %184 = vector.broadcast %cst_92 : f32 to vector<16x1xf32>
    %185 = arith.divf %183, %184 : vector<16x1xf32>
    %186 = vector.broadcast %185 : vector<16x1xf32> to vector<16x32xf32>
    %187 = arith.subf %177, %186 : vector<16x32xf32>
    %188 = arith.mulf %187, %187 : vector<16x32xf32>
    %cst_93 = arith.constant dense<0.000000e+00> : vector<16xf32>
    %189 = vector.multi_reduction <add>, %188, %cst_93 [1] : vector<16x32xf32> to vector<16xf32>
    %190 = vector.shape_cast %189 : vector<16xf32> to vector<16x1xf32>
    %cst_94 = arith.constant 3.200000e+01 : f32
    %191 = vector.broadcast %cst_94 : f32 to vector<16x1xf32>
    %192 = arith.divf %190, %191 : vector<16x1xf32>
    %cst_95 = arith.constant 9.99999993E-9 : f32
    %193 = vector.broadcast %cst_95 : f32 to vector<16x1xf32>
    %194 = arith.addf %192, %193 : vector<16x1xf32>
    %195 = math.rsqrt %194 : vector<16x1xf32>
    %196 = vector.broadcast %195 : vector<16x1xf32> to vector<16x32xf32>
    %197 = arith.mulf %187, %196 : vector<16x32xf32>
    %198 = vector.broadcast %179 : vector<1x32xf32> to vector<16x32xf32>
    %199 = arith.mulf %197, %198 : vector<16x32xf32>
    %200 = vector.broadcast %181 : vector<1x32xf32> to vector<16x32xf32>
    %201 = arith.addf %199, %200 : vector<16x32xf32>
    %202 = vector.extract_strided_slice %21 {offsets = [1, 0, 0], sizes = [1, 32, 32], strides = [1, 1, 1]} : vector<2x32x32xf32> to vector<1x32x32xf32>
    %203 = vector.shape_cast %202 : vector<1x32x32xf32> to vector<32x32xf32>
    %cst_96 = arith.constant dense<0.000000e+00> : vector<16x32xf32>
    %204 = tpu.matmul %201, %203, %cst_96 {dimension_numbers = #tpu.dot_dimension_numbers<[1], [0], [0], [1], [0, 0, 1, 1], [], []>} : vector<16x32xf32>, vector<32x32xf32>, vector<16x32xf32> -> vector<16x32xf32>
    %205 = vector.extract_strided_slice %23 {offsets = [1, 0, 0], sizes = [1, 1, 32], strides = [1, 1, 1]} : vector<2x1x32xf32> to vector<1x1x32xf32>
    %206 = vector.shape_cast %205 : vector<1x1x32xf32> to vector<1x32xf32>
    %207 = vector.broadcast %206 : vector<1x32xf32> to vector<16x32xf32>
    %208 = arith.addf %204, %207 : vector<16x32xf32>
    %209 = vector.extract_strided_slice %25 {offsets = [1, 0, 0], sizes = [1, 32, 64], strides = [1, 1, 1]} : vector<2x32x64xf32> to vector<1x32x64xf32>
    %210 = vector.shape_cast %209 : vector<1x32x64xf32> to vector<32x64xf32>
    %cst_97 = arith.constant dense<0.000000e+00> : vector<16x64xf32>
    %211 = tpu.matmul %177, %210, %cst_97 {dimension_numbers = #tpu.dot_dimension_numbers<[1], [0], [0], [1], [0, 0, 1, 1], [], []>} : vector<16x32xf32>, vector<32x64xf32>, vector<16x64xf32> -> vector<16x64xf32>
    %212 = vector.extract_strided_slice %27 {offsets = [1, 0, 0], sizes = [1, 1, 64], strides = [1, 1, 1]} : vector<2x1x64xf32> to vector<1x1x64xf32>
    %213 = vector.shape_cast %212 : vector<1x1x64xf32> to vector<1x64xf32>
    %214 = vector.broadcast %213 : vector<1x64xf32> to vector<16x64xf32>
    %215 = arith.addf %211, %214 : vector<16x64xf32>
    %216 = vector.extract_strided_slice %208 {offsets = [0, 0], sizes = [16, 16], strides = [1, 1]} : vector<16x32xf32> to vector<16x16xf32>
    %217 = vector.shape_cast %216 : vector<16x16xf32> to vector<2x8x16xf32>
    %218 = vector.extract_strided_slice %215 {offsets = [0, 0], sizes = [16, 16], strides = [1, 1]} : vector<16x64xf32> to vector<16x16xf32>
    %219 = vector.shape_cast %218 : vector<16x16xf32> to vector<2x8x16xf32>
    %220 = vector.extract_strided_slice %215 {offsets = [0, 32], sizes = [16, 16], strides = [1, 1]} : vector<16x64xf32> to vector<16x16xf32>
    %221 = vector.shape_cast %220 : vector<16x16xf32> to vector<2x8x16xf32>
    "tpu.trace_start"() <{level = 10 : i32, message = "bqd,bkd->bqk"}> : () -> ()
    %cst_98 = arith.constant dense<0.000000e+00> : vector<2x8x8xf32>
    %222 = tpu.matmul %217, %219, %cst_98 {dimension_numbers = #tpu.dot_dimension_numbers<[2], [2], [1], [1], [0, 0, 0, 1, 1, 1], [0], [0]>} : vector<2x8x16xf32>, vector<2x8x16xf32>, vector<2x8x8xf32> -> vector<2x8x8xf32>
    "tpu.trace_stop"() : () -> ()
    %223 = vector.broadcast %15 : vector<1x8x8xf32> to vector<2x8x8xf32>
    %224 = arith.addf %222, %223 : vector<2x8x8xf32>
    %cst_99 = arith.constant dense<0xFF800000> : vector<2x8xf32>
    %225 = vector.multi_reduction <maximumf>, %224, %cst_99 [2] : vector<2x8x8xf32> to vector<2x8xf32>
    %226 = vector.shape_cast %225 : vector<2x8xf32> to vector<2x8x1xf32>
    %227 = vector.broadcast %226 : vector<2x8x1xf32> to vector<2x8x8xf32>
    %228 = arith.subf %224, %227 : vector<2x8x8xf32>
    %229 = math.exp %228 : vector<2x8x8xf32>
    %cst_100 = arith.constant dense<0.000000e+00> : vector<2x8xf32>
    %230 = vector.multi_reduction <add>, %229, %cst_100 [2] : vector<2x8x8xf32> to vector<2x8xf32>
    %231 = vector.shape_cast %230 : vector<2x8xf32> to vector<2x8x1xf32>
    %232 = vector.broadcast %231 : vector<2x8x1xf32> to vector<2x8x8xf32>
    %233 = arith.divf %229, %232 : vector<2x8x8xf32>
    "tpu.trace_start"() <{level = 10 : i32, message = "bqk,bkd->bqd"}> : () -> ()
    %cst_101 = arith.constant dense<0.000000e+00> : vector<2x8x16xf32>
    %234 = tpu.matmul %233, %221, %cst_101 {dimension_numbers = #tpu.dot_dimension_numbers<[2], [1], [1], [2], [0, 0, 0, 1, 1, 2], [0], [0]>} : vector<2x8x8xf32>, vector<2x8x16xf32>, vector<2x8x16xf32> -> vector<2x8x16xf32>
    "tpu.trace_stop"() : () -> ()
    %235 = vector.shape_cast %234 : vector<2x8x16xf32> to vector<16x16xf32>
    %236 = vector.extract_strided_slice %208 {offsets = [0, 16], sizes = [16, 16], strides = [1, 1]} : vector<16x32xf32> to vector<16x16xf32>
    %237 = vector.shape_cast %236 : vector<16x16xf32> to vector<2x8x16xf32>
    %238 = vector.extract_strided_slice %215 {offsets = [0, 16], sizes = [16, 16], strides = [1, 1]} : vector<16x64xf32> to vector<16x16xf32>
    %239 = vector.shape_cast %238 : vector<16x16xf32> to vector<2x8x16xf32>
    %240 = vector.extract_strided_slice %215 {offsets = [0, 48], sizes = [16, 16], strides = [1, 1]} : vector<16x64xf32> to vector<16x16xf32>
    %241 = vector.shape_cast %240 : vector<16x16xf32> to vector<2x8x16xf32>
    "tpu.trace_start"() <{level = 10 : i32, message = "bqd,bkd->bqk"}> : () -> ()
    %cst_102 = arith.constant dense<0.000000e+00> : vector<2x8x8xf32>
    %242 = tpu.matmul %237, %239, %cst_102 {dimension_numbers = #tpu.dot_dimension_numbers<[2], [2], [1], [1], [0, 0, 0, 1, 1, 1], [0], [0]>} : vector<2x8x16xf32>, vector<2x8x16xf32>, vector<2x8x8xf32> -> vector<2x8x8xf32>
    "tpu.trace_stop"() : () -> ()
    %243 = vector.broadcast %15 : vector<1x8x8xf32> to vector<2x8x8xf32>
    %244 = arith.addf %242, %243 : vector<2x8x8xf32>
    %cst_103 = arith.constant dense<0xFF800000> : vector<2x8xf32>
    %245 = vector.multi_reduction <maximumf>, %244, %cst_103 [2] : vector<2x8x8xf32> to vector<2x8xf32>
    %246 = vector.shape_cast %245 : vector<2x8xf32> to vector<2x8x1xf32>
    %247 = vector.broadcast %246 : vector<2x8x1xf32> to vector<2x8x8xf32>
    %248 = arith.subf %244, %247 : vector<2x8x8xf32>
    %249 = math.exp %248 : vector<2x8x8xf32>
    %cst_104 = arith.constant dense<0.000000e+00> : vector<2x8xf32>
    %250 = vector.multi_reduction <add>, %249, %cst_104 [2] : vector<2x8x8xf32> to vector<2x8xf32>
    %251 = vector.shape_cast %250 : vector<2x8xf32> to vector<2x8x1xf32>
    %252 = vector.broadcast %251 : vector<2x8x1xf32> to vector<2x8x8xf32>
    %253 = arith.divf %249, %252 : vector<2x8x8xf32>
    "tpu.trace_start"() <{level = 10 : i32, message = "bqk,bkd->bqd"}> : () -> ()
    %cst_105 = arith.constant dense<0.000000e+00> : vector<2x8x16xf32>
    %254 = tpu.matmul %253, %241, %cst_105 {dimension_numbers = #tpu.dot_dimension_numbers<[2], [1], [1], [2], [0, 0, 0, 1, 1, 2], [0], [0]>} : vector<2x8x8xf32>, vector<2x8x16xf32>, vector<2x8x16xf32> -> vector<2x8x16xf32>
    "tpu.trace_stop"() : () -> ()
    %255 = vector.shape_cast %254 : vector<2x8x16xf32> to vector<16x16xf32>
    %256 = tpu.concatenate %235, %255 in 1 : vector<16x16xf32>, vector<16x16xf32> -> vector<16x32xf32>
    %257 = vector.extract_strided_slice %29 {offsets = [1, 0, 0], sizes = [1, 32, 32], strides = [1, 1, 1]} : vector<2x32x32xf32> to vector<1x32x32xf32>
    %258 = vector.shape_cast %257 : vector<1x32x32xf32> to vector<32x32xf32>
    %cst_106 = arith.constant dense<0.000000e+00> : vector<16x32xf32>
    %259 = tpu.matmul %256, %258, %cst_106 {dimension_numbers = #tpu.dot_dimension_numbers<[1], [0], [0], [1], [0, 0, 1, 1], [], []>} : vector<16x32xf32>, vector<32x32xf32>, vector<16x32xf32> -> vector<16x32xf32>
    %260 = arith.addf %201, %259 : vector<16x32xf32>
    %261 = vector.extract_strided_slice %31 {offsets = [1, 0, 0], sizes = [1, 1, 32], strides = [1, 1, 1]} : vector<2x1x32xf32> to vector<1x1x32xf32>
    %262 = vector.shape_cast %261 : vector<1x1x32xf32> to vector<1x32xf32>
    %263 = vector.broadcast %262 : vector<1x32xf32> to vector<16x32xf32>
    %264 = arith.addf %260, %263 : vector<16x32xf32>
    %265 = vector.extract_strided_slice %33 {offsets = [1, 0, 0], sizes = [1, 1, 32], strides = [1, 1, 1]} : vector<2x1x32xf32> to vector<1x1x32xf32>
    %266 = vector.shape_cast %265 : vector<1x1x32xf32> to vector<1x32xf32>
    %267 = vector.extract_strided_slice %35 {offsets = [1, 0, 0], sizes = [1, 1, 32], strides = [1, 1, 1]} : vector<2x1x32xf32> to vector<1x1x32xf32>
    %268 = vector.shape_cast %267 : vector<1x1x32xf32> to vector<1x32xf32>
    %cst_107 = arith.constant dense<0.000000e+00> : vector<16xf32>
    %269 = vector.multi_reduction <add>, %264, %cst_107 [1] : vector<16x32xf32> to vector<16xf32>
    %270 = vector.shape_cast %269 : vector<16xf32> to vector<16x1xf32>
    %cst_108 = arith.constant 3.200000e+01 : f32
    %271 = vector.broadcast %cst_108 : f32 to vector<16x1xf32>
    %272 = arith.divf %270, %271 : vector<16x1xf32>
    %273 = vector.broadcast %272 : vector<16x1xf32> to vector<16x32xf32>
    %274 = arith.subf %264, %273 : vector<16x32xf32>
    %275 = arith.mulf %274, %274 : vector<16x32xf32>
    %cst_109 = arith.constant dense<0.000000e+00> : vector<16xf32>
    %276 = vector.multi_reduction <add>, %275, %cst_109 [1] : vector<16x32xf32> to vector<16xf32>
    %277 = vector.shape_cast %276 : vector<16xf32> to vector<16x1xf32>
    %cst_110 = arith.constant 3.200000e+01 : f32
    %278 = vector.broadcast %cst_110 : f32 to vector<16x1xf32>
    %279 = arith.divf %277, %278 : vector<16x1xf32>
    %cst_111 = arith.constant 9.99999993E-9 : f32
    %280 = vector.broadcast %cst_111 : f32 to vector<16x1xf32>
    %281 = arith.addf %279, %280 : vector<16x1xf32>
    %282 = math.rsqrt %281 : vector<16x1xf32>
    %283 = vector.broadcast %282 : vector<16x1xf32> to vector<16x32xf32>
    %284 = arith.mulf %274, %283 : vector<16x32xf32>
    %285 = vector.broadcast %266 : vector<1x32xf32> to vector<16x32xf32>
    %286 = arith.mulf %284, %285 : vector<16x32xf32>
    %287 = vector.broadcast %268 : vector<1x32xf32> to vector<16x32xf32>
    %288 = arith.addf %286, %287 : vector<16x32xf32>
    %289 = vector.extract_strided_slice %37 {offsets = [1, 0, 0], sizes = [1, 32, 32], strides = [1, 1, 1]} : vector<2x32x32xf32> to vector<1x32x32xf32>
    %290 = vector.shape_cast %289 : vector<1x32x32xf32> to vector<32x32xf32>
    %cst_112 = arith.constant dense<0.000000e+00> : vector<16x32xf32>
    %291 = tpu.matmul %288, %290, %cst_112 {dimension_numbers = #tpu.dot_dimension_numbers<[1], [0], [0], [1], [0, 0, 1, 1], [], []>} : vector<16x32xf32>, vector<32x32xf32>, vector<16x32xf32> -> vector<16x32xf32>
    %292 = vector.extract_strided_slice %39 {offsets = [1, 0, 0], sizes = [1, 1, 32], strides = [1, 1, 1]} : vector<2x1x32xf32> to vector<1x1x32xf32>
    %293 = vector.shape_cast %292 : vector<1x1x32xf32> to vector<1x32xf32>
    %294 = vector.broadcast %293 : vector<1x32xf32> to vector<16x32xf32>
    %295 = arith.addf %291, %294 : vector<16x32xf32>
    %cst_113 = arith.constant 0.000000e+00 : f32
    %296 = vector.broadcast %cst_113 : f32 to vector<16x32xf32>
    %297 = arith.maximumf %295, %296 : vector<16x32xf32>
    %298 = vector.extract_strided_slice %41 {offsets = [1, 0, 0], sizes = [1, 32, 32], strides = [1, 1, 1]} : vector<2x32x32xf32> to vector<1x32x32xf32>
    %299 = vector.shape_cast %298 : vector<1x32x32xf32> to vector<32x32xf32>
    %cst_114 = arith.constant dense<0.000000e+00> : vector<16x32xf32>
    %300 = tpu.matmul %297, %299, %cst_114 {dimension_numbers = #tpu.dot_dimension_numbers<[1], [0], [0], [1], [0, 0, 1, 1], [], []>} : vector<16x32xf32>, vector<32x32xf32>, vector<16x32xf32> -> vector<16x32xf32>
    %301 = vector.extract_strided_slice %43 {offsets = [1, 0, 0], sizes = [1, 1, 32], strides = [1, 1, 1]} : vector<2x1x32xf32> to vector<1x1x32xf32>
    %302 = vector.shape_cast %301 : vector<1x1x32xf32> to vector<1x32xf32>
    %303 = vector.broadcast %302 : vector<1x32xf32> to vector<16x32xf32>
    %304 = arith.addf %300, %303 : vector<16x32xf32>
    %305 = arith.addf %304, %288 : vector<16x32xf32>
    %306 = vector.broadcast %6 : vector<16x1xf32> to vector<16x32xf32>
    %307 = arith.mulf %305, %306 : vector<16x32xf32>
    %cst_115 = arith.constant dense<0.000000e+00> : vector<16xf32>
    %308 = vector.multi_reduction <add>, %307, %cst_115 [1] : vector<16x32xf32> to vector<16xf32>
    %309 = vector.shape_cast %308 : vector<16xf32> to vector<16x1xf32>
    %cst_116 = arith.constant 3.200000e+01 : f32
    %310 = vector.broadcast %cst_116 : f32 to vector<16x1xf32>
    %311 = arith.divf %309, %310 : vector<16x1xf32>
    %312 = vector.broadcast %311 : vector<16x1xf32> to vector<16x32xf32>
    %313 = arith.subf %307, %312 : vector<16x32xf32>
    %314 = arith.mulf %313, %313 : vector<16x32xf32>
    %cst_117 = arith.constant dense<0.000000e+00> : vector<16xf32>
    %315 = vector.multi_reduction <add>, %314, %cst_117 [1] : vector<16x32xf32> to vector<16xf32>
    %316 = vector.shape_cast %315 : vector<16xf32> to vector<16x1xf32>
    %cst_118 = arith.constant 3.200000e+01 : f32
    %317 = vector.broadcast %cst_118 : f32 to vector<16x1xf32>
    %318 = arith.divf %316, %317 : vector<16x1xf32>
    %cst_119 = arith.constant 9.99999993E-9 : f32
    %319 = vector.broadcast %cst_119 : f32 to vector<16x1xf32>
    %320 = arith.addf %318, %319 : vector<16x1xf32>
    %321 = math.rsqrt %320 : vector<16x1xf32>
    %322 = vector.broadcast %321 : vector<16x1xf32> to vector<16x32xf32>
    %323 = arith.mulf %313, %322 : vector<16x32xf32>
    %324 = vector.broadcast %45 : vector<1x32xf32> to vector<16x32xf32>
    %325 = arith.mulf %323, %324 : vector<16x32xf32>
    %326 = vector.broadcast %47 : vector<1x32xf32> to vector<16x32xf32>
    %327 = arith.addf %325, %326 : vector<16x32xf32>
    %328 = vector.shape_cast %327 : vector<16x32xf32> to vector<2x8x32xf32>
    %c0_120 = arith.constant 0 : index
    %c0_121 = arith.constant 0 : index
    %c0_122 = arith.constant 0 : index
    %329 = vector.load %arg18[%c0_120, %c0_121, %c0_122] : memref<2x8x32xf32, #tpu.memory_space<vmem>>, vector<2x8x32xf32>
    tpu.vector_store %arg18[%c0_120, %c0_121, %c0_122], %328 {strides = array<i32>} : memref<2x8x32xf32, #tpu.memory_space<vmem>>, vector<2x8x32xf32>,
    %c1 = arith.constant 1 : index
    %c0_123 = arith.constant 0 : index
    %c0_124 = arith.constant 0 : index
    %c0_125 = arith.constant 0 : index
    %330 = vector.load %arg2[%c1, %c0_123, %c0_124, %c0_125] : memref<2x2x1x32xf32, #tpu.memory_space<vmem>>, vector<1x2x1x32xf32>
    %331 = vector.shape_cast %330 : vector<1x2x1x32xf32> to vector<2x1x32xf32>
    %c1_126 = arith.constant 1 : index
    %c0_127 = arith.constant 0 : index
    %c0_128 = arith.constant 0 : index
    %c0_129 = arith.constant 0 : index
    %332 = vector.load %arg3[%c1_126, %c0_127, %c0_128, %c0_129] : memref<2x2x1x32xf32, #tpu.memory_space<vmem>>, vector<1x2x1x32xf32>
    %333 = vector.shape_cast %332 : vector<1x2x1x32xf32> to vector<2x1x32xf32>
    %c1_130 = arith.constant 1 : index
    %c0_131 = arith.constant 0 : index
    %c0_132 = arith.constant 0 : index
    %c0_133 = arith.constant 0 : index
    %334 = vector.load %arg4[%c1_130, %c0_131, %c0_132, %c0_133] : memref<2x2x32x32xf32, #tpu.memory_space<vmem>>, vector<1x2x32x32xf32>
    %335 = vector.shape_cast %334 : vector<1x2x32x32xf32> to vector<2x32x32xf32>
    %c1_134 = arith.constant 1 : index
    %c0_135 = arith.constant 0 : index
    %c0_136 = arith.constant 0 : index
    %c0_137 = arith.constant 0 : index
    %336 = vector.load %arg5[%c1_134, %c0_135, %c0_136, %c0_137] : memref<2x2x1x32xf32, #tpu.memory_space<vmem>>, vector<1x2x1x32xf32>
    %337 = vector.shape_cast %336 : vector<1x2x1x32xf32> to vector<2x1x32xf32>
    %c1_138 = arith.constant 1 : index
    %c0_139 = arith.constant 0 : index
    %c0_140 = arith.constant 0 : index
    %c0_141 = arith.constant 0 : index
    %338 = vector.load %arg6[%c1_138, %c0_139, %c0_140, %c0_141] : memref<2x2x32x64xf32, #tpu.memory_space<vmem>>, vector<1x2x32x64xf32>
    %339 = vector.shape_cast %338 : vector<1x2x32x64xf32> to vector<2x32x64xf32>
    %c1_142 = arith.constant 1 : index
    %c0_143 = arith.constant 0 : index
    %c0_144 = arith.constant 0 : index
    %c0_145 = arith.constant 0 : index
    %340 = vector.load %arg7[%c1_142, %c0_143, %c0_144, %c0_145] : memref<2x2x1x64xf32, #tpu.memory_space<vmem>>, vector<1x2x1x64xf32>
    %341 = vector.shape_cast %340 : vector<1x2x1x64xf32> to vector<2x1x64xf32>
    %c1_146 = arith.constant 1 : index
    %c0_147 = arith.constant 0 : index
    %c0_148 = arith.constant 0 : index
    %c0_149 = arith.constant 0 : index
    %342 = vector.load %arg8[%c1_146, %c0_147, %c0_148, %c0_149] : memref<2x2x32x32xf32, #tpu.memory_space<vmem>>, vector<1x2x32x32xf32>
    %343 = vector.shape_cast %342 : vector<1x2x32x32xf32> to vector<2x32x32xf32>
    %c1_150 = arith.constant 1 : index
    %c0_151 = arith.constant 0 : index
    %c0_152 = arith.constant 0 : index
    %c0_153 = arith.constant 0 : index
    %344 = vector.load %arg9[%c1_150, %c0_151, %c0_152, %c0_153] : memref<2x2x1x32xf32, #tpu.memory_space<vmem>>, vector<1x2x1x32xf32>
    %345 = vector.shape_cast %344 : vector<1x2x1x32xf32> to vector<2x1x32xf32>
    %c1_154 = arith.constant 1 : index
    %c0_155 = arith.constant 0 : index
    %c0_156 = arith.constant 0 : index
    %c0_157 = arith.constant 0 : index
    %346 = vector.load %arg10[%c1_154, %c0_155, %c0_156, %c0_157] : memref<2x2x1x32xf32, #tpu.memory_space<vmem>>, vector<1x2x1x32xf32>
    %347 = vector.shape_cast %346 : vector<1x2x1x32xf32> to vector<2x1x32xf32>
    %c1_158 = arith.constant 1 : index
    %c0_159 = arith.constant 0 : index
    %c0_160 = arith.constant 0 : index
    %c0_161 = arith.constant 0 : index
    %348 = vector.load %arg11[%c1_158, %c0_159, %c0_160, %c0_161] : memref<2x2x1x32xf32, #tpu.memory_space<vmem>>, vector<1x2x1x32xf32>
    %349 = vector.shape_cast %348 : vector<1x2x1x32xf32> to vector<2x1x32xf32>
    %c1_162 = arith.constant 1 : index
    %c0_163 = arith.constant 0 : index
    %c0_164 = arith.constant 0 : index
    %c0_165 = arith.constant 0 : index
    %350 = vector.load %arg12[%c1_162, %c0_163, %c0_164, %c0_165] : memref<2x2x32x32xf32, #tpu.memory_space<vmem>>, vector<1x2x32x32xf32>
    %351 = vector.shape_cast %350 : vector<1x2x32x32xf32> to vector<2x32x32xf32>
    %c1_166 = arith.constant 1 : index
    %c0_167 = arith.constant 0 : index
    %c0_168 = arith.constant 0 : index
    %c0_169 = arith.constant 0 : index
    %352 = vector.load %arg13[%c1_166, %c0_167, %c0_168, %c0_169] : memref<2x2x1x32xf32, #tpu.memory_space<vmem>>, vector<1x2x1x32xf32>
    %353 = vector.shape_cast %352 : vector<1x2x1x32xf32> to vector<2x1x32xf32>
    %c1_170 = arith.constant 1 : index
    %c0_171 = arith.constant 0 : index
    %c0_172 = arith.constant 0 : index
    %c0_173 = arith.constant 0 : index
    %354 = vector.load %arg14[%c1_170, %c0_171, %c0_172, %c0_173] : memref<2x2x32x32xf32, #tpu.memory_space<vmem>>, vector<1x2x32x32xf32>
    %355 = vector.shape_cast %354 : vector<1x2x32x32xf32> to vector<2x32x32xf32>
    %c1_174 = arith.constant 1 : index
    %c0_175 = arith.constant 0 : index
    %c0_176 = arith.constant 0 : index
    %c0_177 = arith.constant 0 : index
    %356 = vector.load %arg15[%c1_174, %c0_175, %c0_176, %c0_177] : memref<2x2x1x32xf32, #tpu.memory_space<vmem>>, vector<1x2x1x32xf32>
    %357 = vector.shape_cast %356 : vector<1x2x1x32xf32> to vector<2x1x32xf32>
    %c1_178 = arith.constant 1 : index
    %c0_179 = arith.constant 0 : index
    %c0_180 = arith.constant 0 : index
    %358 = vector.load %arg16[%c1_178, %c0_179, %c0_180] : memref<2x1x32xf32, #tpu.memory_space<vmem>>, vector<1x1x32xf32>
    %359 = vector.shape_cast %358 : vector<1x1x32xf32> to vector<1x32xf32>
    %c1_181 = arith.constant 1 : index
    %c0_182 = arith.constant 0 : index
    %c0_183 = arith.constant 0 : index
    %360 = vector.load %arg17[%c1_181, %c0_182, %c0_183] : memref<2x1x32xf32, #tpu.memory_space<vmem>>, vector<1x1x32xf32>
    %361 = vector.shape_cast %360 : vector<1x1x32xf32> to vector<1x32xf32>
    %362 = vector.extract_strided_slice %331 {offsets = [0, 0, 0], sizes = [1, 1, 32], strides = [1, 1, 1]} : vector<2x1x32xf32> to vector<1x1x32xf32>
    %363 = vector.shape_cast %362 : vector<1x1x32xf32> to vector<1x32xf32>
    %364 = vector.extract_strided_slice %333 {offsets = [0, 0, 0], sizes = [1, 1, 32], strides = [1, 1, 1]} : vector<2x1x32xf32> to vector<1x1x32xf32>
    %365 = vector.shape_cast %364 : vector<1x1x32xf32> to vector<1x32xf32>
    %cst_184 = arith.constant dense<0.000000e+00> : vector<16xf32>
    %366 = vector.multi_reduction <add>, %8, %cst_184 [1] : vector<16x32xf32> to vector<16xf32>
    %367 = vector.shape_cast %366 : vector<16xf32> to vector<16x1xf32>
    %cst_185 = arith.constant 3.200000e+01 : f32
    %368 = vector.broadcast %cst_185 : f32 to vector<16x1xf32>
    %369 = arith.divf %367, %368 : vector<16x1xf32>
    %370 = vector.broadcast %369 : vector<16x1xf32> to vector<16x32xf32>
    %371 = arith.subf %8, %370 : vector<16x32xf32>
    %372 = arith.mulf %371, %371 : vector<16x32xf32>
    %cst_186 = arith.constant dense<0.000000e+00> : vector<16xf32>
    %373 = vector.multi_reduction <add>, %372, %cst_186 [1] : vector<16x32xf32> to vector<16xf32>
    %374 = vector.shape_cast %373 : vector<16xf32> to vector<16x1xf32>
    %cst_187 = arith.constant 3.200000e+01 : f32
    %375 = vector.broadcast %cst_187 : f32 to vector<16x1xf32>
    %376 = arith.divf %374, %375 : vector<16x1xf32>
    %cst_188 = arith.constant 9.99999993E-9 : f32
    %377 = vector.broadcast %cst_188 : f32 to vector<16x1xf32>
    %378 = arith.addf %376, %377 : vector<16x1xf32>
    %379 = math.rsqrt %378 : vector<16x1xf32>
    %380 = vector.broadcast %379 : vector<16x1xf32> to vector<16x32xf32>
    %381 = arith.mulf %371, %380 : vector<16x32xf32>
    %382 = vector.broadcast %363 : vector<1x32xf32> to vector<16x32xf32>
    %383 = arith.mulf %381, %382 : vector<16x32xf32>
    %384 = vector.broadcast %365 : vector<1x32xf32> to vector<16x32xf32>
    %385 = arith.addf %383, %384 : vector<16x32xf32>
    %386 = vector.extract_strided_slice %335 {offsets = [0, 0, 0], sizes = [1, 32, 32], strides = [1, 1, 1]} : vector<2x32x32xf32> to vector<1x32x32xf32>
    %387 = vector.shape_cast %386 : vector<1x32x32xf32> to vector<32x32xf32>
    %cst_189 = arith.constant dense<0.000000e+00> : vector<16x32xf32>
    %388 = tpu.matmul %385, %387, %cst_189 {dimension_numbers = #tpu.dot_dimension_numbers<[1], [0], [0], [1], [0, 0, 1, 1], [], []>} : vector<16x32xf32>, vector<32x32xf32>, vector<16x32xf32> -> vector<16x32xf32>
    %389 = vector.extract_strided_slice %337 {offsets = [0, 0, 0], sizes = [1, 1, 32], strides = [1, 1, 1]} : vector<2x1x32xf32> to vector<1x1x32xf32>
    %390 = vector.shape_cast %389 : vector<1x1x32xf32> to vector<1x32xf32>
    %391 = vector.broadcast %390 : vector<1x32xf32> to vector<16x32xf32>
    %392 = arith.addf %388, %391 : vector<16x32xf32>
    %393 = vector.extract_strided_slice %339 {offsets = [0, 0, 0], sizes = [1, 32, 64], strides = [1, 1, 1]} : vector<2x32x64xf32> to vector<1x32x64xf32>
    %394 = vector.shape_cast %393 : vector<1x32x64xf32> to vector<32x64xf32>
    %cst_190 = arith.constant dense<0.000000e+00> : vector<16x64xf32>
    %395 = tpu.matmul %8, %394, %cst_190 {dimension_numbers = #tpu.dot_dimension_numbers<[1], [0], [0], [1], [0, 0, 1, 1], [], []>} : vector<16x32xf32>, vector<32x64xf32>, vector<16x64xf32> -> vector<16x64xf32>
    %396 = vector.extract_strided_slice %341 {offsets = [0, 0, 0], sizes = [1, 1, 64], strides = [1, 1, 1]} : vector<2x1x64xf32> to vector<1x1x64xf32>
    %397 = vector.shape_cast %396 : vector<1x1x64xf32> to vector<1x64xf32>
    %398 = vector.broadcast %397 : vector<1x64xf32> to vector<16x64xf32>
    %399 = arith.addf %395, %398 : vector<16x64xf32>
    %400 = vector.extract_strided_slice %392 {offsets = [0, 0], sizes = [16, 16], strides = [1, 1]} : vector<16x32xf32> to vector<16x16xf32>
    %401 = vector.shape_cast %400 : vector<16x16xf32> to vector<2x8x16xf32>
    %402 = vector.extract_strided_slice %399 {offsets = [0, 0], sizes = [16, 16], strides = [1, 1]} : vector<16x64xf32> to vector<16x16xf32>
    %403 = vector.shape_cast %402 : vector<16x16xf32> to vector<2x8x16xf32>
    %404 = vector.extract_strided_slice %399 {offsets = [0, 32], sizes = [16, 16], strides = [1, 1]} : vector<16x64xf32> to vector<16x16xf32>
    %405 = vector.shape_cast %404 : vector<16x16xf32> to vector<2x8x16xf32>
    "tpu.trace_start"() <{level = 10 : i32, message = "bqd,bkd->bqk"}> : () -> ()
    %cst_191 = arith.constant dense<0.000000e+00> : vector<2x8x8xf32>
    %406 = tpu.matmul %401, %403, %cst_191 {dimension_numbers = #tpu.dot_dimension_numbers<[2], [2], [1], [1], [0, 0, 0, 1, 1, 1], [0], [0]>} : vector<2x8x16xf32>, vector<2x8x16xf32>, vector<2x8x8xf32> -> vector<2x8x8xf32>
    "tpu.trace_stop"() : () -> ()
    %407 = vector.broadcast %15 : vector<1x8x8xf32> to vector<2x8x8xf32>
    %408 = arith.addf %406, %407 : vector<2x8x8xf32>
    %cst_192 = arith.constant dense<0xFF800000> : vector<2x8xf32>
    %409 = vector.multi_reduction <maximumf>, %408, %cst_192 [2] : vector<2x8x8xf32> to vector<2x8xf32>
    %410 = vector.shape_cast %409 : vector<2x8xf32> to vector<2x8x1xf32>
    %411 = vector.broadcast %410 : vector<2x8x1xf32> to vector<2x8x8xf32>
    %412 = arith.subf %408, %411 : vector<2x8x8xf32>
    %413 = math.exp %412 : vector<2x8x8xf32>
    %cst_193 = arith.constant dense<0.000000e+00> : vector<2x8xf32>
    %414 = vector.multi_reduction <add>, %413, %cst_193 [2] : vector<2x8x8xf32> to vector<2x8xf32>
    %415 = vector.shape_cast %414 : vector<2x8xf32> to vector<2x8x1xf32>
    %416 = vector.broadcast %415 : vector<2x8x1xf32> to vector<2x8x8xf32>
    %417 = arith.divf %413, %416 : vector<2x8x8xf32>
    "tpu.trace_start"() <{level = 10 : i32, message = "bqk,bkd->bqd"}> : () -> ()
    %cst_194 = arith.constant dense<0.000000e+00> : vector<2x8x16xf32>
    %418 = tpu.matmul %417, %405, %cst_194 {dimension_numbers = #tpu.dot_dimension_numbers<[2], [1], [1], [2], [0, 0, 0, 1, 1, 2], [0], [0]>} : vector<2x8x8xf32>, vector<2x8x16xf32>, vector<2x8x16xf32> -> vector<2x8x16xf32>
    "tpu.trace_stop"() : () -> ()
    %419 = vector.shape_cast %418 : vector<2x8x16xf32> to vector<16x16xf32>
    %420 = vector.extract_strided_slice %392 {offsets = [0, 16], sizes = [16, 16], strides = [1, 1]} : vector<16x32xf32> to vector<16x16xf32>
    %421 = vector.shape_cast %420 : vector<16x16xf32> to vector<2x8x16xf32>
    %422 = vector.extract_strided_slice %399 {offsets = [0, 16], sizes = [16, 16], strides = [1, 1]} : vector<16x64xf32> to vector<16x16xf32>
    %423 = vector.shape_cast %422 : vector<16x16xf32> to vector<2x8x16xf32>
    %424 = vector.extract_strided_slice %399 {offsets = [0, 48], sizes = [16, 16], strides = [1, 1]} : vector<16x64xf32> to vector<16x16xf32>
    %425 = vector.shape_cast %424 : vector<16x16xf32> to vector<2x8x16xf32>
    "tpu.trace_start"() <{level = 10 : i32, message = "bqd,bkd->bqk"}> : () -> ()
    %cst_195 = arith.constant dense<0.000000e+00> : vector<2x8x8xf32>
    %426 = tpu.matmul %421, %423, %cst_195 {dimension_numbers = #tpu.dot_dimension_numbers<[2], [2], [1], [1], [0, 0, 0, 1, 1, 1], [0], [0]>} : vector<2x8x16xf32>, vector<2x8x16xf32>, vector<2x8x8xf32> -> vector<2x8x8xf32>
    "tpu.trace_stop"() : () -> ()
    %427 = vector.broadcast %15 : vector<1x8x8xf32> to vector<2x8x8xf32>
    %428 = arith.addf %426, %427 : vector<2x8x8xf32>
    %cst_196 = arith.constant dense<0xFF800000> : vector<2x8xf32>
    %429 = vector.multi_reduction <maximumf>, %428, %cst_196 [2] : vector<2x8x8xf32> to vector<2x8xf32>
    %430 = vector.shape_cast %429 : vector<2x8xf32> to vector<2x8x1xf32>
    %431 = vector.broadcast %430 : vector<2x8x1xf32> to vector<2x8x8xf32>
    %432 = arith.subf %428, %431 : vector<2x8x8xf32>
    %433 = math.exp %432 : vector<2x8x8xf32>
    %cst_197 = arith.constant dense<0.000000e+00> : vector<2x8xf32>
    %434 = vector.multi_reduction <add>, %433, %cst_197 [2] : vector<2x8x8xf32> to vector<2x8xf32>
    %435 = vector.shape_cast %434 : vector<2x8xf32> to vector<2x8x1xf32>
    %436 = vector.broadcast %435 : vector<2x8x1xf32> to vector<2x8x8xf32>
    %437 = arith.divf %433, %436 : vector<2x8x8xf32>
    "tpu.trace_start"() <{level = 10 : i32, message = "bqk,bkd->bqd"}> : () -> ()
    %cst_198 = arith.constant dense<0.000000e+00> : vector<2x8x16xf32>
    %438 = tpu.matmul %437, %425, %cst_198 {dimension_numbers = #tpu.dot_dimension_numbers<[2], [1], [1], [2], [0, 0, 0, 1, 1, 2], [0], [0]>} : vector<2x8x8xf32>, vector<2x8x16xf32>, vector<2x8x16xf32> -> vector<2x8x16xf32>
    "tpu.trace_stop"() : () -> ()
    %439 = vector.shape_cast %438 : vector<2x8x16xf32> to vector<16x16xf32>
    %440 = tpu.concatenate %419, %439 in 1 : vector<16x16xf32>, vector<16x16xf32> -> vector<16x32xf32>
    %441 = vector.extract_strided_slice %343 {offsets = [0, 0, 0], sizes = [1, 32, 32], strides = [1, 1, 1]} : vector<2x32x32xf32> to vector<1x32x32xf32>
    %442 = vector.shape_cast %441 : vector<1x32x32xf32> to vector<32x32xf32>
    %cst_199 = arith.constant dense<0.000000e+00> : vector<16x32xf32>
    %443 = tpu.matmul %440, %442, %cst_199 {dimension_numbers = #tpu.dot_dimension_numbers<[1], [0], [0], [1], [0, 0, 1, 1], [], []>} : vector<16x32xf32>, vector<32x32xf32>, vector<16x32xf32> -> vector<16x32xf32>
    %444 = arith.addf %385, %443 : vector<16x32xf32>
    %445 = vector.extract_strided_slice %345 {offsets = [0, 0, 0], sizes = [1, 1, 32], strides = [1, 1, 1]} : vector<2x1x32xf32> to vector<1x1x32xf32>
    %446 = vector.shape_cast %445 : vector<1x1x32xf32> to vector<1x32xf32>
    %447 = vector.broadcast %446 : vector<1x32xf32> to vector<16x32xf32>
    %448 = arith.addf %444, %447 : vector<16x32xf32>
    %449 = vector.extract_strided_slice %347 {offsets = [0, 0, 0], sizes = [1, 1, 32], strides = [1, 1, 1]} : vector<2x1x32xf32> to vector<1x1x32xf32>
    %450 = vector.shape_cast %449 : vector<1x1x32xf32> to vector<1x32xf32>
    %451 = vector.extract_strided_slice %349 {offsets = [0, 0, 0], sizes = [1, 1, 32], strides = [1, 1, 1]} : vector<2x1x32xf32> to vector<1x1x32xf32>
    %452 = vector.shape_cast %451 : vector<1x1x32xf32> to vector<1x32xf32>
    %cst_200 = arith.constant dense<0.000000e+00> : vector<16xf32>
    %453 = vector.multi_reduction <add>, %448, %cst_200 [1] : vector<16x32xf32> to vector<16xf32>
    %454 = vector.shape_cast %453 : vector<16xf32> to vector<16x1xf32>
    %cst_201 = arith.constant 3.200000e+01 : f32
    %455 = vector.broadcast %cst_201 : f32 to vector<16x1xf32>
    %456 = arith.divf %454, %455 : vector<16x1xf32>
    %457 = vector.broadcast %456 : vector<16x1xf32> to vector<16x32xf32>
    %458 = arith.subf %448, %457 : vector<16x32xf32>
    %459 = arith.mulf %458, %458 : vector<16x32xf32>
    %cst_202 = arith.constant dense<0.000000e+00> : vector<16xf32>
    %460 = vector.multi_reduction <add>, %459, %cst_202 [1] : vector<16x32xf32> to vector<16xf32>
    %461 = vector.shape_cast %460 : vector<16xf32> to vector<16x1xf32>
    %cst_203 = arith.constant 3.200000e+01 : f32
    %462 = vector.broadcast %cst_203 : f32 to vector<16x1xf32>
    %463 = arith.divf %461, %462 : vector<16x1xf32>
    %cst_204 = arith.constant 9.99999993E-9 : f32
    %464 = vector.broadcast %cst_204 : f32 to vector<16x1xf32>
    %465 = arith.addf %463, %464 : vector<16x1xf32>
    %466 = math.rsqrt %465 : vector<16x1xf32>
    %467 = vector.broadcast %466 : vector<16x1xf32> to vector<16x32xf32>
    %468 = arith.mulf %458, %467 : vector<16x32xf32>
    %469 = vector.broadcast %450 : vector<1x32xf32> to vector<16x32xf32>
    %470 = arith.mulf %468, %469 : vector<16x32xf32>
    %471 = vector.broadcast %452 : vector<1x32xf32> to vector<16x32xf32>
    %472 = arith.addf %470, %471 : vector<16x32xf32>
    %473 = vector.extract_strided_slice %351 {offsets = [0, 0, 0], sizes = [1, 32, 32], strides = [1, 1, 1]} : vector<2x32x32xf32> to vector<1x32x32xf32>
    %474 = vector.shape_cast %473 : vector<1x32x32xf32> to vector<32x32xf32>
    %cst_205 = arith.constant dense<0.000000e+00> : vector<16x32xf32>
    %475 = tpu.matmul %472, %474, %cst_205 {dimension_numbers = #tpu.dot_dimension_numbers<[1], [0], [0], [1], [0, 0, 1, 1], [], []>} : vector<16x32xf32>, vector<32x32xf32>, vector<16x32xf32> -> vector<16x32xf32>
    %476 = vector.extract_strided_slice %353 {offsets = [0, 0, 0], sizes = [1, 1, 32], strides = [1, 1, 1]} : vector<2x1x32xf32> to vector<1x1x32xf32>
    %477 = vector.shape_cast %476 : vector<1x1x32xf32> to vector<1x32xf32>
    %478 = vector.broadcast %477 : vector<1x32xf32> to vector<16x32xf32>
    %479 = arith.addf %475, %478 : vector<16x32xf32>
    %cst_206 = arith.constant 0.000000e+00 : f32
    %480 = vector.broadcast %cst_206 : f32 to vector<16x32xf32>
    %481 = arith.maximumf %479, %480 : vector<16x32xf32>
    %482 = vector.extract_strided_slice %355 {offsets = [0, 0, 0], sizes = [1, 32, 32], strides = [1, 1, 1]} : vector<2x32x32xf32> to vector<1x32x32xf32>
    %483 = vector.shape_cast %482 : vector<1x32x32xf32> to vector<32x32xf32>
    %cst_207 = arith.constant dense<0.000000e+00> : vector<16x32xf32>
    %484 = tpu.matmul %481, %483, %cst_207 {dimension_numbers = #tpu.dot_dimension_numbers<[1], [0], [0], [1], [0, 0, 1, 1], [], []>} : vector<16x32xf32>, vector<32x32xf32>, vector<16x32xf32> -> vector<16x32xf32>
    %485 = vector.extract_strided_slice %357 {offsets = [0, 0, 0], sizes = [1, 1, 32], strides = [1, 1, 1]} : vector<2x1x32xf32> to vector<1x1x32xf32>
    %486 = vector.shape_cast %485 : vector<1x1x32xf32> to vector<1x32xf32>
    %487 = vector.broadcast %486 : vector<1x32xf32> to vector<16x32xf32>
    %488 = arith.addf %484, %487 : vector<16x32xf32>
    %489 = arith.addf %488, %472 : vector<16x32xf32>
    %490 = vector.broadcast %6 : vector<16x1xf32> to vector<16x32xf32>
    %491 = arith.mulf %489, %490 : vector<16x32xf32>
    %492 = vector.extract_strided_slice %331 {offsets = [1, 0, 0], sizes = [1, 1, 32], strides = [1, 1, 1]} : vector<2x1x32xf32> to vector<1x1x32xf32>
    %493 = vector.shape_cast %492 : vector<1x1x32xf32> to vector<1x32xf32>
    %494 = vector.extract_strided_slice %333 {offsets = [1, 0, 0], sizes = [1, 1, 32], strides = [1, 1, 1]} : vector<2x1x32xf32> to vector<1x1x32xf32>
    %495 = vector.shape_cast %494 : vector<1x1x32xf32> to vector<1x32xf32>
    %cst_208 = arith.constant dense<0.000000e+00> : vector<16xf32>
    %496 = vector.multi_reduction <add>, %491, %cst_208 [1] : vector<16x32xf32> to vector<16xf32>
    %497 = vector.shape_cast %496 : vector<16xf32> to vector<16x1xf32>
    %cst_209 = arith.constant 3.200000e+01 : f32
    %498 = vector.broadcast %cst_209 : f32 to vector<16x1xf32>
    %499 = arith.divf %497, %498 : vector<16x1xf32>
    %500 = vector.broadcast %499 : vector<16x1xf32> to vector<16x32xf32>
    %501 = arith.subf %491, %500 : vector<16x32xf32>
    %502 = arith.mulf %501, %501 : vector<16x32xf32>
    %cst_210 = arith.constant dense<0.000000e+00> : vector<16xf32>
    %503 = vector.multi_reduction <add>, %502, %cst_210 [1] : vector<16x32xf32> to vector<16xf32>
    %504 = vector.shape_cast %503 : vector<16xf32> to vector<16x1xf32>
    %cst_211 = arith.constant 3.200000e+01 : f32
    %505 = vector.broadcast %cst_211 : f32 to vector<16x1xf32>
    %506 = arith.divf %504, %505 : vector<16x1xf32>
    %cst_212 = arith.constant 9.99999993E-9 : f32
    %507 = vector.broadcast %cst_212 : f32 to vector<16x1xf32>
    %508 = arith.addf %506, %507 : vector<16x1xf32>
    %509 = math.rsqrt %508 : vector<16x1xf32>
    %510 = vector.broadcast %509 : vector<16x1xf32> to vector<16x32xf32>
    %511 = arith.mulf %501, %510 : vector<16x32xf32>
    %512 = vector.broadcast %493 : vector<1x32xf32> to vector<16x32xf32>
    %513 = arith.mulf %511, %512 : vector<16x32xf32>
    %514 = vector.broadcast %495 : vector<1x32xf32> to vector<16x32xf32>
    %515 = arith.addf %513, %514 : vector<16x32xf32>
    %516 = vector.extract_strided_slice %335 {offsets = [1, 0, 0], sizes = [1, 32, 32], strides = [1, 1, 1]} : vector<2x32x32xf32> to vector<1x32x32xf32>
    %517 = vector.shape_cast %516 : vector<1x32x32xf32> to vector<32x32xf32>
    %cst_213 = arith.constant dense<0.000000e+00> : vector<16x32xf32>
    %518 = tpu.matmul %515, %517, %cst_213 {dimension_numbers = #tpu.dot_dimension_numbers<[1], [0], [0], [1], [0, 0, 1, 1], [], []>} : vector<16x32xf32>, vector<32x32xf32>, vector<16x32xf32> -> vector<16x32xf32>
    %519 = vector.extract_strided_slice %337 {offsets = [1, 0, 0], sizes = [1, 1, 32], strides = [1, 1, 1]} : vector<2x1x32xf32> to vector<1x1x32xf32>
    %520 = vector.shape_cast %519 : vector<1x1x32xf32> to vector<1x32xf32>
    %521 = vector.broadcast %520 : vector<1x32xf32> to vector<16x32xf32>
    %522 = arith.addf %518, %521 : vector<16x32xf32>
    %523 = vector.extract_strided_slice %339 {offsets = [1, 0, 0], sizes = [1, 32, 64], strides = [1, 1, 1]} : vector<2x32x64xf32> to vector<1x32x64xf32>
    %524 = vector.shape_cast %523 : vector<1x32x64xf32> to vector<32x64xf32>
    %cst_214 = arith.constant dense<0.000000e+00> : vector<16x64xf32>
    %525 = tpu.matmul %491, %524, %cst_214 {dimension_numbers = #tpu.dot_dimension_numbers<[1], [0], [0], [1], [0, 0, 1, 1], [], []>} : vector<16x32xf32>, vector<32x64xf32>, vector<16x64xf32> -> vector<16x64xf32>
    %526 = vector.extract_strided_slice %341 {offsets = [1, 0, 0], sizes = [1, 1, 64], strides = [1, 1, 1]} : vector<2x1x64xf32> to vector<1x1x64xf32>
    %527 = vector.shape_cast %526 : vector<1x1x64xf32> to vector<1x64xf32>
    %528 = vector.broadcast %527 : vector<1x64xf32> to vector<16x64xf32>
    %529 = arith.addf %525, %528 : vector<16x64xf32>
    %530 = vector.extract_strided_slice %522 {offsets = [0, 0], sizes = [16, 16], strides = [1, 1]} : vector<16x32xf32> to vector<16x16xf32>
    %531 = vector.shape_cast %530 : vector<16x16xf32> to vector<2x8x16xf32>
    %532 = vector.extract_strided_slice %529 {offsets = [0, 0], sizes = [16, 16], strides = [1, 1]} : vector<16x64xf32> to vector<16x16xf32>
    %533 = vector.shape_cast %532 : vector<16x16xf32> to vector<2x8x16xf32>
    %534 = vector.extract_strided_slice %529 {offsets = [0, 32], sizes = [16, 16], strides = [1, 1]} : vector<16x64xf32> to vector<16x16xf32>
    %535 = vector.shape_cast %534 : vector<16x16xf32> to vector<2x8x16xf32>
    "tpu.trace_start"() <{level = 10 : i32, message = "bqd,bkd->bqk"}> : () -> ()
    %cst_215 = arith.constant dense<0.000000e+00> : vector<2x8x8xf32>
    %536 = tpu.matmul %531, %533, %cst_215 {dimension_numbers = #tpu.dot_dimension_numbers<[2], [2], [1], [1], [0, 0, 0, 1, 1, 1], [0], [0]>} : vector<2x8x16xf32>, vector<2x8x16xf32>, vector<2x8x8xf32> -> vector<2x8x8xf32>
    "tpu.trace_stop"() : () -> ()
    %537 = vector.broadcast %15 : vector<1x8x8xf32> to vector<2x8x8xf32>
    %538 = arith.addf %536, %537 : vector<2x8x8xf32>
    %cst_216 = arith.constant dense<0xFF800000> : vector<2x8xf32>
    %539 = vector.multi_reduction <maximumf>, %538, %cst_216 [2] : vector<2x8x8xf32> to vector<2x8xf32>
    %540 = vector.shape_cast %539 : vector<2x8xf32> to vector<2x8x1xf32>
    %541 = vector.broadcast %540 : vector<2x8x1xf32> to vector<2x8x8xf32>
    %542 = arith.subf %538, %541 : vector<2x8x8xf32>
    %543 = math.exp %542 : vector<2x8x8xf32>
    %cst_217 = arith.constant dense<0.000000e+00> : vector<2x8xf32>
    %544 = vector.multi_reduction <add>, %543, %cst_217 [2] : vector<2x8x8xf32> to vector<2x8xf32>
    %545 = vector.shape_cast %544 : vector<2x8xf32> to vector<2x8x1xf32>
    %546 = vector.broadcast %545 : vector<2x8x1xf32> to vector<2x8x8xf32>
    %547 = arith.divf %543, %546 : vector<2x8x8xf32>
    "tpu.trace_start"() <{level = 10 : i32, message = "bqk,bkd->bqd"}> : () -> ()
    %cst_218 = arith.constant dense<0.000000e+00> : vector<2x8x16xf32>
    %548 = tpu.matmul %547, %535, %cst_218 {dimension_numbers = #tpu.dot_dimension_numbers<[2], [1], [1], [2], [0, 0, 0, 1, 1, 2], [0], [0]>} : vector<2x8x8xf32>, vector<2x8x16xf32>, vector<2x8x16xf32> -> vector<2x8x16xf32>
    "tpu.trace_stop"() : () -> ()
    %549 = vector.shape_cast %548 : vector<2x8x16xf32> to vector<16x16xf32>
    %550 = vector.extract_strided_slice %522 {offsets = [0, 16], sizes = [16, 16], strides = [1, 1]} : vector<16x32xf32> to vector<16x16xf32>
    %551 = vector.shape_cast %550 : vector<16x16xf32> to vector<2x8x16xf32>
    %552 = vector.extract_strided_slice %529 {offsets = [0, 16], sizes = [16, 16], strides = [1, 1]} : vector<16x64xf32> to vector<16x16xf32>
    %553 = vector.shape_cast %552 : vector<16x16xf32> to vector<2x8x16xf32>
    %554 = vector.extract_strided_slice %529 {offsets = [0, 48], sizes = [16, 16], strides = [1, 1]} : vector<16x64xf32> to vector<16x16xf32>
    %555 = vector.shape_cast %554 : vector<16x16xf32> to vector<2x8x16xf32>
    "tpu.trace_start"() <{level = 10 : i32, message = "bqd,bkd->bqk"}> : () -> ()
    %cst_219 = arith.constant dense<0.000000e+00> : vector<2x8x8xf32>
    %556 = tpu.matmul %551, %553, %cst_219 {dimension_numbers = #tpu.dot_dimension_numbers<[2], [2], [1], [1], [0, 0, 0, 1, 1, 1], [0], [0]>} : vector<2x8x16xf32>, vector<2x8x16xf32>, vector<2x8x8xf32> -> vector<2x8x8xf32>
    "tpu.trace_stop"() : () -> ()
    %557 = vector.broadcast %15 : vector<1x8x8xf32> to vector<2x8x8xf32>
    %558 = arith.addf %556, %557 : vector<2x8x8xf32>
    %cst_220 = arith.constant dense<0xFF800000> : vector<2x8xf32>
    %559 = vector.multi_reduction <maximumf>, %558, %cst_220 [2] : vector<2x8x8xf32> to vector<2x8xf32>
    %560 = vector.shape_cast %559 : vector<2x8xf32> to vector<2x8x1xf32>
    %561 = vector.broadcast %560 : vector<2x8x1xf32> to vector<2x8x8xf32>
    %562 = arith.subf %558, %561 : vector<2x8x8xf32>
    %563 = math.exp %562 : vector<2x8x8xf32>
    %cst_221 = arith.constant dense<0.000000e+00> : vector<2x8xf32>
    %564 = vector.multi_reduction <add>, %563, %cst_221 [2] : vector<2x8x8xf32> to vector<2x8xf32>
    %565 = vector.shape_cast %564 : vector<2x8xf32> to vector<2x8x1xf32>
    %566 = vector.broadcast %565 : vector<2x8x1xf32> to vector<2x8x8xf32>
    %567 = arith.divf %563, %566 : vector<2x8x8xf32>
    "tpu.trace_start"() <{level = 10 : i32, message = "bqk,bkd->bqd"}> : () -> ()
    %cst_222 = arith.constant dense<0.000000e+00> : vector<2x8x16xf32>
    %568 = tpu.matmul %567, %555, %cst_222 {dimension_numbers = #tpu.dot_dimension_numbers<[2], [1], [1], [2], [0, 0, 0, 1, 1, 2], [0], [0]>} : vector<2x8x8xf32>, vector<2x8x16xf32>, vector<2x8x16xf32> -> vector<2x8x16xf32>
    "tpu.trace_stop"() : () -> ()
    %569 = vector.shape_cast %568 : vector<2x8x16xf32> to vector<16x16xf32>
    %570 = tpu.concatenate %549, %569 in 1 : vector<16x16xf32>, vector<16x16xf32> -> vector<16x32xf32>
    %571 = vector.extract_strided_slice %343 {offsets = [1, 0, 0], sizes = [1, 32, 32], strides = [1, 1, 1]} : vector<2x32x32xf32> to vector<1x32x32xf32>
    %572 = vector.shape_cast %571 : vector<1x32x32xf32> to vector<32x32xf32>
    %cst_223 = arith.constant dense<0.000000e+00> : vector<16x32xf32>
    %573 = tpu.matmul %570, %572, %cst_223 {dimension_numbers = #tpu.dot_dimension_numbers<[1], [0], [0], [1], [0, 0, 1, 1], [], []>} : vector<16x32xf32>, vector<32x32xf32>, vector<16x32xf32> -> vector<16x32xf32>
    %574 = arith.addf %515, %573 : vector<16x32xf32>
    %575 = vector.extract_strided_slice %345 {offsets = [1, 0, 0], sizes = [1, 1, 32], strides = [1, 1, 1]} : vector<2x1x32xf32> to vector<1x1x32xf32>
    %576 = vector.shape_cast %575 : vector<1x1x32xf32> to vector<1x32xf32>
    %577 = vector.broadcast %576 : vector<1x32xf32> to vector<16x32xf32>
    %578 = arith.addf %574, %577 : vector<16x32xf32>
    %579 = vector.extract_strided_slice %347 {offsets = [1, 0, 0], sizes = [1, 1, 32], strides = [1, 1, 1]} : vector<2x1x32xf32> to vector<1x1x32xf32>
    %580 = vector.shape_cast %579 : vector<1x1x32xf32> to vector<1x32xf32>
    %581 = vector.extract_strided_slice %349 {offsets = [1, 0, 0], sizes = [1, 1, 32], strides = [1, 1, 1]} : vector<2x1x32xf32> to vector<1x1x32xf32>
    %582 = vector.shape_cast %581 : vector<1x1x32xf32> to vector<1x32xf32>
    %cst_224 = arith.constant dense<0.000000e+00> : vector<16xf32>
    %583 = vector.multi_reduction <add>, %578, %cst_224 [1] : vector<16x32xf32> to vector<16xf32>
    %584 = vector.shape_cast %583 : vector<16xf32> to vector<16x1xf32>
    %cst_225 = arith.constant 3.200000e+01 : f32
    %585 = vector.broadcast %cst_225 : f32 to vector<16x1xf32>
    %586 = arith.divf %584, %585 : vector<16x1xf32>
    %587 = vector.broadcast %586 : vector<16x1xf32> to vector<16x32xf32>
    %588 = arith.subf %578, %587 : vector<16x32xf32>
    %589 = arith.mulf %588, %588 : vector<16x32xf32>
    %cst_226 = arith.constant dense<0.000000e+00> : vector<16xf32>
    %590 = vector.multi_reduction <add>, %589, %cst_226 [1] : vector<16x32xf32> to vector<16xf32>
    %591 = vector.shape_cast %590 : vector<16xf32> to vector<16x1xf32>
    %cst_227 = arith.constant 3.200000e+01 : f32
    %592 = vector.broadcast %cst_227 : f32 to vector<16x1xf32>
    %593 = arith.divf %591, %592 : vector<16x1xf32>
    %cst_228 = arith.constant 9.99999993E-9 : f32
    %594 = vector.broadcast %cst_228 : f32 to vector<16x1xf32>
    %595 = arith.addf %593, %594 : vector<16x1xf32>
    %596 = math.rsqrt %595 : vector<16x1xf32>
    %597 = vector.broadcast %596 : vector<16x1xf32> to vector<16x32xf32>
    %598 = arith.mulf %588, %597 : vector<16x32xf32>
    %599 = vector.broadcast %580 : vector<1x32xf32> to vector<16x32xf32>
    %600 = arith.mulf %598, %599 : vector<16x32xf32>
    %601 = vector.broadcast %582 : vector<1x32xf32> to vector<16x32xf32>
    %602 = arith.addf %600, %601 : vector<16x32xf32>
    %603 = vector.extract_strided_slice %351 {offsets = [1, 0, 0], sizes = [1, 32, 32], strides = [1, 1, 1]} : vector<2x32x32xf32> to vector<1x32x32xf32>
    %604 = vector.shape_cast %603 : vector<1x32x32xf32> to vector<32x32xf32>
    %cst_229 = arith.constant dense<0.000000e+00> : vector<16x32xf32>
    %605 = tpu.matmul %602, %604, %cst_229 {dimension_numbers = #tpu.dot_dimension_numbers<[1], [0], [0], [1], [0, 0, 1, 1], [], []>} : vector<16x32xf32>, vector<32x32xf32>, vector<16x32xf32> -> vector<16x32xf32>
    %606 = vector.extract_strided_slice %353 {offsets = [1, 0, 0], sizes = [1, 1, 32], strides = [1, 1, 1]} : vector<2x1x32xf32> to vector<1x1x32xf32>
    %607 = vector.shape_cast %606 : vector<1x1x32xf32> to vector<1x32xf32>
    %608 = vector.broadcast %607 : vector<1x32xf32> to vector<16x32xf32>
    %609 = arith.addf %605, %608 : vector<16x32xf32>
    %cst_230 = arith.constant 0.000000e+00 : f32
    %610 = vector.broadcast %cst_230 : f32 to vector<16x32xf32>
    %611 = arith.maximumf %609, %610 : vector<16x32xf32>
    %612 = vector.extract_strided_slice %355 {offsets = [1, 0, 0], sizes = [1, 32, 32], strides = [1, 1, 1]} : vector<2x32x32xf32> to vector<1x32x32xf32>
    %613 = vector.shape_cast %612 : vector<1x32x32xf32> to vector<32x32xf32>
    %cst_231 = arith.constant dense<0.000000e+00> : vector<16x32xf32>
    %614 = tpu.matmul %611, %613, %cst_231 {dimension_numbers = #tpu.dot_dimension_numbers<[1], [0], [0], [1], [0, 0, 1, 1], [], []>} : vector<16x32xf32>, vector<32x32xf32>, vector<16x32xf32> -> vector<16x32xf32>
    %615 = vector.extract_strided_slice %357 {offsets = [1, 0, 0], sizes = [1, 1, 32], strides = [1, 1, 1]} : vector<2x1x32xf32> to vector<1x1x32xf32>
    %616 = vector.shape_cast %615 : vector<1x1x32xf32> to vector<1x32xf32>
    %617 = vector.broadcast %616 : vector<1x32xf32> to vector<16x32xf32>
    %618 = arith.addf %614, %617 : vector<16x32xf32>
    %619 = arith.addf %618, %602 : vector<16x32xf32>
    %620 = vector.broadcast %6 : vector<16x1xf32> to vector<16x32xf32>
    %621 = arith.mulf %619, %620 : vector<16x32xf32>
    %cst_232 = arith.constant dense<0.000000e+00> : vector<16xf32>
    %622 = vector.multi_reduction <add>, %621, %cst_232 [1] : vector<16x32xf32> to vector<16xf32>
    %623 = vector.shape_cast %622 : vector<16xf32> to vector<16x1xf32>
    %cst_233 = arith.constant 3.200000e+01 : f32
    %624 = vector.broadcast %cst_233 : f32 to vector<16x1xf32>
    %625 = arith.divf %623, %624 : vector<16x1xf32>
    %626 = vector.broadcast %625 : vector<16x1xf32> to vector<16x32xf32>
    %627 = arith.subf %621, %626 : vector<16x32xf32>
    %628 = arith.mulf %627, %627 : vector<16x32xf32>
    %cst_234 = arith.constant dense<0.000000e+00> : vector<16xf32>
    %629 = vector.multi_reduction <add>, %628, %cst_234 [1] : vector<16x32xf32> to vector<16xf32>
    %630 = vector.shape_cast %629 : vector<16xf32> to vector<16x1xf32>
    %cst_235 = arith.constant 3.200000e+01 : f32
    %631 = vector.broadcast %cst_235 : f32 to vector<16x1xf32>
    %632 = arith.divf %630, %631 : vector<16x1xf32>
    %cst_236 = arith.constant 9.99999993E-9 : f32
    %633 = vector.broadcast %cst_236 : f32 to vector<16x1xf32>
    %634 = arith.addf %632, %633 : vector<16x1xf32>
    %635 = math.rsqrt %634 : vector<16x1xf32>
    %636 = vector.broadcast %635 : vector<16x1xf32> to vector<16x32xf32>
    %637 = arith.mulf %627, %636 : vector<16x32xf32>
    %638 = vector.broadcast %359 : vector<1x32xf32> to vector<16x32xf32>
    %639 = arith.mulf %637, %638 : vector<16x32xf32>
    %640 = vector.broadcast %361 : vector<1x32xf32> to vector<16x32xf32>
    %641 = arith.addf %639, %640 : vector<16x32xf32>
    %642 = vector.shape_cast %641 : vector<16x32xf32> to vector<2x8x32xf32>
    %c0_237 = arith.constant 0 : index
    %c0_238 = arith.constant 0 : index
    %c0_239 = arith.constant 0 : index
    %643 = vector.load %arg19[%c0_237, %c0_238, %c0_239] : memref<2x8x32xf32, #tpu.memory_space<vmem>>, vector<2x8x32xf32>
    tpu.vector_store %arg19[%c0_237, %c0_238, %c0_239], %642 {strides = array<i32>} : memref<2x8x32xf32, #tpu.memory_space<vmem>>, vector<2x8x32xf32>,
    return
  }
}

</mosaic_0001>

<llo_original>
// kernel: encoder_forward.1
$region0: #{encoder_forward.1}
  #allocation0 [shape = 'u32[]', space=smem, size = 0x4, offset = 0x4, fixed_abs, tag = 'smem constant byte address 0x4 - core index']
  #allocation1 [shape = 'u32[144,128]{1,0:T(1,128)}', space=vmem, size = 0x12000, scoped, tag = 'internal scratch']
  %s0 = inlined_call_operand.vmem [shape: f32[2,8,32], index: 0, kind: input, shape index: {}]
  %s1 = inlined_call_operand.vmem [shape: s32[16,1], index: 1, kind: input, shape index: {}]
  %s2 = inlined_call_operand.vmem [shape: f32[2,2,1,32], index: 2, kind: input, shape index: {}]
  %s3 = inlined_call_operand.vmem [shape: f32[2,2,1,32], index: 3, kind: input, shape index: {}]
  %s4 = inlined_call_operand.vmem [shape: f32[2,2,32,32], index: 4, kind: input, shape index: {}]
  %s5 = inlined_call_operand.vmem [shape: f32[2,2,1,32], index: 5, kind: input, shape index: {}]
  %s6 = inlined_call_operand.vmem [shape: f32[2,2,32,64], index: 6, kind: input, shape index: {}]
  %s7 = inlined_call_operand.vmem [shape: f32[2,2,1,64], index: 7, kind: input, shape index: {}]
  %s8 = inlined_call_operand.vmem [shape: f32[2,2,32,32], index: 8, kind: input, shape index: {}]
  %s9 = inlined_call_operand.vmem [shape: f32[2,2,1,32], index: 9, kind: input, shape index: {}]
  %s10 = inlined_call_operand.vmem [shape: f32[2,2,1,32], index: 10, kind: input, shape index: {}]
  %s11 = inlined_call_operand.vmem [shape: f32[2,2,1,32], index: 11, kind: input, shape index: {}]
  %s12 = inlined_call_operand.vmem [shape: f32[2,2,32,32], index: 12, kind: input, shape index: {}]
  %s13 = inlined_call_operand.vmem [shape: f32[2,2,1,32], index: 13, kind: input, shape index: {}]
  %s14 = inlined_call_operand.vmem [shape: f32[2,2,32,32], index: 14, kind: input, shape index: {}]
  %s15 = inlined_call_operand.vmem [shape: f32[2,2,1,32], index: 15, kind: input, shape index: {}]
  %s16 = inlined_call_operand.vmem [shape: f32[2,1,32], index: 16, kind: input, shape index: {}]
  %s17 = inlined_call_operand.vmem [shape: f32[2,1,32], index: 17, kind: input, shape index: {}]
  %s18 = inlined_call_operand.hbm [shape: f32[2,8,32], index: 18, kind: output, shape index: {0}]
  %s19 = inlined_call_operand.hbm [shape: f32[2,8,32], index: 19, kind: output, shape index: {1}]
  %20 = xla_tuple %s18, %s19
  %s21 = sld [smem:[#allocation0]]
  $region90: #{encoder_forward.1} parent=0
    _
  %s23 = ssub.s32 1, %s21
  %s24 = scalar_select 0, %s23, %s21
  $region1: #{encoder_forward.1} parent=0
    #allocation2 [shape = 'u8[8192]{0}', space=vmem, size = 0x2000, scoped, tag = 'output window, operand 0, single buffered']
    #allocation3 [shape = 's32[1]{0}', space=sflag, size = 0x4, scoped, tag = 'scoped memory for encoder_forward.1']
    #allocation4 [shape = 'u8[8192]{0}', space=vmem, size = 0x2000, scoped, tag = 'output window, operand 1, single buffered']
    #allocation5 [shape = 's32[1]{0}', space=sflag, size = 0x4, scoped, tag = 'scoped memory for encoder_forward.1']
    %25 = vsyncpa [#allocation3], 0
    %26 = vsyncpa [#allocation5], 0
    // Predicated region
    $region2: #{encoder_forward.1} parent=1 // pred_check
      _
    $region3: #{encoder_forward.1} parent=1 // pred_check_branch
      %28 = sbr.rel (0) target = $region5
    $region4: #{encoder_forward.1} parent=1 // pred_region
      _
    $region5: #{encoder_forward.1} parent=1 // pred_fallthru
      _
    // Predicated region
    $region6: #{encoder_forward.1} parent=1 // pred_check
      _
    $region7: #{encoder_forward.1} parent=1 // pred_check_branch
      %30 = sbr.rel (0) target = $region9
    $region8: #{encoder_forward.1} parent=1 // pred_region
      _
    $region9: #{encoder_forward.1} parent=1 // pred_fallthru
      _
    // Predicated region
    $region10: #{encoder_forward.1} parent=1 // pred_check
      _
    $region11: #{encoder_forward.1} parent=1 // pred_check_branch
      %32 = sbr.rel (0) target = $region13
    $region12: #{encoder_forward.1} parent=1 // pred_region
      _
    $region13: #{encoder_forward.1} parent=1 // pred_fallthru
      _
    // Predicated region
    $region14: #{encoder_forward.1} parent=1 // pred_check
      _
    $region15: #{encoder_forward.1} parent=1 // pred_check_branch
      %34 = sbr.rel (0) target = $region17
    $region16: #{encoder_forward.1} parent=1 // pred_region
      _
    $region17: #{encoder_forward.1} parent=1 // pred_fallthru
      _
    // Predicated region
    $region18: #{encoder_forward.1} parent=1 // pred_check
      _
    $region19: #{encoder_forward.1} parent=1 // pred_check_branch
      %36 = sbr.rel (0) target = $region21
    $region20: #{encoder_forward.1} parent=1 // pred_region
      _
    $region21: #{encoder_forward.1} parent=1 // pred_fallthru
      _
    // Predicated region
    $region22: #{encoder_forward.1} parent=1 // pred_check
      _
    $region23: #{encoder_forward.1} parent=1 // pred_check_branch
      %38 = sbr.rel (0) target = $region25
    $region24: #{encoder_forward.1} parent=1 // pred_region
      _
    $region25: #{encoder_forward.1} parent=1 // pred_fallthru
      _
    // Predicated region
    $region26: #{encoder_forward.1} parent=1 // pred_check
      _
    $region27: #{encoder_forward.1} parent=1 // pred_check_branch
      %40 = sbr.rel (0) target = $region29
    $region28: #{encoder_forward.1} parent=1 // pred_region
      _
    $region29: #{encoder_forward.1} parent=1 // pred_fallthru
      _
    // Predicated region
    $region30: #{encoder_forward.1} parent=1 // pred_check
      _
    $region31: #{encoder_forward.1} parent=1 // pred_check_branch
      %42 = sbr.rel (0) target = $region33
    $region32: #{encoder_forward.1} parent=1 // pred_region
      _
    $region33: #{encoder_forward.1} parent=1 // pred_fallthru
      _
    // Predicated region
    $region34: #{encoder_forward.1} parent=1 // pred_check
      _
    $region35: #{encoder_forward.1} parent=1 // pred_check_branch
      %44 = sbr.rel (0) target = $region37
    $region36: #{encoder_forward.1} parent=1 // pred_region
      _
    $region37: #{encoder_forward.1} parent=1 // pred_fallthru
      _
    // Predicated region
    $region38: #{encoder_forward.1} parent=1 // pred_check
      _
    $region39: #{encoder_forward.1} parent=1 // pred_check_branch
      %46 = sbr.rel (0) target = $region41
    $region40: #{encoder_forward.1} parent=1 // pred_region
      _
    $region41: #{encoder_forward.1} parent=1 // pred_fallthru
      _
    // Predicated region
    $region42: #{encoder_forward.1} parent=1 // pred_check
      _
    $region43: #{encoder_forward.1} parent=1 // pred_check_branch
      %48 = sbr.rel (0) target = $region45
    $region44: #{encoder_forward.1} parent=1 // pred_region
      _
    $region45: #{encoder_forward.1} parent=1 // pred_fallthru
      _
    // Predicated region
    $region46: #{encoder_forward.1} parent=1 // pred_check
      _
    $region47: #{encoder_forward.1} parent=1 // pred_check_branch
      %50 = sbr.rel (0) target = $region49
    $region48: #{encoder_forward.1} parent=1 // pred_region
      _
    $region49: #{encoder_forward.1} parent=1 // pred_fallthru
      _
    // Predicated region
    $region50: #{encoder_forward.1} parent=1 // pred_check
      _
    $region51: #{encoder_forward.1} parent=1 // pred_check_branch
      %52 = sbr.rel (0) target = $region53
    $region52: #{encoder_forward.1} parent=1 // pred_region
      _
    $region53: #{encoder_forward.1} parent=1 // pred_fallthru
      _
    // Predicated region
    $region54: #{encoder_forward.1} parent=1 // pred_check
      _
    $region55: #{encoder_forward.1} parent=1 // pred_check_branch
      %54 = sbr.rel (0) target = $region57
    $region56: #{encoder_forward.1} parent=1 // pred_region
      _
    $region57: #{encoder_forward.1} parent=1 // pred_fallthru
      _
    // Predicated region
    $region58: #{encoder_forward.1} parent=1 // pred_check
      _
    $region59: #{encoder_forward.1} parent=1 // pred_check_branch
      %56 = sbr.rel (0) target = $region61
    $region60: #{encoder_forward.1} parent=1 // pred_region
      _
    $region61: #{encoder_forward.1} parent=1 // pred_fallthru
      _
    // Predicated region
    $region62: #{encoder_forward.1} parent=1 // pred_check
      _
    $region63: #{encoder_forward.1} parent=1 // pred_check_branch
      %58 = sbr.rel (0) target = $region65
    $region64: #{encoder_forward.1} parent=1 // pred_region
      _
    $region65: #{encoder_forward.1} parent=1 // pred_fallthru
      _
    // Predicated region
    $region66: #{encoder_forward.1} parent=1 // pred_check
      _
    $region67: #{encoder_forward.1} parent=1 // pred_check_branch
      %60 = sbr.rel (0) target = $region69
    $region68: #{encoder_forward.1} parent=1 // pred_region
      _
    $region69: #{encoder_forward.1} parent=1 // pred_fallthru
      _
    // Predicated region
    $region70: #{encoder_forward.1} parent=1 // pred_check
      _
    $region71: #{encoder_forward.1} parent=1 // pred_check_branch
      %62 = sbr.rel (0) target = $region73
    $region72: #{encoder_forward.1} parent=1 // pred_region
      _
    $region73: #{encoder_forward.1} parent=1 // pred_fallthru
      _
    %v63 = vld [vmem:[%s0] sm:$0xff]
    %v64 = vld [vmem:[%s0 + $0x8] sm:$0xff]
    %v65 = vld [vmem:[%s1] sm:$0xff]
    %v66 = vld [vmem:[%s1 + $0x8] sm:$0xff]
    %vm67 = vcmp.ne.s32.totalorder %v65, 0
    %vm68 = vcmp.ne.s32.totalorder %v66, 0
    %v69 = vsel %vm67, 1, 0
    %v70 = vsel %vm68, 1, 0
    %v71 = vcvt.s32.f32 %v69
    %v72 = vcvt.s32.f32 %v70
    %74 = vset.pattern.permute.xlu0 0
    %75 = vperm.xlu0 %74, %v71
    %v76 = vpop.permute.xlu0 %75
    %79 = vset.pattern.permute.xlu0 0
    %80 = vperm.xlu0 %79, %v72
    %v81 = vpop.permute.xlu0 %80
    %v83 = vmul.f32 %v63, %v76
    %v84 = vmul.f32 %v64, %v81
    %v85 = vlaneseq
    %v86 = vshrl.u32 %v85, 7
    %v87 = vlaneseq
    %v88 = vand.u32 %v87, 127
    %vm89 = vcmp.le.s32.totalorder %v88, %v86
    %v90 = vsel %vm89, 0.0, -1e+30
    %v91 = vld [vmem:[%s2] sm:$0x1]
    %v92 = vld [vmem:[%s2 + $0x1] sm:$0x1]
    %v93 = vld [vmem:[%s3] sm:$0x1]
    %v94 = vld [vmem:[%s3 + $0x1] sm:$0x1]
    %v95 = vld [vmem:[%s4] sm:$0xff]
    %v96 = vld [vmem:[%s4 + $0x8] sm:$0xff]
    %v97 = vld [vmem:[%s4 + $0x10] sm:$0xff]
    %v98 = vld [vmem:[%s4 + $0x18] sm:$0xff]
    %v99 = vld [vmem:[%s4 + $0x20] sm:$0xff]
    %v100 = vld [vmem:[%s4 + $0x28] sm:$0xff]
    %v101 = vld [vmem:[%s4 + $0x30] sm:$0xff]
    %v102 = vld [vmem:[%s4 + $0x38] sm:$0xff]
    %v103 = vld [vmem:[%s5] sm:$0x1]
    %v104 = vld [vmem:[%s5 + $0x1] sm:$0x1]
    %v105 = vld [vmem:[%s6] sm:$0xff]
    %v106 = vld [vmem:[%s6 + $0x8] sm:$0xff]
    %v107 = vld [vmem:[%s6 + $0x10] sm:$0xff]
    %v108 = vld [vmem:[%s6 + $0x18] sm:$0xff]
    %v109 = vld [vmem:[%s6 + $0x20] sm:$0xff]
    %v110 = vld [vmem:[%s6 + $0x28] sm:$0xff]
    %v111 = vld [vmem:[%s6 + $0x30] sm:$0xff]
    %v112 = vld [vmem:[%s6 + $0x38] sm:$0xff]
    %v113 = vld [vmem:[%s7] sm:$0x1]
    %v114 = vld [vmem:[%s7 + $0x1] sm:$0x1]
    %v115 = vld [vmem:[%s8] sm:$0xff]
    %v116 = vld [vmem:[%s8 + $0x8] sm:$0xff]
    %v117 = vld [vmem:[%s8 + $0x10] sm:$0xff]
    %v118 = vld [vmem:[%s8 + $0x18] sm:$0xff]
    %v119 = vld [vmem:[%s8 + $0x20] sm:$0xff]
    %v120 = vld [vmem:[%s8 + $0x28] sm:$0xff]
    %v121 = vld [vmem:[%s8 + $0x30] sm:$0xff]
    %v122 = vld [vmem:[%s8 + $0x38] sm:$0xff]
    %v123 = vld [vmem:[%s9] sm:$0x1]
    %v124 = vld [vmem:[%s9 + $0x1] sm:$0x1]
    %v125 = vld [vmem:[%s10] sm:$0x1]
    %v126 = vld [vmem:[%s10 + $0x1] sm:$0x1]
    %v127 = vld [vmem:[%s11] sm:$0x1]
    %v128 = vld [vmem:[%s11 + $0x1] sm:$0x1]
    %v129 = vld [vmem:[%s12] sm:$0xff]
    %v130 = vld [vmem:[%s12 + $0x8] sm:$0xff]
    %v131 = vld [vmem:[%s12 + $0x10] sm:$0xff]
    %v132 = vld [vmem:[%s12 + $0x18] sm:$0xff]
    %v133 = vld [vmem:[%s12 + $0x20] sm:$0xff]
    %v134 = vld [vmem:[%s12 + $0x28] sm:$0xff]
    %v135 = vld [vmem:[%s12 + $0x30] sm:$0xff]
    %v136 = vld [vmem:[%s12 + $0x38] sm:$0xff]
    %v137 = vld [vmem:[%s13] sm:$0x1]
    %v138 = vld [vmem:[%s13 + $0x1] sm:$0x1]
    %v139 = vld [vmem:[%s14] sm:$0xff]
    %v140 = vld [vmem:[%s14 + $0x8] sm:$0xff]
    %v141 = vld [vmem:[%s14 + $0x10] sm:$0xff]
    %v142 = vld [vmem:[%s14 + $0x18] sm:$0xff]
    %v143 = vld [vmem:[%s14 + $0x20] sm:$0xff]
    %v144 = vld [vmem:[%s14 + $0x28] sm:$0xff]
    %v145 = vld [vmem:[%s14 + $0x30] sm:$0xff]
    %v146 = vld [vmem:[%s14 + $0x38] sm:$0xff]
    %v147 = vld [vmem:[%s15] sm:$0x1]
    %v148 = vld [vmem:[%s15 + $0x1] sm:$0x1]
    %v149 = vld [vmem:[%s16] sm:$0x1]
    %v150 = vld [vmem:[%s17] sm:$0x1]
    %vm151 = vcmask 261120
    %v152 = vsel %vm151, %v83, 0.0
    %153 = vadd.xlane.f32.xlu0 %v152
    %v154 = vpop.xlane.xlu0 %153
    %v155 = vsel %vm151, %v84, 0.0
    %156 = vadd.xlane.f32.xlu0 %v155
    %v157 = vpop.xlane.xlu0 %156
    %v158 = vrcp.pop 32.0
    %v159 = vmul.f32 %v154, %v158
    %v160 = vmul.f32 %v157, %v158
    %v161 = vsub.f32 %v83, %v159
    %v162 = vsub.f32 %v84, %v160
    %v163 = vmul.f32 %v161, %v161
    %v164 = vmul.f32 %v162, %v162
    %v165 = vsel %vm151, %v163, 0.0
    %166 = vadd.xlane.f32.xlu0 %v165
    %v167 = vpop.xlane.xlu0 %166
    %v168 = vsel %vm151, %v164, 0.0
    %169 = vadd.xlane.f32.xlu0 %v168
    %v170 = vpop.xlane.xlu0 %169
    %v171 = vmul.f32 %v167, %v158
    %v172 = vmul.f32 %v170, %v158
    %v173 = vadd.f32 %v171, 1e-08
    %v174 = vadd.f32 %v172, 1e-08
    %v175 = vrsqrt.pop %v173
    %v176 = vrsqrt.pop %v174
    %v177 = vmul.f32 %v161, %v175
    %v178 = vmul.f32 %v162, %v176
    %v180 = vlaneseq
    %v181 = vshrl.u32 %v180, 7
    %v182 = vsub.s32 0, %v181
    %v183 = vrot.slane %v91, %v182
    %v185 = vmul.f32 %v177, %v183
    %v186 = vmul.f32 %v178, %v183
    %v188 = vlaneseq
    %v189 = vshrl.u32 %v188, 7
    %v190 = vsub.s32 0, %v189
    %v191 = vrot.slane %v93, %v190
    %v193 = vadd.f32 %v185, %v191
    %v194 = vadd.f32 %v186, %v191
    %v196 = vlaneseq
    %v197 = vshrl.u32 %v196, 7
    %v198 = vsub.s32 0, %v197
    %v199 = vrot.slane %v103, %v198
    %v202 = vsel %vm151, %v193, 0
    %v205 = vsel %vm151, %v194, 0
    %207 = vmatprep.subr.mxu0 0.0
    %208 = vmatpush1.msra.mxu0 %v95
    %209 = vmatprep.subr.mxu0 0.0
    %210 = vmatpush1.msra.mxu0 %v96
    %211 = vmatprep.subr.mxu0 0.0
    %212 = vmatpush1.msra.mxu0 %v97
    %213 = vmatprep.subr.mxu0 0.0
    %214 = vmatpush1.msra.mxu0 %v98
    %215 = vmatprep.subr.mxu0 0.0
    %216 = vmatpush1.msra.mxu0 0.0
    %217 = vmatprep.subr.mxu0 0.0
    %218 = vmatpush1.msra.mxu0 0.0
    %219 = vmatprep.subr.mxu0 0.0
    %220 = vmatpush1.msra.mxu0 0.0
    %221 = vmatprep.subr.mxu0 0.0
    %222 = vmatpush1.msra.mxu0 0.0
    %223 = vmatprep.subr.mxu0 0.0
    %224 = vmatpush1.msra.mxu0 0.0
    %225 = vmatprep.subr.mxu0 0.0
    %226 = vmatpush1.msra.mxu0 0.0
    %227 = vmatprep.subr.mxu0 0.0
    %228 = vmatpush1.msra.mxu0 0.0
    %229 = vmatprep.subr.mxu0 0.0
    %230 = vmatpush1.msra.mxu0 0.0
    %231 = vmatprep.subr.mxu0 0.0
    %232 = vmatpush1.msra.mxu0 0.0
    %233 = vmatprep.subr.mxu0 0.0
    %234 = vmatpush1.msra.mxu0 0.0
    %235 = vmatprep.subr.mxu0 0.0
    %236 = vmatpush1.msra.mxu0 0.0
    %237 = vmatprep.subr.mxu0 0.0
    %238 = vmatpush1.msra.mxu0 0.0
    %239 = vmatprep.subr.mxu0 0.0
    %240 = vmatpush1.msra.mxu0 0.0
    %241 = vmatprep.subr.mxu0 0.0
    %242 = vmatpush1.msra.mxu0 0.0
    %243 = vmatprep.subr.mxu0 0.0
    %244 = vmatpush1.msra.mxu0 0.0
    %245 = vmatprep.subr.mxu0 0.0
    %246 = vmatpush1.msra.mxu0 0.0
    %247 = vmatprep.subr.mxu0 0.0
    %248 = vmatpush1.msra.mxu0 0.0
    %249 = vmatprep.subr.mxu0 0.0
    %250 = vmatpush1.msra.mxu0 0.0
    %251 = vmatprep.subr.mxu0 0.0
    %252 = vmatpush1.msra.mxu0 0.0
    %253 = vmatprep.subr.mxu0 0.0
    %254 = vmatpush1.msra.mxu0 0.0
    %255 = vmatprep.subr.mxu0 0.0
    %256 = vmatpush1.msra.mxu0 0.0
    %257 = vmatprep.subr.mxu0 0.0
    %258 = vmatpush1.msra.mxu0 0.0
    %259 = vmatprep.subr.mxu0 0.0
    %260 = vmatpush1.msra.mxu0 0.0
    %261 = vmatprep.subr.mxu0 0.0
    %262 = vmatpush1.msra.mxu0 0.0
    %263 = vmatprep.subr.mxu0 0.0
    %264 = vmatpush1.msra.mxu0 0.0
    %265 = vmatprep.subr.mxu0 0.0
    %266 = vmatpush1.msra.mxu0 0.0
    %267 = vmatprep.subr.mxu0 0.0
    %268 = vmatpush1.msra.mxu0 0.0
    %269 = vmatprep.subr.mxu0 0.0
    %270 = vmatpush1.msra.mxu0 0.0
    %271 = vmatprep.mubr.f32.mxu0 0.0
    %272 = vmatmul.mubr.f32.gmra.mrb[0].mxu0 %v202
    %v273 = vpop.f32.mrb[0].mxu0
    %v274 = vadd.f32 %v199, %v273
    %v275 = vpop.f32.mrb[0].mxu0
    %276 = vmatprep.mubr.f32.mxu0 0.0
    %277 = vmatmul.mubr.f32.gmra.mrb[0].mxu0 %v205
    %v278 = vpop.f32.mrb[0].mxu0
    %v279 = vadd.f32 %v199, %v278
    %v280 = vpop.f32.mrb[0].mxu0
    %281 = vdwg.mxu0
    %v283 = vlaneseq
    %v284 = vshrl.u32 %v283, 7
    %v285 = vsub.s32 0, %v284
    %v286 = vrot.slane %v113, %v285
    %v289 = vsel %vm151, %v83, 0
    %v292 = vsel %vm151, %v84, 0
    %294 = vmatprep.subr.mxu0 0.0
    %295 = vmatpush1.msra.mxu0 %v105
    %296 = vmatprep.subr.mxu0 0.0
    %297 = vmatpush1.msra.mxu0 %v106
    %298 = vmatprep.subr.mxu0 0.0
    %299 = vmatpush1.msra.mxu0 %v107
    %300 = vmatprep.subr.mxu0 0.0
    %301 = vmatpush1.msra.mxu0 %v108
    %302 = vmatprep.subr.mxu0 0.0
    %303 = vmatpush1.msra.mxu0 0.0
    %304 = vmatprep.subr.mxu0 0.0
    %305 = vmatpush1.msra.mxu0 0.0
    %306 = vmatprep.subr.mxu0 0.0
    %307 = vmatpush1.msra.mxu0 0.0
    %308 = vmatprep.subr.mxu0 0.0
    %309 = vmatpush1.msra.mxu0 0.0
    %310 = vmatprep.subr.mxu0 0.0
    %311 = vmatpush1.msra.mxu0 0.0
    %312 = vmatprep.subr.mxu0 0.0
    %313 = vmatpush1.msra.mxu0 0.0
    %314 = vmatprep.subr.mxu0 0.0
    %315 = vmatpush1.msra.mxu0 0.0
    %316 = vmatprep.subr.mxu0 0.0
    %317 = vmatpush1.msra.mxu0 0.0
    %318 = vmatprep.subr.mxu0 0.0
    %319 = vmatpush1.msra.mxu0 0.0
    %320 = vmatprep.subr.mxu0 0.0
    %321 = vmatpush1.msra.mxu0 0.0
    %322 = vmatprep.subr.mxu0 0.0
    %323 = vmatpush1.msra.mxu0 0.0
    %324 = vmatprep.subr.mxu0 0.0
    %325 = vmatpush1.msra.mxu0 0.0
    %326 = vmatprep.subr.mxu0 0.0
    %327 = vmatpush1.msra.mxu0 0.0
    %328 = vmatprep.subr.mxu0 0.0
    %329 = vmatpush1.msra.mxu0 0.0
    %330 = vmatprep.subr.mxu0 0.0
    %331 = vmatpush1.msra.mxu0 0.0
    %332 = vmatprep.subr.mxu0 0.0
    %333 = vmatpush1.msra.mxu0 0.0
    %334 = vmatprep.subr.mxu0 0.0
    %335 = vmatpush1.msra.mxu0 0.0
    %336 = vmatprep.subr.mxu0 0.0
    %337 = vmatpush1.msra.mxu0 0.0
    %338 = vmatprep.subr.mxu0 0.0
    %339 = vmatpush1.msra.mxu0 0.0
    %340 = vmatprep.subr.mxu0 0.0
    %341 = vmatpush1.msra.mxu0 0.0
    %342 = vmatprep.subr.mxu0 0.0
    %343 = vmatpush1.msra.mxu0 0.0
    %344 = vmatprep.subr.mxu0 0.0
    %345 = vmatpush1.msra.mxu0 0.0
    %346 = vmatprep.subr.mxu0 0.0
    %347 = vmatpush1.msra.mxu0 0.0
    %348 = vmatprep.subr.mxu0 0.0
    %349 = vmatpush1.msra.mxu0 0.0
    %350 = vmatprep.subr.mxu0 0.0
    %351 = vmatpush1.msra.mxu0 0.0
    %352 = vmatprep.subr.mxu0 0.0
    %353 = vmatpush1.msra.mxu0 0.0
    %354 = vmatprep.subr.mxu0 0.0
    %355 = vmatpush1.msra.mxu0 0.0
    %356 = vmatprep.subr.mxu0 0.0
    %357 = vmatpush1.msra.mxu0 0.0
    %358 = vmatprep.mubr.f32.mxu0 0.0
    %359 = vmatmul.mubr.f32.gmra.mrb[0].mxu0 %v289
    %v360 = vpop.f32.mrb[0].mxu0
    %v361 = vadd.f32 %v286, %v360
    %v362 = vpop.f32.mrb[0].mxu0
    %363 = vmatprep.mubr.f32.mxu0 0.0
    %364 = vmatmul.mubr.f32.gmra.mrb[0].mxu0 %v292
    %v365 = vpop.f32.mrb[0].mxu0
    %v366 = vadd.f32 %v286, %v365
    %v367 = vpop.f32.mrb[0].mxu0
    %368 = vdwg.mxu0
    %vm369 = vcmask 130048
    %v371 = vsel %vm369, %v274, 0
    %v374 = vsel %vm369, %v361, 0
    %376 = vmatprep.subr.mxu0 0.0
    %377 = vmatpush1.xpose.msra.mxu0 %v374
    %378 = vmatprep.subr.mxu0 0.0
    %379 = vmatpush1.xpose.msra.mxu0 0.0
    %380 = vmatprep.subr.mxu0 0.0
    %381 = vmatpush1.xpose.msra.mxu0 0.0
    %382 = vmatprep.subr.mxu0 0.0
    %383 = vmatpush1.xpose.msra.mxu0 0.0
    %384 = vmatprep.subr.mxu0 0.0
    %385 = vmatpush1.xpose.msra.mxu0 0.0
    %386 = vmatprep.subr.mxu0 0.0
    %387 = vmatpush1.xpose.msra.mxu0 0.0
    %388 = vmatprep.subr.mxu0 0.0
    %389 = vmatpush1.xpose.msra.mxu0 0.0
    %390 = vmatprep.subr.mxu0 0.0
    %391 = vmatpush1.xpose.msra.mxu0 0.0
    %392 = vmatprep.subr.mxu0 0.0
    %393 = vmatpush1.xpose.msra.mxu0 0.0
    %394 = vmatprep.subr.mxu0 0.0
    %395 = vmatpush1.xpose.msra.mxu0 0.0
    %396 = vmatprep.subr.mxu0 0.0
    %397 = vmatpush1.xpose.msra.mxu0 0.0
    %398 = vmatprep.subr.mxu0 0.0
    %399 = vmatpush1.xpose.msra.mxu0 0.0
    %400 = vmatprep.subr.mxu0 0.0
    %401 = vmatpush1.xpose.msra.mxu0 0.0
    %402 = vmatprep.subr.mxu0 0.0
    %403 = vmatpush1.xpose.msra.mxu0 0.0
    %404 = vmatprep.subr.mxu0 0.0
    %405 = vmatpush1.xpose.msra.mxu0 0.0
    %406 = vmatprep.subr.mxu0 0.0
    %407 = vmatpush1.xpose.msra.mxu0 0.0
    %408 = vmatprep.subr.mxu0 0.0
    %409 = vmatpush1.xpose.msra.mxu0 0.0
    %410 = vmatprep.subr.mxu0 0.0
    %411 = vmatpush1.xpose.msra.mxu0 0.0
    %412 = vmatprep.subr.mxu0 0.0
    %413 = vmatpush1.xpose.msra.mxu0 0.0
    %414 = vmatprep.subr.mxu0 0.0
    %415 = vmatpush1.xpose.msra.mxu0 0.0
    %416 = vmatprep.subr.mxu0 0.0
    %417 = vmatpush1.xpose.msra.mxu0 0.0
    %418 = vmatprep.subr.mxu0 0.0
    %419 = vmatpush1.xpose.msra.mxu0 0.0
    %420 = vmatprep.subr.mxu0 0.0
    %421 = vmatpush1.xpose.msra.mxu0 0.0
    %422 = vmatprep.subr.mxu0 0.0
    %423 = vmatpush1.xpose.msra.mxu0 0.0
    %424 = vmatprep.subr.mxu0 0.0
    %425 = vmatpush1.xpose.msra.mxu0 0.0
    %426 = vmatprep.subr.mxu0 0.0
    %427 = vmatpush1.xpose.msra.mxu0 0.0
    %428 = vmatprep.subr.mxu0 0.0
    %429 = vmatpush1.xpose.msra.mxu0 0.0
    %430 = vmatprep.subr.mxu0 0.0
    %431 = vmatpush1.xpose.msra.mxu0 0.0
    %432 = vmatprep.subr.mxu0 0.0
    %433 = vmatpush1.xpose.msra.mxu0 0.0
    %434 = vmatprep.subr.mxu0 0.0
    %435 = vmatpush1.xpose.msra.mxu0 0.0
    %436 = vmatprep.subr.mxu0 0.0
    %437 = vmatpush1.xpose.msra.mxu0 0.0
    %438 = vmatprep.subr.mxu0 0.0
    %439 = vmatpush1.xpose.msra.mxu0 0.0
    %440 = vmatprep.mubr.f32.mxu0 0.0
    %441 = vmatmul.mubr.f32.gmra.mrb[0].mxu0 %v371
    %v442 = vpop.f32.mrb[0].mxu0
    %v443 = vadd.f32 %v90, %v442
    %v444 = vpop.f32.mrb[0].mxu0
    %445 = vdwg.mxu0
    %v447 = vsel %vm369, %v279, 0
    %v450 = vsel %vm369, %v366, 0
    %452 = vmatprep.subr.mxu0 0.0
    %453 = vmatpush1.xpose.msra.mxu0 %v450
    %454 = vmatprep.subr.mxu0 0.0
    %455 = vmatpush1.xpose.msra.mxu0 0.0
    %456 = vmatprep.subr.mxu0 0.0
    %457 = vmatpush1.xpose.msra.mxu0 0.0
    %458 = vmatprep.subr.mxu0 0.0
    %459 = vmatpush1.xpose.msra.mxu0 0.0
    %460 = vmatprep.subr.mxu0 0.0
    %461 = vmatpush1.xpose.msra.mxu0 0.0
    %462 = vmatprep.subr.mxu0 0.0
    %463 = vmatpush1.xpose.msra.mxu0 0.0
    %464 = vmatprep.subr.mxu0 0.0
    %465 = vmatpush1.xpose.msra.mxu0 0.0
    %466 = vmatprep.subr.mxu0 0.0
    %467 = vmatpush1.xpose.msra.mxu0 0.0
    %468 = vmatprep.subr.mxu0 0.0
    %469 = vmatpush1.xpose.msra.mxu0 0.0
    %470 = vmatprep.subr.mxu0 0.0
    %471 = vmatpush1.xpose.msra.mxu0 0.0
    %472 = vmatprep.subr.mxu0 0.0
    %473 = vmatpush1.xpose.msra.mxu0 0.0
    %474 = vmatprep.subr.mxu0 0.0
    %475 = vmatpush1.xpose.msra.mxu0 0.0
    %476 = vmatprep.subr.mxu0 0.0
    %477 = vmatpush1.xpose.msra.mxu0 0.0
    %478 = vmatprep.subr.mxu0 0.0
    %479 = vmatpush1.xpose.msra.mxu0 0.0
    %480 = vmatprep.subr.mxu0 0.0
    %481 = vmatpush1.xpose.msra.mxu0 0.0
    %482 = vmatprep.subr.mxu0 0.0
    %483 = vmatpush1.xpose.msra.mxu0 0.0
    %484 = vmatprep.subr.mxu0 0.0
    %485 = vmatpush1.xpose.msra.mxu0 0.0
    %486 = vmatprep.subr.mxu0 0.0
    %487 = vmatpush1.xpose.msra.mxu0 0.0
    %488 = vmatprep.subr.mxu0 0.0
    %489 = vmatpush1.xpose.msra.mxu0 0.0
    %490 = vmatprep.subr.mxu0 0.0
    %491 = vmatpush1.xpose.msra.mxu0 0.0
    %492 = vmatprep.subr.mxu0 0.0
    %493 = vmatpush1.xpose.msra.mxu0 0.0
    %494 = vmatprep.subr.mxu0 0.0
    %495 = vmatpush1.xpose.msra.mxu0 0.0
    %496 = vmatprep.subr.mxu0 0.0
    %497 = vmatpush1.xpose.msra.mxu0 0.0
    %498 = vmatprep.subr.mxu0 0.0
    %499 = vmatpush1.xpose.msra.mxu0 0.0
    %500 = vmatprep.subr.mxu0 0.0
    %501 = vmatpush1.xpose.msra.mxu0 0.0
    %502 = vmatprep.subr.mxu0 0.0
    %503 = vmatpush1.xpose.msra.mxu0 0.0
    %504 = vmatprep.subr.mxu0 0.0
    %505 = vmatpush1.xpose.msra.mxu0 0.0
    %506 = vmatprep.subr.mxu0 0.0
    %507 = vmatpush1.xpose.msra.mxu0 0.0
    %508 = vmatprep.subr.mxu0 0.0
    %509 = vmatpush1.xpose.msra.mxu0 0.0
    %510 = vmatprep.subr.mxu0 0.0
    %511 = vmatpush1.xpose.msra.mxu0 0.0
    %512 = vmatprep.subr.mxu0 0.0
    %513 = vmatpush1.xpose.msra.mxu0 0.0
    %514 = vmatprep.subr.mxu0 0.0
    %515 = vmatpush1.xpose.msra.mxu0 0.0
    %516 = vmatprep.mubr.f32.mxu0 0.0
    %517 = vmatmul.mubr.f32.gmra.mrb[0].mxu0 %v447
    %v518 = vpop.f32.mrb[0].mxu0
    %v519 = vadd.f32 %v90, %v518
    %v520 = vpop.f32.mrb[0].mxu0
    %521 = vdwg.mxu0
    %vm522 = vcmask 64512
    %v523 = vsel %vm522, %v443, -inf
    %524 = vmax.xlane.f32.xlu0 %v523
    %v525 = vpop.xlane.xlu0 %524
    %v526 = vsel %vm522, %v519, -inf
    %527 = vmax.xlane.f32.xlu0 %v526
    %v528 = vpop.xlane.xlu0 %527
    %v529 = vsub.f32 %v443, %v525
    %v530 = vsub.f32 %v519, %v528
    %v531 = vmul.f32 %v529, 1.442695
    %v532 = vpow.pop %v531
    %v533 = vmul.f32 %v530, 1.442695
    %v534 = vpow.pop %v533
    %v535 = vsel %vm522, %v532, 0.0
    %536 = vadd.xlane.f32.xlu0 %v535
    %v537 = vpop.xlane.xlu0 %536
    %v538 = vsel %vm522, %v534, 0.0
    %539 = vadd.xlane.f32.xlu0 %v538
    %v540 = vpop.xlane.xlu0 %539
    %v541 = vrcp.pop %v537
    %v542 = vmul.f32 %v532, %v541
    %v543 = vrcp.pop %v540
    %v544 = vmul.f32 %v534, %v543
    %545 = vrot.lane.b32.xlu0 %v361, 96
    %v546 = vpop.permute.xlu0 %545
    %v549 = vsel %vm522, %v542, 0
    %551 = vmatprep.subr.mxu0 0.0
    %552 = vmatpush1.msra.mxu0 %v546
    %553 = vmatprep.subr.mxu0 0.0
    %554 = vmatpush1.msra.mxu0 0.0
    %555 = vmatprep.subr.mxu0 0.0
    %556 = vmatpush1.msra.mxu0 0.0
    %557 = vmatprep.subr.mxu0 0.0
    %558 = vmatpush1.msra.mxu0 0.0
    %559 = vmatprep.subr.mxu0 0.0
    %560 = vmatpush1.msra.mxu0 0.0
    %561 = vmatprep.subr.mxu0 0.0
    %562 = vmatpush1.msra.mxu0 0.0
    %563 = vmatprep.subr.mxu0 0.0
    %564 = vmatpush1.msra.mxu0 0.0
    %565 = vmatprep.subr.mxu0 0.0
    %566 = vmatpush1.msra.mxu0 0.0
    %567 = vmatprep.subr.mxu0 0.0
    %568 = vmatpush1.msra.mxu0 0.0
    %569 = vmatprep.subr.mxu0 0.0
    %570 = vmatpush1.msra.mxu0 0.0
    %571 = vmatprep.subr.mxu0 0.0
    %572 = vmatpush1.msra.mxu0 0.0
    %573 = vmatprep.subr.mxu0 0.0
    %574 = vmatpush1.msra.mxu0 0.0
    %575 = vmatprep.subr.mxu0 0.0
    %576 = vmatpush1.msra.mxu0 0.0
    %577 = vmatprep.subr.mxu0 0.0
    %578 = vmatpush1.msra.mxu0 0.0
    %579 = vmatprep.subr.mxu0 0.0
    %580 = vmatpush1.msra.mxu0 0.0
    %581 = vmatprep.subr.mxu0 0.0
    %582 = vmatpush1.msra.mxu0 0.0
    %583 = vmatprep.subr.mxu0 0.0
    %584 = vmatpush1.msra.mxu0 0.0
    %585 = vmatprep.subr.mxu0 0.0
    %586 = vmatpush1.msra.mxu0 0.0
    %587 = vmatprep.subr.mxu0 0.0
    %588 = vmatpush1.msra.mxu0 0.0
    %589 = vmatprep.subr.mxu0 0.0
    %590 = vmatpush1.msra.mxu0 0.0
    %591 = vmatprep.subr.mxu0 0.0
    %592 = vmatpush1.msra.mxu0 0.0
    %593 = vmatprep.subr.mxu0 0.0
    %594 = vmatpush1.msra.mxu0 0.0
    %595 = vmatprep.subr.mxu0 0.0
    %596 = vmatpush1.msra.mxu0 0.0
    %597 = vmatprep.subr.mxu0 0.0
    %598 = vmatpush1.msra.mxu0 0.0
    %599 = vmatprep.subr.mxu0 0.0
    %600 = vmatpush1.msra.mxu0 0.0
    %601 = vmatprep.subr.mxu0 0.0
    %602 = vmatpush1.msra.mxu0 0.0
    %603 = vmatprep.subr.mxu0 0.0
    %604 = vmatpush1.msra.mxu0 0.0
    %605 = vmatprep.subr.mxu0 0.0
    %606 = vmatpush1.msra.mxu0 0.0
    %607 = vmatprep.subr.mxu0 0.0
    %608 = vmatpush1.msra.mxu0 0.0
    %609 = vmatprep.subr.mxu0 0.0
    %610 = vmatpush1.msra.mxu0 0.0
    %611 = vmatprep.subr.mxu0 0.0
    %612 = vmatpush1.msra.mxu0 0.0
    %613 = vmatprep.subr.mxu0 0.0
    %614 = vmatpush1.msra.mxu0 0.0
    %615 = vmatprep.mubr.f32.mxu0 0.0
    %616 = vmatmul.mubr.f32.gmra.mrb[0].mxu0 %v549
    %v617 = vpop.f32.mrb[0].mxu0
    %v618 = vadd.f32 0.0, %v617
    %v619 = vpop.f32.mrb[0].mxu0
    %620 = vdwg.mxu0
    %621 = vrot.lane.b32.xlu0 %v366, 96
    %v622 = vpop.permute.xlu0 %621
    %v625 = vsel %vm522, %v544, 0
    %627 = vmatprep.subr.mxu0 0.0
    %628 = vmatpush1.msra.mxu0 %v622
    %629 = vmatprep.subr.mxu0 0.0
    %630 = vmatpush1.msra.mxu0 0.0
    %631 = vmatprep.subr.mxu0 0.0
    %632 = vmatpush1.msra.mxu0 0.0
    %633 = vmatprep.subr.mxu0 0.0
    %634 = vmatpush1.msra.mxu0 0.0
    %635 = vmatprep.subr.mxu0 0.0
    %636 = vmatpush1.msra.mxu0 0.0
    %637 = vmatprep.subr.mxu0 0.0
    %638 = vmatpush1.msra.mxu0 0.0
    %639 = vmatprep.subr.mxu0 0.0
    %640 = vmatpush1.msra.mxu0 0.0
    %641 = vmatprep.subr.mxu0 0.0
    %642 = vmatpush1.msra.mxu0 0.0
    %643 = vmatprep.subr.mxu0 0.0
    %644 = vmatpush1.msra.mxu0 0.0
    %645 = vmatprep.subr.mxu0 0.0
    %646 = vmatpush1.msra.mxu0 0.0
    %647 = vmatprep.subr.mxu0 0.0
    %648 = vmatpush1.msra.mxu0 0.0
    %649 = vmatprep.subr.mxu0 0.0
    %650 = vmatpush1.msra.mxu0 0.0
    %651 = vmatprep.subr.mxu0 0.0
    %652 = vmatpush1.msra.mxu0 0.0
    %653 = vmatprep.subr.mxu0 0.0
    %654 = vmatpush1.msra.mxu0 0.0
    %655 = vmatprep.subr.mxu0 0.0
    %656 = vmatpush1.msra.mxu0 0.0
    %657 = vmatprep.subr.mxu0 0.0
    %658 = vmatpush1.msra.mxu0 0.0
    %659 = vmatprep.subr.mxu0 0.0
    %660 = vmatpush1.msra.mxu0 0.0
    %661 = vmatprep.subr.mxu0 0.0
    %662 = vmatpush1.msra.mxu0 0.0
    %663 = vmatprep.subr.mxu0 0.0
    %664 = vmatpush1.msra.mxu0 0.0
    %665 = vmatprep.subr.mxu0 0.0
    %666 = vmatpush1.msra.mxu0 0.0
    %667 = vmatprep.subr.mxu0 0.0
    %668 = vmatpush1.msra.mxu0 0.0
    %669 = vmatprep.subr.mxu0 0.0
    %670 = vmatpush1.msra.mxu0 0.0
    %671 = vmatprep.subr.mxu0 0.0
    %672 = vmatpush1.msra.mxu0 0.0
    %673 = vmatprep.subr.mxu0 0.0
    %674 = vmatpush1.msra.mxu0 0.0
    %675 = vmatprep.subr.mxu0 0.0
    %676 = vmatpush1.msra.mxu0 0.0
    %677 = vmatprep.subr.mxu0 0.0
    %678 = vmatpush1.msra.mxu0 0.0
    %679 = vmatprep.subr.mxu0 0.0
    %680 = vmatpush1.msra.mxu0 0.0
    %681 = vmatprep.subr.mxu0 0.0
    %682 = vmatpush1.msra.mxu0 0.0
    %683 = vmatprep.subr.mxu0 0.0
    %684 = vmatpush1.msra.mxu0 0.0
    %685 = vmatprep.subr.mxu0 0.0
    %686 = vmatpush1.msra.mxu0 0.0
    %687 = vmatprep.subr.mxu0 0.0
    %688 = vmatpush1.msra.mxu0 0.0
    %689 = vmatprep.subr.mxu0 0.0
    %690 = vmatpush1.msra.mxu0 0.0
    %691 = vmatprep.mubr.f32.mxu0 0.0
    %692 = vmatmul.mubr.f32.gmra.mrb[0].mxu0 %v625
    %v693 = vpop.f32.mrb[0].mxu0
    %v694 = vadd.f32 0.0, %v693
    %v695 = vpop.f32.mrb[0].mxu0
    %696 = vdwg.mxu0
    %697 = vrot.lane.b32.xlu0 %v274, 112
    %v698 = vpop.permute.xlu0 %697
    %699 = vrot.lane.b32.xlu0 %v361, 112
    %v700 = vpop.permute.xlu0 %699
    %v701 = vsel %vm369, %v698, 0
    %v703 = vsel %vm369, %v700, 0
    %705 = vmatprep.subr.mxu0 0.0
    %706 = vmatpush1.xpose.msra.mxu0 %v703
    %707 = vmatprep.subr.mxu0 0.0
    %708 = vmatpush1.xpose.msra.mxu0 0.0
    %709 = vmatprep.subr.mxu0 0.0
    %710 = vmatpush1.xpose.msra.mxu0 0.0
    %711 = vmatprep.subr.mxu0 0.0
    %712 = vmatpush1.xpose.msra.mxu0 0.0
    %713 = vmatprep.subr.mxu0 0.0
    %714 = vmatpush1.xpose.msra.mxu0 0.0
    %715 = vmatprep.subr.mxu0 0.0
    %716 = vmatpush1.xpose.msra.mxu0 0.0
    %717 = vmatprep.subr.mxu0 0.0
    %718 = vmatpush1.xpose.msra.mxu0 0.0
    %719 = vmatprep.subr.mxu0 0.0
    %720 = vmatpush1.xpose.msra.mxu0 0.0
    %721 = vmatprep.subr.mxu0 0.0
    %722 = vmatpush1.xpose.msra.mxu0 0.0
    %723 = vmatprep.subr.mxu0 0.0
    %724 = vmatpush1.xpose.msra.mxu0 0.0
    %725 = vmatprep.subr.mxu0 0.0
    %726 = vmatpush1.xpose.msra.mxu0 0.0
    %727 = vmatprep.subr.mxu0 0.0
    %728 = vmatpush1.xpose.msra.mxu0 0.0
    %729 = vmatprep.subr.mxu0 0.0
    %730 = vmatpush1.xpose.msra.mxu0 0.0
    %731 = vmatprep.subr.mxu0 0.0
    %732 = vmatpush1.xpose.msra.mxu0 0.0
    %733 = vmatprep.subr.mxu0 0.0
    %734 = vmatpush1.xpose.msra.mxu0 0.0
    %735 = vmatprep.subr.mxu0 0.0
    %736 = vmatpush1.xpose.msra.mxu0 0.0
    %737 = vmatprep.subr.mxu0 0.0
    %738 = vmatpush1.xpose.msra.mxu0 0.0
    %739 = vmatprep.subr.mxu0 0.0
    %740 = vmatpush1.xpose.msra.mxu0 0.0
    %741 = vmatprep.subr.mxu0 0.0
    %742 = vmatpush1.xpose.msra.mxu0 0.0
    %743 = vmatprep.subr.mxu0 0.0
    %744 = vmatpush1.xpose.msra.mxu0 0.0
    %745 = vmatprep.subr.mxu0 0.0
    %746 = vmatpush1.xpose.msra.mxu0 0.0
    %747 = vmatprep.subr.mxu0 0.0
    %748 = vmatpush1.xpose.msra.mxu0 0.0
    %749 = vmatprep.subr.mxu0 0.0
    %750 = vmatpush1.xpose.msra.mxu0 0.0
    %751 = vmatprep.subr.mxu0 0.0
    %752 = vmatpush1.xpose.msra.mxu0 0.0
    %753 = vmatprep.subr.mxu0 0.0
    %754 = vmatpush1.xpose.msra.mxu0 0.0
    %755 = vmatprep.subr.mxu0 0.0
    %756 = vmatpush1.xpose.msra.mxu0 0.0
    %757 = vmatprep.subr.mxu0 0.0
    %758 = vmatpush1.xpose.msra.mxu0 0.0
    %759 = vmatprep.subr.mxu0 0.0
    %760 = vmatpush1.xpose.msra.mxu0 0.0
    %761 = vmatprep.subr.mxu0 0.0
    %762 = vmatpush1.xpose.msra.mxu0 0.0
    %763 = vmatprep.subr.mxu0 0.0
    %764 = vmatpush1.xpose.msra.mxu0 0.0
    %765 = vmatprep.subr.mxu0 0.0
    %766 = vmatpush1.xpose.msra.mxu0 0.0
    %767 = vmatprep.subr.mxu0 0.0
    %768 = vmatpush1.xpose.msra.mxu0 0.0
    %769 = vmatprep.mubr.f32.mxu0 0.0
    %770 = vmatmul.mubr.f32.gmra.mrb[0].mxu0 %v701
    %v771 = vpop.f32.mrb[0].mxu0
    %v772 = vadd.f32 %v90, %v771
    %v773 = vpop.f32.mrb[0].mxu0
    %774 = vdwg.mxu0
    %775 = vrot.lane.b32.xlu0 %v279, 112
    %v776 = vpop.permute.xlu0 %775
    %777 = vrot.lane.b32.xlu0 %v366, 112
    %v778 = vpop.permute.xlu0 %777
    %v779 = vsel %vm369, %v776, 0
    %v781 = vsel %vm369, %v778, 0
    %783 = vmatprep.subr.mxu0 0.0
    %784 = vmatpush1.xpose.msra.mxu0 %v781
    %785 = vmatprep.subr.mxu0 0.0
    %786 = vmatpush1.xpose.msra.mxu0 0.0
    %787 = vmatprep.subr.mxu0 0.0
    %788 = vmatpush1.xpose.msra.mxu0 0.0
    %789 = vmatprep.subr.mxu0 0.0
    %790 = vmatpush1.xpose.msra.mxu0 0.0
    %791 = vmatprep.subr.mxu0 0.0
    %792 = vmatpush1.xpose.msra.mxu0 0.0
    %793 = vmatprep.subr.mxu0 0.0
    %794 = vmatpush1.xpose.msra.mxu0 0.0
    %795 = vmatprep.subr.mxu0 0.0
    %796 = vmatpush1.xpose.msra.mxu0 0.0
    %797 = vmatprep.subr.mxu0 0.0
    %798 = vmatpush1.xpose.msra.mxu0 0.0
    %799 = vmatprep.subr.mxu0 0.0
    %800 = vmatpush1.xpose.msra.mxu0 0.0
    %801 = vmatprep.subr.mxu0 0.0
    %802 = vmatpush1.xpose.msra.mxu0 0.0
    %803 = vmatprep.subr.mxu0 0.0
    %804 = vmatpush1.xpose.msra.mxu0 0.0
    %805 = vmatprep.subr.mxu0 0.0
    %806 = vmatpush1.xpose.msra.mxu0 0.0
    %807 = vmatprep.subr.mxu0 0.0
    %808 = vmatpush1.xpose.msra.mxu0 0.0
    %809 = vmatprep.subr.mxu0 0.0
    %810 = vmatpush1.xpose.msra.mxu0 0.0
    %811 = vmatprep.subr.mxu0 0.0
    %812 = vmatpush1.xpose.msra.mxu0 0.0
    %813 = vmatprep.subr.mxu0 0.0
    %814 = vmatpush1.xpose.msra.mxu0 0.0
    %815 = vmatprep.subr.mxu0 0.0
    %816 = vmatpush1.xpose.msra.mxu0 0.0
    %817 = vmatprep.subr.mxu0 0.0
    %818 = vmatpush1.xpose.msra.mxu0 0.0
    %819 = vmatprep.subr.mxu0 0.0
    %820 = vmatpush1.xpose.msra.mxu0 0.0
    %821 = vmatprep.subr.mxu0 0.0
    %822 = vmatpush1.xpose.msra.mxu0 0.0
    %823 = vmatprep.subr.mxu0 0.0
    %824 = vmatpush1.xpose.msra.mxu0 0.0
    %825 = vmatprep.subr.mxu0 0.0
    %826 = vmatpush1.xpose.msra.mxu0 0.0
    %827 = vmatprep.subr.mxu0 0.0
    %828 = vmatpush1.xpose.msra.mxu0 0.0
    %829 = vmatprep.subr.mxu0 0.0
    %830 = vmatpush1.xpose.msra.mxu0 0.0
    %831 = vmatprep.subr.mxu0 0.0
    %832 = vmatpush1.xpose.msra.mxu0 0.0
    %833 = vmatprep.subr.mxu0 0.0
    %834 = vmatpush1.xpose.msra.mxu0 0.0
    %835 = vmatprep.subr.mxu0 0.0
    %836 = vmatpush1.xpose.msra.mxu0 0.0
    %837 = vmatprep.subr.mxu0 0.0
    %838 = vmatpush1.xpose.msra.mxu0 0.0
    %839 = vmatprep.subr.mxu0 0.0
    %840 = vmatpush1.xpose.msra.mxu0 0.0
    %841 = vmatprep.subr.mxu0 0.0
    %842 = vmatpush1.xpose.msra.mxu0 0.0
    %843 = vmatprep.subr.mxu0 0.0
    %844 = vmatpush1.xpose.msra.mxu0 0.0
    %845 = vmatprep.subr.mxu0 0.0
    %846 = vmatpush1.xpose.msra.mxu0 0.0
    %847 = vmatprep.mubr.f32.mxu0 0.0
    %848 = vmatmul.mubr.f32.gmra.mrb[0].mxu0 %v779
    %v849 = vpop.f32.mrb[0].mxu0
    %v850 = vadd.f32 %v90, %v849
    %v851 = vpop.f32.mrb[0].mxu0
    %852 = vdwg.mxu0
    %v853 = vsel %vm522, %v772, -inf
    %854 = vmax.xlane.f32.xlu0 %v853
    %v855 = vpop.xlane.xlu0 %854
    %v856 = vsel %vm522, %v850, -inf
    %857 = vmax.xlane.f32.xlu0 %v856
    %v858 = vpop.xlane.xlu0 %857
    %v859 = vsub.f32 %v772, %v855
    %v860 = vsub.f32 %v850, %v858
    %v861 = vmul.f32 %v859, 1.442695
    %v862 = vpow.pop %v861
    %v863 = vmul.f32 %v860, 1.442695
    %v864 = vpow.pop %v863
    %v865 = vsel %vm522, %v862, 0.0
    %866 = vadd.xlane.f32.xlu0 %v865
    %v867 = vpop.xlane.xlu0 %866
    %v868 = vsel %vm522, %v864, 0.0
    %869 = vadd.xlane.f32.xlu0 %v868
    %v870 = vpop.xlane.xlu0 %869
    %v871 = vrcp.pop %v867
    %v872 = vmul.f32 %v862, %v871
    %v873 = vrcp.pop %v870
    %v874 = vmul.f32 %v864, %v873
    %875 = vrot.lane.b32.xlu0 %v361, 80
    %v876 = vpop.permute.xlu0 %875
    %v879 = vsel %vm522, %v872, 0
    %881 = vmatprep.subr.mxu0 0.0
    %882 = vmatpush1.msra.mxu0 %v876
    %883 = vmatprep.subr.mxu0 0.0
    %884 = vmatpush1.msra.mxu0 0.0
    %885 = vmatprep.subr.mxu0 0.0
    %886 = vmatpush1.msra.mxu0 0.0
    %887 = vmatprep.subr.mxu0 0.0
    %888 = vmatpush1.msra.mxu0 0.0
    %889 = vmatprep.subr.mxu0 0.0
    %890 = vmatpush1.msra.mxu0 0.0
    %891 = vmatprep.subr.mxu0 0.0
    %892 = vmatpush1.msra.mxu0 0.0
    %893 = vmatprep.subr.mxu0 0.0
    %894 = vmatpush1.msra.mxu0 0.0
    %895 = vmatprep.subr.mxu0 0.0
    %896 = vmatpush1.msra.mxu0 0.0
    %897 = vmatprep.subr.mxu0 0.0
    %898 = vmatpush1.msra.mxu0 0.0
    %899 = vmatprep.subr.mxu0 0.0
    %900 = vmatpush1.msra.mxu0 0.0
    %901 = vmatprep.subr.mxu0 0.0
    %902 = vmatpush1.msra.mxu0 0.0
    %903 = vmatprep.subr.mxu0 0.0
    %904 = vmatpush1.msra.mxu0 0.0
    %905 = vmatprep.subr.mxu0 0.0
    %906 = vmatpush1.msra.mxu0 0.0
    %907 = vmatprep.subr.mxu0 0.0
    %908 = vmatpush1.msra.mxu0 0.0
    %909 = vmatprep.subr.mxu0 0.0
    %910 = vmatpush1.msra.mxu0 0.0
    %911 = vmatprep.subr.mxu0 0.0
    %912 = vmatpush1.msra.mxu0 0.0
    %913 = vmatprep.subr.mxu0 0.0
    %914 = vmatpush1.msra.mxu0 0.0
    %915 = vmatprep.subr.mxu0 0.0
    %916 = vmatpush1.msra.mxu0 0.0
    %917 = vmatprep.subr.mxu0 0.0
    %918 = vmatpush1.msra.mxu0 0.0
    %919 = vmatprep.subr.mxu0 0.0
    %920 = vmatpush1.msra.mxu0 0.0
    %921 = vmatprep.subr.mxu0 0.0
    %922 = vmatpush1.msra.mxu0 0.0
    %923 = vmatprep.subr.mxu0 0.0
    %924 = vmatpush1.msra.mxu0 0.0
    %925 = vmatprep.subr.mxu0 0.0
    %926 = vmatpush1.msra.mxu0 0.0
    %927 = vmatprep.subr.mxu0 0.0
    %928 = vmatpush1.msra.mxu0 0.0
    %929 = vmatprep.subr.mxu0 0.0
    %930 = vmatpush1.msra.mxu0 0.0
    %931 = vmatprep.subr.mxu0 0.0
    %932 = vmatpush1.msra.mxu0 0.0
    %933 = vmatprep.subr.mxu0 0.0
    %934 = vmatpush1.msra.mxu0 0.0
    %935 = vmatprep.subr.mxu0 0.0
    %936 = vmatpush1.msra.mxu0 0.0
    %937 = vmatprep.subr.mxu0 0.0
    %938 = vmatpush1.msra.mxu0 0.0
    %939 = vmatprep.subr.mxu0 0.0
    %940 = vmatpush1.msra.mxu0 0.0
    %941 = vmatprep.subr.mxu0 0.0
    %942 = vmatpush1.msra.mxu0 0.0
    %943 = vmatprep.subr.mxu0 0.0
    %944 = vmatpush1.msra.mxu0 0.0
    %945 = vmatprep.mubr.f32.mxu0 0.0
    %946 = vmatmul.mubr.f32.gmra.mrb[0].mxu0 %v879
    %v947 = vpop.f32.mrb[0].mxu0
    %v948 = vadd.f32 0.0, %v947
    %v949 = vpop.f32.mrb[0].mxu0
    %950 = vdwg.mxu0
    %951 = vrot.lane.b32.xlu0 %v366, 80
    %v952 = vpop.permute.xlu0 %951
    %v955 = vsel %vm522, %v874, 0
    %957 = vmatprep.subr.mxu0 0.0
    %958 = vmatpush1.msra.mxu0 %v952
    %959 = vmatprep.subr.mxu0 0.0
    %960 = vmatpush1.msra.mxu0 0.0
    %961 = vmatprep.subr.mxu0 0.0
    %962 = vmatpush1.msra.mxu0 0.0
    %963 = vmatprep.subr.mxu0 0.0
    %964 = vmatpush1.msra.mxu0 0.0
    %965 = vmatprep.subr.mxu0 0.0
    %966 = vmatpush1.msra.mxu0 0.0
    %967 = vmatprep.subr.mxu0 0.0
    %968 = vmatpush1.msra.mxu0 0.0
    %969 = vmatprep.subr.mxu0 0.0
    %970 = vmatpush1.msra.mxu0 0.0
    %971 = vmatprep.subr.mxu0 0.0
    %972 = vmatpush1.msra.mxu0 0.0
    %973 = vmatprep.subr.mxu0 0.0
    %974 = vmatpush1.msra.mxu0 0.0
    %975 = vmatprep.subr.mxu0 0.0
    %976 = vmatpush1.msra.mxu0 0.0
    %977 = vmatprep.subr.mxu0 0.0
    %978 = vmatpush1.msra.mxu0 0.0
    %979 = vmatprep.subr.mxu0 0.0
    %980 = vmatpush1.msra.mxu0 0.0
    %981 = vmatprep.subr.mxu0 0.0
    %982 = vmatpush1.msra.mxu0 0.0
    %983 = vmatprep.subr.mxu0 0.0
    %984 = vmatpush1.msra.mxu0 0.0
    %985 = vmatprep.subr.mxu0 0.0
    %986 = vmatpush1.msra.mxu0 0.0
    %987 = vmatprep.subr.mxu0 0.0
    %988 = vmatpush1.msra.mxu0 0.0
    %989 = vmatprep.subr.mxu0 0.0
    %990 = vmatpush1.msra.mxu0 0.0
    %991 = vmatprep.subr.mxu0 0.0
    %992 = vmatpush1.msra.mxu0 0.0
    %993 = vmatprep.subr.mxu0 0.0
    %994 = vmatpush1.msra.mxu0 0.0
    %995 = vmatprep.subr.mxu0 0.0
    %996 = vmatpush1.msra.mxu0 0.0
    %997 = vmatprep.subr.mxu0 0.0
    %998 = vmatpush1.msra.mxu0 0.0
    %999 = vmatprep.subr.mxu0 0.0
    %1000 = vmatpush1.msra.mxu0 0.0
    %1001 = vmatprep.subr.mxu0 0.0
    %1002 = vmatpush1.msra.mxu0 0.0
    %1003 = vmatprep.subr.mxu0 0.0
    %1004 = vmatpush1.msra.mxu0 0.0
    %1005 = vmatprep.subr.mxu0 0.0
    %1006 = vmatpush1.msra.mxu0 0.0
    %1007 = vmatprep.subr.mxu0 0.0
    %1008 = vmatpush1.msra.mxu0 0.0
    %1009 = vmatprep.subr.mxu0 0.0
    %1010 = vmatpush1.msra.mxu0 0.0
    %1011 = vmatprep.subr.mxu0 0.0
    %1012 = vmatpush1.msra.mxu0 0.0
    %1013 = vmatprep.subr.mxu0 0.0
    %1014 = vmatpush1.msra.mxu0 0.0
    %1015 = vmatprep.subr.mxu0 0.0
    %1016 = vmatpush1.msra.mxu0 0.0
    %1017 = vmatprep.subr.mxu0 0.0
    %1018 = vmatpush1.msra.mxu0 0.0
    %1019 = vmatprep.subr.mxu0 0.0
    %1020 = vmatpush1.msra.mxu0 0.0
    %1021 = vmatprep.mubr.f32.mxu0 0.0
    %1022 = vmatmul.mubr.f32.gmra.mrb[0].mxu0 %v955
    %v1023 = vpop.f32.mrb[0].mxu0
    %v1024 = vadd.f32 0.0, %v1023
    %v1025 = vpop.f32.mrb[0].mxu0
    %1026 = vdwg.mxu0
    %1029 = vrot.lane.b32.xlu0 %v948, 16
    %v1030 = vpop.permute.xlu0 %1029
    %1031 = vrot.lane.b32.xlu0 %v1024, 16
    %v1032 = vpop.permute.xlu0 %1031
    %v1035 = vsel %vm369, %v618, %v1030
    %v1036 = vsel %vm369, %v694, %v1032
    %v1038 = vsel %vm151, %v1035, 0
    %v1041 = vsel %vm151, %v1036, 0
    %1043 = vmatprep.subr.mxu0 0.0
    %1044 = vmatpush1.msra.mxu0 %v115
    %1045 = vmatprep.subr.mxu0 0.0
    %1046 = vmatpush1.msra.mxu0 %v116
    %1047 = vmatprep.subr.mxu0 0.0
    %1048 = vmatpush1.msra.mxu0 %v117
    %1049 = vmatprep.subr.mxu0 0.0
    %1050 = vmatpush1.msra.mxu0 %v118
    %1051 = vmatprep.subr.mxu0 0.0
    %1052 = vmatpush1.msra.mxu0 0.0
    %1053 = vmatprep.subr.mxu0 0.0
    %1054 = vmatpush1.msra.mxu0 0.0
    %1055 = vmatprep.subr.mxu0 0.0
    %1056 = vmatpush1.msra.mxu0 0.0
    %1057 = vmatprep.subr.mxu0 0.0
    %1058 = vmatpush1.msra.mxu0 0.0
    %1059 = vmatprep.subr.mxu0 0.0
    %1060 = vmatpush1.msra.mxu0 0.0
    %1061 = vmatprep.subr.mxu0 0.0
    %1062 = vmatpush1.msra.mxu0 0.0
    %1063 = vmatprep.subr.mxu0 0.0
    %1064 = vmatpush1.msra.mxu0 0.0
    %1065 = vmatprep.subr.mxu0 0.0
    %1066 = vmatpush1.msra.mxu0 0.0
    %1067 = vmatprep.subr.mxu0 0.0
    %1068 = vmatpush1.msra.mxu0 0.0
    %1069 = vmatprep.subr.mxu0 0.0
    %1070 = vmatpush1.msra.mxu0 0.0
    %1071 = vmatprep.subr.mxu0 0.0
    %1072 = vmatpush1.msra.mxu0 0.0
    %1073 = vmatprep.subr.mxu0 0.0
    %1074 = vmatpush1.msra.mxu0 0.0
    %1075 = vmatprep.subr.mxu0 0.0
    %1076 = vmatpush1.msra.mxu0 0.0
    %1077 = vmatprep.subr.mxu0 0.0
    %1078 = vmatpush1.msra.mxu0 0.0
    %1079 = vmatprep.subr.mxu0 0.0
    %1080 = vmatpush1.msra.mxu0 0.0
    %1081 = vmatprep.subr.mxu0 0.0
    %1082 = vmatpush1.msra.mxu0 0.0
    %1083 = vmatprep.subr.mxu0 0.0
    %1084 = vmatpush1.msra.mxu0 0.0
    %1085 = vmatprep.subr.mxu0 0.0
    %1086 = vmatpush1.msra.mxu0 0.0
    %1087 = vmatprep.subr.mxu0 0.0
    %1088 = vmatpush1.msra.mxu0 0.0
    %1089 = vmatprep.subr.mxu0 0.0
    %1090 = vmatpush1.msra.mxu0 0.0
    %1091 = vmatprep.subr.mxu0 0.0
    %1092 = vmatpush1.msra.mxu0 0.0
    %1093 = vmatprep.subr.mxu0 0.0
    %1094 = vmatpush1.msra.mxu0 0.0
    %1095 = vmatprep.subr.mxu0 0.0
    %1096 = vmatpush1.msra.mxu0 0.0
    %1097 = vmatprep.subr.mxu0 0.0
    %1098 = vmatpush1.msra.mxu0 0.0
    %1099 = vmatprep.subr.mxu0 0.0
    %1100 = vmatpush1.msra.mxu0 0.0
    %1101 = vmatprep.subr.mxu0 0.0
    %1102 = vmatpush1.msra.mxu0 0.0
    %1103 = vmatprep.subr.mxu0 0.0
    %1104 = vmatpush1.msra.mxu0 0.0
    %1105 = vmatprep.subr.mxu0 0.0
    %1106 = vmatpush1.msra.mxu0 0.0
    %1107 = vmatprep.mubr.f32.mxu0 0.0
    %1108 = vmatmul.mubr.f32.gmra.mrb[0].mxu0 %v1038
    %v1109 = vpop.f32.mrb[0].mxu0
    %v1110 = vadd.f32 0.0, %v1109
    %v1111 = vpop.f32.mrb[0].mxu0
    %1112 = vmatprep.mubr.f32.mxu0 0.0
    %1113 = vmatmul.mubr.f32.gmra.mrb[0].mxu0 %v1041
    %v1114 = vpop.f32.mrb[0].mxu0
    %v1115 = vadd.f32 0.0, %v1114
    %v1116 = vpop.f32.mrb[0].mxu0
    %1117 = vdwg.mxu0
    %v1118 = vadd.f32 %v193, %v1110
    %v1119 = vadd.f32 %v194, %v1115
    %v1121 = vlaneseq
    %v1122 = vshrl.u32 %v1121, 7
    %v1123 = vsub.s32 0, %v1122
    %v1124 = vrot.slane %v123, %v1123
    %v1126 = vadd.f32 %v1118, %v1124
    %v1127 = vadd.f32 %v1119, %v1124
    %v1128 = vsel %vm151, %v1126, 0.0
    %1129 = vadd.xlane.f32.xlu0 %v1128
    %v1130 = vpop.xlane.xlu0 %1129
    %v1131 = vsel %vm151, %v1127, 0.0
    %1132 = vadd.xlane.f32.xlu0 %v1131
    %v1133 = vpop.xlane.xlu0 %1132
    %v1134 = vmul.f32 %v1130, %v158
    %v1135 = vmul.f32 %v1133, %v158
    %v1136 = vsub.f32 %v1126, %v1134
    %v1137 = vsub.f32 %v1127, %v1135
    %v1138 = vmul.f32 %v1136, %v1136
    %v1139 = vmul.f32 %v1137, %v1137
    %v1140 = vsel %vm151, %v1138, 0.0
    %1141 = vadd.xlane.f32.xlu0 %v1140
    %v1142 = vpop.xlane.xlu0 %1141
    %v1143 = vsel %vm151, %v1139, 0.0
    %1144 = vadd.xlane.f32.xlu0 %v1143
    %v1145 = vpop.xlane.xlu0 %1144
    %v1146 = vmul.f32 %v1142, %v158
    %v1147 = vmul.f32 %v1145, %v158
    %v1148 = vadd.f32 %v1146, 1e-08
    %v1149 = vadd.f32 %v1147, 1e-08
    %v1150 = vrsqrt.pop %v1148
    %v1151 = vrsqrt.pop %v1149
    %v1152 = vmul.f32 %v1136, %v1150
    %v1153 = vmul.f32 %v1137, %v1151
    %v1155 = vlaneseq
    %v1156 = vshrl.u32 %v1155, 7
    %v1157 = vsub.s32 0, %v1156
    %v1158 = vrot.slane %v125, %v1157
    %v1160 = vmul.f32 %v1152, %v1158
    %v1161 = vmul.f32 %v1153, %v1158
    %v1163 = vlaneseq
    %v1164 = vshrl.u32 %v1163, 7
    %v1165 = vsub.s32 0, %v1164
    %v1166 = vrot.slane %v127, %v1165
    %v1168 = vadd.f32 %v1160, %v1166
    %v1169 = vadd.f32 %v1161, %v1166
    %v1171 = vlaneseq
    %v1172 = vshrl.u32 %v1171, 7
    %v1173 = vsub.s32 0, %v1172
    %v1174 = vrot.slane %v137, %v1173
    %v1177 = vsel %vm151, %v1168, 0
    %v1180 = vsel %vm151, %v1169, 0
    %1182 = vmatprep.subr.mxu0 0.0
    %1183 = vmatpush1.msra.mxu0 %v129
    %1184 = vmatprep.subr.mxu0 0.0
    %1185 = vmatpush1.msra.mxu0 %v130
    %1186 = vmatprep.subr.mxu0 0.0
    %1187 = vmatpush1.msra.mxu0 %v131
    %1188 = vmatprep.subr.mxu0 0.0
    %1189 = vmatpush1.msra.mxu0 %v132
    %1190 = vmatprep.subr.mxu0 0.0
    %1191 = vmatpush1.msra.mxu0 0.0
    %1192 = vmatprep.subr.mxu0 0.0
    %1193 = vmatpush1.msra.mxu0 0.0
    %1194 = vmatprep.subr.mxu0 0.0
    %1195 = vmatpush1.msra.mxu0 0.0
    %1196 = vmatprep.subr.mxu0 0.0
    %1197 = vmatpush1.msra.mxu0 0.0
    %1198 = vmatprep.subr.mxu0 0.0
    %1199 = vmatpush1.msra.mxu0 0.0
    %1200 = vmatprep.subr.mxu0 0.0
    %1201 = vmatpush1.msra.mxu0 0.0
    %1202 = vmatprep.subr.mxu0 0.0
    %1203 = vmatpush1.msra.mxu0 0.0
    %1204 = vmatprep.subr.mxu0 0.0
    %1205 = vmatpush1.msra.mxu0 0.0
    %1206 = vmatprep.subr.mxu0 0.0
    %1207 = vmatpush1.msra.mxu0 0.0
    %1208 = vmatprep.subr.mxu0 0.0
    %1209 = vmatpush1.msra.mxu0 0.0
    %1210 = vmatprep.subr.mxu0 0.0
    %1211 = vmatpush1.msra.mxu0 0.0
    %1212 = vmatprep.subr.mxu0 0.0
    %1213 = vmatpush1.msra.mxu0 0.0
    %1214 = vmatprep.subr.mxu0 0.0
    %1215 = vmatpush1.msra.mxu0 0.0
    %1216 = vmatprep.subr.mxu0 0.0
    %1217 = vmatpush1.msra.mxu0 0.0
    %1218 = vmatprep.subr.mxu0 0.0
    %1219 = vmatpush1.msra.mxu0 0.0
    %1220 = vmatprep.subr.mxu0 0.0
    %1221 = vmatpush1.msra.mxu0 0.0
    %1222 = vmatprep.subr.mxu0 0.0
    %1223 = vmatpush1.msra.mxu0 0.0
    %1224 = vmatprep.subr.mxu0 0.0
    %1225 = vmatpush1.msra.mxu0 0.0
    %1226 = vmatprep.subr.mxu0 0.0
    %1227 = vmatpush1.msra.mxu0 0.0
    %1228 = vmatprep.subr.mxu0 0.0
    %1229 = vmatpush1.msra.mxu0 0.0
    %1230 = vmatprep.subr.mxu0 0.0
    %1231 = vmatpush1.msra.mxu0 0.0
    %1232 = vmatprep.subr.mxu0 0.0
    %1233 = vmatpush1.msra.mxu0 0.0
    %1234 = vmatprep.subr.mxu0 0.0
    %1235 = vmatpush1.msra.mxu0 0.0
    %1236 = vmatprep.subr.mxu0 0.0
    %1237 = vmatpush1.msra.mxu0 0.0
    %1238 = vmatprep.subr.mxu0 0.0
    %1239 = vmatpush1.msra.mxu0 0.0
    %1240 = vmatprep.subr.mxu0 0.0
    %1241 = vmatpush1.msra.mxu0 0.0
    %1242 = vmatprep.subr.mxu0 0.0
    %1243 = vmatpush1.msra.mxu0 0.0
    %1244 = vmatprep.subr.mxu0 0.0
    %1245 = vmatpush1.msra.mxu0 0.0
    %1246 = vmatprep.mubr.f32.mxu0 0.0
    %1247 = vmatmul.mubr.f32.gmra.mrb[0].mxu0 %v1177
    %v1248 = vpop.f32.mrb[0].mxu0
    %v1249 = vadd.f32 %v1174, %v1248
    %v1250 = vpop.f32.mrb[0].mxu0
    %1251 = vmatprep.mubr.f32.mxu0 0.0
    %1252 = vmatmul.mubr.f32.gmra.mrb[0].mxu0 %v1180
    %v1253 = vpop.f32.mrb[0].mxu0
    %v1254 = vadd.f32 %v1174, %v1253
    %v1255 = vpop.f32.mrb[0].mxu0
    %1256 = vdwg.mxu0
    %v1257 = vmax.f32 %v1249, 0.0
    %v1258 = vmax.f32 %v1254, 0.0
    %v1260 = vlaneseq
    %v1261 = vshrl.u32 %v1260, 7
    %v1262 = vsub.s32 0, %v1261
    %v1263 = vrot.slane %v147, %v1262
    %v1266 = vsel %vm151, %v1257, 0
    %v1269 = vsel %vm151, %v1258, 0
    %1271 = vmatprep.subr.mxu0 0.0
    %1272 = vmatpush1.msra.mxu0 %v139
    %1273 = vmatprep.subr.mxu0 0.0
    %1274 = vmatpush1.msra.mxu0 %v140
    %1275 = vmatprep.subr.mxu0 0.0
    %1276 = vmatpush1.msra.mxu0 %v141
    %1277 = vmatprep.subr.mxu0 0.0
    %1278 = vmatpush1.msra.mxu0 %v142
    %1279 = vmatprep.subr.mxu0 0.0
    %1280 = vmatpush1.msra.mxu0 0.0
    %1281 = vmatprep.subr.mxu0 0.0
    %1282 = vmatpush1.msra.mxu0 0.0
    %1283 = vmatprep.subr.mxu0 0.0
    %1284 = vmatpush1.msra.mxu0 0.0
    %1285 = vmatprep.subr.mxu0 0.0
    %1286 = vmatpush1.msra.mxu0 0.0
    %1287 = vmatprep.subr.mxu0 0.0
    %1288 = vmatpush1.msra.mxu0 0.0
    %1289 = vmatprep.subr.mxu0 0.0
    %1290 = vmatpush1.msra.mxu0 0.0
    %1291 = vmatprep.subr.mxu0 0.0
    %1292 = vmatpush1.msra.mxu0 0.0
    %1293 = vmatprep.subr.mxu0 0.0
    %1294 = vmatpush1.msra.mxu0 0.0
    %1295 = vmatprep.subr.mxu0 0.0
    %1296 = vmatpush1.msra.mxu0 0.0
    %1297 = vmatprep.subr.mxu0 0.0
    %1298 = vmatpush1.msra.mxu0 0.0
    %1299 = vmatprep.subr.mxu0 0.0
    %1300 = vmatpush1.msra.mxu0 0.0
    %1301 = vmatprep.subr.mxu0 0.0
    %1302 = vmatpush1.msra.mxu0 0.0
    %1303 = vmatprep.subr.mxu0 0.0
    %1304 = vmatpush1.msra.mxu0 0.0
    %1305 = vmatprep.subr.mxu0 0.0
    %1306 = vmatpush1.msra.mxu0 0.0
    %1307 = vmatprep.subr.mxu0 0.0
    %1308 = vmatpush1.msra.mxu0 0.0
    %1309 = vmatprep.subr.mxu0 0.0
    %1310 = vmatpush1.msra.mxu0 0.0
    %1311 = vmatprep.subr.mxu0 0.0
    %1312 = vmatpush1.msra.mxu0 0.0
    %1313 = vmatprep.subr.mxu0 0.0
    %1314 = vmatpush1.msra.mxu0 0.0
    %1315 = vmatprep.subr.mxu0 0.0
    %1316 = vmatpush1.msra.mxu0 0.0
    %1317 = vmatprep.subr.mxu0 0.0
    %1318 = vmatpush1.msra.mxu0 0.0
    %1319 = vmatprep.subr.mxu0 0.0
    %1320 = vmatpush1.msra.mxu0 0.0
    %1321 = vmatprep.subr.mxu0 0.0
    %1322 = vmatpush1.msra.mxu0 0.0
    %1323 = vmatprep.subr.mxu0 0.0
    %1324 = vmatpush1.msra.mxu0 0.0
    %1325 = vmatprep.subr.mxu0 0.0
    %1326 = vmatpush1.msra.mxu0 0.0
    %1327 = vmatprep.subr.mxu0 0.0
    %1328 = vmatpush1.msra.mxu0 0.0
    %1329 = vmatprep.subr.mxu0 0.0
    %1330 = vmatpush1.msra.mxu0 0.0
    %1331 = vmatprep.subr.mxu0 0.0
    %1332 = vmatpush1.msra.mxu0 0.0
    %1333 = vmatprep.subr.mxu0 0.0
    %1334 = vmatpush1.msra.mxu0 0.0
    %1335 = vmatprep.mubr.f32.mxu0 0.0
    %1336 = vmatmul.mubr.f32.gmra.mrb[0].mxu0 %v1266
    %v1337 = vpop.f32.mrb[0].mxu0
    %v1338 = vadd.f32 %v1263, %v1337
    %v1339 = vpop.f32.mrb[0].mxu0
    %1340 = vmatprep.mubr.f32.mxu0 0.0
    %1341 = vmatmul.mubr.f32.gmra.mrb[0].mxu0 %v1269
    %v1342 = vpop.f32.mrb[0].mxu0
    %v1343 = vadd.f32 %v1263, %v1342
    %v1344 = vpop.f32.mrb[0].mxu0
    %1345 = vdwg.mxu0
    %v1346 = vadd.f32 %v1338, %v1168
    %v1347 = vadd.f32 %v1343, %v1169
    %v1348 = vmul.f32 %v1346, %v76
    %v1349 = vmul.f32 %v1347, %v81
    %v1350 = vsel %vm151, %v1348, 0.0
    %1351 = vadd.xlane.f32.xlu0 %v1350
    %v1352 = vpop.xlane.xlu0 %1351
    %v1353 = vsel %vm151, %v1349, 0.0
    %1354 = vadd.xlane.f32.xlu0 %v1353
    %v1355 = vpop.xlane.xlu0 %1354
    %v1356 = vmul.f32 %v1352, %v158
    %v1357 = vmul.f32 %v1355, %v158
    %v1358 = vsub.f32 %v1348, %v1356
    %v1359 = vsub.f32 %v1349, %v1357
    %v1360 = vmul.f32 %v1358, %v1358
    %v1361 = vmul.f32 %v1359, %v1359
    %v1362 = vsel %vm151, %v1360, 0.0
    %1363 = vadd.xlane.f32.xlu0 %v1362
    %v1364 = vpop.xlane.xlu0 %1363
    %v1365 = vsel %vm151, %v1361, 0.0
    %1366 = vadd.xlane.f32.xlu0 %v1365
    %v1367 = vpop.xlane.xlu0 %1366
    %v1368 = vmul.f32 %v1364, %v158
    %v1369 = vmul.f32 %v1367, %v158
    %v1370 = vadd.f32 %v1368, 1e-08
    %v1371 = vadd.f32 %v1369, 1e-08
    %v1372 = vrsqrt.pop %v1370
    %v1373 = vrsqrt.pop %v1371
    %v1374 = vmul.f32 %v1358, %v1372
    %v1375 = vmul.f32 %v1359, %v1373
    %v1377 = vlaneseq
    %v1378 = vshrl.u32 %v1377, 7
    %v1379 = vsub.s32 0, %v1378
    %v1380 = vrot.slane %v92, %v1379
    %v1382 = vmul.f32 %v1374, %v1380
    %v1383 = vmul.f32 %v1375, %v1380
    %v1385 = vlaneseq
    %v1386 = vshrl.u32 %v1385, 7
    %v1387 = vsub.s32 0, %v1386
    %v1388 = vrot.slane %v94, %v1387
    %v1390 = vadd.f32 %v1382, %v1388
    %v1391 = vadd.f32 %v1383, %v1388
    %v1393 = vlaneseq
    %v1394 = vshrl.u32 %v1393, 7
    %v1395 = vsub.s32 0, %v1394
    %v1396 = vrot.slane %v104, %v1395
    %v1399 = vsel %vm151, %v1390, 0
    %v1402 = vsel %vm151, %v1391, 0
    %1404 = vmatprep.subr.mxu0 0.0
    %1405 = vmatpush1.msra.mxu0 %v99
    %1406 = vmatprep.subr.mxu0 0.0
    %1407 = vmatpush1.msra.mxu0 %v100
    %1408 = vmatprep.subr.mxu0 0.0
    %1409 = vmatpush1.msra.mxu0 %v101
    %1410 = vmatprep.subr.mxu0 0.0
    %1411 = vmatpush1.msra.mxu0 %v102
    %1412 = vmatprep.subr.mxu0 0.0
    %1413 = vmatpush1.msra.mxu0 0.0
    %1414 = vmatprep.subr.mxu0 0.0
    %1415 = vmatpush1.msra.mxu0 0.0
    %1416 = vmatprep.subr.mxu0 0.0
    %1417 = vmatpush1.msra.mxu0 0.0
    %1418 = vmatprep.subr.mxu0 0.0
    %1419 = vmatpush1.msra.mxu0 0.0
    %1420 = vmatprep.subr.mxu0 0.0
    %1421 = vmatpush1.msra.mxu0 0.0
    %1422 = vmatprep.subr.mxu0 0.0
    %1423 = vmatpush1.msra.mxu0 0.0
    %1424 = vmatprep.subr.mxu0 0.0
    %1425 = vmatpush1.msra.mxu0 0.0
    %1426 = vmatprep.subr.mxu0 0.0
    %1427 = vmatpush1.msra.mxu0 0.0
    %1428 = vmatprep.subr.mxu0 0.0
    %1429 = vmatpush1.msra.mxu0 0.0
    %1430 = vmatprep.subr.mxu0 0.0
    %1431 = vmatpush1.msra.mxu0 0.0
    %1432 = vmatprep.subr.mxu0 0.0
    %1433 = vmatpush1.msra.mxu0 0.0
    %1434 = vmatprep.subr.mxu0 0.0
    %1435 = vmatpush1.msra.mxu0 0.0
    %1436 = vmatprep.subr.mxu0 0.0
    %1437 = vmatpush1.msra.mxu0 0.0
    %1438 = vmatprep.subr.mxu0 0.0
    %1439 = vmatpush1.msra.mxu0 0.0
    %1440 = vmatprep.subr.mxu0 0.0
    %1441 = vmatpush1.msra.mxu0 0.0
    %1442 = vmatprep.subr.mxu0 0.0
    %1443 = vmatpush1.msra.mxu0 0.0
    %1444 = vmatprep.subr.mxu0 0.0
    %1445 = vmatpush1.msra.mxu0 0.0
    %1446 = vmatprep.subr.mxu0 0.0
    %1447 = vmatpush1.msra.mxu0 0.0
    %1448 = vmatprep.subr.mxu0 0.0
    %1449 = vmatpush1.msra.mxu0 0.0
    %1450 = vmatprep.subr.mxu0 0.0
    %1451 = vmatpush1.msra.mxu0 0.0
    %1452 = vmatprep.subr.mxu0 0.0
    %1453 = vmatpush1.msra.mxu0 0.0
    %1454 = vmatprep.subr.mxu0 0.0
    %1455 = vmatpush1.msra.mxu0 0.0
    %1456 = vmatprep.subr.mxu0 0.0
    %1457 = vmatpush1.msra.mxu0 0.0
    %1458 = vmatprep.subr.mxu0 0.0
    %1459 = vmatpush1.msra.mxu0 0.0
    %1460 = vmatprep.subr.mxu0 0.0
    %1461 = vmatpush1.msra.mxu0 0.0
    %1462 = vmatprep.subr.mxu0 0.0
    %1463 = vmatpush1.msra.mxu0 0.0
    %1464 = vmatprep.subr.mxu0 0.0
    %1465 = vmatpush1.msra.mxu0 0.0
    %1466 = vmatprep.subr.mxu0 0.0
    %1467 = vmatpush1.msra.mxu0 0.0
    %1468 = vmatprep.mubr.f32.mxu0 0.0
    %1469 = vmatmul.mubr.f32.gmra.mrb[0].mxu0 %v1399
    %v1470 = vpop.f32.mrb[0].mxu0
    %v1471 = vadd.f32 %v1396, %v1470
    %v1472 = vpop.f32.mrb[0].mxu0
    %1473 = vmatprep.mubr.f32.mxu0 0.0
    %1474 = vmatmul.mubr.f32.gmra.mrb[0].mxu0 %v1402
    %v1475 = vpop.f32.mrb[0].mxu0
    %v1476 = vadd.f32 %v1396, %v1475
    %v1477 = vpop.f32.mrb[0].mxu0
    %1478 = vdwg.mxu0
    %v1480 = vlaneseq
    %v1481 = vshrl.u32 %v1480, 7
    %v1482 = vsub.s32 0, %v1481
    %v1483 = vrot.slane %v114, %v1482
    %v1486 = vsel %vm151, %v1348, 0
    %v1489 = vsel %vm151, %v1349, 0
    %1491 = vmatprep.subr.mxu0 0.0
    %1492 = vmatpush1.msra.mxu0 %v109
    %1493 = vmatprep.subr.mxu0 0.0
    %1494 = vmatpush1.msra.mxu0 %v110
    %1495 = vmatprep.subr.mxu0 0.0
    %1496 = vmatpush1.msra.mxu0 %v111
    %1497 = vmatprep.subr.mxu0 0.0
    %1498 = vmatpush1.msra.mxu0 %v112
    %1499 = vmatprep.subr.mxu0 0.0
    %1500 = vmatpush1.msra.mxu0 0.0
    %1501 = vmatprep.subr.mxu0 0.0
    %1502 = vmatpush1.msra.mxu0 0.0
    %1503 = vmatprep.subr.mxu0 0.0
    %1504 = vmatpush1.msra.mxu0 0.0
    %1505 = vmatprep.subr.mxu0 0.0
    %1506 = vmatpush1.msra.mxu0 0.0
    %1507 = vmatprep.subr.mxu0 0.0
    %1508 = vmatpush1.msra.mxu0 0.0
    %1509 = vmatprep.subr.mxu0 0.0
    %1510 = vmatpush1.msra.mxu0 0.0
    %1511 = vmatprep.subr.mxu0 0.0
    %1512 = vmatpush1.msra.mxu0 0.0
    %1513 = vmatprep.subr.mxu0 0.0
    %1514 = vmatpush1.msra.mxu0 0.0
    %1515 = vmatprep.subr.mxu0 0.0
    %1516 = vmatpush1.msra.mxu0 0.0
    %1517 = vmatprep.subr.mxu0 0.0
    %1518 = vmatpush1.msra.mxu0 0.0
    %1519 = vmatprep.subr.mxu0 0.0
    %1520 = vmatpush1.msra.mxu0 0.0
    %1521 = vmatprep.subr.mxu0 0.0
    %1522 = vmatpush1.msra.mxu0 0.0
    %1523 = vmatprep.subr.mxu0 0.0
    %1524 = vmatpush1.msra.mxu0 0.0
    %1525 = vmatprep.subr.mxu0 0.0
    %1526 = vmatpush1.msra.mxu0 0.0
    %1527 = vmatprep.subr.mxu0 0.0
    %1528 = vmatpush1.msra.mxu0 0.0
    %1529 = vmatprep.subr.mxu0 0.0
    %1530 = vmatpush1.msra.mxu0 0.0
    %1531 = vmatprep.subr.mxu0 0.0
    %1532 = vmatpush1.msra.mxu0 0.0
    %1533 = vmatprep.subr.mxu0 0.0
    %1534 = vmatpush1.msra.mxu0 0.0
    %1535 = vmatprep.subr.mxu0 0.0
    %1536 = vmatpush1.msra.mxu0 0.0
    %1537 = vmatprep.subr.mxu0 0.0
    %1538 = vmatpush1.msra.mxu0 0.0
    %1539 = vmatprep.subr.mxu0 0.0
    %1540 = vmatpush1.msra.mxu0 0.0
    %1541 = vmatprep.subr.mxu0 0.0
    %1542 = vmatpush1.msra.mxu0 0.0
    %1543 = vmatprep.subr.mxu0 0.0
    %1544 = vmatpush1.msra.mxu0 0.0
    %1545 = vmatprep.subr.mxu0 0.0
    %1546 = vmatpush1.msra.mxu0 0.0
    %1547 = vmatprep.subr.mxu0 0.0
    %1548 = vmatpush1.msra.mxu0 0.0
    %1549 = vmatprep.subr.mxu0 0.0
    %1550 = vmatpush1.msra.mxu0 0.0
    %1551 = vmatprep.subr.mxu0 0.0
    %1552 = vmatpush1.msra.mxu0 0.0
    %1553 = vmatprep.subr.mxu0 0.0
    %1554 = vmatpush1.msra.mxu0 0.0
    %1555 = vmatprep.mubr.f32.mxu0 0.0
    %1556 = vmatmul.mubr.f32.gmra.mrb[0].mxu0 %v1486
    %v1557 = vpop.f32.mrb[0].mxu0
    %v1558 = vadd.f32 %v1483, %v1557
    %v1559 = vpop.f32.mrb[0].mxu0
    %1560 = vmatprep.mubr.f32.mxu0 0.0
    %1561 = vmatmul.mubr.f32.gmra.mrb[0].mxu0 %v1489
    %v1562 = vpop.f32.mrb[0].mxu0
    %v1563 = vadd.f32 %v1483, %v1562
    %v1564 = vpop.f32.mrb[0].mxu0
    %1565 = vdwg.mxu0
    %v1567 = vsel %vm369, %v1471, 0
    %v1570 = vsel %vm369, %v1558, 0
    %1572 = vmatprep.subr.mxu0 0.0
    %1573 = vmatpush1.xpose.msra.mxu0 %v1570
    %1574 = vmatprep.subr.mxu0 0.0
    %1575 = vmatpush1.xpose.msra.mxu0 0.0
    %1576 = vmatprep.subr.mxu0 0.0
    %1577 = vmatpush1.xpose.msra.mxu0 0.0
    %1578 = vmatprep.subr.mxu0 0.0
    %1579 = vmatpush1.xpose.msra.mxu0 0.0
    %1580 = vmatprep.subr.mxu0 0.0
    %1581 = vmatpush1.xpose.msra.mxu0 0.0
    %1582 = vmatprep.subr.mxu0 0.0
    %1583 = vmatpush1.xpose.msra.mxu0 0.0
    %1584 = vmatprep.subr.mxu0 0.0
    %1585 = vmatpush1.xpose.msra.mxu0 0.0
    %1586 = vmatprep.subr.mxu0 0.0
    %1587 = vmatpush1.xpose.msra.mxu0 0.0
    %1588 = vmatprep.subr.mxu0 0.0
    %1589 = vmatpush1.xpose.msra.mxu0 0.0
    %1590 = vmatprep.subr.mxu0 0.0
    %1591 = vmatpush1.xpose.msra.mxu0 0.0
    %1592 = vmatprep.subr.mxu0 0.0
    %1593 = vmatpush1.xpose.msra.mxu0 0.0
    %1594 = vmatprep.subr.mxu0 0.0
    %1595 = vmatpush1.xpose.msra.mxu0 0.0
    %1596 = vmatprep.subr.mxu0 0.0
    %1597 = vmatpush1.xpose.msra.mxu0 0.0
    %1598 = vmatprep.subr.mxu0 0.0
    %1599 = vmatpush1.xpose.msra.mxu0 0.0
    %1600 = vmatprep.subr.mxu0 0.0
    %1601 = vmatpush1.xpose.msra.mxu0 0.0
    %1602 = vmatprep.subr.mxu0 0.0
    %1603 = vmatpush1.xpose.msra.mxu0 0.0
    %1604 = vmatprep.subr.mxu0 0.0
    %1605 = vmatpush1.xpose.msra.mxu0 0.0
    %1606 = vmatprep.subr.mxu0 0.0
    %1607 = vmatpush1.xpose.msra.mxu0 0.0
    %1608 = vmatprep.subr.mxu0 0.0
    %1609 = vmatpush1.xpose.msra.mxu0 0.0
    %1610 = vmatprep.subr.mxu0 0.0
    %1611 = vmatpush1.xpose.msra.mxu0 0.0
    %1612 = vmatprep.subr.mxu0 0.0
    %1613 = vmatpush1.xpose.msra.mxu0 0.0
    %1614 = vmatprep.subr.mxu0 0.0
    %1615 = vmatpush1.xpose.msra.mxu0 0.0
    %1616 = vmatprep.subr.mxu0 0.0
    %1617 = vmatpush1.xpose.msra.mxu0 0.0
    %1618 = vmatprep.subr.mxu0 0.0
    %1619 = vmatpush1.xpose.msra.mxu0 0.0
    %1620 = vmatprep.subr.mxu0 0.0
    %1621 = vmatpush1.xpose.msra.mxu0 0.0
    %1622 = vmatprep.subr.mxu0 0.0
    %1623 = vmatpush1.xpose.msra.mxu0 0.0
    %1624 = vmatprep.subr.mxu0 0.0
    %1625 = vmatpush1.xpose.msra.mxu0 0.0
    %1626 = vmatprep.subr.mxu0 0.0
    %1627 = vmatpush1.xpose.msra.mxu0 0.0
    %1628 = vmatprep.subr.mxu0 0.0
    %1629 = vmatpush1.xpose.msra.mxu0 0.0
    %1630 = vmatprep.subr.mxu0 0.0
    %1631 = vmatpush1.xpose.msra.mxu0 0.0
    %1632 = vmatprep.subr.mxu0 0.0
    %1633 = vmatpush1.xpose.msra.mxu0 0.0
    %1634 = vmatprep.subr.mxu0 0.0
    %1635 = vmatpush1.xpose.msra.mxu0 0.0
    %1636 = vmatprep.mubr.f32.mxu0 0.0
    %1637 = vmatmul.mubr.f32.gmra.mrb[0].mxu0 %v1567
    %v1638 = vpop.f32.mrb[0].mxu0
    %v1639 = vadd.f32 %v90, %v1638
    %v1640 = vpop.f32.mrb[0].mxu0
    %1641 = vdwg.mxu0
    %v1643 = vsel %vm369, %v1476, 0
    %v1646 = vsel %vm369, %v1563, 0
    %1648 = vmatprep.subr.mxu0 0.0
    %1649 = vmatpush1.xpose.msra.mxu0 %v1646
    %1650 = vmatprep.subr.mxu0 0.0
    %1651 = vmatpush1.xpose.msra.mxu0 0.0
    %1652 = vmatprep.subr.mxu0 0.0
    %1653 = vmatpush1.xpose.msra.mxu0 0.0
    %1654 = vmatprep.subr.mxu0 0.0
    %1655 = vmatpush1.xpose.msra.mxu0 0.0
    %1656 = vmatprep.subr.mxu0 0.0
    %1657 = vmatpush1.xpose.msra.mxu0 0.0
    %1658 = vmatprep.subr.mxu0 0.0
    %1659 = vmatpush1.xpose.msra.mxu0 0.0
    %1660 = vmatprep.subr.mxu0 0.0
    %1661 = vmatpush1.xpose.msra.mxu0 0.0
    %1662 = vmatprep.subr.mxu0 0.0
    %1663 = vmatpush1.xpose.msra.mxu0 0.0
    %1664 = vmatprep.subr.mxu0 0.0
    %1665 = vmatpush1.xpose.msra.mxu0 0.0
    %1666 = vmatprep.subr.mxu0 0.0
    %1667 = vmatpush1.xpose.msra.mxu0 0.0
    %1668 = vmatprep.subr.mxu0 0.0
    %1669 = vmatpush1.xpose.msra.mxu0 0.0
    %1670 = vmatprep.subr.mxu0 0.0
    %1671 = vmatpush1.xpose.msra.mxu0 0.0
    %1672 = vmatprep.subr.mxu0 0.0
    %1673 = vmatpush1.xpose.msra.mxu0 0.0
    %1674 = vmatprep.subr.mxu0 0.0
    %1675 = vmatpush1.xpose.msra.mxu0 0.0
    %1676 = vmatprep.subr.mxu0 0.0
    %1677 = vmatpush1.xpose.msra.mxu0 0.0
    %1678 = vmatprep.subr.mxu0 0.0
    %1679 = vmatpush1.xpose.msra.mxu0 0.0
    %1680 = vmatprep.subr.mxu0 0.0
    %1681 = vmatpush1.xpose.msra.mxu0 0.0
    %1682 = vmatprep.subr.mxu0 0.0
    %1683 = vmatpush1.xpose.msra.mxu0 0.0
    %1684 = vmatprep.subr.mxu0 0.0
    %1685 = vmatpush1.xpose.msra.mxu0 0.0
    %1686 = vmatprep.subr.mxu0 0.0
    %1687 = vmatpush1.xpose.msra.mxu0 0.0
    %1688 = vmatprep.subr.mxu0 0.0
    %1689 = vmatpush1.xpose.msra.mxu0 0.0
    %1690 = vmatprep.subr.mxu0 0.0
    %1691 = vmatpush1.xpose.msra.mxu0 0.0
    %1692 = vmatprep.subr.mxu0 0.0
    %1693 = vmatpush1.xpose.msra.mxu0 0.0
    %1694 = vmatprep.subr.mxu0 0.0
    %1695 = vmatpush1.xpose.msra.mxu0 0.0
    %1696 = vmatprep.subr.mxu0 0.0
    %1697 = vmatpush1.xpose.msra.mxu0 0.0
    %1698 = vmatprep.subr.mxu0 0.0
    %1699 = vmatpush1.xpose.msra.mxu0 0.0
    %1700 = vmatprep.subr.mxu0 0.0
    %1701 = vmatpush1.xpose.msra.mxu0 0.0
    %1702 = vmatprep.subr.mxu0 0.0
    %1703 = vmatpush1.xpose.msra.mxu0 0.0
    %1704 = vmatprep.subr.mxu0 0.0
    %1705 = vmatpush1.xpose.msra.mxu0 0.0
    %1706 = vmatprep.subr.mxu0 0.0
    %1707 = vmatpush1.xpose.msra.mxu0 0.0
    %1708 = vmatprep.subr.mxu0 0.0
    %1709 = vmatpush1.xpose.msra.mxu0 0.0
    %1710 = vmatprep.subr.mxu0 0.0
    %1711 = vmatpush1.xpose.msra.mxu0 0.0
    %1712 = vmatprep.mubr.f32.mxu0 0.0
    %1713 = vmatmul.mubr.f32.gmra.mrb[0].mxu0 %v1643
    %v1714 = vpop.f32.mrb[0].mxu0
    %v1715 = vadd.f32 %v90, %v1714
    %v1716 = vpop.f32.mrb[0].mxu0
    %1717 = vdwg.mxu0
    %v1718 = vsel %vm522, %v1639, -inf
    %1719 = vmax.xlane.f32.xlu0 %v1718
    %v1720 = vpop.xlane.xlu0 %1719
    %v1721 = vsel %vm522, %v1715, -inf
    %1722 = vmax.xlane.f32.xlu0 %v1721
    %v1723 = vpop.xlane.xlu0 %1722
    %v1724 = vsub.f32 %v1639, %v1720
    %v1725 = vsub.f32 %v1715, %v1723
    %v1726 = vmul.f32 %v1724, 1.442695
    %v1727 = vpow.pop %v1726
    %v1728 = vmul.f32 %v1725, 1.442695
    %v1729 = vpow.pop %v1728
    %v1730 = vsel %vm522, %v1727, 0.0
    %1731 = vadd.xlane.f32.xlu0 %v1730
    %v1732 = vpop.xlane.xlu0 %1731
    %v1733 = vsel %vm522, %v1729, 0.0
    %1734 = vadd.xlane.f32.xlu0 %v1733
    %v1735 = vpop.xlane.xlu0 %1734
    %v1736 = vrcp.pop %v1732
    %v1737 = vmul.f32 %v1727, %v1736
    %v1738 = vrcp.pop %v1735
    %v1739 = vmul.f32 %v1729, %v1738
    %1740 = vrot.lane.b32.xlu0 %v1558, 96
    %v1741 = vpop.permute.xlu0 %1740
    %v1744 = vsel %vm522, %v1737, 0
    %1746 = vmatprep.subr.mxu0 0.0
    %1747 = vmatpush1.msra.mxu0 %v1741
    %1748 = vmatprep.subr.mxu0 0.0
    %1749 = vmatpush1.msra.mxu0 0.0
    %1750 = vmatprep.subr.mxu0 0.0
    %1751 = vmatpush1.msra.mxu0 0.0
    %1752 = vmatprep.subr.mxu0 0.0
    %1753 = vmatpush1.msra.mxu0 0.0
    %1754 = vmatprep.subr.mxu0 0.0
    %1755 = vmatpush1.msra.mxu0 0.0
    %1756 = vmatprep.subr.mxu0 0.0
    %1757 = vmatpush1.msra.mxu0 0.0
    %1758 = vmatprep.subr.mxu0 0.0
    %1759 = vmatpush1.msra.mxu0 0.0
    %1760 = vmatprep.subr.mxu0 0.0
    %1761 = vmatpush1.msra.mxu0 0.0
    %1762 = vmatprep.subr.mxu0 0.0
    %1763 = vmatpush1.msra.mxu0 0.0
    %1764 = vmatprep.subr.mxu0 0.0
    %1765 = vmatpush1.msra.mxu0 0.0
    %1766 = vmatprep.subr.mxu0 0.0
    %1767 = vmatpush1.msra.mxu0 0.0
    %1768 = vmatprep.subr.mxu0 0.0
    %1769 = vmatpush1.msra.mxu0 0.0
    %1770 = vmatprep.subr.mxu0 0.0
    %1771 = vmatpush1.msra.mxu0 0.0
    %1772 = vmatprep.subr.mxu0 0.0
    %1773 = vmatpush1.msra.mxu0 0.0
    %1774 = vmatprep.subr.mxu0 0.0
    %1775 = vmatpush1.msra.mxu0 0.0
    %1776 = vmatprep.subr.mxu0 0.0
    %1777 = vmatpush1.msra.mxu0 0.0
    %1778 = vmatprep.subr.mxu0 0.0
    %1779 = vmatpush1.msra.mxu0 0.0
    %1780 = vmatprep.subr.mxu0 0.0
    %1781 = vmatpush1.msra.mxu0 0.0
    %1782 = vmatprep.subr.mxu0 0.0
    %1783 = vmatpush1.msra.mxu0 0.0
    %1784 = vmatprep.subr.mxu0 0.0
    %1785 = vmatpush1.msra.mxu0 0.0
    %1786 = vmatprep.subr.mxu0 0.0
    %1787 = vmatpush1.msra.mxu0 0.0
    %1788 = vmatprep.subr.mxu0 0.0
    %1789 = vmatpush1.msra.mxu0 0.0
    %1790 = vmatprep.subr.mxu0 0.0
    %1791 = vmatpush1.msra.mxu0 0.0
    %1792 = vmatprep.subr.mxu0 0.0
    %1793 = vmatpush1.msra.mxu0 0.0
    %1794 = vmatprep.subr.mxu0 0.0
    %1795 = vmatpush1.msra.mxu0 0.0
    %1796 = vmatprep.subr.mxu0 0.0
    %1797 = vmatpush1.msra.mxu0 0.0
    %1798 = vmatprep.subr.mxu0 0.0
    %1799 = vmatpush1.msra.mxu0 0.0
    %1800 = vmatprep.subr.mxu0 0.0
    %1801 = vmatpush1.msra.mxu0 0.0
    %1802 = vmatprep.subr.mxu0 0.0
    %1803 = vmatpush1.msra.mxu0 0.0
    %1804 = vmatprep.subr.mxu0 0.0
    %1805 = vmatpush1.msra.mxu0 0.0
    %1806 = vmatprep.subr.mxu0 0.0
    %1807 = vmatpush1.msra.mxu0 0.0
    %1808 = vmatprep.subr.mxu0 0.0
    %1809 = vmatpush1.msra.mxu0 0.0
    %1810 = vmatprep.mubr.f32.mxu0 0.0
    %1811 = vmatmul.mubr.f32.gmra.mrb[0].mxu0 %v1744
    %v1812 = vpop.f32.mrb[0].mxu0
    %v1813 = vadd.f32 0.0, %v1812
    %v1814 = vpop.f32.mrb[0].mxu0
    %1815 = vdwg.mxu0
    %1816 = vrot.lane.b32.xlu0 %v1563, 96
    %v1817 = vpop.permute.xlu0 %1816
    %v1820 = vsel %vm522, %v1739, 0
    %1822 = vmatprep.subr.mxu0 0.0
    %1823 = vmatpush1.msra.mxu0 %v1817
    %1824 = vmatprep.subr.mxu0 0.0
    %1825 = vmatpush1.msra.mxu0 0.0
    %1826 = vmatprep.subr.mxu0 0.0
    %1827 = vmatpush1.msra.mxu0 0.0
    %1828 = vmatprep.subr.mxu0 0.0
    %1829 = vmatpush1.msra.mxu0 0.0
    %1830 = vmatprep.subr.mxu0 0.0
    %1831 = vmatpush1.msra.mxu0 0.0
    %1832 = vmatprep.subr.mxu0 0.0
    %1833 = vmatpush1.msra.mxu0 0.0
    %1834 = vmatprep.subr.mxu0 0.0
    %1835 = vmatpush1.msra.mxu0 0.0
    %1836 = vmatprep.subr.mxu0 0.0
    %1837 = vmatpush1.msra.mxu0 0.0
    %1838 = vmatprep.subr.mxu0 0.0
    %1839 = vmatpush1.msra.mxu0 0.0
    %1840 = vmatprep.subr.mxu0 0.0
    %1841 = vmatpush1.msra.mxu0 0.0
    %1842 = vmatprep.subr.mxu0 0.0
    %1843 = vmatpush1.msra.mxu0 0.0
    %1844 = vmatprep.subr.mxu0 0.0
    %1845 = vmatpush1.msra.mxu0 0.0
    %1846 = vmatprep.subr.mxu0 0.0
    %1847 = vmatpush1.msra.mxu0 0.0
    %1848 = vmatprep.subr.mxu0 0.0
    %1849 = vmatpush1.msra.mxu0 0.0
    %1850 = vmatprep.subr.mxu0 0.0
    %1851 = vmatpush1.msra.mxu0 0.0
    %1852 = vmatprep.subr.mxu0 0.0
    %1853 = vmatpush1.msra.mxu0 0.0
    %1854 = vmatprep.subr.mxu0 0.0
    %1855 = vmatpush1.msra.mxu0 0.0
    %1856 = vmatprep.subr.mxu0 0.0
    %1857 = vmatpush1.msra.mxu0 0.0
    %1858 = vmatprep.subr.mxu0 0.0
    %1859 = vmatpush1.msra.mxu0 0.0
    %1860 = vmatprep.subr.mxu0 0.0
    %1861 = vmatpush1.msra.mxu0 0.0
    %1862 = vmatprep.subr.mxu0 0.0
    %1863 = vmatpush1.msra.mxu0 0.0
    %1864 = vmatprep.subr.mxu0 0.0
    %1865 = vmatpush1.msra.mxu0 0.0
    %1866 = vmatprep.subr.mxu0 0.0
    %1867 = vmatpush1.msra.mxu0 0.0
    %1868 = vmatprep.subr.mxu0 0.0
    %1869 = vmatpush1.msra.mxu0 0.0
    %1870 = vmatprep.subr.mxu0 0.0
    %1871 = vmatpush1.msra.mxu0 0.0
    %1872 = vmatprep.subr.mxu0 0.0
    %1873 = vmatpush1.msra.mxu0 0.0
    %1874 = vmatprep.subr.mxu0 0.0
    %1875 = vmatpush1.msra.mxu0 0.0
    %1876 = vmatprep.subr.mxu0 0.0
    %1877 = vmatpush1.msra.mxu0 0.0
    %1878 = vmatprep.subr.mxu0 0.0
    %1879 = vmatpush1.msra.mxu0 0.0
    %1880 = vmatprep.subr.mxu0 0.0
    %1881 = vmatpush1.msra.mxu0 0.0
    %1882 = vmatprep.subr.mxu0 0.0
    %1883 = vmatpush1.msra.mxu0 0.0
    %1884 = vmatprep.subr.mxu0 0.0
    %1885 = vmatpush1.msra.mxu0 0.0
    %1886 = vmatprep.mubr.f32.mxu0 0.0
    %1887 = vmatmul.mubr.f32.gmra.mrb[0].mxu0 %v1820
    %v1888 = vpop.f32.mrb[0].mxu0
    %v1889 = vadd.f32 0.0, %v1888
    %v1890 = vpop.f32.mrb[0].mxu0
    %1891 = vdwg.mxu0
    %1892 = vrot.lane.b32.xlu0 %v1471, 112
    %v1893 = vpop.permute.xlu0 %1892
    %1894 = vrot.lane.b32.xlu0 %v1558, 112
    %v1895 = vpop.permute.xlu0 %1894
    %v1896 = vsel %vm369, %v1893, 0
    %v1898 = vsel %vm369, %v1895, 0
    %1900 = vmatprep.subr.mxu0 0.0
    %1901 = vmatpush1.xpose.msra.mxu0 %v1898
    %1902 = vmatprep.subr.mxu0 0.0
    %1903 = vmatpush1.xpose.msra.mxu0 0.0
    %1904 = vmatprep.subr.mxu0 0.0
    %1905 = vmatpush1.xpose.msra.mxu0 0.0
    %1906 = vmatprep.subr.mxu0 0.0
    %1907 = vmatpush1.xpose.msra.mxu0 0.0
    %1908 = vmatprep.subr.mxu0 0.0
    %1909 = vmatpush1.xpose.msra.mxu0 0.0
    %1910 = vmatprep.subr.mxu0 0.0
    %1911 = vmatpush1.xpose.msra.mxu0 0.0
    %1912 = vmatprep.subr.mxu0 0.0
    %1913 = vmatpush1.xpose.msra.mxu0 0.0
    %1914 = vmatprep.subr.mxu0 0.0
    %1915 = vmatpush1.xpose.msra.mxu0 0.0
    %1916 = vmatprep.subr.mxu0 0.0
    %1917 = vmatpush1.xpose.msra.mxu0 0.0
    %1918 = vmatprep.subr.mxu0 0.0
    %1919 = vmatpush1.xpose.msra.mxu0 0.0
    %1920 = vmatprep.subr.mxu0 0.0
    %1921 = vmatpush1.xpose.msra.mxu0 0.0
    %1922 = vmatprep.subr.mxu0 0.0
    %1923 = vmatpush1.xpose.msra.mxu0 0.0
    %1924 = vmatprep.subr.mxu0 0.0
    %1925 = vmatpush1.xpose.msra.mxu0 0.0
    %1926 = vmatprep.subr.mxu0 0.0
    %1927 = vmatpush1.xpose.msra.mxu0 0.0
    %1928 = vmatprep.subr.mxu0 0.0
    %1929 = vmatpush1.xpose.msra.mxu0 0.0
    %1930 = vmatprep.subr.mxu0 0.0
    %1931 = vmatpush1.xpose.msra.mxu0 0.0
    %1932 = vmatprep.subr.mxu0 0.0
    %1933 = vmatpush1.xpose.msra.mxu0 0.0
    %1934 = vmatprep.subr.mxu0 0.0
    %1935 = vmatpush1.xpose.msra.mxu0 0.0
    %1936 = vmatprep.subr.mxu0 0.0
    %1937 = vmatpush1.xpose.msra.mxu0 0.0
    %1938 = vmatprep.subr.mxu0 0.0
    %1939 = vmatpush1.xpose.msra.mxu0 0.0
    %1940 = vmatprep.subr.mxu0 0.0
    %1941 = vmatpush1.xpose.msra.mxu0 0.0
    %1942 = vmatprep.subr.mxu0 0.0
    %1943 = vmatpush1.xpose.msra.mxu0 0.0
    %1944 = vmatprep.subr.mxu0 0.0
    %1945 = vmatpush1.xpose.msra.mxu0 0.0
    %1946 = vmatprep.subr.mxu0 0.0
    %1947 = vmatpush1.xpose.msra.mxu0 0.0
    %1948 = vmatprep.subr.mxu0 0.0
    %1949 = vmatpush1.xpose.msra.mxu0 0.0
    %1950 = vmatprep.subr.mxu0 0.0
    %1951 = vmatpush1.xpose.msra.mxu0 0.0
    %1952 = vmatprep.subr.mxu0 0.0
    %1953 = vmatpush1.xpose.msra.mxu0 0.0
    %1954 = vmatprep.subr.mxu0 0.0
    %1955 = vmatpush1.xpose.msra.mxu0 0.0
    %1956 = vmatprep.subr.mxu0 0.0
    %1957 = vmatpush1.xpose.msra.mxu0 0.0
    %1958 = vmatprep.subr.mxu0 0.0
    %1959 = vmatpush1.xpose.msra.mxu0 0.0
    %1960 = vmatprep.subr.mxu0 0.0
    %1961 = vmatpush1.xpose.msra.mxu0 0.0
    %1962 = vmatprep.subr.mxu0 0.0
    %1963 = vmatpush1.xpose.msra.mxu0 0.0
    %1964 = vmatprep.mubr.f32.mxu0 0.0
    %1965 = vmatmul.mubr.f32.gmra.mrb[0].mxu0 %v1896
    %v1966 = vpop.f32.mrb[0].mxu0
    %v1967 = vadd.f32 %v90, %v1966
    %v1968 = vpop.f32.mrb[0].mxu0
    %1969 = vdwg.mxu0
    %1970 = vrot.lane.b32.xlu0 %v1476, 112
    %v1971 = vpop.permute.xlu0 %1970
    %1972 = vrot.lane.b32.xlu0 %v1563, 112
    %v1973 = vpop.permute.xlu0 %1972
    %v1974 = vsel %vm369, %v1971, 0
    %v1976 = vsel %vm369, %v1973, 0
    %1978 = vmatprep.subr.mxu0 0.0
    %1979 = vmatpush1.xpose.msra.mxu0 %v1976
    %1980 = vmatprep.subr.mxu0 0.0
    %1981 = vmatpush1.xpose.msra.mxu0 0.0
    %1982 = vmatprep.subr.mxu0 0.0
    %1983 = vmatpush1.xpose.msra.mxu0 0.0
    %1984 = vmatprep.subr.mxu0 0.0
    %1985 = vmatpush1.xpose.msra.mxu0 0.0
    %1986 = vmatprep.subr.mxu0 0.0
    %1987 = vmatpush1.xpose.msra.mxu0 0.0
    %1988 = vmatprep.subr.mxu0 0.0
    %1989 = vmatpush1.xpose.msra.mxu0 0.0
    %1990 = vmatprep.subr.mxu0 0.0
    %1991 = vmatpush1.xpose.msra.mxu0 0.0
    %1992 = vmatprep.subr.mxu0 0.0
    %1993 = vmatpush1.xpose.msra.mxu0 0.0
    %1994 = vmatprep.subr.mxu0 0.0
    %1995 = vmatpush1.xpose.msra.mxu0 0.0
    %1996 = vmatprep.subr.mxu0 0.0
    %1997 = vmatpush1.xpose.msra.mxu0 0.0
    %1998 = vmatprep.subr.mxu0 0.0
    %1999 = vmatpush1.xpose.msra.mxu0 0.0
    %2000 = vmatprep.subr.mxu0 0.0
    %2001 = vmatpush1.xpose.msra.mxu0 0.0
    %2002 = vmatprep.subr.mxu0 0.0
    %2003 = vmatpush1.xpose.msra.mxu0 0.0
    %2004 = vmatprep.subr.mxu0 0.0
    %2005 = vmatpush1.xpose.msra.mxu0 0.0
    %2006 = vmatprep.subr.mxu0 0.0
    %2007 = vmatpush1.xpose.msra.mxu0 0.0
    %2008 = vmatprep.subr.mxu0 0.0
    %2009 = vmatpush1.xpose.msra.mxu0 0.0
    %2010 = vmatprep.subr.mxu0 0.0
    %2011 = vmatpush1.xpose.msra.mxu0 0.0
    %2012 = vmatprep.subr.mxu0 0.0
    %2013 = vmatpush1.xpose.msra.mxu0 0.0
    %2014 = vmatprep.subr.mxu0 0.0
    %2015 = vmatpush1.xpose.msra.mxu0 0.0
    %2016 = vmatprep.subr.mxu0 0.0
    %2017 = vmatpush1.xpose.msra.mxu0 0.0
    %2018 = vmatprep.subr.mxu0 0.0
    %2019 = vmatpush1.xpose.msra.mxu0 0.0
    %2020 = vmatprep.subr.mxu0 0.0
    %2021 = vmatpush1.xpose.msra.mxu0 0.0
    %2022 = vmatprep.subr.mxu0 0.0
    %2023 = vmatpush1.xpose.msra.mxu0 0.0
    %2024 = vmatprep.subr.mxu0 0.0
    %2025 = vmatpush1.xpose.msra.mxu0 0.0
    %2026 = vmatprep.subr.mxu0 0.0
    %2027 = vmatpush1.xpose.msra.mxu0 0.0
    %2028 = vmatprep.subr.mxu0 0.0
    %2029 = vmatpush1.xpose.msra.mxu0 0.0
    %2030 = vmatprep.subr.mxu0 0.0
    %2031 = vmatpush1.xpose.msra.mxu0 0.0
    %2032 = vmatprep.subr.mxu0 0.0
    %2033 = vmatpush1.xpose.msra.mxu0 0.0
    %2034 = vmatprep.subr.mxu0 0.0
    %2035 = vmatpush1.xpose.msra.mxu0 0.0
    %2036 = vmatprep.subr.mxu0 0.0
    %2037 = vmatpush1.xpose.msra.mxu0 0.0
    %2038 = vmatprep.subr.mxu0 0.0
    %2039 = vmatpush1.xpose.msra.mxu0 0.0
    %2040 = vmatprep.subr.mxu0 0.0
    %2041 = vmatpush1.xpose.msra.mxu0 0.0
    %2042 = vmatprep.mubr.f32.mxu0 0.0
    %2043 = vmatmul.mubr.f32.gmra.mrb[0].mxu0 %v1974
    %v2044 = vpop.f32.mrb[0].mxu0
    %v2045 = vadd.f32 %v90, %v2044
    %v2046 = vpop.f32.mrb[0].mxu0
    %2047 = vdwg.mxu0
    %v2048 = vsel %vm522, %v1967, -inf
    %2049 = vmax.xlane.f32.xlu0 %v2048
    %v2050 = vpop.xlane.xlu0 %2049
    %v2051 = vsel %vm522, %v2045, -inf
    %2052 = vmax.xlane.f32.xlu0 %v2051
    %v2053 = vpop.xlane.xlu0 %2052
    %v2054 = vsub.f32 %v1967, %v2050
    %v2055 = vsub.f32 %v2045, %v2053
    %v2056 = vmul.f32 %v2054, 1.442695
    %v2057 = vpow.pop %v2056
    %v2058 = vmul.f32 %v2055, 1.442695
    %v2059 = vpow.pop %v2058
    %v2060 = vsel %vm522, %v2057, 0.0
    %2061 = vadd.xlane.f32.xlu0 %v2060
    %v2062 = vpop.xlane.xlu0 %2061
    %v2063 = vsel %vm522, %v2059, 0.0
    %2064 = vadd.xlane.f32.xlu0 %v2063
    %v2065 = vpop.xlane.xlu0 %2064
    %v2066 = vrcp.pop %v2062
    %v2067 = vmul.f32 %v2057, %v2066
    %v2068 = vrcp.pop %v2065
    %v2069 = vmul.f32 %v2059, %v2068
    %2070 = vrot.lane.b32.xlu0 %v1558, 80
    %v2071 = vpop.permute.xlu0 %2070
    %v2074 = vsel %vm522, %v2067, 0
    %2076 = vmatprep.subr.mxu0 0.0
    %2077 = vmatpush1.msra.mxu0 %v2071
    %2078 = vmatprep.subr.mxu0 0.0
    %2079 = vmatpush1.msra.mxu0 0.0
    %2080 = vmatprep.subr.mxu0 0.0
    %2081 = vmatpush1.msra.mxu0 0.0
    %2082 = vmatprep.subr.mxu0 0.0
    %2083 = vmatpush1.msra.mxu0 0.0
    %2084 = vmatprep.subr.mxu0 0.0
    %2085 = vmatpush1.msra.mxu0 0.0
    %2086 = vmatprep.subr.mxu0 0.0
    %2087 = vmatpush1.msra.mxu0 0.0
    %2088 = vmatprep.subr.mxu0 0.0
    %2089 = vmatpush1.msra.mxu0 0.0
    %2090 = vmatprep.subr.mxu0 0.0
    %2091 = vmatpush1.msra.mxu0 0.0
    %2092 = vmatprep.subr.mxu0 0.0
    %2093 = vmatpush1.msra.mxu0 0.0
    %2094 = vmatprep.subr.mxu0 0.0
    %2095 = vmatpush1.msra.mxu0 0.0
    %2096 = vmatprep.subr.mxu0 0.0
    %2097 = vmatpush1.msra.mxu0 0.0
    %2098 = vmatprep.subr.mxu0 0.0
    %2099 = vmatpush1.msra.mxu0 0.0
    %2100 = vmatprep.subr.mxu0 0.0
    %2101 = vmatpush1.msra.mxu0 0.0
    %2102 = vmatprep.subr.mxu0 0.0
    %2103 = vmatpush1.msra.mxu0 0.0
    %2104 = vmatprep.subr.mxu0 0.0
    %2105 = vmatpush1.msra.mxu0 0.0
    %2106 = vmatprep.subr.mxu0 0.0
    %2107 = vmatpush1.msra.mxu0 0.0
    %2108 = vmatprep.subr.mxu0 0.0
    %2109 = vmatpush1.msra.mxu0 0.0
    %2110 = vmatprep.subr.mxu0 0.0
    %2111 = vmatpush1.msra.mxu0 0.0
    %2112 = vmatprep.subr.mxu0 0.0
    %2113 = vmatpush1.msra.mxu0 0.0
    %2114 = vmatprep.subr.mxu0 0.0
    %2115 = vmatpush1.msra.mxu0 0.0
    %2116 = vmatprep.subr.mxu0 0.0
    %2117 = vmatpush1.msra.mxu0 0.0
    %2118 = vmatprep.subr.mxu0 0.0
    %2119 = vmatpush1.msra.mxu0 0.0
    %2120 = vmatprep.subr.mxu0 0.0
    %2121 = vmatpush1.msra.mxu0 0.0
    %2122 = vmatprep.subr.mxu0 0.0
    %2123 = vmatpush1.msra.mxu0 0.0
    %2124 = vmatprep.subr.mxu0 0.0
    %2125 = vmatpush1.msra.mxu0 0.0
    %2126 = vmatprep.subr.mxu0 0.0
    %2127 = vmatpush1.msra.mxu0 0.0
    %2128 = vmatprep.subr.mxu0 0.0
    %2129 = vmatpush1.msra.mxu0 0.0
    %2130 = vmatprep.subr.mxu0 0.0
    %2131 = vmatpush1.msra.mxu0 0.0
    %2132 = vmatprep.subr.mxu0 0.0
    %2133 = vmatpush1.msra.mxu0 0.0
    %2134 = vmatprep.subr.mxu0 0.0
    %2135 = vmatpush1.msra.mxu0 0.0
    %2136 = vmatprep.subr.mxu0 0.0
    %2137 = vmatpush1.msra.mxu0 0.0
    %2138 = vmatprep.subr.mxu0 0.0
    %2139 = vmatpush1.msra.mxu0 0.0
    %2140 = vmatprep.mubr.f32.mxu0 0.0
    %2141 = vmatmul.mubr.f32.gmra.mrb[0].mxu0 %v2074
    %v2142 = vpop.f32.mrb[0].mxu0
    %v2143 = vadd.f32 0.0, %v2142
    %v2144 = vpop.f32.mrb[0].mxu0
    %2145 = vdwg.mxu0
    %2146 = vrot.lane.b32.xlu0 %v1563, 80
    %v2147 = vpop.permute.xlu0 %2146
    %v2150 = vsel %vm522, %v2069, 0
    %2152 = vmatprep.subr.mxu0 0.0
    %2153 = vmatpush1.msra.mxu0 %v2147
    %2154 = vmatprep.subr.mxu0 0.0
    %2155 = vmatpush1.msra.mxu0 0.0
    %2156 = vmatprep.subr.mxu0 0.0
    %2157 = vmatpush1.msra.mxu0 0.0
    %2158 = vmatprep.subr.mxu0 0.0
    %2159 = vmatpush1.msra.mxu0 0.0
    %2160 = vmatprep.subr.mxu0 0.0
    %2161 = vmatpush1.msra.mxu0 0.0
    %2162 = vmatprep.subr.mxu0 0.0
    %2163 = vmatpush1.msra.mxu0 0.0
    %2164 = vmatprep.subr.mxu0 0.0
    %2165 = vmatpush1.msra.mxu0 0.0
    %2166 = vmatprep.subr.mxu0 0.0
    %2167 = vmatpush1.msra.mxu0 0.0
    %2168 = vmatprep.subr.mxu0 0.0
    %2169 = vmatpush1.msra.mxu0 0.0
    %2170 = vmatprep.subr.mxu0 0.0
    %2171 = vmatpush1.msra.mxu0 0.0
    %2172 = vmatprep.subr.mxu0 0.0
    %2173 = vmatpush1.msra.mxu0 0.0
    %2174 = vmatprep.subr.mxu0 0.0
    %2175 = vmatpush1.msra.mxu0 0.0
    %2176 = vmatprep.subr.mxu0 0.0
    %2177 = vmatpush1.msra.mxu0 0.0
    %2178 = vmatprep.subr.mxu0 0.0
    %2179 = vmatpush1.msra.mxu0 0.0
    %2180 = vmatprep.subr.mxu0 0.0
    %2181 = vmatpush1.msra.mxu0 0.0
    %2182 = vmatprep.subr.mxu0 0.0
    %2183 = vmatpush1.msra.mxu0 0.0
    %2184 = vmatprep.subr.mxu0 0.0
    %2185 = vmatpush1.msra.mxu0 0.0
    %2186 = vmatprep.subr.mxu0 0.0
    %2187 = vmatpush1.msra.mxu0 0.0
    %2188 = vmatprep.subr.mxu0 0.0
    %2189 = vmatpush1.msra.mxu0 0.0
    %2190 = vmatprep.subr.mxu0 0.0
    %2191 = vmatpush1.msra.mxu0 0.0
    %2192 = vmatprep.subr.mxu0 0.0
    %2193 = vmatpush1.msra.mxu0 0.0
    %2194 = vmatprep.subr.mxu0 0.0
    %2195 = vmatpush1.msra.mxu0 0.0
    %2196 = vmatprep.subr.mxu0 0.0
    %2197 = vmatpush1.msra.mxu0 0.0
    %2198 = vmatprep.subr.mxu0 0.0
    %2199 = vmatpush1.msra.mxu0 0.0
    %2200 = vmatprep.subr.mxu0 0.0
    %2201 = vmatpush1.msra.mxu0 0.0
    %2202 = vmatprep.subr.mxu0 0.0
    %2203 = vmatpush1.msra.mxu0 0.0
    %2204 = vmatprep.subr.mxu0 0.0
    %2205 = vmatpush1.msra.mxu0 0.0
    %2206 = vmatprep.subr.mxu0 0.0
    %2207 = vmatpush1.msra.mxu0 0.0
    %2208 = vmatprep.subr.mxu0 0.0
    %2209 = vmatpush1.msra.mxu0 0.0
    %2210 = vmatprep.subr.mxu0 0.0
    %2211 = vmatpush1.msra.mxu0 0.0
    %2212 = vmatprep.subr.mxu0 0.0
    %2213 = vmatpush1.msra.mxu0 0.0
    %2214 = vmatprep.subr.mxu0 0.0
    %2215 = vmatpush1.msra.mxu0 0.0
    %2216 = vmatprep.mubr.f32.mxu0 0.0
    %2217 = vmatmul.mubr.f32.gmra.mrb[0].mxu0 %v2150
    %v2218 = vpop.f32.mrb[0].mxu0
    %v2219 = vadd.f32 0.0, %v2218
    %v2220 = vpop.f32.mrb[0].mxu0
    %2221 = vdwg.mxu0
    %2224 = vrot.lane.b32.xlu0 %v2143, 16
    %v2225 = vpop.permute.xlu0 %2224
    %2226 = vrot.lane.b32.xlu0 %v2219, 16
    %v2227 = vpop.permute.xlu0 %2226
    %v2230 = vsel %vm369, %v1813, %v2225
    %v2231 = vsel %vm369, %v1889, %v2227
    %v2233 = vsel %vm151, %v2230, 0
    %v2236 = vsel %vm151, %v2231, 0
    %2238 = vmatprep.subr.mxu0 0.0
    %2239 = vmatpush1.msra.mxu0 %v119
    %2240 = vmatprep.subr.mxu0 0.0
    %2241 = vmatpush1.msra.mxu0 %v120
    %2242 = vmatprep.subr.mxu0 0.0
    %2243 = vmatpush1.msra.mxu0 %v121
    %2244 = vmatprep.subr.mxu0 0.0
    %2245 = vmatpush1.msra.mxu0 %v122
    %2246 = vmatprep.subr.mxu0 0.0
    %2247 = vmatpush1.msra.mxu0 0.0
    %2248 = vmatprep.subr.mxu0 0.0
    %2249 = vmatpush1.msra.mxu0 0.0
    %2250 = vmatprep.subr.mxu0 0.0
    %2251 = vmatpush1.msra.mxu0 0.0
    %2252 = vmatprep.subr.mxu0 0.0
    %2253 = vmatpush1.msra.mxu0 0.0
    %2254 = vmatprep.subr.mxu0 0.0
    %2255 = vmatpush1.msra.mxu0 0.0
    %2256 = vmatprep.subr.mxu0 0.0
    %2257 = vmatpush1.msra.mxu0 0.0
    %2258 = vmatprep.subr.mxu0 0.0
    %2259 = vmatpush1.msra.mxu0 0.0
    %2260 = vmatprep.subr.mxu0 0.0
    %2261 = vmatpush1.msra.mxu0 0.0
    %2262 = vmatprep.subr.mxu0 0.0
    %2263 = vmatpush1.msra.mxu0 0.0
    %2264 = vmatprep.subr.mxu0 0.0
    %2265 = vmatpush1.msra.mxu0 0.0
    %2266 = vmatprep.subr.mxu0 0.0
    %2267 = vmatpush1.msra.mxu0 0.0
    %2268 = vmatprep.subr.mxu0 0.0
    %2269 = vmatpush1.msra.mxu0 0.0
    %2270 = vmatprep.subr.mxu0 0.0
    %2271 = vmatpush1.msra.mxu0 0.0
    %2272 = vmatprep.subr.mxu0 0.0
    %2273 = vmatpush1.msra.mxu0 0.0
    %2274 = vmatprep.subr.mxu0 0.0
    %2275 = vmatpush1.msra.mxu0 0.0
    %2276 = vmatprep.subr.mxu0 0.0
    %2277 = vmatpush1.msra.mxu0 0.0
    %2278 = vmatprep.subr.mxu0 0.0
    %2279 = vmatpush1.msra.mxu0 0.0
    %2280 = vmatprep.subr.mxu0 0.0
    %2281 = vmatpush1.msra.mxu0 0.0
    %2282 = vmatprep.subr.mxu0 0.0
    %2283 = vmatpush1.msra.mxu0 0.0
    %2284 = vmatprep.subr.mxu0 0.0
    %2285 = vmatpush1.msra.mxu0 0.0
    %2286 = vmatprep.subr.mxu0 0.0
    %2287 = vmatpush1.msra.mxu0 0.0
    %2288 = vmatprep.subr.mxu0 0.0
    %2289 = vmatpush1.msra.mxu0 0.0
    %2290 = vmatprep.subr.mxu0 0.0
    %2291 = vmatpush1.msra.mxu0 0.0
    %2292 = vmatprep.subr.mxu0 0.0
    %2293 = vmatpush1.msra.mxu0 0.0
    %2294 = vmatprep.subr.mxu0 0.0
    %2295 = vmatpush1.msra.mxu0 0.0
    %2296 = vmatprep.subr.mxu0 0.0
    %2297 = vmatpush1.msra.mxu0 0.0
    %2298 = vmatprep.subr.mxu0 0.0
    %2299 = vmatpush1.msra.mxu0 0.0
    %2300 = vmatprep.subr.mxu0 0.0
    %2301 = vmatpush1.msra.mxu0 0.0
    %2302 = vmatprep.mubr.f32.mxu0 0.0
    %2303 = vmatmul.mubr.f32.gmra.mrb[0].mxu0 %v2233
    %v2304 = vpop.f32.mrb[0].mxu0
    %v2305 = vadd.f32 0.0, %v2304
    %v2306 = vpop.f32.mrb[0].mxu0
    %2307 = vmatprep.mubr.f32.mxu0 0.0
    %2308 = vmatmul.mubr.f32.gmra.mrb[0].mxu0 %v2236
    %v2309 = vpop.f32.mrb[0].mxu0
    %v2310 = vadd.f32 0.0, %v2309
    %v2311 = vpop.f32.mrb[0].mxu0
    %2312 = vdwg.mxu0
    %v2313 = vadd.f32 %v1390, %v2305
    %v2314 = vadd.f32 %v1391, %v2310
    %v2316 = vlaneseq
    %v2317 = vshrl.u32 %v2316, 7
    %v2318 = vsub.s32 0, %v2317
    %v2319 = vrot.slane %v124, %v2318
    %v2321 = vadd.f32 %v2313, %v2319
    %v2322 = vadd.f32 %v2314, %v2319
    %v2323 = vsel %vm151, %v2321, 0.0
    %2324 = vadd.xlane.f32.xlu0 %v2323
    %v2325 = vpop.xlane.xlu0 %2324
    %v2326 = vsel %vm151, %v2322, 0.0
    %2327 = vadd.xlane.f32.xlu0 %v2326
    %v2328 = vpop.xlane.xlu0 %2327
    %v2329 = vmul.f32 %v2325, %v158
    %v2330 = vmul.f32 %v2328, %v158
    %v2331 = vsub.f32 %v2321, %v2329
    %v2332 = vsub.f32 %v2322, %v2330
    %v2333 = vmul.f32 %v2331, %v2331
    %v2334 = vmul.f32 %v2332, %v2332
    %v2335 = vsel %vm151, %v2333, 0.0
    %2336 = vadd.xlane.f32.xlu0 %v2335
    %v2337 = vpop.xlane.xlu0 %2336
    %v2338 = vsel %vm151, %v2334, 0.0
    %2339 = vadd.xlane.f32.xlu0 %v2338
    %v2340 = vpop.xlane.xlu0 %2339
    %v2341 = vmul.f32 %v2337, %v158
    %v2342 = vmul.f32 %v2340, %v158
    %v2343 = vadd.f32 %v2341, 1e-08
    %v2344 = vadd.f32 %v2342, 1e-08
    %v2345 = vrsqrt.pop %v2343
    %v2346 = vrsqrt.pop %v2344
    %v2347 = vmul.f32 %v2331, %v2345
    %v2348 = vmul.f32 %v2332, %v2346
    %v2350 = vlaneseq
    %v2351 = vshrl.u32 %v2350, 7
    %v2352 = vsub.s32 0, %v2351
    %v2353 = vrot.slane %v126, %v2352
    %v2355 = vmul.f32 %v2347, %v2353
    %v2356 = vmul.f32 %v2348, %v2353
    %v2358 = vlaneseq
    %v2359 = vshrl.u32 %v2358, 7
    %v2360 = vsub.s32 0, %v2359
    %v2361 = vrot.slane %v128, %v2360
    %v2363 = vadd.f32 %v2355, %v2361
    %v2364 = vadd.f32 %v2356, %v2361
    %v2366 = vlaneseq
    %v2367 = vshrl.u32 %v2366, 7
    %v2368 = vsub.s32 0, %v2367
    %v2369 = vrot.slane %v138, %v2368
    %v2372 = vsel %vm151, %v2363, 0
    %v2375 = vsel %vm151, %v2364, 0
    %2377 = vmatprep.subr.mxu0 0.0
    %2378 = vmatpush1.msra.mxu0 %v133
    %2379 = vmatprep.subr.mxu0 0.0
    %2380 = vmatpush1.msra.mxu0 %v134
    %2381 = vmatprep.subr.mxu0 0.0
    %2382 = vmatpush1.msra.mxu0 %v135
    %2383 = vmatprep.subr.mxu0 0.0
    %2384 = vmatpush1.msra.mxu0 %v136
    %2385 = vmatprep.subr.mxu0 0.0
    %2386 = vmatpush1.msra.mxu0 0.0
    %2387 = vmatprep.subr.mxu0 0.0
    %2388 = vmatpush1.msra.mxu0 0.0
    %2389 = vmatprep.subr.mxu0 0.0
    %2390 = vmatpush1.msra.mxu0 0.0
    %2391 = vmatprep.subr.mxu0 0.0
    %2392 = vmatpush1.msra.mxu0 0.0
    %2393 = vmatprep.subr.mxu0 0.0
    %2394 = vmatpush1.msra.mxu0 0.0
    %2395 = vmatprep.subr.mxu0 0.0
    %2396 = vmatpush1.msra.mxu0 0.0
    %2397 = vmatprep.subr.mxu0 0.0
    %2398 = vmatpush1.msra.mxu0 0.0
    %2399 = vmatprep.subr.mxu0 0.0
    %2400 = vmatpush1.msra.mxu0 0.0
    %2401 = vmatprep.subr.mxu0 0.0
    %2402 = vmatpush1.msra.mxu0 0.0
    %2403 = vmatprep.subr.mxu0 0.0
    %2404 = vmatpush1.msra.mxu0 0.0
    %2405 = vmatprep.subr.mxu0 0.0
    %2406 = vmatpush1.msra.mxu0 0.0
    %2407 = vmatprep.subr.mxu0 0.0
    %2408 = vmatpush1.msra.mxu0 0.0
    %2409 = vmatprep.subr.mxu0 0.0
    %2410 = vmatpush1.msra.mxu0 0.0
    %2411 = vmatprep.subr.mxu0 0.0
    %2412 = vmatpush1.msra.mxu0 0.0
    %2413 = vmatprep.subr.mxu0 0.0
    %2414 = vmatpush1.msra.mxu0 0.0
    %2415 = vmatprep.subr.mxu0 0.0
    %2416 = vmatpush1.msra.mxu0 0.0
    %2417 = vmatprep.subr.mxu0 0.0
    %2418 = vmatpush1.msra.mxu0 0.0
    %2419 = vmatprep.subr.mxu0 0.0
    %2420 = vmatpush1.msra.mxu0 0.0
    %2421 = vmatprep.subr.mxu0 0.0
    %2422 = vmatpush1.msra.mxu0 0.0
    %2423 = vmatprep.subr.mxu0 0.0
    %2424 = vmatpush1.msra.mxu0 0.0
    %2425 = vmatprep.subr.mxu0 0.0
    %2426 = vmatpush1.msra.mxu0 0.0
    %2427 = vmatprep.subr.mxu0 0.0
    %2428 = vmatpush1.msra.mxu0 0.0
    %2429 = vmatprep.subr.mxu0 0.0
    %2430 = vmatpush1.msra.mxu0 0.0
    %2431 = vmatprep.subr.mxu0 0.0
    %2432 = vmatpush1.msra.mxu0 0.0
    %2433 = vmatprep.subr.mxu0 0.0
    %2434 = vmatpush1.msra.mxu0 0.0
    %2435 = vmatprep.subr.mxu0 0.0
    %2436 = vmatpush1.msra.mxu0 0.0
    %2437 = vmatprep.subr.mxu0 0.0
    %2438 = vmatpush1.msra.mxu0 0.0
    %2439 = vmatprep.subr.mxu0 0.0
    %2440 = vmatpush1.msra.mxu0 0.0
    %2441 = vmatprep.mubr.f32.mxu0 0.0
    %2442 = vmatmul.mubr.f32.gmra.mrb[0].mxu0 %v2372
    %v2443 = vpop.f32.mrb[0].mxu0
    %v2444 = vadd.f32 %v2369, %v2443
    %v2445 = vpop.f32.mrb[0].mxu0
    %2446 = vmatprep.mubr.f32.mxu0 0.0
    %2447 = vmatmul.mubr.f32.gmra.mrb[0].mxu0 %v2375
    %v2448 = vpop.f32.mrb[0].mxu0
    %v2449 = vadd.f32 %v2369, %v2448
    %v2450 = vpop.f32.mrb[0].mxu0
    %2451 = vdwg.mxu0
    %v2452 = vmax.f32 %v2444, 0.0
    %v2453 = vmax.f32 %v2449, 0.0
    %v2455 = vlaneseq
    %v2456 = vshrl.u32 %v2455, 7
    %v2457 = vsub.s32 0, %v2456
    %v2458 = vrot.slane %v148, %v2457
    %v2461 = vsel %vm151, %v2452, 0
    %v2464 = vsel %vm151, %v2453, 0
    %2466 = vmatprep.subr.mxu0 0.0
    %2467 = vmatpush1.msra.mxu0 %v143
    %2468 = vmatprep.subr.mxu0 0.0
    %2469 = vmatpush1.msra.mxu0 %v144
    %2470 = vmatprep.subr.mxu0 0.0
    %2471 = vmatpush1.msra.mxu0 %v145
    %2472 = vmatprep.subr.mxu0 0.0
    %2473 = vmatpush1.msra.mxu0 %v146
    %2474 = vmatprep.subr.mxu0 0.0
    %2475 = vmatpush1.msra.mxu0 0.0
    %2476 = vmatprep.subr.mxu0 0.0
    %2477 = vmatpush1.msra.mxu0 0.0
    %2478 = vmatprep.subr.mxu0 0.0
    %2479 = vmatpush1.msra.mxu0 0.0
    %2480 = vmatprep.subr.mxu0 0.0
    %2481 = vmatpush1.msra.mxu0 0.0
    %2482 = vmatprep.subr.mxu0 0.0
    %2483 = vmatpush1.msra.mxu0 0.0
    %2484 = vmatprep.subr.mxu0 0.0
    %2485 = vmatpush1.msra.mxu0 0.0
    %2486 = vmatprep.subr.mxu0 0.0
    %2487 = vmatpush1.msra.mxu0 0.0
    %2488 = vmatprep.subr.mxu0 0.0
    %2489 = vmatpush1.msra.mxu0 0.0
    %2490 = vmatprep.subr.mxu0 0.0
    %2491 = vmatpush1.msra.mxu0 0.0
    %2492 = vmatprep.subr.mxu0 0.0
    %2493 = vmatpush1.msra.mxu0 0.0
    %2494 = vmatprep.subr.mxu0 0.0
    %2495 = vmatpush1.msra.mxu0 0.0
    %2496 = vmatprep.subr.mxu0 0.0
    %2497 = vmatpush1.msra.mxu0 0.0
    %2498 = vmatprep.subr.mxu0 0.0
    %2499 = vmatpush1.msra.mxu0 0.0
    %2500 = vmatprep.subr.mxu0 0.0
    %2501 = vmatpush1.msra.mxu0 0.0
    %2502 = vmatprep.subr.mxu0 0.0
    %2503 = vmatpush1.msra.mxu0 0.0
    %2504 = vmatprep.subr.mxu0 0.0
    %2505 = vmatpush1.msra.mxu0 0.0
    %2506 = vmatprep.subr.mxu0 0.0
    %2507 = vmatpush1.msra.mxu0 0.0
    %2508 = vmatprep.subr.mxu0 0.0
    %2509 = vmatpush1.msra.mxu0 0.0
    %2510 = vmatprep.subr.mxu0 0.0
    %2511 = vmatpush1.msra.mxu0 0.0
    %2512 = vmatprep.subr.mxu0 0.0
    %2513 = vmatpush1.msra.mxu0 0.0
    %2514 = vmatprep.subr.mxu0 0.0
    %2515 = vmatpush1.msra.mxu0 0.0
    %2516 = vmatprep.subr.mxu0 0.0
    %2517 = vmatpush1.msra.mxu0 0.0
    %2518 = vmatprep.subr.mxu0 0.0
    %2519 = vmatpush1.msra.mxu0 0.0
    %2520 = vmatprep.subr.mxu0 0.0
    %2521 = vmatpush1.msra.mxu0 0.0
    %2522 = vmatprep.subr.mxu0 0.0
    %2523 = vmatpush1.msra.mxu0 0.0
    %2524 = vmatprep.subr.mxu0 0.0
    %2525 = vmatpush1.msra.mxu0 0.0
    %2526 = vmatprep.subr.mxu0 0.0
    %2527 = vmatpush1.msra.mxu0 0.0
    %2528 = vmatprep.subr.mxu0 0.0
    %2529 = vmatpush1.msra.mxu0 0.0
    %2530 = vmatprep.mubr.f32.mxu0 0.0
    %2531 = vmatmul.mubr.f32.gmra.mrb[0].mxu0 %v2461
    %v2532 = vpop.f32.mrb[0].mxu0
    %v2533 = vadd.f32 %v2458, %v2532
    %v2534 = vpop.f32.mrb[0].mxu0
    %2535 = vmatprep.mubr.f32.mxu0 0.0
    %2536 = vmatmul.mubr.f32.gmra.mrb[0].mxu0 %v2464
    %v2537 = vpop.f32.mrb[0].mxu0
    %v2538 = vadd.f32 %v2458, %v2537
    %v2539 = vpop.f32.mrb[0].mxu0
    %2540 = vdwg.mxu0
    %v2541 = vadd.f32 %v2533, %v2363
    %v2542 = vadd.f32 %v2538, %v2364
    %v2543 = vmul.f32 %v2541, %v76
    %v2544 = vmul.f32 %v2542, %v81
    %v2545 = vsel %vm151, %v2543, 0.0
    %2546 = vadd.xlane.f32.xlu0 %v2545
    %v2547 = vpop.xlane.xlu0 %2546
    %v2548 = vsel %vm151, %v2544, 0.0
    %2549 = vadd.xlane.f32.xlu0 %v2548
    %v2550 = vpop.xlane.xlu0 %2549
    %v2551 = vmul.f32 %v2547, %v158
    %v2552 = vmul.f32 %v2550, %v158
    %v2553 = vsub.f32 %v2543, %v2551
    %v2554 = vsub.f32 %v2544, %v2552
    %v2555 = vmul.f32 %v2553, %v2553
    %v2556 = vmul.f32 %v2554, %v2554
    %v2557 = vsel %vm151, %v2555, 0.0
    %2558 = vadd.xlane.f32.xlu0 %v2557
    %v2559 = vpop.xlane.xlu0 %2558
    %v2560 = vsel %vm151, %v2556, 0.0
    %2561 = vadd.xlane.f32.xlu0 %v2560
    %v2562 = vpop.xlane.xlu0 %2561
    %v2563 = vmul.f32 %v2559, %v158
    %v2564 = vmul.f32 %v2562, %v158
    %v2565 = vadd.f32 %v2563, 1e-08
    %v2566 = vadd.f32 %v2564, 1e-08
    %v2567 = vrsqrt.pop %v2565
    %v2568 = vrsqrt.pop %v2566
    %v2569 = vmul.f32 %v2553, %v2567
    %v2570 = vmul.f32 %v2554, %v2568
    %v2572 = vlaneseq
    %v2573 = vshrl.u32 %v2572, 7
    %v2574 = vsub.s32 0, %v2573
    %v2575 = vrot.slane %v149, %v2574
    %v2577 = vmul.f32 %v2569, %v2575
    %v2578 = vmul.f32 %v2570, %v2575
    %v2580 = vlaneseq
    %v2581 = vshrl.u32 %v2580, 7
    %v2582 = vsub.s32 0, %v2581
    %v2583 = vrot.slane %v150, %v2582
    %v2585 = vadd.f32 %v2577, %v2583
    %v2586 = vadd.f32 %v2578, %v2583
    %2587 = vst.msk [vmem:[#allocation2] sm:$0xff] %vm151, %v2585
    %2588 = vst.msk [vmem:[#allocation2 + $0x8] sm:$0xff] %vm151, %v2586
    %s2589 = scalar_lea.vmem %s2, 2
    %v2590 = vld [vmem:[%s2589] sm:$0x1]
    %v2591 = vld [vmem:[%s2589 + $0x1] sm:$0x1]
    %s2592 = scalar_lea.vmem %s3, 2
    %v2593 = vld [vmem:[%s2592] sm:$0x1]
    %v2594 = vld [vmem:[%s2592 + $0x1] sm:$0x1]
    %s2595 = scalar_lea.vmem %s4, 64
    %v2596 = vld [vmem:[%s2595] sm:$0xff]
    %v2597 = vld [vmem:[%s2595 + $0x8] sm:$0xff]
    %v2598 = vld [vmem:[%s2595 + $0x10] sm:$0xff]
    %v2599 = vld [vmem:[%s2595 + $0x18] sm:$0xff]
    %v2600 = vld [vmem:[%s2595 + $0x20] sm:$0xff]
    %v2601 = vld [vmem:[%s2595 + $0x28] sm:$0xff]
    %v2602 = vld [vmem:[%s2595 + $0x30] sm:$0xff]
    %v2603 = vld [vmem:[%s2595 + $0x38] sm:$0xff]
    %s2604 = scalar_lea.vmem %s5, 2
    %v2605 = vld [vmem:[%s2604] sm:$0x1]
    %v2606 = vld [vmem:[%s2604 + $0x1] sm:$0x1]
    %s2607 = scalar_lea.vmem %s6, 64
    %v2608 = vld [vmem:[%s2607] sm:$0xff]
    %v2609 = vld [vmem:[%s2607 + $0x8] sm:$0xff]
    %v2610 = vld [vmem:[%s2607 + $0x10] sm:$0xff]
    %v2611 = vld [vmem:[%s2607 + $0x18] sm:$0xff]
    %v2612 = vld [vmem:[%s2607 + $0x20] sm:$0xff]
    %v2613 = vld [vmem:[%s2607 + $0x28] sm:$0xff]
    %v2614 = vld [vmem:[%s2607 + $0x30] sm:$0xff]
    %v2615 = vld [vmem:[%s2607 + $0x38] sm:$0xff]
    %s2616 = scalar_lea.vmem %s7, 2
    %v2617 = vld [vmem:[%s2616] sm:$0x1]
    %v2618 = vld [vmem:[%s2616 + $0x1] sm:$0x1]
    %s2619 = scalar_lea.vmem %s8, 64
    %v2620 = vld [vmem:[%s2619] sm:$0xff]
    %v2621 = vld [vmem:[%s2619 + $0x8] sm:$0xff]
    %v2622 = vld [vmem:[%s2619 + $0x10] sm:$0xff]
    %v2623 = vld [vmem:[%s2619 + $0x18] sm:$0xff]
    %v2624 = vld [vmem:[%s2619 + $0x20] sm:$0xff]
    %v2625 = vld [vmem:[%s2619 + $0x28] sm:$0xff]
    %v2626 = vld [vmem:[%s2619 + $0x30] sm:$0xff]
    %v2627 = vld [vmem:[%s2619 + $0x38] sm:$0xff]
    %s2628 = scalar_lea.vmem %s9, 2
    %v2629 = vld [vmem:[%s2628] sm:$0x1]
    %v2630 = vld [vmem:[%s2628 + $0x1] sm:$0x1]
    %s2631 = scalar_lea.vmem %s10, 2
    %v2632 = vld [vmem:[%s2631] sm:$0x1]
    %v2633 = vld [vmem:[%s2631 + $0x1] sm:$0x1]
    %s2634 = scalar_lea.vmem %s11, 2
    %v2635 = vld [vmem:[%s2634] sm:$0x1]
    %v2636 = vld [vmem:[%s2634 + $0x1] sm:$0x1]
    %s2637 = scalar_lea.vmem %s12, 64
    %v2638 = vld [vmem:[%s2637] sm:$0xff]
    %v2639 = vld [vmem:[%s2637 + $0x8] sm:$0xff]
    %v2640 = vld [vmem:[%s2637 + $0x10] sm:$0xff]
    %v2641 = vld [vmem:[%s2637 + $0x18] sm:$0xff]
    %v2642 = vld [vmem:[%s2637 + $0x20] sm:$0xff]
    %v2643 = vld [vmem:[%s2637 + $0x28] sm:$0xff]
    %v2644 = vld [vmem:[%s2637 + $0x30] sm:$0xff]
    %v2645 = vld [vmem:[%s2637 + $0x38] sm:$0xff]
    %s2646 = scalar_lea.vmem %s13, 2
    %v2647 = vld [vmem:[%s2646] sm:$0x1]
    %v2648 = vld [vmem:[%s2646 + $0x1] sm:$0x1]
    %s2649 = scalar_lea.vmem %s14, 64
    %v2650 = vld [vmem:[%s2649] sm:$0xff]
    %v2651 = vld [vmem:[%s2649 + $0x8] sm:$0xff]
    %v2652 = vld [vmem:[%s2649 + $0x10] sm:$0xff]
    %v2653 = vld [vmem:[%s2649 + $0x18] sm:$0xff]
    %v2654 = vld [vmem:[%s2649 + $0x20] sm:$0xff]
    %v2655 = vld [vmem:[%s2649 + $0x28] sm:$0xff]
    %v2656 = vld [vmem:[%s2649 + $0x30] sm:$0xff]
    %v2657 = vld [vmem:[%s2649 + $0x38] sm:$0xff]
    %s2658 = scalar_lea.vmem %s15, 2
    %v2659 = vld [vmem:[%s2658] sm:$0x1]
    %v2660 = vld [vmem:[%s2658 + $0x1] sm:$0x1]
    %s2661 = scalar_lea.vmem %s16, 1
    %v2662 = vld [vmem:[%s2661] sm:$0x1]
    %s2663 = scalar_lea.vmem %s17, 1
    %v2664 = vld [vmem:[%s2663] sm:$0x1]
    %v2666 = vlaneseq
    %v2667 = vshrl.u32 %v2666, 7
    %v2668 = vsub.s32 0, %v2667
    %v2669 = vrot.slane %v2590, %v2668
    %v2671 = vmul.f32 %v177, %v2669
    %v2672 = vmul.f32 %v178, %v2669
    %v2674 = vlaneseq
    %v2675 = vshrl.u32 %v2674, 7
    %v2676 = vsub.s32 0, %v2675
    %v2677 = vrot.slane %v2593, %v2676
    %v2679 = vadd.f32 %v2671, %v2677
    %v2680 = vadd.f32 %v2672, %v2677
    %v2682 = vlaneseq
    %v2683 = vshrl.u32 %v2682, 7
    %v2684 = vsub.s32 0, %v2683
    %v2685 = vrot.slane %v2605, %v2684
    %v2688 = vsel %vm151, %v2679, 0
    %v2691 = vsel %vm151, %v2680, 0
    %2693 = vmatprep.subr.mxu0 0.0
    %2694 = vmatpush1.msra.mxu0 %v2596
    %2695 = vmatprep.subr.mxu0 0.0
    %2696 = vmatpush1.msra.mxu0 %v2597
    %2697 = vmatprep.subr.mxu0 0.0
    %2698 = vmatpush1.msra.mxu0 %v2598
    %2699 = vmatprep.subr.mxu0 0.0
    %2700 = vmatpush1.msra.mxu0 %v2599
    %2701 = vmatprep.subr.mxu0 0.0
    %2702 = vmatpush1.msra.mxu0 0.0
    %2703 = vmatprep.subr.mxu0 0.0
    %2704 = vmatpush1.msra.mxu0 0.0
    %2705 = vmatprep.subr.mxu0 0.0
    %2706 = vmatpush1.msra.mxu0 0.0
    %2707 = vmatprep.subr.mxu0 0.0
    %2708 = vmatpush1.msra.mxu0 0.0
    %2709 = vmatprep.subr.mxu0 0.0
    %2710 = vmatpush1.msra.mxu0 0.0
    %2711 = vmatprep.subr.mxu0 0.0
    %2712 = vmatpush1.msra.mxu0 0.0
    %2713 = vmatprep.subr.mxu0 0.0
    %2714 = vmatpush1.msra.mxu0 0.0
    %2715 = vmatprep.subr.mxu0 0.0
    %2716 = vmatpush1.msra.mxu0 0.0
    %2717 = vmatprep.subr.mxu0 0.0
    %2718 = vmatpush1.msra.mxu0 0.0
    %2719 = vmatprep.subr.mxu0 0.0
    %2720 = vmatpush1.msra.mxu0 0.0
    %2721 = vmatprep.subr.mxu0 0.0
    %2722 = vmatpush1.msra.mxu0 0.0
    %2723 = vmatprep.subr.mxu0 0.0
    %2724 = vmatpush1.msra.mxu0 0.0
    %2725 = vmatprep.subr.mxu0 0.0
    %2726 = vmatpush1.msra.mxu0 0.0
    %2727 = vmatprep.subr.mxu0 0.0
    %2728 = vmatpush1.msra.mxu0 0.0
    %2729 = vmatprep.subr.mxu0 0.0
    %2730 = vmatpush1.msra.mxu0 0.0
    %2731 = vmatprep.subr.mxu0 0.0
    %2732 = vmatpush1.msra.mxu0 0.0
    %2733 = vmatprep.subr.mxu0 0.0
    %2734 = vmatpush1.msra.mxu0 0.0
    %2735 = vmatprep.subr.mxu0 0.0
    %2736 = vmatpush1.msra.mxu0 0.0
    %2737 = vmatprep.subr.mxu0 0.0
    %2738 = vmatpush1.msra.mxu0 0.0
    %2739 = vmatprep.subr.mxu0 0.0
    %2740 = vmatpush1.msra.mxu0 0.0
    %2741 = vmatprep.subr.mxu0 0.0
    %2742 = vmatpush1.msra.mxu0 0.0
    %2743 = vmatprep.subr.mxu0 0.0
    %2744 = vmatpush1.msra.mxu0 0.0
    %2745 = vmatprep.subr.mxu0 0.0
    %2746 = vmatpush1.msra.mxu0 0.0
    %2747 = vmatprep.subr.mxu0 0.0
    %2748 = vmatpush1.msra.mxu0 0.0
    %2749 = vmatprep.subr.mxu0 0.0
    %2750 = vmatpush1.msra.mxu0 0.0
    %2751 = vmatprep.subr.mxu0 0.0
    %2752 = vmatpush1.msra.mxu0 0.0
    %2753 = vmatprep.subr.mxu0 0.0
    %2754 = vmatpush1.msra.mxu0 0.0
    %2755 = vmatprep.subr.mxu0 0.0
    %2756 = vmatpush1.msra.mxu0 0.0
    %2757 = vmatprep.mubr.f32.mxu0 0.0
    %2758 = vmatmul.mubr.f32.gmra.mrb[0].mxu0 %v2688
    %v2759 = vpop.f32.mrb[0].mxu0
    %v2760 = vadd.f32 %v2685, %v2759
    %v2761 = vpop.f32.mrb[0].mxu0
    %2762 = vmatprep.mubr.f32.mxu0 0.0
    %2763 = vmatmul.mubr.f32.gmra.mrb[0].mxu0 %v2691
    %v2764 = vpop.f32.mrb[0].mxu0
    %v2765 = vadd.f32 %v2685, %v2764
    %v2766 = vpop.f32.mrb[0].mxu0
    %2767 = vdwg.mxu0
    %v2769 = vlaneseq
    %v2770 = vshrl.u32 %v2769, 7
    %v2771 = vsub.s32 0, %v2770
    %v2772 = vrot.slane %v2617, %v2771
    %2774 = vmatprep.subr.mxu0 0.0
    %2775 = vmatpush1.msra.mxu0 %v2608
    %2776 = vmatprep.subr.mxu0 0.0
    %2777 = vmatpush1.msra.mxu0 %v2609
    %2778 = vmatprep.subr.mxu0 0.0
    %2779 = vmatpush1.msra.mxu0 %v2610
    %2780 = vmatprep.subr.mxu0 0.0
    %2781 = vmatpush1.msra.mxu0 %v2611
    %2782 = vmatprep.subr.mxu0 0.0
    %2783 = vmatpush1.msra.mxu0 0.0
    %2784 = vmatprep.subr.mxu0 0.0
    %2785 = vmatpush1.msra.mxu0 0.0
    %2786 = vmatprep.subr.mxu0 0.0
    %2787 = vmatpush1.msra.mxu0 0.0
    %2788 = vmatprep.subr.mxu0 0.0
    %2789 = vmatpush1.msra.mxu0 0.0
    %2790 = vmatprep.subr.mxu0 0.0
    %2791 = vmatpush1.msra.mxu0 0.0
    %2792 = vmatprep.subr.mxu0 0.0
    %2793 = vmatpush1.msra.mxu0 0.0
    %2794 = vmatprep.subr.mxu0 0.0
    %2795 = vmatpush1.msra.mxu0 0.0
    %2796 = vmatprep.subr.mxu0 0.0
    %2797 = vmatpush1.msra.mxu0 0.0
    %2798 = vmatprep.subr.mxu0 0.0
    %2799 = vmatpush1.msra.mxu0 0.0
    %2800 = vmatprep.subr.mxu0 0.0
    %2801 = vmatpush1.msra.mxu0 0.0
    %2802 = vmatprep.subr.mxu0 0.0
    %2803 = vmatpush1.msra.mxu0 0.0
    %2804 = vmatprep.subr.mxu0 0.0
    %2805 = vmatpush1.msra.mxu0 0.0
    %2806 = vmatprep.subr.mxu0 0.0
    %2807 = vmatpush1.msra.mxu0 0.0
    %2808 = vmatprep.subr.mxu0 0.0
    %2809 = vmatpush1.msra.mxu0 0.0
    %2810 = vmatprep.subr.mxu0 0.0
    %2811 = vmatpush1.msra.mxu0 0.0
    %2812 = vmatprep.subr.mxu0 0.0
    %2813 = vmatpush1.msra.mxu0 0.0
    %2814 = vmatprep.subr.mxu0 0.0
    %2815 = vmatpush1.msra.mxu0 0.0
    %2816 = vmatprep.subr.mxu0 0.0
    %2817 = vmatpush1.msra.mxu0 0.0
    %2818 = vmatprep.subr.mxu0 0.0
    %2819 = vmatpush1.msra.mxu0 0.0
    %2820 = vmatprep.subr.mxu0 0.0
    %2821 = vmatpush1.msra.mxu0 0.0
    %2822 = vmatprep.subr.mxu0 0.0
    %2823 = vmatpush1.msra.mxu0 0.0
    %2824 = vmatprep.subr.mxu0 0.0
    %2825 = vmatpush1.msra.mxu0 0.0
    %2826 = vmatprep.subr.mxu0 0.0
    %2827 = vmatpush1.msra.mxu0 0.0
    %2828 = vmatprep.subr.mxu0 0.0
    %2829 = vmatpush1.msra.mxu0 0.0
    %2830 = vmatprep.subr.mxu0 0.0
    %2831 = vmatpush1.msra.mxu0 0.0
    %2832 = vmatprep.subr.mxu0 0.0
    %2833 = vmatpush1.msra.mxu0 0.0
    %2834 = vmatprep.subr.mxu0 0.0
    %2835 = vmatpush1.msra.mxu0 0.0
    %2836 = vmatprep.subr.mxu0 0.0
    %2837 = vmatpush1.msra.mxu0 0.0
    %2838 = vmatprep.mubr.f32.mxu0 0.0
    %2839 = vmatmul.mubr.f32.gmra.mrb[0].mxu0 %v289
    %v2840 = vpop.f32.mrb[0].mxu0
    %v2841 = vadd.f32 %v2772, %v2840
    %v2842 = vpop.f32.mrb[0].mxu0
    %2843 = vmatprep.mubr.f32.mxu0 0.0
    %2844 = vmatmul.mubr.f32.gmra.mrb[0].mxu0 %v292
    %v2845 = vpop.f32.mrb[0].mxu0
    %v2846 = vadd.f32 %v2772, %v2845
    %v2847 = vpop.f32.mrb[0].mxu0
    %2848 = vdwg.mxu0
    %v2850 = vsel %vm369, %v2760, 0
    %v2853 = vsel %vm369, %v2841, 0
    %2855 = vmatprep.subr.mxu0 0.0
    %2856 = vmatpush1.xpose.msra.mxu0 %v2853
    %2857 = vmatprep.subr.mxu0 0.0
    %2858 = vmatpush1.xpose.msra.mxu0 0.0
    %2859 = vmatprep.subr.mxu0 0.0
    %2860 = vmatpush1.xpose.msra.mxu0 0.0
    %2861 = vmatprep.subr.mxu0 0.0
    %2862 = vmatpush1.xpose.msra.mxu0 0.0
    %2863 = vmatprep.subr.mxu0 0.0
    %2864 = vmatpush1.xpose.msra.mxu0 0.0
    %2865 = vmatprep.subr.mxu0 0.0
    %2866 = vmatpush1.xpose.msra.mxu0 0.0
    %2867 = vmatprep.subr.mxu0 0.0
    %2868 = vmatpush1.xpose.msra.mxu0 0.0
    %2869 = vmatprep.subr.mxu0 0.0
    %2870 = vmatpush1.xpose.msra.mxu0 0.0
    %2871 = vmatprep.subr.mxu0 0.0
    %2872 = vmatpush1.xpose.msra.mxu0 0.0
    %2873 = vmatprep.subr.mxu0 0.0
    %2874 = vmatpush1.xpose.msra.mxu0 0.0
    %2875 = vmatprep.subr.mxu0 0.0
    %2876 = vmatpush1.xpose.msra.mxu0 0.0
    %2877 = vmatprep.subr.mxu0 0.0
    %2878 = vmatpush1.xpose.msra.mxu0 0.0
    %2879 = vmatprep.subr.mxu0 0.0
    %2880 = vmatpush1.xpose.msra.mxu0 0.0
    %2881 = vmatprep.subr.mxu0 0.0
    %2882 = vmatpush1.xpose.msra.mxu0 0.0
    %2883 = vmatprep.subr.mxu0 0.0
    %2884 = vmatpush1.xpose.msra.mxu0 0.0
    %2885 = vmatprep.subr.mxu0 0.0
    %2886 = vmatpush1.xpose.msra.mxu0 0.0
    %2887 = vmatprep.subr.mxu0 0.0
    %2888 = vmatpush1.xpose.msra.mxu0 0.0
    %2889 = vmatprep.subr.mxu0 0.0
    %2890 = vmatpush1.xpose.msra.mxu0 0.0
    %2891 = vmatprep.subr.mxu0 0.0
    %2892 = vmatpush1.xpose.msra.mxu0 0.0
    %2893 = vmatprep.subr.mxu0 0.0
    %2894 = vmatpush1.xpose.msra.mxu0 0.0
    %2895 = vmatprep.subr.mxu0 0.0
    %2896 = vmatpush1.xpose.msra.mxu0 0.0
    %2897 = vmatprep.subr.mxu0 0.0
    %2898 = vmatpush1.xpose.msra.mxu0 0.0
    %2899 = vmatprep.subr.mxu0 0.0
    %2900 = vmatpush1.xpose.msra.mxu0 0.0
    %2901 = vmatprep.subr.mxu0 0.0
    %2902 = vmatpush1.xpose.msra.mxu0 0.0
    %2903 = vmatprep.subr.mxu0 0.0
    %2904 = vmatpush1.xpose.msra.mxu0 0.0
    %2905 = vmatprep.subr.mxu0 0.0
    %2906 = vmatpush1.xpose.msra.mxu0 0.0
    %2907 = vmatprep.subr.mxu0 0.0
    %2908 = vmatpush1.xpose.msra.mxu0 0.0
    %2909 = vmatprep.subr.mxu0 0.0
    %2910 = vmatpush1.xpose.msra.mxu0 0.0
    %2911 = vmatprep.subr.mxu0 0.0
    %2912 = vmatpush1.xpose.msra.mxu0 0.0
    %2913 = vmatprep.subr.mxu0 0.0
    %2914 = vmatpush1.xpose.msra.mxu0 0.0
    %2915 = vmatprep.subr.mxu0 0.0
    %2916 = vmatpush1.xpose.msra.mxu0 0.0
    %2917 = vmatprep.subr.mxu0 0.0
    %2918 = vmatpush1.xpose.msra.mxu0 0.0
    %2919 = vmatprep.mubr.f32.mxu0 0.0
    %2920 = vmatmul.mubr.f32.gmra.mrb[0].mxu0 %v2850
    %v2921 = vpop.f32.mrb[0].mxu0
    %v2922 = vadd.f32 %v90, %v2921
    %v2923 = vpop.f32.mrb[0].mxu0
    %2924 = vdwg.mxu0
    %v2926 = vsel %vm369, %v2765, 0
    %v2929 = vsel %vm369, %v2846, 0
    %2931 = vmatprep.subr.mxu0 0.0
    %2932 = vmatpush1.xpose.msra.mxu0 %v2929
    %2933 = vmatprep.subr.mxu0 0.0
    %2934 = vmatpush1.xpose.msra.mxu0 0.0
    %2935 = vmatprep.subr.mxu0 0.0
    %2936 = vmatpush1.xpose.msra.mxu0 0.0
    %2937 = vmatprep.subr.mxu0 0.0
    %2938 = vmatpush1.xpose.msra.mxu0 0.0
    %2939 = vmatprep.subr.mxu0 0.0
    %2940 = vmatpush1.xpose.msra.mxu0 0.0
    %2941 = vmatprep.subr.mxu0 0.0
    %2942 = vmatpush1.xpose.msra.mxu0 0.0
    %2943 = vmatprep.subr.mxu0 0.0
    %2944 = vmatpush1.xpose.msra.mxu0 0.0
    %2945 = vmatprep.subr.mxu0 0.0
    %2946 = vmatpush1.xpose.msra.mxu0 0.0
    %2947 = vmatprep.subr.mxu0 0.0
    %2948 = vmatpush1.xpose.msra.mxu0 0.0
    %2949 = vmatprep.subr.mxu0 0.0
    %2950 = vmatpush1.xpose.msra.mxu0 0.0
    %2951 = vmatprep.subr.mxu0 0.0
    %2952 = vmatpush1.xpose.msra.mxu0 0.0
    %2953 = vmatprep.subr.mxu0 0.0
    %2954 = vmatpush1.xpose.msra.mxu0 0.0
    %2955 = vmatprep.subr.mxu0 0.0
    %2956 = vmatpush1.xpose.msra.mxu0 0.0
    %2957 = vmatprep.subr.mxu0 0.0
    %2958 = vmatpush1.xpose.msra.mxu0 0.0
    %2959 = vmatprep.subr.mxu0 0.0
    %2960 = vmatpush1.xpose.msra.mxu0 0.0
    %2961 = vmatprep.subr.mxu0 0.0
    %2962 = vmatpush1.xpose.msra.mxu0 0.0
    %2963 = vmatprep.subr.mxu0 0.0
    %2964 = vmatpush1.xpose.msra.mxu0 0.0
    %2965 = vmatprep.subr.mxu0 0.0
    %2966 = vmatpush1.xpose.msra.mxu0 0.0
    %2967 = vmatprep.subr.mxu0 0.0
    %2968 = vmatpush1.xpose.msra.mxu0 0.0
    %2969 = vmatprep.subr.mxu0 0.0
    %2970 = vmatpush1.xpose.msra.mxu0 0.0
    %2971 = vmatprep.subr.mxu0 0.0
    %2972 = vmatpush1.xpose.msra.mxu0 0.0
    %2973 = vmatprep.subr.mxu0 0.0
    %2974 = vmatpush1.xpose.msra.mxu0 0.0
    %2975 = vmatprep.subr.mxu0 0.0
    %2976 = vmatpush1.xpose.msra.mxu0 0.0
    %2977 = vmatprep.subr.mxu0 0.0
    %2978 = vmatpush1.xpose.msra.mxu0 0.0
    %2979 = vmatprep.subr.mxu0 0.0
    %2980 = vmatpush1.xpose.msra.mxu0 0.0
    %2981 = vmatprep.subr.mxu0 0.0
    %2982 = vmatpush1.xpose.msra.mxu0 0.0
    %2983 = vmatprep.subr.mxu0 0.0
    %2984 = vmatpush1.xpose.msra.mxu0 0.0
    %2985 = vmatprep.subr.mxu0 0.0
    %2986 = vmatpush1.xpose.msra.mxu0 0.0
    %2987 = vmatprep.subr.mxu0 0.0
    %2988 = vmatpush1.xpose.msra.mxu0 0.0
    %2989 = vmatprep.subr.mxu0 0.0
    %2990 = vmatpush1.xpose.msra.mxu0 0.0
    %2991 = vmatprep.subr.mxu0 0.0
    %2992 = vmatpush1.xpose.msra.mxu0 0.0
    %2993 = vmatprep.subr.mxu0 0.0
    %2994 = vmatpush1.xpose.msra.mxu0 0.0
    %2995 = vmatprep.mubr.f32.mxu0 0.0
    %2996 = vmatmul.mubr.f32.gmra.mrb[0].mxu0 %v2926
    %v2997 = vpop.f32.mrb[0].mxu0
    %v2998 = vadd.f32 %v90, %v2997
    %v2999 = vpop.f32.mrb[0].mxu0
    %3000 = vdwg.mxu0
    %v3001 = vsel %vm522, %v2922, -inf
    %3002 = vmax.xlane.f32.xlu0 %v3001
    %v3003 = vpop.xlane.xlu0 %3002
    %v3004 = vsel %vm522, %v2998, -inf
    %3005 = vmax.xlane.f32.xlu0 %v3004
    %v3006 = vpop.xlane.xlu0 %3005
    %v3007 = vsub.f32 %v2922, %v3003
    %v3008 = vsub.f32 %v2998, %v3006
    %v3009 = vmul.f32 %v3007, 1.442695
    %v3010 = vpow.pop %v3009
    %v3011 = vmul.f32 %v3008, 1.442695
    %v3012 = vpow.pop %v3011
    %v3013 = vsel %vm522, %v3010, 0.0
    %3014 = vadd.xlane.f32.xlu0 %v3013
    %v3015 = vpop.xlane.xlu0 %3014
    %v3016 = vsel %vm522, %v3012, 0.0
    %3017 = vadd.xlane.f32.xlu0 %v3016
    %v3018 = vpop.xlane.xlu0 %3017
    %v3019 = vrcp.pop %v3015
    %v3020 = vmul.f32 %v3010, %v3019
    %v3021 = vrcp.pop %v3018
    %v3022 = vmul.f32 %v3012, %v3021
    %3023 = vrot.lane.b32.xlu0 %v2841, 96
    %v3024 = vpop.permute.xlu0 %3023
    %v3027 = vsel %vm522, %v3020, 0
    %3029 = vmatprep.subr.mxu0 0.0
    %3030 = vmatpush1.msra.mxu0 %v3024
    %3031 = vmatprep.subr.mxu0 0.0
    %3032 = vmatpush1.msra.mxu0 0.0
    %3033 = vmatprep.subr.mxu0 0.0
    %3034 = vmatpush1.msra.mxu0 0.0
    %3035 = vmatprep.subr.mxu0 0.0
    %3036 = vmatpush1.msra.mxu0 0.0
    %3037 = vmatprep.subr.mxu0 0.0
    %3038 = vmatpush1.msra.mxu0 0.0
    %3039 = vmatprep.subr.mxu0 0.0
    %3040 = vmatpush1.msra.mxu0 0.0
    %3041 = vmatprep.subr.mxu0 0.0
    %3042 = vmatpush1.msra.mxu0 0.0
    %3043 = vmatprep.subr.mxu0 0.0
    %3044 = vmatpush1.msra.mxu0 0.0
    %3045 = vmatprep.subr.mxu0 0.0
    %3046 = vmatpush1.msra.mxu0 0.0
    %3047 = vmatprep.subr.mxu0 0.0
    %3048 = vmatpush1.msra.mxu0 0.0
    %3049 = vmatprep.subr.mxu0 0.0
    %3050 = vmatpush1.msra.mxu0 0.0
    %3051 = vmatprep.subr.mxu0 0.0
    %3052 = vmatpush1.msra.mxu0 0.0
    %3053 = vmatprep.subr.mxu0 0.0
    %3054 = vmatpush1.msra.mxu0 0.0
    %3055 = vmatprep.subr.mxu0 0.0
    %3056 = vmatpush1.msra.mxu0 0.0
    %3057 = vmatprep.subr.mxu0 0.0
    %3058 = vmatpush1.msra.mxu0 0.0
    %3059 = vmatprep.subr.mxu0 0.0
    %3060 = vmatpush1.msra.mxu0 0.0
    %3061 = vmatprep.subr.mxu0 0.0
    %3062 = vmatpush1.msra.mxu0 0.0
    %3063 = vmatprep.subr.mxu0 0.0
    %3064 = vmatpush1.msra.mxu0 0.0
    %3065 = vmatprep.subr.mxu0 0.0
    %3066 = vmatpush1.msra.mxu0 0.0
    %3067 = vmatprep.subr.mxu0 0.0
    %3068 = vmatpush1.msra.mxu0 0.0
    %3069 = vmatprep.subr.mxu0 0.0
    %3070 = vmatpush1.msra.mxu0 0.0
    %3071 = vmatprep.subr.mxu0 0.0
    %3072 = vmatpush1.msra.mxu0 0.0
    %3073 = vmatprep.subr.mxu0 0.0
    %3074 = vmatpush1.msra.mxu0 0.0
    %3075 = vmatprep.subr.mxu0 0.0
    %3076 = vmatpush1.msra.mxu0 0.0
    %3077 = vmatprep.subr.mxu0 0.0
    %3078 = vmatpush1.msra.mxu0 0.0
    %3079 = vmatprep.subr.mxu0 0.0
    %3080 = vmatpush1.msra.mxu0 0.0
    %3081 = vmatprep.subr.mxu0 0.0
    %3082 = vmatpush1.msra.mxu0 0.0
    %3083 = vmatprep.subr.mxu0 0.0
    %3084 = vmatpush1.msra.mxu0 0.0
    %3085 = vmatprep.subr.mxu0 0.0
    %3086 = vmatpush1.msra.mxu0 0.0
    %3087 = vmatprep.subr.mxu0 0.0
    %3088 = vmatpush1.msra.mxu0 0.0
    %3089 = vmatprep.subr.mxu0 0.0
    %3090 = vmatpush1.msra.mxu0 0.0
    %3091 = vmatprep.subr.mxu0 0.0
    %3092 = vmatpush1.msra.mxu0 0.0
    %3093 = vmatprep.mubr.f32.mxu0 0.0
    %3094 = vmatmul.mubr.f32.gmra.mrb[0].mxu0 %v3027
    %v3095 = vpop.f32.mrb[0].mxu0
    %v3096 = vadd.f32 0.0, %v3095
    %v3097 = vpop.f32.mrb[0].mxu0
    %3098 = vdwg.mxu0
    %3099 = vrot.lane.b32.xlu0 %v2846, 96
    %v3100 = vpop.permute.xlu0 %3099
    %v3103 = vsel %vm522, %v3022, 0
    %3105 = vmatprep.subr.mxu0 0.0
    %3106 = vmatpush1.msra.mxu0 %v3100
    %3107 = vmatprep.subr.mxu0 0.0
    %3108 = vmatpush1.msra.mxu0 0.0
    %3109 = vmatprep.subr.mxu0 0.0
    %3110 = vmatpush1.msra.mxu0 0.0
    %3111 = vmatprep.subr.mxu0 0.0
    %3112 = vmatpush1.msra.mxu0 0.0
    %3113 = vmatprep.subr.mxu0 0.0
    %3114 = vmatpush1.msra.mxu0 0.0
    %3115 = vmatprep.subr.mxu0 0.0
    %3116 = vmatpush1.msra.mxu0 0.0
    %3117 = vmatprep.subr.mxu0 0.0
    %3118 = vmatpush1.msra.mxu0 0.0
    %3119 = vmatprep.subr.mxu0 0.0
    %3120 = vmatpush1.msra.mxu0 0.0
    %3121 = vmatprep.subr.mxu0 0.0
    %3122 = vmatpush1.msra.mxu0 0.0
    %3123 = vmatprep.subr.mxu0 0.0
    %3124 = vmatpush1.msra.mxu0 0.0
    %3125 = vmatprep.subr.mxu0 0.0
    %3126 = vmatpush1.msra.mxu0 0.0
    %3127 = vmatprep.subr.mxu0 0.0
    %3128 = vmatpush1.msra.mxu0 0.0
    %3129 = vmatprep.subr.mxu0 0.0
    %3130 = vmatpush1.msra.mxu0 0.0
    %3131 = vmatprep.subr.mxu0 0.0
    %3132 = vmatpush1.msra.mxu0 0.0
    %3133 = vmatprep.subr.mxu0 0.0
    %3134 = vmatpush1.msra.mxu0 0.0
    %3135 = vmatprep.subr.mxu0 0.0
    %3136 = vmatpush1.msra.mxu0 0.0
    %3137 = vmatprep.subr.mxu0 0.0
    %3138 = vmatpush1.msra.mxu0 0.0
    %3139 = vmatprep.subr.mxu0 0.0
    %3140 = vmatpush1.msra.mxu0 0.0
    %3141 = vmatprep.subr.mxu0 0.0
    %3142 = vmatpush1.msra.mxu0 0.0
    %3143 = vmatprep.subr.mxu0 0.0
    %3144 = vmatpush1.msra.mxu0 0.0
    %3145 = vmatprep.subr.mxu0 0.0
    %3146 = vmatpush1.msra.mxu0 0.0
    %3147 = vmatprep.subr.mxu0 0.0
    %3148 = vmatpush1.msra.mxu0 0.0
    %3149 = vmatprep.subr.mxu0 0.0
    %3150 = vmatpush1.msra.mxu0 0.0
    %3151 = vmatprep.subr.mxu0 0.0
    %3152 = vmatpush1.msra.mxu0 0.0
    %3153 = vmatprep.subr.mxu0 0.0
    %3154 = vmatpush1.msra.mxu0 0.0
    %3155 = vmatprep.subr.mxu0 0.0
    %3156 = vmatpush1.msra.mxu0 0.0
    %3157 = vmatprep.subr.mxu0 0.0
    %3158 = vmatpush1.msra.mxu0 0.0
    %3159 = vmatprep.subr.mxu0 0.0
    %3160 = vmatpush1.msra.mxu0 0.0
    %3161 = vmatprep.subr.mxu0 0.0
    %3162 = vmatpush1.msra.mxu0 0.0
    %3163 = vmatprep.subr.mxu0 0.0
    %3164 = vmatpush1.msra.mxu0 0.0
    %3165 = vmatprep.subr.mxu0 0.0
    %3166 = vmatpush1.msra.mxu0 0.0
    %3167 = vmatprep.subr.mxu0 0.0
    %3168 = vmatpush1.msra.mxu0 0.0
    %3169 = vmatprep.mubr.f32.mxu0 0.0
    %3170 = vmatmul.mubr.f32.gmra.mrb[0].mxu0 %v3103
    %v3171 = vpop.f32.mrb[0].mxu0
    %v3172 = vadd.f32 0.0, %v3171
    %v3173 = vpop.f32.mrb[0].mxu0
    %3174 = vdwg.mxu0
    %3175 = vrot.lane.b32.xlu0 %v2760, 112
    %v3176 = vpop.permute.xlu0 %3175
    %3177 = vrot.lane.b32.xlu0 %v2841, 112
    %v3178 = vpop.permute.xlu0 %3177
    %v3179 = vsel %vm369, %v3176, 0
    %v3181 = vsel %vm369, %v3178, 0
    %3183 = vmatprep.subr.mxu0 0.0
    %3184 = vmatpush1.xpose.msra.mxu0 %v3181
    %3185 = vmatprep.subr.mxu0 0.0
    %3186 = vmatpush1.xpose.msra.mxu0 0.0
    %3187 = vmatprep.subr.mxu0 0.0
    %3188 = vmatpush1.xpose.msra.mxu0 0.0
    %3189 = vmatprep.subr.mxu0 0.0
    %3190 = vmatpush1.xpose.msra.mxu0 0.0
    %3191 = vmatprep.subr.mxu0 0.0
    %3192 = vmatpush1.xpose.msra.mxu0 0.0
    %3193 = vmatprep.subr.mxu0 0.0
    %3194 = vmatpush1.xpose.msra.mxu0 0.0
    %3195 = vmatprep.subr.mxu0 0.0
    %3196 = vmatpush1.xpose.msra.mxu0 0.0
    %3197 = vmatprep.subr.mxu0 0.0
    %3198 = vmatpush1.xpose.msra.mxu0 0.0
    %3199 = vmatprep.subr.mxu0 0.0
    %3200 = vmatpush1.xpose.msra.mxu0 0.0
    %3201 = vmatprep.subr.mxu0 0.0
    %3202 = vmatpush1.xpose.msra.mxu0 0.0
    %3203 = vmatprep.subr.mxu0 0.0
    %3204 = vmatpush1.xpose.msra.mxu0 0.0
    %3205 = vmatprep.subr.mxu0 0.0
    %3206 = vmatpush1.xpose.msra.mxu0 0.0
    %3207 = vmatprep.subr.mxu0 0.0
    %3208 = vmatpush1.xpose.msra.mxu0 0.0
    %3209 = vmatprep.subr.mxu0 0.0
    %3210 = vmatpush1.xpose.msra.mxu0 0.0
    %3211 = vmatprep.subr.mxu0 0.0
    %3212 = vmatpush1.xpose.msra.mxu0 0.0
    %3213 = vmatprep.subr.mxu0 0.0
    %3214 = vmatpush1.xpose.msra.mxu0 0.0
    %3215 = vmatprep.subr.mxu0 0.0
    %3216 = vmatpush1.xpose.msra.mxu0 0.0
    %3217 = vmatprep.subr.mxu0 0.0
    %3218 = vmatpush1.xpose.msra.mxu0 0.0
    %3219 = vmatprep.subr.mxu0 0.0
    %3220 = vmatpush1.xpose.msra.mxu0 0.0
    %3221 = vmatprep.subr.mxu0 0.0
    %3222 = vmatpush1.xpose.msra.mxu0 0.0
    %3223 = vmatprep.subr.mxu0 0.0
    %3224 = vmatpush1.xpose.msra.mxu0 0.0
    %3225 = vmatprep.subr.mxu0 0.0
    %3226 = vmatpush1.xpose.msra.mxu0 0.0
    %3227 = vmatprep.subr.mxu0 0.0
    %3228 = vmatpush1.xpose.msra.mxu0 0.0
    %3229 = vmatprep.subr.mxu0 0.0
    %3230 = vmatpush1.xpose.msra.mxu0 0.0
    %3231 = vmatprep.subr.mxu0 0.0
    %3232 = vmatpush1.xpose.msra.mxu0 0.0
    %3233 = vmatprep.subr.mxu0 0.0
    %3234 = vmatpush1.xpose.msra.mxu0 0.0
    %3235 = vmatprep.subr.mxu0 0.0
    %3236 = vmatpush1.xpose.msra.mxu0 0.0
    %3237 = vmatprep.subr.mxu0 0.0
    %3238 = vmatpush1.xpose.msra.mxu0 0.0
    %3239 = vmatprep.subr.mxu0 0.0
    %3240 = vmatpush1.xpose.msra.mxu0 0.0
    %3241 = vmatprep.subr.mxu0 0.0
    %3242 = vmatpush1.xpose.msra.mxu0 0.0
    %3243 = vmatprep.subr.mxu0 0.0
    %3244 = vmatpush1.xpose.msra.mxu0 0.0
    %3245 = vmatprep.subr.mxu0 0.0
    %3246 = vmatpush1.xpose.msra.mxu0 0.0
    %3247 = vmatprep.mubr.f32.mxu0 0.0
    %3248 = vmatmul.mubr.f32.gmra.mrb[0].mxu0 %v3179
    %v3249 = vpop.f32.mrb[0].mxu0
    %v3250 = vadd.f32 %v90, %v3249
    %v3251 = vpop.f32.mrb[0].mxu0
    %3252 = vdwg.mxu0
    %3253 = vrot.lane.b32.xlu0 %v2765, 112
    %v3254 = vpop.permute.xlu0 %3253
    %3255 = vrot.lane.b32.xlu0 %v2846, 112
    %v3256 = vpop.permute.xlu0 %3255
    %v3257 = vsel %vm369, %v3254, 0
    %v3259 = vsel %vm369, %v3256, 0
    %3261 = vmatprep.subr.mxu0 0.0
    %3262 = vmatpush1.xpose.msra.mxu0 %v3259
    %3263 = vmatprep.subr.mxu0 0.0
    %3264 = vmatpush1.xpose.msra.mxu0 0.0
    %3265 = vmatprep.subr.mxu0 0.0
    %3266 = vmatpush1.xpose.msra.mxu0 0.0
    %3267 = vmatprep.subr.mxu0 0.0
    %3268 = vmatpush1.xpose.msra.mxu0 0.0
    %3269 = vmatprep.subr.mxu0 0.0
    %3270 = vmatpush1.xpose.msra.mxu0 0.0
    %3271 = vmatprep.subr.mxu0 0.0
    %3272 = vmatpush1.xpose.msra.mxu0 0.0
    %3273 = vmatprep.subr.mxu0 0.0
    %3274 = vmatpush1.xpose.msra.mxu0 0.0
    %3275 = vmatprep.subr.mxu0 0.0
    %3276 = vmatpush1.xpose.msra.mxu0 0.0
    %3277 = vmatprep.subr.mxu0 0.0
    %3278 = vmatpush1.xpose.msra.mxu0 0.0
    %3279 = vmatprep.subr.mxu0 0.0
    %3280 = vmatpush1.xpose.msra.mxu0 0.0
    %3281 = vmatprep.subr.mxu0 0.0
    %3282 = vmatpush1.xpose.msra.mxu0 0.0
    %3283 = vmatprep.subr.mxu0 0.0
    %3284 = vmatpush1.xpose.msra.mxu0 0.0
    %3285 = vmatprep.subr.mxu0 0.0
    %3286 = vmatpush1.xpose.msra.mxu0 0.0
    %3287 = vmatprep.subr.mxu0 0.0
    %3288 = vmatpush1.xpose.msra.mxu0 0.0
    %3289 = vmatprep.subr.mxu0 0.0
    %3290 = vmatpush1.xpose.msra.mxu0 0.0
    %3291 = vmatprep.subr.mxu0 0.0
    %3292 = vmatpush1.xpose.msra.mxu0 0.0
    %3293 = vmatprep.subr.mxu0 0.0
    %3294 = vmatpush1.xpose.msra.mxu0 0.0
    %3295 = vmatprep.subr.mxu0 0.0
    %3296 = vmatpush1.xpose.msra.mxu0 0.0
    %3297 = vmatprep.subr.mxu0 0.0
    %3298 = vmatpush1.xpose.msra.mxu0 0.0
    %3299 = vmatprep.subr.mxu0 0.0
    %3300 = vmatpush1.xpose.msra.mxu0 0.0
    %3301 = vmatprep.subr.mxu0 0.0
    %3302 = vmatpush1.xpose.msra.mxu0 0.0
    %3303 = vmatprep.subr.mxu0 0.0
    %3304 = vmatpush1.xpose.msra.mxu0 0.0
    %3305 = vmatprep.subr.mxu0 0.0
    %3306 = vmatpush1.xpose.msra.mxu0 0.0
    %3307 = vmatprep.subr.mxu0 0.0
    %3308 = vmatpush1.xpose.msra.mxu0 0.0
    %3309 = vmatprep.subr.mxu0 0.0
    %3310 = vmatpush1.xpose.msra.mxu0 0.0
    %3311 = vmatprep.subr.mxu0 0.0
    %3312 = vmatpush1.xpose.msra.mxu0 0.0
    %3313 = vmatprep.subr.mxu0 0.0
    %3314 = vmatpush1.xpose.msra.mxu0 0.0
    %3315 = vmatprep.subr.mxu0 0.0
    %3316 = vmatpush1.xpose.msra.mxu0 0.0
    %3317 = vmatprep.subr.mxu0 0.0
    %3318 = vmatpush1.xpose.msra.mxu0 0.0
    %3319 = vmatprep.subr.mxu0 0.0
    %3320 = vmatpush1.xpose.msra.mxu0 0.0
    %3321 = vmatprep.subr.mxu0 0.0
    %3322 = vmatpush1.xpose.msra.mxu0 0.0
    %3323 = vmatprep.subr.mxu0 0.0
    %3324 = vmatpush1.xpose.msra.mxu0 0.0
    %3325 = vmatprep.mubr.f32.mxu0 0.0
    %3326 = vmatmul.mubr.f32.gmra.mrb[0].mxu0 %v3257
    %v3327 = vpop.f32.mrb[0].mxu0
    %v3328 = vadd.f32 %v90, %v3327
    %v3329 = vpop.f32.mrb[0].mxu0
    %3330 = vdwg.mxu0
    %v3331 = vsel %vm522, %v3250, -inf
    %3332 = vmax.xlane.f32.xlu0 %v3331
    %v3333 = vpop.xlane.xlu0 %3332
    %v3334 = vsel %vm522, %v3328, -inf
    %3335 = vmax.xlane.f32.xlu0 %v3334
    %v3336 = vpop.xlane.xlu0 %3335
    %v3337 = vsub.f32 %v3250, %v3333
    %v3338 = vsub.f32 %v3328, %v3336
    %v3339 = vmul.f32 %v3337, 1.442695
    %v3340 = vpow.pop %v3339
    %v3341 = vmul.f32 %v3338, 1.442695
    %v3342 = vpow.pop %v3341
    %v3343 = vsel %vm522, %v3340, 0.0
    %3344 = vadd.xlane.f32.xlu0 %v3343
    %v3345 = vpop.xlane.xlu0 %3344
    %v3346 = vsel %vm522, %v3342, 0.0
    %3347 = vadd.xlane.f32.xlu0 %v3346
    %v3348 = vpop.xlane.xlu0 %3347
    %v3349 = vrcp.pop %v3345
    %v3350 = vmul.f32 %v3340, %v3349
    %v3351 = vrcp.pop %v3348
    %v3352 = vmul.f32 %v3342, %v3351
    %3353 = vrot.lane.b32.xlu0 %v2841, 80
    %v3354 = vpop.permute.xlu0 %3353
    %v3357 = vsel %vm522, %v3350, 0
    %3359 = vmatprep.subr.mxu0 0.0
    %3360 = vmatpush1.msra.mxu0 %v3354
    %3361 = vmatprep.subr.mxu0 0.0
    %3362 = vmatpush1.msra.mxu0 0.0
    %3363 = vmatprep.subr.mxu0 0.0
    %3364 = vmatpush1.msra.mxu0 0.0
    %3365 = vmatprep.subr.mxu0 0.0
    %3366 = vmatpush1.msra.mxu0 0.0
    %3367 = vmatprep.subr.mxu0 0.0
    %3368 = vmatpush1.msra.mxu0 0.0
    %3369 = vmatprep.subr.mxu0 0.0
    %3370 = vmatpush1.msra.mxu0 0.0
    %3371 = vmatprep.subr.mxu0 0.0
    %3372 = vmatpush1.msra.mxu0 0.0
    %3373 = vmatprep.subr.mxu0 0.0
    %3374 = vmatpush1.msra.mxu0 0.0
    %3375 = vmatprep.subr.mxu0 0.0
    %3376 = vmatpush1.msra.mxu0 0.0
    %3377 = vmatprep.subr.mxu0 0.0
    %3378 = vmatpush1.msra.mxu0 0.0
    %3379 = vmatprep.subr.mxu0 0.0
    %3380 = vmatpush1.msra.mxu0 0.0
    %3381 = vmatprep.subr.mxu0 0.0
    %3382 = vmatpush1.msra.mxu0 0.0
    %3383 = vmatprep.subr.mxu0 0.0
    %3384 = vmatpush1.msra.mxu0 0.0
    %3385 = vmatprep.subr.mxu0 0.0
    %3386 = vmatpush1.msra.mxu0 0.0
    %3387 = vmatprep.subr.mxu0 0.0
    %3388 = vmatpush1.msra.mxu0 0.0
    %3389 = vmatprep.subr.mxu0 0.0
    %3390 = vmatpush1.msra.mxu0 0.0
    %3391 = vmatprep.subr.mxu0 0.0
    %3392 = vmatpush1.msra.mxu0 0.0
    %3393 = vmatprep.subr.mxu0 0.0
    %3394 = vmatpush1.msra.mxu0 0.0
    %3395 = vmatprep.subr.mxu0 0.0
    %3396 = vmatpush1.msra.mxu0 0.0
    %3397 = vmatprep.subr.mxu0 0.0
    %3398 = vmatpush1.msra.mxu0 0.0
    %3399 = vmatprep.subr.mxu0 0.0
    %3400 = vmatpush1.msra.mxu0 0.0
    %3401 = vmatprep.subr.mxu0 0.0
    %3402 = vmatpush1.msra.mxu0 0.0
    %3403 = vmatprep.subr.mxu0 0.0
    %3404 = vmatpush1.msra.mxu0 0.0
    %3405 = vmatprep.subr.mxu0 0.0
    %3406 = vmatpush1.msra.mxu0 0.0
    %3407 = vmatprep.subr.mxu0 0.0
    %3408 = vmatpush1.msra.mxu0 0.0
    %3409 = vmatprep.subr.mxu0 0.0
    %3410 = vmatpush1.msra.mxu0 0.0
    %3411 = vmatprep.subr.mxu0 0.0
    %3412 = vmatpush1.msra.mxu0 0.0
    %3413 = vmatprep.subr.mxu0 0.0
    %3414 = vmatpush1.msra.mxu0 0.0
    %3415 = vmatprep.subr.mxu0 0.0
    %3416 = vmatpush1.msra.mxu0 0.0
    %3417 = vmatprep.subr.mxu0 0.0
    %3418 = vmatpush1.msra.mxu0 0.0
    %3419 = vmatprep.subr.mxu0 0.0
    %3420 = vmatpush1.msra.mxu0 0.0
    %3421 = vmatprep.subr.mxu0 0.0
    %3422 = vmatpush1.msra.mxu0 0.0
    %3423 = vmatprep.mubr.f32.mxu0 0.0
    %3424 = vmatmul.mubr.f32.gmra.mrb[0].mxu0 %v3357
    %v3425 = vpop.f32.mrb[0].mxu0
    %v3426 = vadd.f32 0.0, %v3425
    %v3427 = vpop.f32.mrb[0].mxu0
    %3428 = vdwg.mxu0
    %3429 = vrot.lane.b32.xlu0 %v2846, 80
    %v3430 = vpop.permute.xlu0 %3429
    %v3433 = vsel %vm522, %v3352, 0
    %3435 = vmatprep.subr.mxu0 0.0
    %3436 = vmatpush1.msra.mxu0 %v3430
    %3437 = vmatprep.subr.mxu0 0.0
    %3438 = vmatpush1.msra.mxu0 0.0
    %3439 = vmatprep.subr.mxu0 0.0
    %3440 = vmatpush1.msra.mxu0 0.0
    %3441 = vmatprep.subr.mxu0 0.0
    %3442 = vmatpush1.msra.mxu0 0.0
    %3443 = vmatprep.subr.mxu0 0.0
    %3444 = vmatpush1.msra.mxu0 0.0
    %3445 = vmatprep.subr.mxu0 0.0
    %3446 = vmatpush1.msra.mxu0 0.0
    %3447 = vmatprep.subr.mxu0 0.0
    %3448 = vmatpush1.msra.mxu0 0.0
    %3449 = vmatprep.subr.mxu0 0.0
    %3450 = vmatpush1.msra.mxu0 0.0
    %3451 = vmatprep.subr.mxu0 0.0
    %3452 = vmatpush1.msra.mxu0 0.0
    %3453 = vmatprep.subr.mxu0 0.0
    %3454 = vmatpush1.msra.mxu0 0.0
    %3455 = vmatprep.subr.mxu0 0.0
    %3456 = vmatpush1.msra.mxu0 0.0
    %3457 = vmatprep.subr.mxu0 0.0
    %3458 = vmatpush1.msra.mxu0 0.0
    %3459 = vmatprep.subr.mxu0 0.0
    %3460 = vmatpush1.msra.mxu0 0.0
    %3461 = vmatprep.subr.mxu0 0.0
    %3462 = vmatpush1.msra.mxu0 0.0
    %3463 = vmatprep.subr.mxu0 0.0
    %3464 = vmatpush1.msra.mxu0 0.0
    %3465 = vmatprep.subr.mxu0 0.0
    %3466 = vmatpush1.msra.mxu0 0.0
    %3467 = vmatprep.subr.mxu0 0.0
    %3468 = vmatpush1.msra.mxu0 0.0
    %3469 = vmatprep.subr.mxu0 0.0
    %3470 = vmatpush1.msra.mxu0 0.0
    %3471 = vmatprep.subr.mxu0 0.0
    %3472 = vmatpush1.msra.mxu0 0.0
    %3473 = vmatprep.subr.mxu0 0.0
    %3474 = vmatpush1.msra.mxu0 0.0
    %3475 = vmatprep.subr.mxu0 0.0
    %3476 = vmatpush1.msra.mxu0 0.0
    %3477 = vmatprep.subr.mxu0 0.0
    %3478 = vmatpush1.msra.mxu0 0.0
    %3479 = vmatprep.subr.mxu0 0.0
    %3480 = vmatpush1.msra.mxu0 0.0
    %3481 = vmatprep.subr.mxu0 0.0
    %3482 = vmatpush1.msra.mxu0 0.0
    %3483 = vmatprep.subr.mxu0 0.0
    %3484 = vmatpush1.msra.mxu0 0.0
    %3485 = vmatprep.subr.mxu0 0.0
    %3486 = vmatpush1.msra.mxu0 0.0
    %3487 = vmatprep.subr.mxu0 0.0
    %3488 = vmatpush1.msra.mxu0 0.0
    %3489 = vmatprep.subr.mxu0 0.0
    %3490 = vmatpush1.msra.mxu0 0.0
    %3491 = vmatprep.subr.mxu0 0.0
    %3492 = vmatpush1.msra.mxu0 0.0
    %3493 = vmatprep.subr.mxu0 0.0
    %3494 = vmatpush1.msra.mxu0 0.0
    %3495 = vmatprep.subr.mxu0 0.0
    %3496 = vmatpush1.msra.mxu0 0.0
    %3497 = vmatprep.subr.mxu0 0.0
    %3498 = vmatpush1.msra.mxu0 0.0
    %3499 = vmatprep.mubr.f32.mxu0 0.0
    %3500 = vmatmul.mubr.f32.gmra.mrb[0].mxu0 %v3433
    %v3501 = vpop.f32.mrb[0].mxu0
    %v3502 = vadd.f32 0.0, %v3501
    %v3503 = vpop.f32.mrb[0].mxu0
    %3504 = vdwg.mxu0
    %3507 = vrot.lane.b32.xlu0 %v3426, 16
    %v3508 = vpop.permute.xlu0 %3507
    %3509 = vrot.lane.b32.xlu0 %v3502, 16
    %v3510 = vpop.permute.xlu0 %3509
    %v3513 = vsel %vm369, %v3096, %v3508
    %v3514 = vsel %vm369, %v3172, %v3510
    %v3516 = vsel %vm151, %v3513, 0
    %v3519 = vsel %vm151, %v3514, 0
    %3521 = vmatprep.subr.mxu0 0.0
    %3522 = vmatpush1.msra.mxu0 %v2620
    %3523 = vmatprep.subr.mxu0 0.0
    %3524 = vmatpush1.msra.mxu0 %v2621
    %3525 = vmatprep.subr.mxu0 0.0
    %3526 = vmatpush1.msra.mxu0 %v2622
    %3527 = vmatprep.subr.mxu0 0.0
    %3528 = vmatpush1.msra.mxu0 %v2623
    %3529 = vmatprep.subr.mxu0 0.0
    %3530 = vmatpush1.msra.mxu0 0.0
    %3531 = vmatprep.subr.mxu0 0.0
    %3532 = vmatpush1.msra.mxu0 0.0
    %3533 = vmatprep.subr.mxu0 0.0
    %3534 = vmatpush1.msra.mxu0 0.0
    %3535 = vmatprep.subr.mxu0 0.0
    %3536 = vmatpush1.msra.mxu0 0.0
    %3537 = vmatprep.subr.mxu0 0.0
    %3538 = vmatpush1.msra.mxu0 0.0
    %3539 = vmatprep.subr.mxu0 0.0
    %3540 = vmatpush1.msra.mxu0 0.0
    %3541 = vmatprep.subr.mxu0 0.0
    %3542 = vmatpush1.msra.mxu0 0.0
    %3543 = vmatprep.subr.mxu0 0.0
    %3544 = vmatpush1.msra.mxu0 0.0
    %3545 = vmatprep.subr.mxu0 0.0
    %3546 = vmatpush1.msra.mxu0 0.0
    %3547 = vmatprep.subr.mxu0 0.0
    %3548 = vmatpush1.msra.mxu0 0.0
    %3549 = vmatprep.subr.mxu0 0.0
    %3550 = vmatpush1.msra.mxu0 0.0
    %3551 = vmatprep.subr.mxu0 0.0
    %3552 = vmatpush1.msra.mxu0 0.0
    %3553 = vmatprep.subr.mxu0 0.0
    %3554 = vmatpush1.msra.mxu0 0.0
    %3555 = vmatprep.subr.mxu0 0.0
    %3556 = vmatpush1.msra.mxu0 0.0
    %3557 = vmatprep.subr.mxu0 0.0
    %3558 = vmatpush1.msra.mxu0 0.0
    %3559 = vmatprep.subr.mxu0 0.0
    %3560 = vmatpush1.msra.mxu0 0.0
    %3561 = vmatprep.subr.mxu0 0.0
    %3562 = vmatpush1.msra.mxu0 0.0
    %3563 = vmatprep.subr.mxu0 0.0
    %3564 = vmatpush1.msra.mxu0 0.0
    %3565 = vmatprep.subr.mxu0 0.0
    %3566 = vmatpush1.msra.mxu0 0.0
    %3567 = vmatprep.subr.mxu0 0.0
    %3568 = vmatpush1.msra.mxu0 0.0
    %3569 = vmatprep.subr.mxu0 0.0
    %3570 = vmatpush1.msra.mxu0 0.0
    %3571 = vmatprep.subr.mxu0 0.0
    %3572 = vmatpush1.msra.mxu0 0.0
    %3573 = vmatprep.subr.mxu0 0.0
    %3574 = vmatpush1.msra.mxu0 0.0
    %3575 = vmatprep.subr.mxu0 0.0
    %3576 = vmatpush1.msra.mxu0 0.0
    %3577 = vmatprep.subr.mxu0 0.0
    %3578 = vmatpush1.msra.mxu0 0.0
    %3579 = vmatprep.subr.mxu0 0.0
    %3580 = vmatpush1.msra.mxu0 0.0
    %3581 = vmatprep.subr.mxu0 0.0
    %3582 = vmatpush1.msra.mxu0 0.0
    %3583 = vmatprep.subr.mxu0 0.0
    %3584 = vmatpush1.msra.mxu0 0.0
    %3585 = vmatprep.mubr.f32.mxu0 0.0
    %3586 = vmatmul.mubr.f32.gmra.mrb[0].mxu0 %v3516
    %v3587 = vpop.f32.mrb[0].mxu0
    %v3588 = vadd.f32 0.0, %v3587
    %v3589 = vpop.f32.mrb[0].mxu0
    %3590 = vmatprep.mubr.f32.mxu0 0.0
    %3591 = vmatmul.mubr.f32.gmra.mrb[0].mxu0 %v3519
    %v3592 = vpop.f32.mrb[0].mxu0
    %v3593 = vadd.f32 0.0, %v3592
    %v3594 = vpop.f32.mrb[0].mxu0
    %3595 = vdwg.mxu0
    %v3596 = vadd.f32 %v2679, %v3588
    %v3597 = vadd.f32 %v2680, %v3593
    %v3599 = vlaneseq
    %v3600 = vshrl.u32 %v3599, 7
    %v3601 = vsub.s32 0, %v3600
    %v3602 = vrot.slane %v2629, %v3601
    %v3604 = vadd.f32 %v3596, %v3602
    %v3605 = vadd.f32 %v3597, %v3602
    %v3606 = vsel %vm151, %v3604, 0.0
    %3607 = vadd.xlane.f32.xlu0 %v3606
    %v3608 = vpop.xlane.xlu0 %3607
    %v3609 = vsel %vm151, %v3605, 0.0
    %3610 = vadd.xlane.f32.xlu0 %v3609
    %v3611 = vpop.xlane.xlu0 %3610
    %v3612 = vmul.f32 %v3608, %v158
    %v3613 = vmul.f32 %v3611, %v158
    %v3614 = vsub.f32 %v3604, %v3612
    %v3615 = vsub.f32 %v3605, %v3613
    %v3616 = vmul.f32 %v3614, %v3614
    %v3617 = vmul.f32 %v3615, %v3615
    %v3618 = vsel %vm151, %v3616, 0.0
    %3619 = vadd.xlane.f32.xlu0 %v3618
    %v3620 = vpop.xlane.xlu0 %3619
    %v3621 = vsel %vm151, %v3617, 0.0
    %3622 = vadd.xlane.f32.xlu0 %v3621
    %v3623 = vpop.xlane.xlu0 %3622
    %v3624 = vmul.f32 %v3620, %v158
    %v3625 = vmul.f32 %v3623, %v158
    %v3626 = vadd.f32 %v3624, 1e-08
    %v3627 = vadd.f32 %v3625, 1e-08
    %v3628 = vrsqrt.pop %v3626
    %v3629 = vrsqrt.pop %v3627
    %v3630 = vmul.f32 %v3614, %v3628
    %v3631 = vmul.f32 %v3615, %v3629
    %v3633 = vlaneseq
    %v3634 = vshrl.u32 %v3633, 7
    %v3635 = vsub.s32 0, %v3634
    %v3636 = vrot.slane %v2632, %v3635
    %v3638 = vmul.f32 %v3630, %v3636
    %v3639 = vmul.f32 %v3631, %v3636
    %v3641 = vlaneseq
    %v3642 = vshrl.u32 %v3641, 7
    %v3643 = vsub.s32 0, %v3642
    %v3644 = vrot.slane %v2635, %v3643
    %v3646 = vadd.f32 %v3638, %v3644
    %v3647 = vadd.f32 %v3639, %v3644
    %v3649 = vlaneseq
    %v3650 = vshrl.u32 %v3649, 7
    %v3651 = vsub.s32 0, %v3650
    %v3652 = vrot.slane %v2647, %v3651
    %v3655 = vsel %vm151, %v3646, 0
    %v3658 = vsel %vm151, %v3647, 0
    %3660 = vmatprep.subr.mxu0 0.0
    %3661 = vmatpush1.msra.mxu0 %v2638
    %3662 = vmatprep.subr.mxu0 0.0
    %3663 = vmatpush1.msra.mxu0 %v2639
    %3664 = vmatprep.subr.mxu0 0.0
    %3665 = vmatpush1.msra.mxu0 %v2640
    %3666 = vmatprep.subr.mxu0 0.0
    %3667 = vmatpush1.msra.mxu0 %v2641
    %3668 = vmatprep.subr.mxu0 0.0
    %3669 = vmatpush1.msra.mxu0 0.0
    %3670 = vmatprep.subr.mxu0 0.0
    %3671 = vmatpush1.msra.mxu0 0.0
    %3672 = vmatprep.subr.mxu0 0.0
    %3673 = vmatpush1.msra.mxu0 0.0
    %3674 = vmatprep.subr.mxu0 0.0
    %3675 = vmatpush1.msra.mxu0 0.0
    %3676 = vmatprep.subr.mxu0 0.0
    %3677 = vmatpush1.msra.mxu0 0.0
    %3678 = vmatprep.subr.mxu0 0.0
    %3679 = vmatpush1.msra.mxu0 0.0
    %3680 = vmatprep.subr.mxu0 0.0
    %3681 = vmatpush1.msra.mxu0 0.0
    %3682 = vmatprep.subr.mxu0 0.0
    %3683 = vmatpush1.msra.mxu0 0.0
    %3684 = vmatprep.subr.mxu0 0.0
    %3685 = vmatpush1.msra.mxu0 0.0
    %3686 = vmatprep.subr.mxu0 0.0
    %3687 = vmatpush1.msra.mxu0 0.0
    %3688 = vmatprep.subr.mxu0 0.0
    %3689 = vmatpush1.msra.mxu0 0.0
    %3690 = vmatprep.subr.mxu0 0.0
    %3691 = vmatpush1.msra.mxu0 0.0
    %3692 = vmatprep.subr.mxu0 0.0
    %3693 = vmatpush1.msra.mxu0 0.0
    %3694 = vmatprep.subr.mxu0 0.0
    %3695 = vmatpush1.msra.mxu0 0.0
    %3696 = vmatprep.subr.mxu0 0.0
    %3697 = vmatpush1.msra.mxu0 0.0
    %3698 = vmatprep.subr.mxu0 0.0
    %3699 = vmatpush1.msra.mxu0 0.0
    %3700 = vmatprep.subr.mxu0 0.0
    %3701 = vmatpush1.msra.mxu0 0.0
    %3702 = vmatprep.subr.mxu0 0.0
    %3703 = vmatpush1.msra.mxu0 0.0
    %3704 = vmatprep.subr.mxu0 0.0
    %3705 = vmatpush1.msra.mxu0 0.0
    %3706 = vmatprep.subr.mxu0 0.0
    %3707 = vmatpush1.msra.mxu0 0.0
    %3708 = vmatprep.subr.mxu0 0.0
    %3709 = vmatpush1.msra.mxu0 0.0
    %3710 = vmatprep.subr.mxu0 0.0
    %3711 = vmatpush1.msra.mxu0 0.0
    %3712 = vmatprep.subr.mxu0 0.0
    %3713 = vmatpush1.msra.mxu0 0.0
    %3714 = vmatprep.subr.mxu0 0.0
    %3715 = vmatpush1.msra.mxu0 0.0
    %3716 = vmatprep.subr.mxu0 0.0
    %3717 = vmatpush1.msra.mxu0 0.0
    %3718 = vmatprep.subr.mxu0 0.0
    %3719 = vmatpush1.msra.mxu0 0.0
    %3720 = vmatprep.subr.mxu0 0.0
    %3721 = vmatpush1.msra.mxu0 0.0
    %3722 = vmatprep.subr.mxu0 0.0
    %3723 = vmatpush1.msra.mxu0 0.0
    %3724 = vmatprep.mubr.f32.mxu0 0.0
    %3725 = vmatmul.mubr.f32.gmra.mrb[0].mxu0 %v3655
    %v3726 = vpop.f32.mrb[0].mxu0
    %v3727 = vadd.f32 %v3652, %v3726
    %v3728 = vpop.f32.mrb[0].mxu0
    %3729 = vmatprep.mubr.f32.mxu0 0.0
    %3730 = vmatmul.mubr.f32.gmra.mrb[0].mxu0 %v3658
    %v3731 = vpop.f32.mrb[0].mxu0
    %v3732 = vadd.f32 %v3652, %v3731
    %v3733 = vpop.f32.mrb[0].mxu0
    %3734 = vdwg.mxu0
    %v3735 = vmax.f32 %v3727, 0.0
    %v3736 = vmax.f32 %v3732, 0.0
    %v3738 = vlaneseq
    %v3739 = vshrl.u32 %v3738, 7
    %v3740 = vsub.s32 0, %v3739
    %v3741 = vrot.slane %v2659, %v3740
    %v3744 = vsel %vm151, %v3735, 0
    %v3747 = vsel %vm151, %v3736, 0
    %3749 = vmatprep.subr.mxu0 0.0
    %3750 = vmatpush1.msra.mxu0 %v2650
    %3751 = vmatprep.subr.mxu0 0.0
    %3752 = vmatpush1.msra.mxu0 %v2651
    %3753 = vmatprep.subr.mxu0 0.0
    %3754 = vmatpush1.msra.mxu0 %v2652
    %3755 = vmatprep.subr.mxu0 0.0
    %3756 = vmatpush1.msra.mxu0 %v2653
    %3757 = vmatprep.subr.mxu0 0.0
    %3758 = vmatpush1.msra.mxu0 0.0
    %3759 = vmatprep.subr.mxu0 0.0
    %3760 = vmatpush1.msra.mxu0 0.0
    %3761 = vmatprep.subr.mxu0 0.0
    %3762 = vmatpush1.msra.mxu0 0.0
    %3763 = vmatprep.subr.mxu0 0.0
    %3764 = vmatpush1.msra.mxu0 0.0
    %3765 = vmatprep.subr.mxu0 0.0
    %3766 = vmatpush1.msra.mxu0 0.0
    %3767 = vmatprep.subr.mxu0 0.0
    %3768 = vmatpush1.msra.mxu0 0.0
    %3769 = vmatprep.subr.mxu0 0.0
    %3770 = vmatpush1.msra.mxu0 0.0
    %3771 = vmatprep.subr.mxu0 0.0
    %3772 = vmatpush1.msra.mxu0 0.0
    %3773 = vmatprep.subr.mxu0 0.0
    %3774 = vmatpush1.msra.mxu0 0.0
    %3775 = vmatprep.subr.mxu0 0.0
    %3776 = vmatpush1.msra.mxu0 0.0
    %3777 = vmatprep.subr.mxu0 0.0
    %3778 = vmatpush1.msra.mxu0 0.0
    %3779 = vmatprep.subr.mxu0 0.0
    %3780 = vmatpush1.msra.mxu0 0.0
    %3781 = vmatprep.subr.mxu0 0.0
    %3782 = vmatpush1.msra.mxu0 0.0
    %3783 = vmatprep.subr.mxu0 0.0
    %3784 = vmatpush1.msra.mxu0 0.0
    %3785 = vmatprep.subr.mxu0 0.0
    %3786 = vmatpush1.msra.mxu0 0.0
    %3787 = vmatprep.subr.mxu0 0.0
    %3788 = vmatpush1.msra.mxu0 0.0
    %3789 = vmatprep.subr.mxu0 0.0
    %3790 = vmatpush1.msra.mxu0 0.0
    %3791 = vmatprep.subr.mxu0 0.0
    %3792 = vmatpush1.msra.mxu0 0.0
    %3793 = vmatprep.subr.mxu0 0.0
    %3794 = vmatpush1.msra.mxu0 0.0
    %3795 = vmatprep.subr.mxu0 0.0
    %3796 = vmatpush1.msra.mxu0 0.0
    %3797 = vmatprep.subr.mxu0 0.0
    %3798 = vmatpush1.msra.mxu0 0.0
    %3799 = vmatprep.subr.mxu0 0.0
    %3800 = vmatpush1.msra.mxu0 0.0
    %3801 = vmatprep.subr.mxu0 0.0
    %3802 = vmatpush1.msra.mxu0 0.0
    %3803 = vmatprep.subr.mxu0 0.0
    %3804 = vmatpush1.msra.mxu0 0.0
    %3805 = vmatprep.subr.mxu0 0.0
    %3806 = vmatpush1.msra.mxu0 0.0
    %3807 = vmatprep.subr.mxu0 0.0
    %3808 = vmatpush1.msra.mxu0 0.0
    %3809 = vmatprep.subr.mxu0 0.0
    %3810 = vmatpush1.msra.mxu0 0.0
    %3811 = vmatprep.subr.mxu0 0.0
    %3812 = vmatpush1.msra.mxu0 0.0
    %3813 = vmatprep.mubr.f32.mxu0 0.0
    %3814 = vmatmul.mubr.f32.gmra.mrb[0].mxu0 %v3744
    %v3815 = vpop.f32.mrb[0].mxu0
    %v3816 = vadd.f32 %v3741, %v3815
    %v3817 = vpop.f32.mrb[0].mxu0
    %3818 = vmatprep.mubr.f32.mxu0 0.0
    %3819 = vmatmul.mubr.f32.gmra.mrb[0].mxu0 %v3747
    %v3820 = vpop.f32.mrb[0].mxu0
    %v3821 = vadd.f32 %v3741, %v3820
    %v3822 = vpop.f32.mrb[0].mxu0
    %3823 = vdwg.mxu0
    %v3824 = vadd.f32 %v3816, %v3646
    %v3825 = vadd.f32 %v3821, %v3647
    %v3826 = vmul.f32 %v3824, %v76
    %v3827 = vmul.f32 %v3825, %v81
    %v3828 = vsel %vm151, %v3826, 0.0
    %3829 = vadd.xlane.f32.xlu0 %v3828
    %v3830 = vpop.xlane.xlu0 %3829
    %v3831 = vsel %vm151, %v3827, 0.0
    %3832 = vadd.xlane.f32.xlu0 %v3831
    %v3833 = vpop.xlane.xlu0 %3832
    %v3834 = vmul.f32 %v3830, %v158
    %v3835 = vmul.f32 %v3833, %v158
    %v3836 = vsub.f32 %v3826, %v3834
    %v3837 = vsub.f32 %v3827, %v3835
    %v3838 = vmul.f32 %v3836, %v3836
    %v3839 = vmul.f32 %v3837, %v3837
    %v3840 = vsel %vm151, %v3838, 0.0
    %3841 = vadd.xlane.f32.xlu0 %v3840
    %v3842 = vpop.xlane.xlu0 %3841
    %v3843 = vsel %vm151, %v3839, 0.0
    %3844 = vadd.xlane.f32.xlu0 %v3843
    %v3845 = vpop.xlane.xlu0 %3844
    %v3846 = vmul.f32 %v3842, %v158
    %v3847 = vmul.f32 %v3845, %v158
    %v3848 = vadd.f32 %v3846, 1e-08
    %v3849 = vadd.f32 %v3847, 1e-08
    %v3850 = vrsqrt.pop %v3848
    %v3851 = vrsqrt.pop %v3849
    %v3852 = vmul.f32 %v3836, %v3850
    %v3853 = vmul.f32 %v3837, %v3851
    %v3855 = vlaneseq
    %v3856 = vshrl.u32 %v3855, 7
    %v3857 = vsub.s32 0, %v3856
    %v3858 = vrot.slane %v2591, %v3857
    %v3860 = vmul.f32 %v3852, %v3858
    %v3861 = vmul.f32 %v3853, %v3858
    %v3863 = vlaneseq
    %v3864 = vshrl.u32 %v3863, 7
    %v3865 = vsub.s32 0, %v3864
    %v3866 = vrot.slane %v2594, %v3865
    %v3868 = vadd.f32 %v3860, %v3866
    %v3869 = vadd.f32 %v3861, %v3866
    %v3871 = vlaneseq
    %v3872 = vshrl.u32 %v3871, 7
    %v3873 = vsub.s32 0, %v3872
    %v3874 = vrot.slane %v2606, %v3873
    %v3877 = vsel %vm151, %v3868, 0
    %v3880 = vsel %vm151, %v3869, 0
    %3882 = vmatprep.subr.mxu0 0.0
    %3883 = vmatpush1.msra.mxu0 %v2600
    %3884 = vmatprep.subr.mxu0 0.0
    %3885 = vmatpush1.msra.mxu0 %v2601
    %3886 = vmatprep.subr.mxu0 0.0
    %3887 = vmatpush1.msra.mxu0 %v2602
    %3888 = vmatprep.subr.mxu0 0.0
    %3889 = vmatpush1.msra.mxu0 %v2603
    %3890 = vmatprep.subr.mxu0 0.0
    %3891 = vmatpush1.msra.mxu0 0.0
    %3892 = vmatprep.subr.mxu0 0.0
    %3893 = vmatpush1.msra.mxu0 0.0
    %3894 = vmatprep.subr.mxu0 0.0
    %3895 = vmatpush1.msra.mxu0 0.0
    %3896 = vmatprep.subr.mxu0 0.0
    %3897 = vmatpush1.msra.mxu0 0.0
    %3898 = vmatprep.subr.mxu0 0.0
    %3899 = vmatpush1.msra.mxu0 0.0
    %3900 = vmatprep.subr.mxu0 0.0
    %3901 = vmatpush1.msra.mxu0 0.0
    %3902 = vmatprep.subr.mxu0 0.0
    %3903 = vmatpush1.msra.mxu0 0.0
    %3904 = vmatprep.subr.mxu0 0.0
    %3905 = vmatpush1.msra.mxu0 0.0
    %3906 = vmatprep.subr.mxu0 0.0
    %3907 = vmatpush1.msra.mxu0 0.0
    %3908 = vmatprep.subr.mxu0 0.0
    %3909 = vmatpush1.msra.mxu0 0.0
    %3910 = vmatprep.subr.mxu0 0.0
    %3911 = vmatpush1.msra.mxu0 0.0
    %3912 = vmatprep.subr.mxu0 0.0
    %3913 = vmatpush1.msra.mxu0 0.0
    %3914 = vmatprep.subr.mxu0 0.0
    %3915 = vmatpush1.msra.mxu0 0.0
    %3916 = vmatprep.subr.mxu0 0.0
    %3917 = vmatpush1.msra.mxu0 0.0
    %3918 = vmatprep.subr.mxu0 0.0
    %3919 = vmatpush1.msra.mxu0 0.0
    %3920 = vmatprep.subr.mxu0 0.0
    %3921 = vmatpush1.msra.mxu0 0.0
    %3922 = vmatprep.subr.mxu0 0.0
    %3923 = vmatpush1.msra.mxu0 0.0
    %3924 = vmatprep.subr.mxu0 0.0
    %3925 = vmatpush1.msra.mxu0 0.0
    %3926 = vmatprep.subr.mxu0 0.0
    %3927 = vmatpush1.msra.mxu0 0.0
    %3928 = vmatprep.subr.mxu0 0.0
    %3929 = vmatpush1.msra.mxu0 0.0
    %3930 = vmatprep.subr.mxu0 0.0
    %3931 = vmatpush1.msra.mxu0 0.0
    %3932 = vmatprep.subr.mxu0 0.0
    %3933 = vmatpush1.msra.mxu0 0.0
    %3934 = vmatprep.subr.mxu0 0.0
    %3935 = vmatpush1.msra.mxu0 0.0
    %3936 = vmatprep.subr.mxu0 0.0
    %3937 = vmatpush1.msra.mxu0 0.0
    %3938 = vmatprep.subr.mxu0 0.0
    %3939 = vmatpush1.msra.mxu0 0.0
    %3940 = vmatprep.subr.mxu0 0.0
    %3941 = vmatpush1.msra.mxu0 0.0
    %3942 = vmatprep.subr.mxu0 0.0
    %3943 = vmatpush1.msra.mxu0 0.0
    %3944 = vmatprep.subr.mxu0 0.0
    %3945 = vmatpush1.msra.mxu0 0.0
    %3946 = vmatprep.mubr.f32.mxu0 0.0
    %3947 = vmatmul.mubr.f32.gmra.mrb[0].mxu0 %v3877
    %v3948 = vpop.f32.mrb[0].mxu0
    %v3949 = vadd.f32 %v3874, %v3948
    %v3950 = vpop.f32.mrb[0].mxu0
    %3951 = vmatprep.mubr.f32.mxu0 0.0
    %3952 = vmatmul.mubr.f32.gmra.mrb[0].mxu0 %v3880
    %v3953 = vpop.f32.mrb[0].mxu0
    %v3954 = vadd.f32 %v3874, %v3953
    %v3955 = vpop.f32.mrb[0].mxu0
    %3956 = vdwg.mxu0
    %v3958 = vlaneseq
    %v3959 = vshrl.u32 %v3958, 7
    %v3960 = vsub.s32 0, %v3959
    %v3961 = vrot.slane %v2618, %v3960
    %v3964 = vsel %vm151, %v3826, 0
    %v3967 = vsel %vm151, %v3827, 0
    %3969 = vmatprep.subr.mxu0 0.0
    %3970 = vmatpush1.msra.mxu0 %v2612
    %3971 = vmatprep.subr.mxu0 0.0
    %3972 = vmatpush1.msra.mxu0 %v2613
    %3973 = vmatprep.subr.mxu0 0.0
    %3974 = vmatpush1.msra.mxu0 %v2614
    %3975 = vmatprep.subr.mxu0 0.0
    %3976 = vmatpush1.msra.mxu0 %v2615
    %3977 = vmatprep.subr.mxu0 0.0
    %3978 = vmatpush1.msra.mxu0 0.0
    %3979 = vmatprep.subr.mxu0 0.0
    %3980 = vmatpush1.msra.mxu0 0.0
    %3981 = vmatprep.subr.mxu0 0.0
    %3982 = vmatpush1.msra.mxu0 0.0
    %3983 = vmatprep.subr.mxu0 0.0
    %3984 = vmatpush1.msra.mxu0 0.0
    %3985 = vmatprep.subr.mxu0 0.0
    %3986 = vmatpush1.msra.mxu0 0.0
    %3987 = vmatprep.subr.mxu0 0.0
    %3988 = vmatpush1.msra.mxu0 0.0
    %3989 = vmatprep.subr.mxu0 0.0
    %3990 = vmatpush1.msra.mxu0 0.0
    %3991 = vmatprep.subr.mxu0 0.0
    %3992 = vmatpush1.msra.mxu0 0.0
    %3993 = vmatprep.subr.mxu0 0.0
    %3994 = vmatpush1.msra.mxu0 0.0
    %3995 = vmatprep.subr.mxu0 0.0
    %3996 = vmatpush1.msra.mxu0 0.0
    %3997 = vmatprep.subr.mxu0 0.0
    %3998 = vmatpush1.msra.mxu0 0.0
    %3999 = vmatprep.subr.mxu0 0.0
    %4000 = vmatpush1.msra.mxu0 0.0
    %4001 = vmatprep.subr.mxu0 0.0
    %4002 = vmatpush1.msra.mxu0 0.0
    %4003 = vmatprep.subr.mxu0 0.0
    %4004 = vmatpush1.msra.mxu0 0.0
    %4005 = vmatprep.subr.mxu0 0.0
    %4006 = vmatpush1.msra.mxu0 0.0
    %4007 = vmatprep.subr.mxu0 0.0
    %4008 = vmatpush1.msra.mxu0 0.0
    %4009 = vmatprep.subr.mxu0 0.0
    %4010 = vmatpush1.msra.mxu0 0.0
    %4011 = vmatprep.subr.mxu0 0.0
    %4012 = vmatpush1.msra.mxu0 0.0
    %4013 = vmatprep.subr.mxu0 0.0
    %4014 = vmatpush1.msra.mxu0 0.0
    %4015 = vmatprep.subr.mxu0 0.0
    %4016 = vmatpush1.msra.mxu0 0.0
    %4017 = vmatprep.subr.mxu0 0.0
    %4018 = vmatpush1.msra.mxu0 0.0
    %4019 = vmatprep.subr.mxu0 0.0
    %4020 = vmatpush1.msra.mxu0 0.0
    %4021 = vmatprep.subr.mxu0 0.0
    %4022 = vmatpush1.msra.mxu0 0.0
    %4023 = vmatprep.subr.mxu0 0.0
    %4024 = vmatpush1.msra.mxu0 0.0
    %4025 = vmatprep.subr.mxu0 0.0
    %4026 = vmatpush1.msra.mxu0 0.0
    %4027 = vmatprep.subr.mxu0 0.0
    %4028 = vmatpush1.msra.mxu0 0.0
    %4029 = vmatprep.subr.mxu0 0.0
    %4030 = vmatpush1.msra.mxu0 0.0
    %4031 = vmatprep.subr.mxu0 0.0
    %4032 = vmatpush1.msra.mxu0 0.0
    %4033 = vmatprep.mubr.f32.mxu0 0.0
    %4034 = vmatmul.mubr.f32.gmra.mrb[0].mxu0 %v3964
    %v4035 = vpop.f32.mrb[0].mxu0
    %v4036 = vadd.f32 %v3961, %v4035
    %v4037 = vpop.f32.mrb[0].mxu0
    %4038 = vmatprep.mubr.f32.mxu0 0.0
    %4039 = vmatmul.mubr.f32.gmra.mrb[0].mxu0 %v3967
    %v4040 = vpop.f32.mrb[0].mxu0
    %v4041 = vadd.f32 %v3961, %v4040
    %v4042 = vpop.f32.mrb[0].mxu0
    %4043 = vdwg.mxu0
    %v4045 = vsel %vm369, %v3949, 0
    %v4048 = vsel %vm369, %v4036, 0
    %4050 = vmatprep.subr.mxu0 0.0
    %4051 = vmatpush1.xpose.msra.mxu0 %v4048
    %4052 = vmatprep.subr.mxu0 0.0
    %4053 = vmatpush1.xpose.msra.mxu0 0.0
    %4054 = vmatprep.subr.mxu0 0.0
    %4055 = vmatpush1.xpose.msra.mxu0 0.0
    %4056 = vmatprep.subr.mxu0 0.0
    %4057 = vmatpush1.xpose.msra.mxu0 0.0
    %4058 = vmatprep.subr.mxu0 0.0
    %4059 = vmatpush1.xpose.msra.mxu0 0.0
    %4060 = vmatprep.subr.mxu0 0.0
    %4061 = vmatpush1.xpose.msra.mxu0 0.0
    %4062 = vmatprep.subr.mxu0 0.0
    %4063 = vmatpush1.xpose.msra.mxu0 0.0
    %4064 = vmatprep.subr.mxu0 0.0
    %4065 = vmatpush1.xpose.msra.mxu0 0.0
    %4066 = vmatprep.subr.mxu0 0.0
    %4067 = vmatpush1.xpose.msra.mxu0 0.0
    %4068 = vmatprep.subr.mxu0 0.0
    %4069 = vmatpush1.xpose.msra.mxu0 0.0
    %4070 = vmatprep.subr.mxu0 0.0
    %4071 = vmatpush1.xpose.msra.mxu0 0.0
    %4072 = vmatprep.subr.mxu0 0.0
    %4073 = vmatpush1.xpose.msra.mxu0 0.0
    %4074 = vmatprep.subr.mxu0 0.0
    %4075 = vmatpush1.xpose.msra.mxu0 0.0
    %4076 = vmatprep.subr.mxu0 0.0
    %4077 = vmatpush1.xpose.msra.mxu0 0.0
    %4078 = vmatprep.subr.mxu0 0.0
    %4079 = vmatpush1.xpose.msra.mxu0 0.0
    %4080 = vmatprep.subr.mxu0 0.0
    %4081 = vmatpush1.xpose.msra.mxu0 0.0
    %4082 = vmatprep.subr.mxu0 0.0
    %4083 = vmatpush1.xpose.msra.mxu0 0.0
    %4084 = vmatprep.subr.mxu0 0.0
    %4085 = vmatpush1.xpose.msra.mxu0 0.0
    %4086 = vmatprep.subr.mxu0 0.0
    %4087 = vmatpush1.xpose.msra.mxu0 0.0
    %4088 = vmatprep.subr.mxu0 0.0
    %4089 = vmatpush1.xpose.msra.mxu0 0.0
    %4090 = vmatprep.subr.mxu0 0.0
    %4091 = vmatpush1.xpose.msra.mxu0 0.0
    %4092 = vmatprep.subr.mxu0 0.0
    %4093 = vmatpush1.xpose.msra.mxu0 0.0
    %4094 = vmatprep.subr.mxu0 0.0
    %4095 = vmatpush1.xpose.msra.mxu0 0.0
    %4096 = vmatprep.subr.mxu0 0.0
    %4097 = vmatpush1.xpose.msra.mxu0 0.0
    %4098 = vmatprep.subr.mxu0 0.0
    %4099 = vmatpush1.xpose.msra.mxu0 0.0
    %4100 = vmatprep.subr.mxu0 0.0
    %4101 = vmatpush1.xpose.msra.mxu0 0.0
    %4102 = vmatprep.subr.mxu0 0.0
    %4103 = vmatpush1.xpose.msra.mxu0 0.0
    %4104 = vmatprep.subr.mxu0 0.0
    %4105 = vmatpush1.xpose.msra.mxu0 0.0
    %4106 = vmatprep.subr.mxu0 0.0
    %4107 = vmatpush1.xpose.msra.mxu0 0.0
    %4108 = vmatprep.subr.mxu0 0.0
    %4109 = vmatpush1.xpose.msra.mxu0 0.0
    %4110 = vmatprep.subr.mxu0 0.0
    %4111 = vmatpush1.xpose.msra.mxu0 0.0
    %4112 = vmatprep.subr.mxu0 0.0
    %4113 = vmatpush1.xpose.msra.mxu0 0.0
    %4114 = vmatprep.mubr.f32.mxu0 0.0
    %4115 = vmatmul.mubr.f32.gmra.mrb[0].mxu0 %v4045
    %v4116 = vpop.f32.mrb[0].mxu0
    %v4117 = vadd.f32 %v90, %v4116
    %v4118 = vpop.f32.mrb[0].mxu0
    %4119 = vdwg.mxu0
    %v4121 = vsel %vm369, %v3954, 0
    %v4124 = vsel %vm369, %v4041, 0
    %4126 = vmatprep.subr.mxu0 0.0
    %4127 = vmatpush1.xpose.msra.mxu0 %v4124
    %4128 = vmatprep.subr.mxu0 0.0
    %4129 = vmatpush1.xpose.msra.mxu0 0.0
    %4130 = vmatprep.subr.mxu0 0.0
    %4131 = vmatpush1.xpose.msra.mxu0 0.0
    %4132 = vmatprep.subr.mxu0 0.0
    %4133 = vmatpush1.xpose.msra.mxu0 0.0
    %4134 = vmatprep.subr.mxu0 0.0
    %4135 = vmatpush1.xpose.msra.mxu0 0.0
    %4136 = vmatprep.subr.mxu0 0.0
    %4137 = vmatpush1.xpose.msra.mxu0 0.0
    %4138 = vmatprep.subr.mxu0 0.0
    %4139 = vmatpush1.xpose.msra.mxu0 0.0
    %4140 = vmatprep.subr.mxu0 0.0
    %4141 = vmatpush1.xpose.msra.mxu0 0.0
    %4142 = vmatprep.subr.mxu0 0.0
    %4143 = vmatpush1.xpose.msra.mxu0 0.0
    %4144 = vmatprep.subr.mxu0 0.0
    %4145 = vmatpush1.xpose.msra.mxu0 0.0
    %4146 = vmatprep.subr.mxu0 0.0
    %4147 = vmatpush1.xpose.msra.mxu0 0.0
    %4148 = vmatprep.subr.mxu0 0.0
    %4149 = vmatpush1.xpose.msra.mxu0 0.0
    %4150 = vmatprep.subr.mxu0 0.0
    %4151 = vmatpush1.xpose.msra.mxu0 0.0
    %4152 = vmatprep.subr.mxu0 0.0
    %4153 = vmatpush1.xpose.msra.mxu0 0.0
    %4154 = vmatprep.subr.mxu0 0.0
    %4155 = vmatpush1.xpose.msra.mxu0 0.0
    %4156 = vmatprep.subr.mxu0 0.0
    %4157 = vmatpush1.xpose.msra.mxu0 0.0
    %4158 = vmatprep.subr.mxu0 0.0
    %4159 = vmatpush1.xpose.msra.mxu0 0.0
    %4160 = vmatprep.subr.mxu0 0.0
    %4161 = vmatpush1.xpose.msra.mxu0 0.0
    %4162 = vmatprep.subr.mxu0 0.0
    %4163 = vmatpush1.xpose.msra.mxu0 0.0
    %4164 = vmatprep.subr.mxu0 0.0
    %4165 = vmatpush1.xpose.msra.mxu0 0.0
    %4166 = vmatprep.subr.mxu0 0.0
    %4167 = vmatpush1.xpose.msra.mxu0 0.0
    %4168 = vmatprep.subr.mxu0 0.0
    %4169 = vmatpush1.xpose.msra.mxu0 0.0
    %4170 = vmatprep.subr.mxu0 0.0
    %4171 = vmatpush1.xpose.msra.mxu0 0.0
    %4172 = vmatprep.subr.mxu0 0.0
    %4173 = vmatpush1.xpose.msra.mxu0 0.0
    %4174 = vmatprep.subr.mxu0 0.0
    %4175 = vmatpush1.xpose.msra.mxu0 0.0
    %4176 = vmatprep.subr.mxu0 0.0
    %4177 = vmatpush1.xpose.msra.mxu0 0.0
    %4178 = vmatprep.subr.mxu0 0.0
    %4179 = vmatpush1.xpose.msra.mxu0 0.0
    %4180 = vmatprep.subr.mxu0 0.0
    %4181 = vmatpush1.xpose.msra.mxu0 0.0
    %4182 = vmatprep.subr.mxu0 0.0
    %4183 = vmatpush1.xpose.msra.mxu0 0.0
    %4184 = vmatprep.subr.mxu0 0.0
    %4185 = vmatpush1.xpose.msra.mxu0 0.0
    %4186 = vmatprep.subr.mxu0 0.0
    %4187 = vmatpush1.xpose.msra.mxu0 0.0
    %4188 = vmatprep.subr.mxu0 0.0
    %4189 = vmatpush1.xpose.msra.mxu0 0.0
    %4190 = vmatprep.mubr.f32.mxu0 0.0
    %4191 = vmatmul.mubr.f32.gmra.mrb[0].mxu0 %v4121
    %v4192 = vpop.f32.mrb[0].mxu0
    %v4193 = vadd.f32 %v90, %v4192
    %v4194 = vpop.f32.mrb[0].mxu0
    %4195 = vdwg.mxu0
    %v4196 = vsel %vm522, %v4117, -inf
    %4197 = vmax.xlane.f32.xlu0 %v4196
    %v4198 = vpop.xlane.xlu0 %4197
    %v4199 = vsel %vm522, %v4193, -inf
    %4200 = vmax.xlane.f32.xlu0 %v4199
    %v4201 = vpop.xlane.xlu0 %4200
    %v4202 = vsub.f32 %v4117, %v4198
    %v4203 = vsub.f32 %v4193, %v4201
    %v4204 = vmul.f32 %v4202, 1.442695
    %v4205 = vpow.pop %v4204
    %v4206 = vmul.f32 %v4203, 1.442695
    %v4207 = vpow.pop %v4206
    %v4208 = vsel %vm522, %v4205, 0.0
    %4209 = vadd.xlane.f32.xlu0 %v4208
    %v4210 = vpop.xlane.xlu0 %4209
    %v4211 = vsel %vm522, %v4207, 0.0
    %4212 = vadd.xlane.f32.xlu0 %v4211
    %v4213 = vpop.xlane.xlu0 %4212
    %v4214 = vrcp.pop %v4210
    %v4215 = vmul.f32 %v4205, %v4214
    %v4216 = vrcp.pop %v4213
    %v4217 = vmul.f32 %v4207, %v4216
    %4218 = vrot.lane.b32.xlu0 %v4036, 96
    %v4219 = vpop.permute.xlu0 %4218
    %v4222 = vsel %vm522, %v4215, 0
    %4224 = vmatprep.subr.mxu0 0.0
    %4225 = vmatpush1.msra.mxu0 %v4219
    %4226 = vmatprep.subr.mxu0 0.0
    %4227 = vmatpush1.msra.mxu0 0.0
    %4228 = vmatprep.subr.mxu0 0.0
    %4229 = vmatpush1.msra.mxu0 0.0
    %4230 = vmatprep.subr.mxu0 0.0
    %4231 = vmatpush1.msra.mxu0 0.0
    %4232 = vmatprep.subr.mxu0 0.0
    %4233 = vmatpush1.msra.mxu0 0.0
    %4234 = vmatprep.subr.mxu0 0.0
    %4235 = vmatpush1.msra.mxu0 0.0
    %4236 = vmatprep.subr.mxu0 0.0
    %4237 = vmatpush1.msra.mxu0 0.0
    %4238 = vmatprep.subr.mxu0 0.0
    %4239 = vmatpush1.msra.mxu0 0.0
    %4240 = vmatprep.subr.mxu0 0.0
    %4241 = vmatpush1.msra.mxu0 0.0
    %4242 = vmatprep.subr.mxu0 0.0
    %4243 = vmatpush1.msra.mxu0 0.0
    %4244 = vmatprep.subr.mxu0 0.0
    %4245 = vmatpush1.msra.mxu0 0.0
    %4246 = vmatprep.subr.mxu0 0.0
    %4247 = vmatpush1.msra.mxu0 0.0
    %4248 = vmatprep.subr.mxu0 0.0
    %4249 = vmatpush1.msra.mxu0 0.0
    %4250 = vmatprep.subr.mxu0 0.0
    %4251 = vmatpush1.msra.mxu0 0.0
    %4252 = vmatprep.subr.mxu0 0.0
    %4253 = vmatpush1.msra.mxu0 0.0
    %4254 = vmatprep.subr.mxu0 0.0
    %4255 = vmatpush1.msra.mxu0 0.0
    %4256 = vmatprep.subr.mxu0 0.0
    %4257 = vmatpush1.msra.mxu0 0.0
    %4258 = vmatprep.subr.mxu0 0.0
    %4259 = vmatpush1.msra.mxu0 0.0
    %4260 = vmatprep.subr.mxu0 0.0
    %4261 = vmatpush1.msra.mxu0 0.0
    %4262 = vmatprep.subr.mxu0 0.0
    %4263 = vmatpush1.msra.mxu0 0.0
    %4264 = vmatprep.subr.mxu0 0.0
    %4265 = vmatpush1.msra.mxu0 0.0
    %4266 = vmatprep.subr.mxu0 0.0
    %4267 = vmatpush1.msra.mxu0 0.0
    %4268 = vmatprep.subr.mxu0 0.0
    %4269 = vmatpush1.msra.mxu0 0.0
    %4270 = vmatprep.subr.mxu0 0.0
    %4271 = vmatpush1.msra.mxu0 0.0
    %4272 = vmatprep.subr.mxu0 0.0
    %4273 = vmatpush1.msra.mxu0 0.0
    %4274 = vmatprep.subr.mxu0 0.0
    %4275 = vmatpush1.msra.mxu0 0.0
    %4276 = vmatprep.subr.mxu0 0.0
    %4277 = vmatpush1.msra.mxu0 0.0
    %4278 = vmatprep.subr.mxu0 0.0
    %4279 = vmatpush1.msra.mxu0 0.0
    %4280 = vmatprep.subr.mxu0 0.0
    %4281 = vmatpush1.msra.mxu0 0.0
    %4282 = vmatprep.subr.mxu0 0.0
    %4283 = vmatpush1.msra.mxu0 0.0
    %4284 = vmatprep.subr.mxu0 0.0
    %4285 = vmatpush1.msra.mxu0 0.0
    %4286 = vmatprep.subr.mxu0 0.0
    %4287 = vmatpush1.msra.mxu0 0.0
    %4288 = vmatprep.mubr.f32.mxu0 0.0
    %4289 = vmatmul.mubr.f32.gmra.mrb[0].mxu0 %v4222
    %v4290 = vpop.f32.mrb[0].mxu0
    %v4291 = vadd.f32 0.0, %v4290
    %v4292 = vpop.f32.mrb[0].mxu0
    %4293 = vdwg.mxu0
    %4294 = vrot.lane.b32.xlu0 %v4041, 96
    %v4295 = vpop.permute.xlu0 %4294
    %v4298 = vsel %vm522, %v4217, 0
    %4300 = vmatprep.subr.mxu0 0.0
    %4301 = vmatpush1.msra.mxu0 %v4295
    %4302 = vmatprep.subr.mxu0 0.0
    %4303 = vmatpush1.msra.mxu0 0.0
    %4304 = vmatprep.subr.mxu0 0.0
    %4305 = vmatpush1.msra.mxu0 0.0
    %4306 = vmatprep.subr.mxu0 0.0
    %4307 = vmatpush1.msra.mxu0 0.0
    %4308 = vmatprep.subr.mxu0 0.0
    %4309 = vmatpush1.msra.mxu0 0.0
    %4310 = vmatprep.subr.mxu0 0.0
    %4311 = vmatpush1.msra.mxu0 0.0
    %4312 = vmatprep.subr.mxu0 0.0
    %4313 = vmatpush1.msra.mxu0 0.0
    %4314 = vmatprep.subr.mxu0 0.0
    %4315 = vmatpush1.msra.mxu0 0.0
    %4316 = vmatprep.subr.mxu0 0.0
    %4317 = vmatpush1.msra.mxu0 0.0
    %4318 = vmatprep.subr.mxu0 0.0
    %4319 = vmatpush1.msra.mxu0 0.0
    %4320 = vmatprep.subr.mxu0 0.0
    %4321 = vmatpush1.msra.mxu0 0.0
    %4322 = vmatprep.subr.mxu0 0.0
    %4323 = vmatpush1.msra.mxu0 0.0
    %4324 = vmatprep.subr.mxu0 0.0
    %4325 = vmatpush1.msra.mxu0 0.0
    %4326 = vmatprep.subr.mxu0 0.0
    %4327 = vmatpush1.msra.mxu0 0.0
    %4328 = vmatprep.subr.mxu0 0.0
    %4329 = vmatpush1.msra.mxu0 0.0
    %4330 = vmatprep.subr.mxu0 0.0
    %4331 = vmatpush1.msra.mxu0 0.0
    %4332 = vmatprep.subr.mxu0 0.0
    %4333 = vmatpush1.msra.mxu0 0.0
    %4334 = vmatprep.subr.mxu0 0.0
    %4335 = vmatpush1.msra.mxu0 0.0
    %4336 = vmatprep.subr.mxu0 0.0
    %4337 = vmatpush1.msra.mxu0 0.0
    %4338 = vmatprep.subr.mxu0 0.0
    %4339 = vmatpush1.msra.mxu0 0.0
    %4340 = vmatprep.subr.mxu0 0.0
    %4341 = vmatpush1.msra.mxu0 0.0
    %4342 = vmatprep.subr.mxu0 0.0
    %4343 = vmatpush1.msra.mxu0 0.0
    %4344 = vmatprep.subr.mxu0 0.0
    %4345 = vmatpush1.msra.mxu0 0.0
    %4346 = vmatprep.subr.mxu0 0.0
    %4347 = vmatpush1.msra.mxu0 0.0
    %4348 = vmatprep.subr.mxu0 0.0
    %4349 = vmatpush1.msra.mxu0 0.0
    %4350 = vmatprep.subr.mxu0 0.0
    %4351 = vmatpush1.msra.mxu0 0.0
    %4352 = vmatprep.subr.mxu0 0.0
    %4353 = vmatpush1.msra.mxu0 0.0
    %4354 = vmatprep.subr.mxu0 0.0
    %4355 = vmatpush1.msra.mxu0 0.0
    %4356 = vmatprep.subr.mxu0 0.0
    %4357 = vmatpush1.msra.mxu0 0.0
    %4358 = vmatprep.subr.mxu0 0.0
    %4359 = vmatpush1.msra.mxu0 0.0
    %4360 = vmatprep.subr.mxu0 0.0
    %4361 = vmatpush1.msra.mxu0 0.0
    %4362 = vmatprep.subr.mxu0 0.0
    %4363 = vmatpush1.msra.mxu0 0.0
    %4364 = vmatprep.mubr.f32.mxu0 0.0
    %4365 = vmatmul.mubr.f32.gmra.mrb[0].mxu0 %v4298
    %v4366 = vpop.f32.mrb[0].mxu0
    %v4367 = vadd.f32 0.0, %v4366
    %v4368 = vpop.f32.mrb[0].mxu0
    %4369 = vdwg.mxu0
    %4370 = vrot.lane.b32.xlu0 %v3949, 112
    %v4371 = vpop.permute.xlu0 %4370
    %4372 = vrot.lane.b32.xlu0 %v4036, 112
    %v4373 = vpop.permute.xlu0 %4372
    %v4374 = vsel %vm369, %v4371, 0
    %v4376 = vsel %vm369, %v4373, 0
    %4378 = vmatprep.subr.mxu0 0.0
    %4379 = vmatpush1.xpose.msra.mxu0 %v4376
    %4380 = vmatprep.subr.mxu0 0.0
    %4381 = vmatpush1.xpose.msra.mxu0 0.0
    %4382 = vmatprep.subr.mxu0 0.0
    %4383 = vmatpush1.xpose.msra.mxu0 0.0
    %4384 = vmatprep.subr.mxu0 0.0
    %4385 = vmatpush1.xpose.msra.mxu0 0.0
    %4386 = vmatprep.subr.mxu0 0.0
    %4387 = vmatpush1.xpose.msra.mxu0 0.0
    %4388 = vmatprep.subr.mxu0 0.0
    %4389 = vmatpush1.xpose.msra.mxu0 0.0
    %4390 = vmatprep.subr.mxu0 0.0
    %4391 = vmatpush1.xpose.msra.mxu0 0.0
    %4392 = vmatprep.subr.mxu0 0.0
    %4393 = vmatpush1.xpose.msra.mxu0 0.0
    %4394 = vmatprep.subr.mxu0 0.0
    %4395 = vmatpush1.xpose.msra.mxu0 0.0
    %4396 = vmatprep.subr.mxu0 0.0
    %4397 = vmatpush1.xpose.msra.mxu0 0.0
    %4398 = vmatprep.subr.mxu0 0.0
    %4399 = vmatpush1.xpose.msra.mxu0 0.0
    %4400 = vmatprep.subr.mxu0 0.0
    %4401 = vmatpush1.xpose.msra.mxu0 0.0
    %4402 = vmatprep.subr.mxu0 0.0
    %4403 = vmatpush1.xpose.msra.mxu0 0.0
    %4404 = vmatprep.subr.mxu0 0.0
    %4405 = vmatpush1.xpose.msra.mxu0 0.0
    %4406 = vmatprep.subr.mxu0 0.0
    %4407 = vmatpush1.xpose.msra.mxu0 0.0
    %4408 = vmatprep.subr.mxu0 0.0
    %4409 = vmatpush1.xpose.msra.mxu0 0.0
    %4410 = vmatprep.subr.mxu0 0.0
    %4411 = vmatpush1.xpose.msra.mxu0 0.0
    %4412 = vmatprep.subr.mxu0 0.0
    %4413 = vmatpush1.xpose.msra.mxu0 0.0
    %4414 = vmatprep.subr.mxu0 0.0
    %4415 = vmatpush1.xpose.msra.mxu0 0.0
    %4416 = vmatprep.subr.mxu0 0.0
    %4417 = vmatpush1.xpose.msra.mxu0 0.0
    %4418 = vmatprep.subr.mxu0 0.0
    %4419 = vmatpush1.xpose.msra.mxu0 0.0
    %4420 = vmatprep.subr.mxu0 0.0
    %4421 = vmatpush1.xpose.msra.mxu0 0.0
    %4422 = vmatprep.subr.mxu0 0.0
    %4423 = vmatpush1.xpose.msra.mxu0 0.0
    %4424 = vmatprep.subr.mxu0 0.0
    %4425 = vmatpush1.xpose.msra.mxu0 0.0
    %4426 = vmatprep.subr.mxu0 0.0
    %4427 = vmatpush1.xpose.msra.mxu0 0.0
    %4428 = vmatprep.subr.mxu0 0.0
    %4429 = vmatpush1.xpose.msra.mxu0 0.0
    %4430 = vmatprep.subr.mxu0 0.0
    %4431 = vmatpush1.xpose.msra.mxu0 0.0
    %4432 = vmatprep.subr.mxu0 0.0
    %4433 = vmatpush1.xpose.msra.mxu0 0.0
    %4434 = vmatprep.subr.mxu0 0.0
    %4435 = vmatpush1.xpose.msra.mxu0 0.0
    %4436 = vmatprep.subr.mxu0 0.0
    %4437 = vmatpush1.xpose.msra.mxu0 0.0
    %4438 = vmatprep.subr.mxu0 0.0
    %4439 = vmatpush1.xpose.msra.mxu0 0.0
    %4440 = vmatprep.subr.mxu0 0.0
    %4441 = vmatpush1.xpose.msra.mxu0 0.0
    %4442 = vmatprep.mubr.f32.mxu0 0.0
    %4443 = vmatmul.mubr.f32.gmra.mrb[0].mxu0 %v4374
    %v4444 = vpop.f32.mrb[0].mxu0
    %v4445 = vadd.f32 %v90, %v4444
    %v4446 = vpop.f32.mrb[0].mxu0
    %4447 = vdwg.mxu0
    %4448 = vrot.lane.b32.xlu0 %v3954, 112
    %v4449 = vpop.permute.xlu0 %4448
    %4450 = vrot.lane.b32.xlu0 %v4041, 112
    %v4451 = vpop.permute.xlu0 %4450
    %v4452 = vsel %vm369, %v4449, 0
    %v4454 = vsel %vm369, %v4451, 0
    %4456 = vmatprep.subr.mxu0 0.0
    %4457 = vmatpush1.xpose.msra.mxu0 %v4454
    %4458 = vmatprep.subr.mxu0 0.0
    %4459 = vmatpush1.xpose.msra.mxu0 0.0
    %4460 = vmatprep.subr.mxu0 0.0
    %4461 = vmatpush1.xpose.msra.mxu0 0.0
    %4462 = vmatprep.subr.mxu0 0.0
    %4463 = vmatpush1.xpose.msra.mxu0 0.0
    %4464 = vmatprep.subr.mxu0 0.0
    %4465 = vmatpush1.xpose.msra.mxu0 0.0
    %4466 = vmatprep.subr.mxu0 0.0
    %4467 = vmatpush1.xpose.msra.mxu0 0.0
    %4468 = vmatprep.subr.mxu0 0.0
    %4469 = vmatpush1.xpose.msra.mxu0 0.0
    %4470 = vmatprep.subr.mxu0 0.0
    %4471 = vmatpush1.xpose.msra.mxu0 0.0
    %4472 = vmatprep.subr.mxu0 0.0
    %4473 = vmatpush1.xpose.msra.mxu0 0.0
    %4474 = vmatprep.subr.mxu0 0.0
    %4475 = vmatpush1.xpose.msra.mxu0 0.0
    %4476 = vmatprep.subr.mxu0 0.0
    %4477 = vmatpush1.xpose.msra.mxu0 0.0
    %4478 = vmatprep.subr.mxu0 0.0
    %4479 = vmatpush1.xpose.msra.mxu0 0.0
    %4480 = vmatprep.subr.mxu0 0.0
    %4481 = vmatpush1.xpose.msra.mxu0 0.0
    %4482 = vmatprep.subr.mxu0 0.0
    %4483 = vmatpush1.xpose.msra.mxu0 0.0
    %4484 = vmatprep.subr.mxu0 0.0
    %4485 = vmatpush1.xpose.msra.mxu0 0.0
    %4486 = vmatprep.subr.mxu0 0.0
    %4487 = vmatpush1.xpose.msra.mxu0 0.0
    %4488 = vmatprep.subr.mxu0 0.0
    %4489 = vmatpush1.xpose.msra.mxu0 0.0
    %4490 = vmatprep.subr.mxu0 0.0
    %4491 = vmatpush1.xpose.msra.mxu0 0.0
    %4492 = vmatprep.subr.mxu0 0.0
    %4493 = vmatpush1.xpose.msra.mxu0 0.0
    %4494 = vmatprep.subr.mxu0 0.0
    %4495 = vmatpush1.xpose.msra.mxu0 0.0
    %4496 = vmatprep.subr.mxu0 0.0
    %4497 = vmatpush1.xpose.msra.mxu0 0.0
    %4498 = vmatprep.subr.mxu0 0.0
    %4499 = vmatpush1.xpose.msra.mxu0 0.0
    %4500 = vmatprep.subr.mxu0 0.0
    %4501 = vmatpush1.xpose.msra.mxu0 0.0
    %4502 = vmatprep.subr.mxu0 0.0
    %4503 = vmatpush1.xpose.msra.mxu0 0.0
    %4504 = vmatprep.subr.mxu0 0.0
    %4505 = vmatpush1.xpose.msra.mxu0 0.0
    %4506 = vmatprep.subr.mxu0 0.0
    %4507 = vmatpush1.xpose.msra.mxu0 0.0
    %4508 = vmatprep.subr.mxu0 0.0
    %4509 = vmatpush1.xpose.msra.mxu0 0.0
    %4510 = vmatprep.subr.mxu0 0.0
    %4511 = vmatpush1.xpose.msra.mxu0 0.0
    %4512 = vmatprep.subr.mxu0 0.0
    %4513 = vmatpush1.xpose.msra.mxu0 0.0
    %4514 = vmatprep.subr.mxu0 0.0
    %4515 = vmatpush1.xpose.msra.mxu0 0.0
    %4516 = vmatprep.subr.mxu0 0.0
    %4517 = vmatpush1.xpose.msra.mxu0 0.0
    %4518 = vmatprep.subr.mxu0 0.0
    %4519 = vmatpush1.xpose.msra.mxu0 0.0
    %4520 = vmatprep.mubr.f32.mxu0 0.0
    %4521 = vmatmul.mubr.f32.gmra.mrb[0].mxu0 %v4452
    %v4522 = vpop.f32.mrb[0].mxu0
    %v4523 = vadd.f32 %v90, %v4522
    %v4524 = vpop.f32.mrb[0].mxu0
    %4525 = vdwg.mxu0
    %v4526 = vsel %vm522, %v4445, -inf
    %4527 = vmax.xlane.f32.xlu0 %v4526
    %v4528 = vpop.xlane.xlu0 %4527
    %v4529 = vsel %vm522, %v4523, -inf
    %4530 = vmax.xlane.f32.xlu0 %v4529
    %v4531 = vpop.xlane.xlu0 %4530
    %v4532 = vsub.f32 %v4445, %v4528
    %v4533 = vsub.f32 %v4523, %v4531
    %v4534 = vmul.f32 %v4532, 1.442695
    %v4535 = vpow.pop %v4534
    %v4536 = vmul.f32 %v4533, 1.442695
    %v4537 = vpow.pop %v4536
    %v4538 = vsel %vm522, %v4535, 0.0
    %4539 = vadd.xlane.f32.xlu0 %v4538
    %v4540 = vpop.xlane.xlu0 %4539
    %v4541 = vsel %vm522, %v4537, 0.0
    %4542 = vadd.xlane.f32.xlu0 %v4541
    %v4543 = vpop.xlane.xlu0 %4542
    %v4544 = vrcp.pop %v4540
    %v4545 = vmul.f32 %v4535, %v4544
    %v4546 = vrcp.pop %v4543
    %v4547 = vmul.f32 %v4537, %v4546
    %4548 = vrot.lane.b32.xlu0 %v4036, 80
    %v4549 = vpop.permute.xlu0 %4548
    %v4552 = vsel %vm522, %v4545, 0
    %4554 = vmatprep.subr.mxu0 0.0
    %4555 = vmatpush1.msra.mxu0 %v4549
    %4556 = vmatprep.subr.mxu0 0.0
    %4557 = vmatpush1.msra.mxu0 0.0
    %4558 = vmatprep.subr.mxu0 0.0
    %4559 = vmatpush1.msra.mxu0 0.0
    %4560 = vmatprep.subr.mxu0 0.0
    %4561 = vmatpush1.msra.mxu0 0.0
    %4562 = vmatprep.subr.mxu0 0.0
    %4563 = vmatpush1.msra.mxu0 0.0
    %4564 = vmatprep.subr.mxu0 0.0
    %4565 = vmatpush1.msra.mxu0 0.0
    %4566 = vmatprep.subr.mxu0 0.0
    %4567 = vmatpush1.msra.mxu0 0.0
    %4568 = vmatprep.subr.mxu0 0.0
    %4569 = vmatpush1.msra.mxu0 0.0
    %4570 = vmatprep.subr.mxu0 0.0
    %4571 = vmatpush1.msra.mxu0 0.0
    %4572 = vmatprep.subr.mxu0 0.0
    %4573 = vmatpush1.msra.mxu0 0.0
    %4574 = vmatprep.subr.mxu0 0.0
    %4575 = vmatpush1.msra.mxu0 0.0
    %4576 = vmatprep.subr.mxu0 0.0
    %4577 = vmatpush1.msra.mxu0 0.0
    %4578 = vmatprep.subr.mxu0 0.0
    %4579 = vmatpush1.msra.mxu0 0.0
    %4580 = vmatprep.subr.mxu0 0.0
    %4581 = vmatpush1.msra.mxu0 0.0
    %4582 = vmatprep.subr.mxu0 0.0
    %4583 = vmatpush1.msra.mxu0 0.0
    %4584 = vmatprep.subr.mxu0 0.0
    %4585 = vmatpush1.msra.mxu0 0.0
    %4586 = vmatprep.subr.mxu0 0.0
    %4587 = vmatpush1.msra.mxu0 0.0
    %4588 = vmatprep.subr.mxu0 0.0
    %4589 = vmatpush1.msra.mxu0 0.0
    %4590 = vmatprep.subr.mxu0 0.0
    %4591 = vmatpush1.msra.mxu0 0.0
    %4592 = vmatprep.subr.mxu0 0.0
    %4593 = vmatpush1.msra.mxu0 0.0
    %4594 = vmatprep.subr.mxu0 0.0
    %4595 = vmatpush1.msra.mxu0 0.0
    %4596 = vmatprep.subr.mxu0 0.0
    %4597 = vmatpush1.msra.mxu0 0.0
    %4598 = vmatprep.subr.mxu0 0.0
    %4599 = vmatpush1.msra.mxu0 0.0
    %4600 = vmatprep.subr.mxu0 0.0
    %4601 = vmatpush1.msra.mxu0 0.0
    %4602 = vmatprep.subr.mxu0 0.0
    %4603 = vmatpush1.msra.mxu0 0.0
    %4604 = vmatprep.subr.mxu0 0.0
    %4605 = vmatpush1.msra.mxu0 0.0
    %4606 = vmatprep.subr.mxu0 0.0
    %4607 = vmatpush1.msra.mxu0 0.0
    %4608 = vmatprep.subr.mxu0 0.0
    %4609 = vmatpush1.msra.mxu0 0.0
    %4610 = vmatprep.subr.mxu0 0.0
    %4611 = vmatpush1.msra.mxu0 0.0
    %4612 = vmatprep.subr.mxu0 0.0
    %4613 = vmatpush1.msra.mxu0 0.0
    %4614 = vmatprep.subr.mxu0 0.0
    %4615 = vmatpush1.msra.mxu0 0.0
    %4616 = vmatprep.subr.mxu0 0.0
    %4617 = vmatpush1.msra.mxu0 0.0
    %4618 = vmatprep.mubr.f32.mxu0 0.0
    %4619 = vmatmul.mubr.f32.gmra.mrb[0].mxu0 %v4552
    %v4620 = vpop.f32.mrb[0].mxu0
    %v4621 = vadd.f32 0.0, %v4620
    %v4622 = vpop.f32.mrb[0].mxu0
    %4623 = vdwg.mxu0
    %4624 = vrot.lane.b32.xlu0 %v4041, 80
    %v4625 = vpop.permute.xlu0 %4624
    %v4628 = vsel %vm522, %v4547, 0
    %4630 = vmatprep.subr.mxu0 0.0
    %4631 = vmatpush1.msra.mxu0 %v4625
    %4632 = vmatprep.subr.mxu0 0.0
    %4633 = vmatpush1.msra.mxu0 0.0
    %4634 = vmatprep.subr.mxu0 0.0
    %4635 = vmatpush1.msra.mxu0 0.0
    %4636 = vmatprep.subr.mxu0 0.0
    %4637 = vmatpush1.msra.mxu0 0.0
    %4638 = vmatprep.subr.mxu0 0.0
    %4639 = vmatpush1.msra.mxu0 0.0
    %4640 = vmatprep.subr.mxu0 0.0
    %4641 = vmatpush1.msra.mxu0 0.0
    %4642 = vmatprep.subr.mxu0 0.0
    %4643 = vmatpush1.msra.mxu0 0.0
    %4644 = vmatprep.subr.mxu0 0.0
    %4645 = vmatpush1.msra.mxu0 0.0
    %4646 = vmatprep.subr.mxu0 0.0
    %4647 = vmatpush1.msra.mxu0 0.0
    %4648 = vmatprep.subr.mxu0 0.0
    %4649 = vmatpush1.msra.mxu0 0.0
    %4650 = vmatprep.subr.mxu0 0.0
    %4651 = vmatpush1.msra.mxu0 0.0
    %4652 = vmatprep.subr.mxu0 0.0
    %4653 = vmatpush1.msra.mxu0 0.0
    %4654 = vmatprep.subr.mxu0 0.0
    %4655 = vmatpush1.msra.mxu0 0.0
    %4656 = vmatprep.subr.mxu0 0.0
    %4657 = vmatpush1.msra.mxu0 0.0
    %4658 = vmatprep.subr.mxu0 0.0
    %4659 = vmatpush1.msra.mxu0 0.0
    %4660 = vmatprep.subr.mxu0 0.0
    %4661 = vmatpush1.msra.mxu0 0.0
    %4662 = vmatprep.subr.mxu0 0.0
    %4663 = vmatpush1.msra.mxu0 0.0
    %4664 = vmatprep.subr.mxu0 0.0
    %4665 = vmatpush1.msra.mxu0 0.0
    %4666 = vmatprep.subr.mxu0 0.0
    %4667 = vmatpush1.msra.mxu0 0.0
    %4668 = vmatprep.subr.mxu0 0.0
    %4669 = vmatpush1.msra.mxu0 0.0
    %4670 = vmatprep.subr.mxu0 0.0
    %4671 = vmatpush1.msra.mxu0 0.0
    %4672 = vmatprep.subr.mxu0 0.0
    %4673 = vmatpush1.msra.mxu0 0.0
    %4674 = vmatprep.subr.mxu0 0.0
    %4675 = vmatpush1.msra.mxu0 0.0
    %4676 = vmatprep.subr.mxu0 0.0
    %4677 = vmatpush1.msra.mxu0 0.0
    %4678 = vmatprep.subr.mxu0 0.0
    %4679 = vmatpush1.msra.mxu0 0.0
    %4680 = vmatprep.subr.mxu0 0.0
    %4681 = vmatpush1.msra.mxu0 0.0
    %4682 = vmatprep.subr.mxu0 0.0
    %4683 = vmatpush1.msra.mxu0 0.0
    %4684 = vmatprep.subr.mxu0 0.0
    %4685 = vmatpush1.msra.mxu0 0.0
    %4686 = vmatprep.subr.mxu0 0.0
    %4687 = vmatpush1.msra.mxu0 0.0
    %4688 = vmatprep.subr.mxu0 0.0
    %4689 = vmatpush1.msra.mxu0 0.0
    %4690 = vmatprep.subr.mxu0 0.0
    %4691 = vmatpush1.msra.mxu0 0.0
    %4692 = vmatprep.subr.mxu0 0.0
    %4693 = vmatpush1.msra.mxu0 0.0
    %4694 = vmatprep.mubr.f32.mxu0 0.0
    %4695 = vmatmul.mubr.f32.gmra.mrb[0].mxu0 %v4628
    %v4696 = vpop.f32.mrb[0].mxu0
    %v4697 = vadd.f32 0.0, %v4696
    %v4698 = vpop.f32.mrb[0].mxu0
    %4699 = vdwg.mxu0
    %4702 = vrot.lane.b32.xlu0 %v4621, 16
    %v4703 = vpop.permute.xlu0 %4702
    %4704 = vrot.lane.b32.xlu0 %v4697, 16
    %v4705 = vpop.permute.xlu0 %4704
    %v4708 = vsel %vm369, %v4291, %v4703
    %v4709 = vsel %vm369, %v4367, %v4705
    %v4711 = vsel %vm151, %v4708, 0
    %v4714 = vsel %vm151, %v4709, 0
    %4716 = vmatprep.subr.mxu0 0.0
    %4717 = vmatpush1.msra.mxu0 %v2624
    %4718 = vmatprep.subr.mxu0 0.0
    %4719 = vmatpush1.msra.mxu0 %v2625
    %4720 = vmatprep.subr.mxu0 0.0
    %4721 = vmatpush1.msra.mxu0 %v2626
    %4722 = vmatprep.subr.mxu0 0.0
    %4723 = vmatpush1.msra.mxu0 %v2627
    %4724 = vmatprep.subr.mxu0 0.0
    %4725 = vmatpush1.msra.mxu0 0.0
    %4726 = vmatprep.subr.mxu0 0.0
    %4727 = vmatpush1.msra.mxu0 0.0
    %4728 = vmatprep.subr.mxu0 0.0
    %4729 = vmatpush1.msra.mxu0 0.0
    %4730 = vmatprep.subr.mxu0 0.0
    %4731 = vmatpush1.msra.mxu0 0.0
    %4732 = vmatprep.subr.mxu0 0.0
    %4733 = vmatpush1.msra.mxu0 0.0
    %4734 = vmatprep.subr.mxu0 0.0
    %4735 = vmatpush1.msra.mxu0 0.0
    %4736 = vmatprep.subr.mxu0 0.0
    %4737 = vmatpush1.msra.mxu0 0.0
    %4738 = vmatprep.subr.mxu0 0.0
    %4739 = vmatpush1.msra.mxu0 0.0
    %4740 = vmatprep.subr.mxu0 0.0
    %4741 = vmatpush1.msra.mxu0 0.0
    %4742 = vmatprep.subr.mxu0 0.0
    %4743 = vmatpush1.msra.mxu0 0.0
    %4744 = vmatprep.subr.mxu0 0.0
    %4745 = vmatpush1.msra.mxu0 0.0
    %4746 = vmatprep.subr.mxu0 0.0
    %4747 = vmatpush1.msra.mxu0 0.0
    %4748 = vmatprep.subr.mxu0 0.0
    %4749 = vmatpush1.msra.mxu0 0.0
    %4750 = vmatprep.subr.mxu0 0.0
    %4751 = vmatpush1.msra.mxu0 0.0
    %4752 = vmatprep.subr.mxu0 0.0
    %4753 = vmatpush1.msra.mxu0 0.0
    %4754 = vmatprep.subr.mxu0 0.0
    %4755 = vmatpush1.msra.mxu0 0.0
    %4756 = vmatprep.subr.mxu0 0.0
    %4757 = vmatpush1.msra.mxu0 0.0
    %4758 = vmatprep.subr.mxu0 0.0
    %4759 = vmatpush1.msra.mxu0 0.0
    %4760 = vmatprep.subr.mxu0 0.0
    %4761 = vmatpush1.msra.mxu0 0.0
    %4762 = vmatprep.subr.mxu0 0.0
    %4763 = vmatpush1.msra.mxu0 0.0
    %4764 = vmatprep.subr.mxu0 0.0
    %4765 = vmatpush1.msra.mxu0 0.0
    %4766 = vmatprep.subr.mxu0 0.0
    %4767 = vmatpush1.msra.mxu0 0.0
    %4768 = vmatprep.subr.mxu0 0.0
    %4769 = vmatpush1.msra.mxu0 0.0
    %4770 = vmatprep.subr.mxu0 0.0
    %4771 = vmatpush1.msra.mxu0 0.0
    %4772 = vmatprep.subr.mxu0 0.0
    %4773 = vmatpush1.msra.mxu0 0.0
    %4774 = vmatprep.subr.mxu0 0.0
    %4775 = vmatpush1.msra.mxu0 0.0
    %4776 = vmatprep.subr.mxu0 0.0
    %4777 = vmatpush1.msra.mxu0 0.0
    %4778 = vmatprep.subr.mxu0 0.0
    %4779 = vmatpush1.msra.mxu0 0.0
    %4780 = vmatprep.mubr.f32.mxu0 0.0
    %4781 = vmatmul.mubr.f32.gmra.mrb[0].mxu0 %v4711
    %v4782 = vpop.f32.mrb[0].mxu0
    %v4783 = vadd.f32 0.0, %v4782
    %v4784 = vpop.f32.mrb[0].mxu0
    %4785 = vmatprep.mubr.f32.mxu0 0.0
    %4786 = vmatmul.mubr.f32.gmra.mrb[0].mxu0 %v4714
    %v4787 = vpop.f32.mrb[0].mxu0
    %v4788 = vadd.f32 0.0, %v4787
    %v4789 = vpop.f32.mrb[0].mxu0
    %4790 = vdwg.mxu0
    %v4791 = vadd.f32 %v3868, %v4783
    %v4792 = vadd.f32 %v3869, %v4788
    %v4794 = vlaneseq
    %v4795 = vshrl.u32 %v4794, 7
    %v4796 = vsub.s32 0, %v4795
    %v4797 = vrot.slane %v2630, %v4796
    %v4799 = vadd.f32 %v4791, %v4797
    %v4800 = vadd.f32 %v4792, %v4797
    %v4801 = vsel %vm151, %v4799, 0.0
    %4802 = vadd.xlane.f32.xlu0 %v4801
    %v4803 = vpop.xlane.xlu0 %4802
    %v4804 = vsel %vm151, %v4800, 0.0
    %4805 = vadd.xlane.f32.xlu0 %v4804
    %v4806 = vpop.xlane.xlu0 %4805
    %v4807 = vmul.f32 %v4803, %v158
    %v4808 = vmul.f32 %v4806, %v158
    %v4809 = vsub.f32 %v4799, %v4807
    %v4810 = vsub.f32 %v4800, %v4808
    %v4811 = vmul.f32 %v4809, %v4809
    %v4812 = vmul.f32 %v4810, %v4810
    %v4813 = vsel %vm151, %v4811, 0.0
    %4814 = vadd.xlane.f32.xlu0 %v4813
    %v4815 = vpop.xlane.xlu0 %4814
    %v4816 = vsel %vm151, %v4812, 0.0
    %4817 = vadd.xlane.f32.xlu0 %v4816
    %v4818 = vpop.xlane.xlu0 %4817
    %v4819 = vmul.f32 %v4815, %v158
    %v4820 = vmul.f32 %v4818, %v158
    %v4821 = vadd.f32 %v4819, 1e-08
    %v4822 = vadd.f32 %v4820, 1e-08
    %v4823 = vrsqrt.pop %v4821
    %v4824 = vrsqrt.pop %v4822
    %v4825 = vmul.f32 %v4809, %v4823
    %v4826 = vmul.f32 %v4810, %v4824
    %v4828 = vlaneseq
    %v4829 = vshrl.u32 %v4828, 7
    %v4830 = vsub.s32 0, %v4829
    %v4831 = vrot.slane %v2633, %v4830
    %v4833 = vmul.f32 %v4825, %v4831
    %v4834 = vmul.f32 %v4826, %v4831
    %v4836 = vlaneseq
    %v4837 = vshrl.u32 %v4836, 7
    %v4838 = vsub.s32 0, %v4837
    %v4839 = vrot.slane %v2636, %v4838
    %v4841 = vadd.f32 %v4833, %v4839
    %v4842 = vadd.f32 %v4834, %v4839
    %v4844 = vlaneseq
    %v4845 = vshrl.u32 %v4844, 7
    %v4846 = vsub.s32 0, %v4845
    %v4847 = vrot.slane %v2648, %v4846
    %v4850 = vsel %vm151, %v4841, 0
    %v4853 = vsel %vm151, %v4842, 0
    %4855 = vmatprep.subr.mxu0 0.0
    %4856 = vmatpush1.msra.mxu0 %v2642
    %4857 = vmatprep.subr.mxu0 0.0
    %4858 = vmatpush1.msra.mxu0 %v2643
    %4859 = vmatprep.subr.mxu0 0.0
    %4860 = vmatpush1.msra.mxu0 %v2644
    %4861 = vmatprep.subr.mxu0 0.0
    %4862 = vmatpush1.msra.mxu0 %v2645
    %4863 = vmatprep.subr.mxu0 0.0
    %4864 = vmatpush1.msra.mxu0 0.0
    %4865 = vmatprep.subr.mxu0 0.0
    %4866 = vmatpush1.msra.mxu0 0.0
    %4867 = vmatprep.subr.mxu0 0.0
    %4868 = vmatpush1.msra.mxu0 0.0
    %4869 = vmatprep.subr.mxu0 0.0
    %4870 = vmatpush1.msra.mxu0 0.0
    %4871 = vmatprep.subr.mxu0 0.0
    %4872 = vmatpush1.msra.mxu0 0.0
    %4873 = vmatprep.subr.mxu0 0.0
    %4874 = vmatpush1.msra.mxu0 0.0
    %4875 = vmatprep.subr.mxu0 0.0
    %4876 = vmatpush1.msra.mxu0 0.0
    %4877 = vmatprep.subr.mxu0 0.0
    %4878 = vmatpush1.msra.mxu0 0.0
    %4879 = vmatprep.subr.mxu0 0.0
    %4880 = vmatpush1.msra.mxu0 0.0
    %4881 = vmatprep.subr.mxu0 0.0
    %4882 = vmatpush1.msra.mxu0 0.0
    %4883 = vmatprep.subr.mxu0 0.0
    %4884 = vmatpush1.msra.mxu0 0.0
    %4885 = vmatprep.subr.mxu0 0.0
    %4886 = vmatpush1.msra.mxu0 0.0
    %4887 = vmatprep.subr.mxu0 0.0
    %4888 = vmatpush1.msra.mxu0 0.0
    %4889 = vmatprep.subr.mxu0 0.0
    %4890 = vmatpush1.msra.mxu0 0.0
    %4891 = vmatprep.subr.mxu0 0.0
    %4892 = vmatpush1.msra.mxu0 0.0
    %4893 = vmatprep.subr.mxu0 0.0
    %4894 = vmatpush1.msra.mxu0 0.0
    %4895 = vmatprep.subr.mxu0 0.0
    %4896 = vmatpush1.msra.mxu0 0.0
    %4897 = vmatprep.subr.mxu0 0.0
    %4898 = vmatpush1.msra.mxu0 0.0
    %4899 = vmatprep.subr.mxu0 0.0
    %4900 = vmatpush1.msra.mxu0 0.0
    %4901 = vmatprep.subr.mxu0 0.0
    %4902 = vmatpush1.msra.mxu0 0.0
    %4903 = vmatprep.subr.mxu0 0.0
    %4904 = vmatpush1.msra.mxu0 0.0
    %4905 = vmatprep.subr.mxu0 0.0
    %4906 = vmatpush1.msra.mxu0 0.0
    %4907 = vmatprep.subr.mxu0 0.0
    %4908 = vmatpush1.msra.mxu0 0.0
    %4909 = vmatprep.subr.mxu0 0.0
    %4910 = vmatpush1.msra.mxu0 0.0
    %4911 = vmatprep.subr.mxu0 0.0
    %4912 = vmatpush1.msra.mxu0 0.0
    %4913 = vmatprep.subr.mxu0 0.0
    %4914 = vmatpush1.msra.mxu0 0.0
    %4915 = vmatprep.subr.mxu0 0.0
    %4916 = vmatpush1.msra.mxu0 0.0
    %4917 = vmatprep.subr.mxu0 0.0
    %4918 = vmatpush1.msra.mxu0 0.0
    %4919 = vmatprep.mubr.f32.mxu0 0.0
    %4920 = vmatmul.mubr.f32.gmra.mrb[0].mxu0 %v4850
    %v4921 = vpop.f32.mrb[0].mxu0
    %v4922 = vadd.f32 %v4847, %v4921
    %v4923 = vpop.f32.mrb[0].mxu0
    %4924 = vmatprep.mubr.f32.mxu0 0.0
    %4925 = vmatmul.mubr.f32.gmra.mrb[0].mxu0 %v4853
    %v4926 = vpop.f32.mrb[0].mxu0
    %v4927 = vadd.f32 %v4847, %v4926
    %v4928 = vpop.f32.mrb[0].mxu0
    %4929 = vdwg.mxu0
    %v4930 = vmax.f32 %v4922, 0.0
    %v4931 = vmax.f32 %v4927, 0.0
    %v4933 = vlaneseq
    %v4934 = vshrl.u32 %v4933, 7
    %v4935 = vsub.s32 0, %v4934
    %v4936 = vrot.slane %v2660, %v4935
    %v4939 = vsel %vm151, %v4930, 0
    %v4942 = vsel %vm151, %v4931, 0
    %4944 = vmatprep.subr.mxu0 0.0
    %4945 = vmatpush1.msra.mxu0 %v2654
    %4946 = vmatprep.subr.mxu0 0.0
    %4947 = vmatpush1.msra.mxu0 %v2655
    %4948 = vmatprep.subr.mxu0 0.0
    %4949 = vmatpush1.msra.mxu0 %v2656
    %4950 = vmatprep.subr.mxu0 0.0
    %4951 = vmatpush1.msra.mxu0 %v2657
    %4952 = vmatprep.subr.mxu0 0.0
    %4953 = vmatpush1.msra.mxu0 0.0
    %4954 = vmatprep.subr.mxu0 0.0
    %4955 = vmatpush1.msra.mxu0 0.0
    %4956 = vmatprep.subr.mxu0 0.0
    %4957 = vmatpush1.msra.mxu0 0.0
    %4958 = vmatprep.subr.mxu0 0.0
    %4959 = vmatpush1.msra.mxu0 0.0
    %4960 = vmatprep.subr.mxu0 0.0
    %4961 = vmatpush1.msra.mxu0 0.0
    %4962 = vmatprep.subr.mxu0 0.0
    %4963 = vmatpush1.msra.mxu0 0.0
    %4964 = vmatprep.subr.mxu0 0.0
    %4965 = vmatpush1.msra.mxu0 0.0
    %4966 = vmatprep.subr.mxu0 0.0
    %4967 = vmatpush1.msra.mxu0 0.0
    %4968 = vmatprep.subr.mxu0 0.0
    %4969 = vmatpush1.msra.mxu0 0.0
    %4970 = vmatprep.subr.mxu0 0.0
    %4971 = vmatpush1.msra.mxu0 0.0
    %4972 = vmatprep.subr.mxu0 0.0
    %4973 = vmatpush1.msra.mxu0 0.0
    %4974 = vmatprep.subr.mxu0 0.0
    %4975 = vmatpush1.msra.mxu0 0.0
    %4976 = vmatprep.subr.mxu0 0.0
    %4977 = vmatpush1.msra.mxu0 0.0
    %4978 = vmatprep.subr.mxu0 0.0
    %4979 = vmatpush1.msra.mxu0 0.0
    %4980 = vmatprep.subr.mxu0 0.0
    %4981 = vmatpush1.msra.mxu0 0.0
    %4982 = vmatprep.subr.mxu0 0.0
    %4983 = vmatpush1.msra.mxu0 0.0
    %4984 = vmatprep.subr.mxu0 0.0
    %4985 = vmatpush1.msra.mxu0 0.0
    %4986 = vmatprep.subr.mxu0 0.0
    %4987 = vmatpush1.msra.mxu0 0.0
    %4988 = vmatprep.subr.mxu0 0.0
    %4989 = vmatpush1.msra.mxu0 0.0
    %4990 = vmatprep.subr.mxu0 0.0
    %4991 = vmatpush1.msra.mxu0 0.0
    %4992 = vmatprep.subr.mxu0 0.0
    %4993 = vmatpush1.msra.mxu0 0.0
    %4994 = vmatprep.subr.mxu0 0.0
    %4995 = vmatpush1.msra.mxu0 0.0
    %4996 = vmatprep.subr.mxu0 0.0
    %4997 = vmatpush1.msra.mxu0 0.0
    %4998 = vmatprep.subr.mxu0 0.0
    %4999 = vmatpush1.msra.mxu0 0.0
    %5000 = vmatprep.subr.mxu0 0.0
    %5001 = vmatpush1.msra.mxu0 0.0
    %5002 = vmatprep.subr.mxu0 0.0
    %5003 = vmatpush1.msra.mxu0 0.0
    %5004 = vmatprep.subr.mxu0 0.0
    %5005 = vmatpush1.msra.mxu0 0.0
    %5006 = vmatprep.subr.mxu0 0.0
    %5007 = vmatpush1.msra.mxu0 0.0
    %5008 = vmatprep.mubr.f32.mxu0 0.0
    %5009 = vmatmul.mubr.f32.gmra.mrb[0].mxu0 %v4939
    %v5010 = vpop.f32.mrb[0].mxu0
    %v5011 = vadd.f32 %v4936, %v5010
    %v5012 = vpop.f32.mrb[0].mxu0
    %5013 = vmatprep.mubr.f32.mxu0 0.0
    %5014 = vmatmul.mubr.f32.gmra.mrb[0].mxu0 %v4942
    %v5015 = vpop.f32.mrb[0].mxu0
    %v5016 = vadd.f32 %v4936, %v5015
    %v5017 = vpop.f32.mrb[0].mxu0
    %5018 = vdwg.mxu0
    %v5019 = vadd.f32 %v5011, %v4841
    %v5020 = vadd.f32 %v5016, %v4842
    %v5021 = vmul.f32 %v5019, %v76
    %v5022 = vmul.f32 %v5020, %v81
    %v5023 = vsel %vm151, %v5021, 0.0
    %5024 = vadd.xlane.f32.xlu0 %v5023
    %v5025 = vpop.xlane.xlu0 %5024
    %v5026 = vsel %vm151, %v5022, 0.0
    %5027 = vadd.xlane.f32.xlu0 %v5026
    %v5028 = vpop.xlane.xlu0 %5027
    %v5029 = vmul.f32 %v5025, %v158
    %v5030 = vmul.f32 %v5028, %v158
    %v5031 = vsub.f32 %v5021, %v5029
    %v5032 = vsub.f32 %v5022, %v5030
    %v5033 = vmul.f32 %v5031, %v5031
    %v5034 = vmul.f32 %v5032, %v5032
    %v5035 = vsel %vm151, %v5033, 0.0
    %5036 = vadd.xlane.f32.xlu0 %v5035
    %v5037 = vpop.xlane.xlu0 %5036
    %v5038 = vsel %vm151, %v5034, 0.0
    %5039 = vadd.xlane.f32.xlu0 %v5038
    %v5040 = vpop.xlane.xlu0 %5039
    %v5041 = vmul.f32 %v5037, %v158
    %v5042 = vmul.f32 %v5040, %v158
    %v5043 = vadd.f32 %v5041, 1e-08
    %v5044 = vadd.f32 %v5042, 1e-08
    %v5045 = vrsqrt.pop %v5043
    %v5046 = vrsqrt.pop %v5044
    %v5047 = vmul.f32 %v5031, %v5045
    %v5048 = vmul.f32 %v5032, %v5046
    %v5050 = vlaneseq
    %v5051 = vshrl.u32 %v5050, 7
    %v5052 = vsub.s32 0, %v5051
    %v5053 = vrot.slane %v2662, %v5052
    %v5055 = vmul.f32 %v5047, %v5053
    %v5056 = vmul.f32 %v5048, %v5053
    %v5058 = vlaneseq
    %v5059 = vshrl.u32 %v5058, 7
    %v5060 = vsub.s32 0, %v5059
    %v5061 = vrot.slane %v2664, %v5060
    %v5063 = vadd.f32 %v5055, %v5061
    %v5064 = vadd.f32 %v5056, %v5061
    %5065 = vst.msk [vmem:[#allocation4] sm:$0xff] %vm151, %v5063
    %5066 = vst.msk [vmem:[#allocation4 + $0x8] sm:$0xff] %vm151, %v5064
    // Predicated region
    $region74: #{encoder_forward.1} parent=1 // pred_check
      _
    $region75: #{encoder_forward.1} parent=1 // pred_check_branch
      %5068 = sbr.rel (0) target = $region77
    $region76: #{encoder_forward.1} parent=1 // pred_region
      %s5070 = ssub.s32 256, 256
      %5071 = vsyncadd [#allocation3], %s5070
      %s5072 = sshll.u32 [#allocation2], 4
      %s5073 = int_to_ptr.vmem [resolvable:$true] %s5072
      %5078 = dma.vmem_to_hbm [thread:$0]  %s5073, 256, %s18, [#allocation3], 128, 128, 8
    $region77: #{encoder_forward.1} parent=1 // pred_fallthru
      _
    // Predicated region
    $region78: #{encoder_forward.1} parent=1 // pred_check
      _
    $region79: #{encoder_forward.1} parent=1 // pred_check_branch
      %5080 = sbr.rel (0) target = $region81
    $region80: #{encoder_forward.1} parent=1 // pred_region
      %s5082 = ssub.s32 256, 256
      %5083 = vsyncadd [#allocation5], %s5082
      %s5084 = sshll.u32 [#allocation4], 4
      %s5085 = int_to_ptr.vmem [resolvable:$true] %s5084
      %5090 = dma.vmem_to_hbm [thread:$0]  %s5085, 256, %s19, [#allocation5], 128, 128, 8
    $region81: #{encoder_forward.1} parent=1 // pred_fallthru
      _
    // Predicated region
    $region82: #{encoder_forward.1} parent=1 // pred_check
      _
    $region83: #{encoder_forward.1} parent=1 // pred_check_branch
      %5092 = sbr.rel (0) target = $region85
    $region84: #{encoder_forward.1} parent=1 // pred_region
      %5093 = dma.done [#allocation3], 256
    $region85: #{encoder_forward.1} parent=1 // pred_fallthru
      _
    // Predicated region
    $region86: #{encoder_forward.1} parent=1 // pred_check
      _
    $region87: #{encoder_forward.1} parent=1 // pred_check_branch
      %5095 = sbr.rel (0) target = $region89
    $region88: #{encoder_forward.1} parent=1 // pred_region
      %5096 = dma.done [#allocation5], 256
    $region89: #{encoder_forward.1} parent=1 // pred_fallthru
      _
    %5097 = vsyncpa [#allocation3], 1
    %5098 = vsyncpa [#allocation5], 1

</llo_original>
